<compile_context>
chip_gen: v6e
topology: v6e:2x2x1
jax: 0.10.0
libtpu: 0.0.40
codegen_flags: <defaults>
</compile_context>

<pallas_src>
import functools

import jax
import jax.numpy as jnp
from jax.experimental import pallas as pl
from jax.experimental.pallas import tpu as pltpu

LEAK = 0.2
EPS = 1e-5
VMEM_LIMIT = 48 * 1024 * 1024   # explicit, < v7x 64 MiB per-TC VMEM


def _leaky(y):
    return jnp.where(y > 0, y, LEAK * y)


# -----------------------------------------------------------------------------
# Pallas kernels
# -----------------------------------------------------------------------------

def edgeconv_kernel(nbr_ref, ctr_ref, wd_ref, wcd_ref, shift_ref, o_ref):
    """EdgeConv block with split weights.

    nbr_ref: (k, tm, C) bf16 gathered neighbors, ctr_ref: (tm, C) bf16 centers.
    y_j = nbr_j @ W_d + ctr @ (W_c - W_d) + shift ; out = leaky(max_j y_j).

    The k-max is folded into the accumulator right after each per-neighbor
    MXU dot, so the peak f32 intermediate is ~2x(tm, Cout) regardless of k.
    """
    k = nbr_ref.shape[0]
    # per-point (center) term, computed once per point instead of per neighbor
    yc = jnp.dot(ctr_ref[...], wcd_ref[...], preferred_element_type=jnp.float32)
    acc = jnp.dot(nbr_ref[0], wd_ref[...], preferred_element_type=jnp.float32)
    for j in range(1, k):
        acc = jnp.maximum(
            acc, jnp.dot(nbr_ref[j], wd_ref[...],
                         preferred_element_type=jnp.float32))
    # leaky is monotone increasing and yc/shift are constant over j, so the
    # activation and the per-point terms are applied once after the max.
    o_ref[...] = _leaky(acc + yc + shift_ref[...]).astype(o_ref.dtype)


def edgeconv(nbr, ctr, wd, wcd, shift, tm=512):
    """nbr: (k, M, C) bf16; ctr: (M, C) bf16.  Returns (M, Cout) bf16."""
    k, M, C = nbr.shape
    cout = wd.shape[1]
    tm = min(tm, M)
    assert M % tm == 0 and (tm == M or tm % 16 == 0), (M, tm)

    grid_m = M // tm
    if grid_m >= 3:
        # Deeper neighbor buffering only makes sense with >= 3 grid steps.
        nbr_spec = pl.BlockSpec((k, tm, C), lambda i: (0, i, 0),
                                pipeline_mode=pl.Buffered(3))
    else:
        nbr_spec = pl.BlockSpec((k, tm, C), lambda i: (0, i, 0))

    return pl.pallas_call(
        edgeconv_kernel,
        out_shape=jax.ShapeDtypeStruct((M, cout), jnp.bfloat16),
        grid=(grid_m,),
        in_specs=[
            nbr_spec,
            pl.BlockSpec((tm, C), lambda i: (i, 0)),
            pl.BlockSpec((C, cout), lambda i: (0, 0)),
            pl.BlockSpec((C, cout), lambda i: (0, 0)),
            pl.BlockSpec((1, cout), lambda i: (0, 0)),
        ],
        out_specs=pl.BlockSpec((tm, cout), lambda i: (i, 0)),
        compiler_params=pltpu.CompilerParams(
            dimension_semantics=("parallel",),
            vmem_limit_bytes=VMEM_LIMIT),
    )(nbr, ctr, wd, wcd, shift)


def conv5_pool_kernel(x1_ref, x2_ref, x3_ref, x4_ref,
                      w1_ref, w2_ref, w3_ref, w4_ref, shift_ref,
                      max_ref, mean_ref, *, inv_n):
    """conv5 on the *split* 512-channel bf16 input (no concat) + BN shift +
    LeakyReLU fused with running global max & avg pool over N (tiled along
    axis j).  Max/sum accumulate directly into the resident output blocks."""
    j = pl.program_id(1)
    y = jnp.dot(x1_ref[0], w1_ref[...], preferred_element_type=jnp.float32)
    y = y + jnp.dot(x2_ref[0], w2_ref[...], preferred_element_type=jnp.float32)
    y = y + jnp.dot(x3_ref[0], w3_ref[...], preferred_element_type=jnp.float32)
    y = y + jnp.dot(x4_ref[0], w4_ref[...], preferred_element_type=jnp.float32)
    y = _leaky(y + shift_ref[...])                    # (tn, emb) f32
    tile_max = jnp.max(y, axis=0, keepdims=True)      # (1, emb)
    tile_sum = jnp.sum(y, axis=0, keepdims=True)      # (1, emb)

    @pl.when(j == 0)
    def _():
        max_ref[0] = tile_max
        mean_ref[0] = tile_sum

    @pl.when(j > 0)
    def _():
        max_ref[0] = jnp.maximum(max_ref[0], tile_max)
        mean_ref[0] = mean_ref[0] + tile_sum

    @pl.when(j == pl.num_programs(1) - 1)
    def _():
        mean_ref[0] = mean_ref[0] * inv_n


def conv5_pool(x1, x2, x3, x4, w5_parts, shift, tn=1024):
    """x1..x4: (B, N, Ci) bf16.  Returns global max / mean pooled (B, emb)."""
    B, N, _ = x1.shape
    emb = shift.shape[1]
    tn = min(tn, N)
    assert N % tn == 0 and (tn % 16 == 0 or tn == N), (N, tn)
    w5a, w5b, w5c, w5d = w5_parts
    kern = functools.partial(conv5_pool_kernel, inv_n=1.0 / N)

    # TODO(synk): on v7x (2 TCs) with small B, split N across a second
    # "parallel" grid axis and combine the partial max/sum outside the kernel.

    def xspec(c):
        return pl.BlockSpec((1, tn, c), lambda b, j: (b, j, 0))

    def wspec(w):
        return pl.BlockSpec(w.shape, lambda b, j: (0, 0))

    xmax, xavg = pl.pallas_call(
        kern,
        out_shape=(jax.ShapeDtypeStruct((B, 1, emb), jnp.float32),
                   jax.ShapeDtypeStruct((B, 1, emb), jnp.float32)),
        grid=(B, N // tn),
        in_specs=[xspec(x1.shape[-1]), xspec(x2.shape[-1]),
                  xspec(x3.shape[-1]), xspec(x4.shape[-1]),
                  wspec(w5a), wspec(w5b), wspec(w5c), wspec(w5d),
                  pl.BlockSpec((1, emb), lambda b, j: (0, 0))],
        out_specs=(pl.BlockSpec((1, 1, emb), lambda b, j: (b, 0, 0)),
                   pl.BlockSpec((1, 1, emb), lambda b, j: (b, 0, 0))),
        compiler_params=pltpu.CompilerParams(
            dimension_semantics=("parallel", "arbitrary"),
            vmem_limit_bytes=VMEM_LIMIT),
    )(x1, x2, x3, x4, w5a, w5b, w5c, w5d, shift)
    return xmax.reshape(B, emb), xavg.reshape(B, emb)


def head_kernel(x_ref, w1_ref, b1_ref, w2_ref, b2_ref, w3_ref, b3_ref, o_ref):
    """linear1(+BN6 folded)+lrelu -> linear2(+BN7 folded)+lrelu -> linear3."""
    x = x_ref[...].astype(jnp.bfloat16)
    h = _leaky(jnp.dot(x, w1_ref[...], preferred_element_type=jnp.float32)
               + b1_ref[...])
    # TODO(synk): Dropout layers are eval-mode identities (deterministic run).
    h = _leaky(jnp.dot(h.astype(jnp.bfloat16), w2_ref[...],
                       preferred_element_type=jnp.float32) + b2_ref[...])
    o_ref[...] = (jnp.dot(h.astype(jnp.bfloat16), w3_ref[...],
                          preferred_element_type=jnp.float32) + b3_ref[...])


def mlp_head(x, w1, b1, w2, b2, w3, b3):
    B = x.shape[0]
    cout = w3.shape[1]

    def full(a):
        return pl.BlockSpec(a.shape, lambda i: (0,) * a.ndim)

    return pl.pallas_call(
        head_kernel,
        out_shape=jax.ShapeDtypeStruct((B, cout), jnp.float32),
        grid=(1,),
        in_specs=[full(x), full(w1), full(b1), full(w2), full(b2),
                  full(w3), full(b3)],
        out_specs=pl.BlockSpec((B, cout), lambda i: (0, 0)),
        compiler_params=pltpu.CompilerParams(vmem_limit_bytes=VMEM_LIMIT),
    )(x, w1, b1, w2, b2, w3, b3)


# -----------------------------------------------------------------------------
# Plain-JAX glue (kNN, gather, 3x3 eigh preprocessing)
# -----------------------------------------------------------------------------

def knn_gather(x_nlc, k):
    """x_nlc: (B, N, C) f32 or bf16.  Returns bf16 neighbors (k, B*N, C) and
    bf16 centers (B*N, C).  Matches torch knn (point is its own neighbor)."""
    B, N, C = x_nlc.shape
    xb = x_nlc.astype(jnp.bfloat16)
    xf = xb.astype(jnp.float32)
    # bf16 inputs, f32 accumulation for the pairwise distance matmul.
    inner = jnp.einsum('bnc,bmc->bnm', xb, xb,
                       preferred_element_type=jnp.float32)
    xx = jnp.sum(xf * xf, axis=-1)                              # (B, N)
    pairwise = 2.0 * inner - xx[:, :, None] - xx[:, None, :]    # -||xi - xj||^2
    idx = jax.lax.top_k(pairwise, k)[1]                         # (B, N, k)
    idx_t = jnp.transpose(idx, (2, 0, 1))                       # (k, B, N)
    # TODO(synk): move this gather into the Pallas kernel via scalar-prefetched
    # idx + a VMEM-resident per-cloud point slab to skip one HBM round trip.
    nbr = xb[jnp.arange(B)[None, :, None], idx_t]               # (k, B, N, C)
    return nbr.reshape(k, B * N, C), xb.reshape(B * N, C)


def edge_block(x_nlc, wd, wcd, shift, k, tm=512):
    B, N, _ = x_nlc.shape
    nbr, ctr = knn_gather(x_nlc, k)
    y = edgeconv(nbr, ctr, wd, wcd, shift, tm=tm)               # (B*N, Cout) bf16
    return y.reshape(B, N, -1)


def dgcnn_forward(x, p, k):
    """x: (B, 3, N) float32 (PyTorch NCW layout at the interface)."""
    B = x.shape[0]
    # ---- torch.no_grad() preprocessing ----
    # NOTE: the reference does `x = x - x.mean()` -> one scalar mean over the
    # whole batch tensor; reproduced exactly here.
    x = x - jnp.mean(x)
    feat = jnp.einsum('bcn,bdn->bcd', x, x)                     # x @ x^T  (B,3,3)
    _, eigvecs = jnp.linalg.eigh(feat)
    # NOTE: eigenvector signs / tie order may differ from torch.linalg.eigh;
    # both are valid PCA alignments.
    x = jnp.einsum('bdc,bdn->bcn', eigvecs, x)                  # eigvecs^T @ x
    x_nlc = jnp.transpose(x, (0, 2, 1))                         # (B, N, 3)

    x1 = edge_block(x_nlc, *p['e1'], k=k)                       # (B, N, 64)  bf16
    x2 = edge_block(x1, *p['e2'], k=k)                          # (B, N, 64)  bf16
    x3 = edge_block(x2, *p['e3'], k=k)                          # (B, N, 128) bf16
    x4 = edge_block(x3, *p['e4'], k=k)                          # (B, N, 256) bf16

    xmax, xavg = conv5_pool(x1, x2, x3, x4, p['w5'], p['sh5'])  # (B, emb) each
    feats = jnp.concatenate([xmax, xavg], axis=-1)              # (B, 2*emb)

    out = mlp_head(feats, p['h1_w'], p['h1_b'], p['h2_w'], p['h2_b'],
                   p['h3_w'], p['h3_b'])
    return out                                                  # (B, 40)


# -----------------------------------------------------------------------------
# Deterministic parameter init (synthetic; BN in eval mode) + host-side folding
# -----------------------------------------------------------------------------

def init_params(key, emb_dims=64, output_channels=40):
    keys = iter(jax.random.split(key, 32))

    def conv_w(cin, cout):
        return jax.random.normal(next(keys), (cin, cout), jnp.float32) * jnp.sqrt(2.0 / cin)

    def bn(c):
        gamma = 1.0 + 0.1 * jax.random.normal(next(keys), (1, c), jnp.float32)
        beta = 0.1 * jax.random.normal(next(keys), (1, c), jnp.float32)
        # running_mean = 0, running_var = 1  ->  fold into scale/shift
        scale = gamma / jnp.sqrt(1.0 + EPS)
        shift = beta
        return scale, shift

    p = {}
    p['w1'] = conv_w(6, 64);    p['s1'], p['sh1'] = bn(64)
    p['w2'] = conv_w(128, 64);  p['s2'], p['sh2'] = bn(64)
    p['w3'] = conv_w(128, 128); p['s3'], p['sh3'] = bn(128)
    p['w4'] = conv_w(256, 256); p['s4'], p['sh4'] = bn(256)
    p['w5'] = conv_w(512, emb_dims); p['s5'], p['sh5'] = bn(emb_dims)

    p['l1_w'] = conv_w(emb_dims * 2, 512); p['s6'], p['sh6'] = bn(512)
    p['l2_w'] = conv_w(512, 256)
    p['l2_b'] = 0.01 * jax.random.normal(next(keys), (1, 256), jnp.float32)
    p['s7'], p['sh7'] = bn(256)
    p['l3_w'] = conv_w(256, output_channels)
    p['l3_b'] = 0.01 * jax.random.normal(next(keys), (1, output_channels), jnp.float32)
    return p


def fold_params(p):
    """Fold BN scale into weights, split EdgeConv weights (W_d, W_c - W_d),
    split W5 row-wise to match the un-concatenated conv5 inputs, cast to bf16.

    EdgeConv channel order follows get_graph_feature: cat((x_j - x_i, x_i)),
    i.e. rows [0:C) of W multiply the neighbor-difference and rows [C:2C) the
    center, so y_j = x_j @ W[:C] + x_i @ (W[C:] - W[:C])."""
    # TODO(synk): folding assumes running_mean=0, running_var=1 (synthetic
    # init); a real checkpoint would also fold mean/var into scale/shift here.
    bf16 = jnp.bfloat16

    def edge(w, s, sh):
        c = w.shape[0] // 2
        wd = (w[:c] * s).astype(bf16)              # multiplies x_j (neighbor)
        wcd = ((w[c:] - w[:c]) * s).astype(bf16)   # multiplies x_i (center)
        return wd, wcd, sh

    f = {}
    f['e1'] = edge(p['w1'], p['s1'], p['sh1'])
    f['e2'] = edge(p['w2'], p['s2'], p['sh2'])
    f['e3'] = edge(p['w3'], p['s3'], p['sh3'])
    f['e4'] = edge(p['w4'], p['s4'], p['sh4'])

    w5 = p['w5'] * p['s5']
    f['w5'] = (w5[0:64].astype(bf16), w5[64:128].astype(bf16),
               w5[128:256].astype(bf16), w5[256:512].astype(bf16))
    f['sh5'] = p['sh5']

    f['h1_w'] = (p['l1_w'] * p['s6']).astype(bf16)
    f['h1_b'] = p['sh6']
    f['h2_w'] = (p['l2_w'] * p['s7']).astype(bf16)
    f['h2_b'] = p['s7'] * p['l2_b'] + p['sh7']
    f['h3_w'] = p['l3_w'].astype(bf16)
    f['h3_b'] = p['l3_b']
    return f


if __name__ == "__main__":
    key = jax.random.PRNGKey(0)
    kx, kp = jax.random.split(key)

    B, N, K_NN = 2, 32, 8          # small shapes: 2 clouds, 32 points, k=8 neighbors
    EMB, OUT = 64, 40

    x = jax.random.normal(kx, (B, 3, N), jnp.float32)
    params = fold_params(init_params(kp, emb_dims=EMB, output_channels=OUT))

    fwd = jax.jit(functools.partial(dgcnn_forward, k=K_NN))
    out = jax.block_until_ready(fwd(x, params))

    assert out.shape == (B, OUT), out.shape
    assert bool(jnp.all(jnp.isfinite(out)))
    print("KERNEL_OK")
</pallas_src>

<mosaic_0001>
module attributes {stable_mosaic.version = 11 : i64} {
  func.func @edgeconv_kernel(%arg0: i32, %arg1: memref<8x64x3xbf16, #tpu.memory_space<vmem>>, %arg2: memref<64x3xbf16, #tpu.memory_space<vmem>>, %arg3: memref<3x64xbf16, #tpu.memory_space<vmem>>, %arg4: memref<3x64xbf16, #tpu.memory_space<vmem>>, %arg5: memref<1x64xf32, #tpu.memory_space<vmem>>, %arg6: memref<64x64xbf16, #tpu.memory_space<vmem>>) attributes {dimension_semantics = [#tpu.dimension_semantics<parallel>], iteration_bounds = array<i64: 1>, scalar_prefetch = 0 : i64, scratch_operands = 0 : i64, tpu.core_type = #tpu.core_type<tc>, window_params = [{transform_indices = @transform_0, window_bounds = array<i64: 8, 64, 3>}, {transform_indices = @transform_1, window_bounds = array<i64: 64, 3>}, {pipeline_mode = #tpu.pipeline_mode<synchronous>, transform_indices = @transform_2, window_bounds = array<i64: 3, 64>}, {pipeline_mode = #tpu.pipeline_mode<synchronous>, transform_indices = @transform_3, window_bounds = array<i64: 3, 64>}, {pipeline_mode = #tpu.pipeline_mode<synchronous>, transform_indices = @transform_4, window_bounds = array<i64: 1, 64>}, {transform_indices = @transform_5, window_bounds = array<i64: 64, 64>}]} {
    %c0 = arith.constant 0 : index
    %c0_0 = arith.constant 0 : index
    %0 = vector.load %arg2[%c0, %c0_0] : memref<64x3xbf16, #tpu.memory_space<vmem>>, vector<64x3xbf16>
    %c0_1 = arith.constant 0 : index
    %c0_2 = arith.constant 0 : index
    %1 = vector.load %arg4[%c0_1, %c0_2] : memref<3x64xbf16, #tpu.memory_space<vmem>>, vector<3x64xbf16>
    %cst = arith.constant dense<0.000000e+00> : vector<64x64xf32>
    %2 = tpu.matmul %0, %1, %cst {dimension_numbers = #tpu.dot_dimension_numbers<[1], [0], [0], [1], [0, 0, 1, 1], [], []>} : vector<64x3xbf16>, vector<3x64xbf16>, vector<64x64xf32> -> vector<64x64xf32>
    %c0_3 = arith.constant 0 : index
    %c0_4 = arith.constant 0 : index
    %c0_5 = arith.constant 0 : index
    %3 = vector.load %arg1[%c0_3, %c0_4, %c0_5] : memref<8x64x3xbf16, #tpu.memory_space<vmem>>, vector<1x64x3xbf16>
    %4 = vector.shape_cast %3 : vector<1x64x3xbf16> to vector<64x3xbf16>
    %c0_6 = arith.constant 0 : index
    %c0_7 = arith.constant 0 : index
    %5 = vector.load %arg3[%c0_6, %c0_7] : memref<3x64xbf16, #tpu.memory_space<vmem>>, vector<3x64xbf16>
    %cst_8 = arith.constant dense<0.000000e+00> : vector<64x64xf32>
    %6 = tpu.matmul %4, %5, %cst_8 {dimension_numbers = #tpu.dot_dimension_numbers<[1], [0], [0], [1], [0, 0, 1, 1], [], []>} : vector<64x3xbf16>, vector<3x64xbf16>, vector<64x64xf32> -> vector<64x64xf32>
    %c1 = arith.constant 1 : index
    %c0_9 = arith.constant 0 : index
    %c0_10 = arith.constant 0 : index
    %7 = vector.load %arg1[%c1, %c0_9, %c0_10] : memref<8x64x3xbf16, #tpu.memory_space<vmem>>, vector<1x64x3xbf16>
    %8 = vector.shape_cast %7 : vector<1x64x3xbf16> to vector<64x3xbf16>
    %c0_11 = arith.constant 0 : index
    %c0_12 = arith.constant 0 : index
    %9 = vector.load %arg3[%c0_11, %c0_12] : memref<3x64xbf16, #tpu.memory_space<vmem>>, vector<3x64xbf16>
    %cst_13 = arith.constant dense<0.000000e+00> : vector<64x64xf32>
    %10 = tpu.matmul %8, %9, %cst_13 {dimension_numbers = #tpu.dot_dimension_numbers<[1], [0], [0], [1], [0, 0, 1, 1], [], []>} : vector<64x3xbf16>, vector<3x64xbf16>, vector<64x64xf32> -> vector<64x64xf32>
    %11 = arith.maximumf %6, %10 : vector<64x64xf32>
    %c2 = arith.constant 2 : index
    %c0_14 = arith.constant 0 : index
    %c0_15 = arith.constant 0 : index
    %12 = vector.load %arg1[%c2, %c0_14, %c0_15] : memref<8x64x3xbf16, #tpu.memory_space<vmem>>, vector<1x64x3xbf16>
    %13 = vector.shape_cast %12 : vector<1x64x3xbf16> to vector<64x3xbf16>
    %c0_16 = arith.constant 0 : index
    %c0_17 = arith.constant 0 : index
    %14 = vector.load %arg3[%c0_16, %c0_17] : memref<3x64xbf16, #tpu.memory_space<vmem>>, vector<3x64xbf16>
    %cst_18 = arith.constant dense<0.000000e+00> : vector<64x64xf32>
    %15 = tpu.matmul %13, %14, %cst_18 {dimension_numbers = #tpu.dot_dimension_numbers<[1], [0], [0], [1], [0, 0, 1, 1], [], []>} : vector<64x3xbf16>, vector<3x64xbf16>, vector<64x64xf32> -> vector<64x64xf32>
    %16 = arith.maximumf %11, %15 : vector<64x64xf32>
    %c3 = arith.constant 3 : index
    %c0_19 = arith.constant 0 : index
    %c0_20 = arith.constant 0 : index
    %17 = vector.load %arg1[%c3, %c0_19, %c0_20] : memref<8x64x3xbf16, #tpu.memory_space<vmem>>, vector<1x64x3xbf16>
    %18 = vector.shape_cast %17 : vector<1x64x3xbf16> to vector<64x3xbf16>
    %c0_21 = arith.constant 0 : index
    %c0_22 = arith.constant 0 : index
    %19 = vector.load %arg3[%c0_21, %c0_22] : memref<3x64xbf16, #tpu.memory_space<vmem>>, vector<3x64xbf16>
    %cst_23 = arith.constant dense<0.000000e+00> : vector<64x64xf32>
    %20 = tpu.matmul %18, %19, %cst_23 {dimension_numbers = #tpu.dot_dimension_numbers<[1], [0], [0], [1], [0, 0, 1, 1], [], []>} : vector<64x3xbf16>, vector<3x64xbf16>, vector<64x64xf32> -> vector<64x64xf32>
    %21 = arith.maximumf %16, %20 : vector<64x64xf32>
    %c4 = arith.constant 4 : index
    %c0_24 = arith.constant 0 : index
    %c0_25 = arith.constant 0 : index
    %22 = vector.load %arg1[%c4, %c0_24, %c0_25] : memref<8x64x3xbf16, #tpu.memory_space<vmem>>, vector<1x64x3xbf16>
    %23 = vector.shape_cast %22 : vector<1x64x3xbf16> to vector<64x3xbf16>
    %c0_26 = arith.constant 0 : index
    %c0_27 = arith.constant 0 : index
    %24 = vector.load %arg3[%c0_26, %c0_27] : memref<3x64xbf16, #tpu.memory_space<vmem>>, vector<3x64xbf16>
    %cst_28 = arith.constant dense<0.000000e+00> : vector<64x64xf32>
    %25 = tpu.matmul %23, %24, %cst_28 {dimension_numbers = #tpu.dot_dimension_numbers<[1], [0], [0], [1], [0, 0, 1, 1], [], []>} : vector<64x3xbf16>, vector<3x64xbf16>, vector<64x64xf32> -> vector<64x64xf32>
    %26 = arith.maximumf %21, %25 : vector<64x64xf32>
    %c5 = arith.constant 5 : index
    %c0_29 = arith.constant 0 : index
    %c0_30 = arith.constant 0 : index
    %27 = vector.load %arg1[%c5, %c0_29, %c0_30] : memref<8x64x3xbf16, #tpu.memory_space<vmem>>, vector<1x64x3xbf16>
    %28 = vector.shape_cast %27 : vector<1x64x3xbf16> to vector<64x3xbf16>
    %c0_31 = arith.constant 0 : index
    %c0_32 = arith.constant 0 : index
    %29 = vector.load %arg3[%c0_31, %c0_32] : memref<3x64xbf16, #tpu.memory_space<vmem>>, vector<3x64xbf16>
    %cst_33 = arith.constant dense<0.000000e+00> : vector<64x64xf32>
    %30 = tpu.matmul %28, %29, %cst_33 {dimension_numbers = #tpu.dot_dimension_numbers<[1], [0], [0], [1], [0, 0, 1, 1], [], []>} : vector<64x3xbf16>, vector<3x64xbf16>, vector<64x64xf32> -> vector<64x64xf32>
    %31 = arith.maximumf %26, %30 : vector<64x64xf32>
    %c6 = arith.constant 6 : index
    %c0_34 = arith.constant 0 : index
    %c0_35 = arith.constant 0 : index
    %32 = vector.load %arg1[%c6, %c0_34, %c0_35] : memref<8x64x3xbf16, #tpu.memory_space<vmem>>, vector<1x64x3xbf16>
    %33 = vector.shape_cast %32 : vector<1x64x3xbf16> to vector<64x3xbf16>
    %c0_36 = arith.constant 0 : index
    %c0_37 = arith.constant 0 : index
    %34 = vector.load %arg3[%c0_36, %c0_37] : memref<3x64xbf16, #tpu.memory_space<vmem>>, vector<3x64xbf16>
    %cst_38 = arith.constant dense<0.000000e+00> : vector<64x64xf32>
    %35 = tpu.matmul %33, %34, %cst_38 {dimension_numbers = #tpu.dot_dimension_numbers<[1], [0], [0], [1], [0, 0, 1, 1], [], []>} : vector<64x3xbf16>, vector<3x64xbf16>, vector<64x64xf32> -> vector<64x64xf32>
    %36 = arith.maximumf %31, %35 : vector<64x64xf32>
    %c7 = arith.constant 7 : index
    %c0_39 = arith.constant 0 : index
    %c0_40 = arith.constant 0 : index
    %37 = vector.load %arg1[%c7, %c0_39, %c0_40] : memref<8x64x3xbf16, #tpu.memory_space<vmem>>, vector<1x64x3xbf16>
    %38 = vector.shape_cast %37 : vector<1x64x3xbf16> to vector<64x3xbf16>
    %c0_41 = arith.constant 0 : index
    %c0_42 = arith.constant 0 : index
    %39 = vector.load %arg3[%c0_41, %c0_42] : memref<3x64xbf16, #tpu.memory_space<vmem>>, vector<3x64xbf16>
    %cst_43 = arith.constant dense<0.000000e+00> : vector<64x64xf32>
    %40 = tpu.matmul %38, %39, %cst_43 {dimension_numbers = #tpu.dot_dimension_numbers<[1], [0], [0], [1], [0, 0, 1, 1], [], []>} : vector<64x3xbf16>, vector<3x64xbf16>, vector<64x64xf32> -> vector<64x64xf32>
    %41 = arith.maximumf %36, %40 : vector<64x64xf32>
    %42 = arith.addf %41, %2 : vector<64x64xf32>
    %c0_44 = arith.constant 0 : index
    %c0_45 = arith.constant 0 : index
    %43 = vector.load %arg5[%c0_44, %c0_45] : memref<1x64xf32, #tpu.memory_space<vmem>>, vector<1x64xf32>
    %44 = vector.broadcast %43 : vector<1x64xf32> to vector<64x64xf32>
    %45 = arith.addf %42, %44 : vector<64x64xf32>
    %cst_46 = arith.constant 0.000000e+00 : f32
    %46 = vector.broadcast %cst_46 : f32 to vector<64x64xf32>
    %47 = arith.cmpf ogt, %45, %46 : vector<64x64xf32>
    %cst_47 = arith.constant 2.000000e-01 : f32
    %48 = vector.broadcast %cst_47 : f32 to vector<64x64xf32>
    %49 = arith.mulf %48, %45 : vector<64x64xf32>
    %50 = arith.select %47, %45, %49 : vector<64x64xi1>, vector<64x64xf32>
    %51 = arith.truncf %50 : vector<64x64xf32> to vector<64x64xbf16>
    %c0_48 = arith.constant 0 : index
    %c0_49 = arith.constant 0 : index
    %52 = vector.load %arg6[%c0_48, %c0_49] : memref<64x64xbf16, #tpu.memory_space<vmem>>, vector<64x64xbf16>
    tpu.vector_store %arg6[%c0_48, %c0_49], %51 {strides = array<i32>} : memref<64x64xbf16, #tpu.memory_space<vmem>>, vector<64x64xbf16>,
    return
  }
  func.func @transform_0(%arg0: i32) -> (i32, i32, i32) {
    %c0_i32 = arith.constant 0 : i32
    %c0_i32_0 = arith.constant 0 : i32
    %c0_i32_1 = arith.constant 0 : i32
    return %c0_i32, %arg0, %c0_i32_0 : i32, i32, i32
  }
  func.func @transform_1(%arg0: i32) -> (i32, i32) {
    %c0_i32 = arith.constant 0 : i32
    %c0_i32_0 = arith.constant 0 : i32
    return %arg0, %c0_i32 : i32, i32
  }
  func.func @transform_2(%arg0: i32) -> (i32, i32) {
    %c0_i32 = arith.constant 0 : i32
    %c0_i32_0 = arith.constant 0 : i32
    %c0_i32_1 = arith.constant 0 : i32
    return %c0_i32, %c0_i32_0 : i32, i32
  }
  func.func @transform_3(%arg0: i32) -> (i32, i32) {
    %c0_i32 = arith.constant 0 : i32
    %c0_i32_0 = arith.constant 0 : i32
    %c0_i32_1 = arith.constant 0 : i32
    return %c0_i32, %c0_i32_0 : i32, i32
  }
  func.func @transform_4(%arg0: i32) -> (i32, i32) {
    %c0_i32 = arith.constant 0 : i32
    %c0_i32_0 = arith.constant 0 : i32
    %c0_i32_1 = arith.constant 0 : i32
    return %c0_i32, %c0_i32_0 : i32, i32
  }
  func.func @transform_5(%arg0: i32) -> (i32, i32) {
    %c0_i32 = arith.constant 0 : i32
    %c0_i32_0 = arith.constant 0 : i32
    return %arg0, %c0_i32 : i32, i32
  }
}

module attributes {stable_mosaic.version = 11 : i64} {
  func.func @edgeconv_kernel(%arg0: i32, %arg1: memref<8x64x64xbf16, #tpu.memory_space<vmem>>, %arg2: memref<64x64xbf16, #tpu.memory_space<vmem>>, %arg3: memref<64x64xbf16, #tpu.memory_space<vmem>>, %arg4: memref<64x64xbf16, #tpu.memory_space<vmem>>, %arg5: memref<1x64xf32, #tpu.memory_space<vmem>>, %arg6: memref<64x64xbf16, #tpu.memory_space<vmem>>) attributes {dimension_semantics = [#tpu.dimension_semantics<parallel>], iteration_bounds = array<i64: 1>, scalar_prefetch = 0 : i64, scratch_operands = 0 : i64, tpu.core_type = #tpu.core_type<tc>, window_params = [{transform_indices = @transform_0, window_bounds = array<i64: 8, 64, 64>}, {transform_indices = @transform_1, window_bounds = array<i64: 64, 64>}, {pipeline_mode = #tpu.pipeline_mode<synchronous>, transform_indices = @transform_2, window_bounds = array<i64: 64, 64>}, {pipeline_mode = #tpu.pipeline_mode<synchronous>, transform_indices = @transform_3, window_bounds = array<i64: 64, 64>}, {pipeline_mode = #tpu.pipeline_mode<synchronous>, transform_indices = @transform_4, window_bounds = array<i64: 1, 64>}, {transform_indices = @transform_5, window_bounds = array<i64: 64, 64>}]} {
    %c0 = arith.constant 0 : index
    %c0_0 = arith.constant 0 : index
    %0 = vector.load %arg2[%c0, %c0_0] : memref<64x64xbf16, #tpu.memory_space<vmem>>, vector<64x64xbf16>
    %c0_1 = arith.constant 0 : index
    %c0_2 = arith.constant 0 : index
    %1 = vector.load %arg4[%c0_1, %c0_2] : memref<64x64xbf16, #tpu.memory_space<vmem>>, vector<64x64xbf16>
    %cst = arith.constant dense<0.000000e+00> : vector<64x64xf32>
    %2 = tpu.matmul %0, %1, %cst {dimension_numbers = #tpu.dot_dimension_numbers<[1], [0], [0], [1], [0, 0, 1, 1], [], []>} : vector<64x64xbf16>, vector<64x64xbf16>, vector<64x64xf32> -> vector<64x64xf32>
    %c0_3 = arith.constant 0 : index
    %c0_4 = arith.constant 0 : index
    %c0_5 = arith.constant 0 : index
    %3 = vector.load %arg1[%c0_3, %c0_4, %c0_5] : memref<8x64x64xbf16, #tpu.memory_space<vmem>>, vector<1x64x64xbf16>
    %4 = vector.shape_cast %3 : vector<1x64x64xbf16> to vector<64x64xbf16>
    %c0_6 = arith.constant 0 : index
    %c0_7 = arith.constant 0 : index
    %5 = vector.load %arg3[%c0_6, %c0_7] : memref<64x64xbf16, #tpu.memory_space<vmem>>, vector<64x64xbf16>
    %cst_8 = arith.constant dense<0.000000e+00> : vector<64x64xf32>
    %6 = tpu.matmul %4, %5, %cst_8 {dimension_numbers = #tpu.dot_dimension_numbers<[1], [0], [0], [1], [0, 0, 1, 1], [], []>} : vector<64x64xbf16>, vector<64x64xbf16>, vector<64x64xf32> -> vector<64x64xf32>
    %c1 = arith.constant 1 : index
    %c0_9 = arith.constant 0 : index
    %c0_10 = arith.constant 0 : index
    %7 = vector.load %arg1[%c1, %c0_9, %c0_10] : memref<8x64x64xbf16, #tpu.memory_space<vmem>>, vector<1x64x64xbf16>
    %8 = vector.shape_cast %7 : vector<1x64x64xbf16> to vector<64x64xbf16>
    %c0_11 = arith.constant 0 : index
    %c0_12 = arith.constant 0 : index
    %9 = vector.load %arg3[%c0_11, %c0_12] : memref<64x64xbf16, #tpu.memory_space<vmem>>, vector<64x64xbf16>
    %cst_13 = arith.constant dense<0.000000e+00> : vector<64x64xf32>
    %10 = tpu.matmul %8, %9, %cst_13 {dimension_numbers = #tpu.dot_dimension_numbers<[1], [0], [0], [1], [0, 0, 1, 1], [], []>} : vector<64x64xbf16>, vector<64x64xbf16>, vector<64x64xf32> -> vector<64x64xf32>
    %11 = arith.maximumf %6, %10 : vector<64x64xf32>
    %c2 = arith.constant 2 : index
    %c0_14 = arith.constant 0 : index
    %c0_15 = arith.constant 0 : index
    %12 = vector.load %arg1[%c2, %c0_14, %c0_15] : memref<8x64x64xbf16, #tpu.memory_space<vmem>>, vector<1x64x64xbf16>
    %13 = vector.shape_cast %12 : vector<1x64x64xbf16> to vector<64x64xbf16>
    %c0_16 = arith.constant 0 : index
    %c0_17 = arith.constant 0 : index
    %14 = vector.load %arg3[%c0_16, %c0_17] : memref<64x64xbf16, #tpu.memory_space<vmem>>, vector<64x64xbf16>
    %cst_18 = arith.constant dense<0.000000e+00> : vector<64x64xf32>
    %15 = tpu.matmul %13, %14, %cst_18 {dimension_numbers = #tpu.dot_dimension_numbers<[1], [0], [0], [1], [0, 0, 1, 1], [], []>} : vector<64x64xbf16>, vector<64x64xbf16>, vector<64x64xf32> -> vector<64x64xf32>
    %16 = arith.maximumf %11, %15 : vector<64x64xf32>
    %c3 = arith.constant 3 : index
    %c0_19 = arith.constant 0 : index
    %c0_20 = arith.constant 0 : index
    %17 = vector.load %arg1[%c3, %c0_19, %c0_20] : memref<8x64x64xbf16, #tpu.memory_space<vmem>>, vector<1x64x64xbf16>
    %18 = vector.shape_cast %17 : vector<1x64x64xbf16> to vector<64x64xbf16>
    %c0_21 = arith.constant 0 : index
    %c0_22 = arith.constant 0 : index
    %19 = vector.load %arg3[%c0_21, %c0_22] : memref<64x64xbf16, #tpu.memory_space<vmem>>, vector<64x64xbf16>
    %cst_23 = arith.constant dense<0.000000e+00> : vector<64x64xf32>
    %20 = tpu.matmul %18, %19, %cst_23 {dimension_numbers = #tpu.dot_dimension_numbers<[1], [0], [0], [1], [0, 0, 1, 1], [], []>} : vector<64x64xbf16>, vector<64x64xbf16>, vector<64x64xf32> -> vector<64x64xf32>
    %21 = arith.maximumf %16, %20 : vector<64x64xf32>
    %c4 = arith.constant 4 : index
    %c0_24 = arith.constant 0 : index
    %c0_25 = arith.constant 0 : index
    %22 = vector.load %arg1[%c4, %c0_24, %c0_25] : memref<8x64x64xbf16, #tpu.memory_space<vmem>>, vector<1x64x64xbf16>
    %23 = vector.shape_cast %22 : vector<1x64x64xbf16> to vector<64x64xbf16>
    %c0_26 = arith.constant 0 : index
    %c0_27 = arith.constant 0 : index
    %24 = vector.load %arg3[%c0_26, %c0_27] : memref<64x64xbf16, #tpu.memory_space<vmem>>, vector<64x64xbf16>
    %cst_28 = arith.constant dense<0.000000e+00> : vector<64x64xf32>
    %25 = tpu.matmul %23, %24, %cst_28 {dimension_numbers = #tpu.dot_dimension_numbers<[1], [0], [0], [1], [0, 0, 1, 1], [], []>} : vector<64x64xbf16>, vector<64x64xbf16>, vector<64x64xf32> -> vector<64x64xf32>
    %26 = arith.maximumf %21, %25 : vector<64x64xf32>
    %c5 = arith.constant 5 : index
    %c0_29 = arith.constant 0 : index
    %c0_30 = arith.constant 0 : index
    %27 = vector.load %arg1[%c5, %c0_29, %c0_30] : memref<8x64x64xbf16, #tpu.memory_space<vmem>>, vector<1x64x64xbf16>
    %28 = vector.shape_cast %27 : vector<1x64x64xbf16> to vector<64x64xbf16>
    %c0_31 = arith.constant 0 : index
    %c0_32 = arith.constant 0 : index
    %29 = vector.load %arg3[%c0_31, %c0_32] : memref<64x64xbf16, #tpu.memory_space<vmem>>, vector<64x64xbf16>
    %cst_33 = arith.constant dense<0.000000e+00> : vector<64x64xf32>
    %30 = tpu.matmul %28, %29, %cst_33 {dimension_numbers = #tpu.dot_dimension_numbers<[1], [0], [0], [1], [0, 0, 1, 1], [], []>} : vector<64x64xbf16>, vector<64x64xbf16>, vector<64x64xf32> -> vector<64x64xf32>
    %31 = arith.maximumf %26, %30 : vector<64x64xf32>
    %c6 = arith.constant 6 : index
    %c0_34 = arith.constant 0 : index
    %c0_35 = arith.constant 0 : index
    %32 = vector.load %arg1[%c6, %c0_34, %c0_35] : memref<8x64x64xbf16, #tpu.memory_space<vmem>>, vector<1x64x64xbf16>
    %33 = vector.shape_cast %32 : vector<1x64x64xbf16> to vector<64x64xbf16>
    %c0_36 = arith.constant 0 : index
    %c0_37 = arith.constant 0 : index
    %34 = vector.load %arg3[%c0_36, %c0_37] : memref<64x64xbf16, #tpu.memory_space<vmem>>, vector<64x64xbf16>
    %cst_38 = arith.constant dense<0.000000e+00> : vector<64x64xf32>
    %35 = tpu.matmul %33, %34, %cst_38 {dimension_numbers = #tpu.dot_dimension_numbers<[1], [0], [0], [1], [0, 0, 1, 1], [], []>} : vector<64x64xbf16>, vector<64x64xbf16>, vector<64x64xf32> -> vector<64x64xf32>
    %36 = arith.maximumf %31, %35 : vector<64x64xf32>
    %c7 = arith.constant 7 : index
    %c0_39 = arith.constant 0 : index
    %c0_40 = arith.constant 0 : index
    %37 = vector.load %arg1[%c7, %c0_39, %c0_40] : memref<8x64x64xbf16, #tpu.memory_space<vmem>>, vector<1x64x64xbf16>
    %38 = vector.shape_cast %37 : vector<1x64x64xbf16> to vector<64x64xbf16>
    %c0_41 = arith.constant 0 : index
    %c0_42 = arith.constant 0 : index
    %39 = vector.load %arg3[%c0_41, %c0_42] : memref<64x64xbf16, #tpu.memory_space<vmem>>, vector<64x64xbf16>
    %cst_43 = arith.constant dense<0.000000e+00> : vector<64x64xf32>
    %40 = tpu.matmul %38, %39, %cst_43 {dimension_numbers = #tpu.dot_dimension_numbers<[1], [0], [0], [1], [0, 0, 1, 1], [], []>} : vector<64x64xbf16>, vector<64x64xbf16>, vector<64x64xf32> -> vector<64x64xf32>
    %41 = arith.maximumf %36, %40 : vector<64x64xf32>
    %42 = arith.addf %41, %2 : vector<64x64xf32>
    %c0_44 = arith.constant 0 : index
    %c0_45 = arith.constant 0 : index
    %43 = vector.load %arg5[%c0_44, %c0_45] : memref<1x64xf32, #tpu.memory_space<vmem>>, vector<1x64xf32>
    %44 = vector.broadcast %43 : vector<1x64xf32> to vector<64x64xf32>
    %45 = arith.addf %42, %44 : vector<64x64xf32>
    %cst_46 = arith.constant 0.000000e+00 : f32
    %46 = vector.broadcast %cst_46 : f32 to vector<64x64xf32>
    %47 = arith.cmpf ogt, %45, %46 : vector<64x64xf32>
    %cst_47 = arith.constant 2.000000e-01 : f32
    %48 = vector.broadcast %cst_47 : f32 to vector<64x64xf32>
    %49 = arith.mulf %48, %45 : vector<64x64xf32>
    %50 = arith.select %47, %45, %49 : vector<64x64xi1>, vector<64x64xf32>
    %51 = arith.truncf %50 : vector<64x64xf32> to vector<64x64xbf16>
    %c0_48 = arith.constant 0 : index
    %c0_49 = arith.constant 0 : index
    %52 = vector.load %arg6[%c0_48, %c0_49] : memref<64x64xbf16, #tpu.memory_space<vmem>>, vector<64x64xbf16>
    tpu.vector_store %arg6[%c0_48, %c0_49], %51 {strides = array<i32>} : memref<64x64xbf16, #tpu.memory_space<vmem>>, vector<64x64xbf16>,
    return
  }
  func.func @transform_0(%arg0: i32) -> (i32, i32, i32) {
    %c0_i32 = arith.constant 0 : i32
    %c0_i32_0 = arith.constant 0 : i32
    %c0_i32_1 = arith.constant 0 : i32
    return %c0_i32, %arg0, %c0_i32_0 : i32, i32, i32
  }
  func.func @transform_1(%arg0: i32) -> (i32, i32) {
    %c0_i32 = arith.constant 0 : i32
    %c0_i32_0 = arith.constant 0 : i32
    return %arg0, %c0_i32 : i32, i32
  }
  func.func @transform_2(%arg0: i32) -> (i32, i32) {
    %c0_i32 = arith.constant 0 : i32
    %c0_i32_0 = arith.constant 0 : i32
    %c0_i32_1 = arith.constant 0 : i32
    return %c0_i32, %c0_i32_0 : i32, i32
  }
  func.func @transform_3(%arg0: i32) -> (i32, i32) {
    %c0_i32 = arith.constant 0 : i32
    %c0_i32_0 = arith.constant 0 : i32
    %c0_i32_1 = arith.constant 0 : i32
    return %c0_i32, %c0_i32_0 : i32, i32
  }
  func.func @transform_4(%arg0: i32) -> (i32, i32) {
    %c0_i32 = arith.constant 0 : i32
    %c0_i32_0 = arith.constant 0 : i32
    %c0_i32_1 = arith.constant 0 : i32
    return %c0_i32, %c0_i32_0 : i32, i32
  }
  func.func @transform_5(%arg0: i32) -> (i32, i32) {
    %c0_i32 = arith.constant 0 : i32
    %c0_i32_0 = arith.constant 0 : i32
    return %arg0, %c0_i32 : i32, i32
  }
}

module attributes {stable_mosaic.version = 11 : i64} {
  func.func @edgeconv_kernel(%arg0: i32, %arg1: memref<8x64x64xbf16, #tpu.memory_space<vmem>>, %arg2: memref<64x64xbf16, #tpu.memory_space<vmem>>, %arg3: memref<64x128xbf16, #tpu.memory_space<vmem>>, %arg4: memref<64x128xbf16, #tpu.memory_space<vmem>>, %arg5: memref<1x128xf32, #tpu.memory_space<vmem>>, %arg6: memref<64x128xbf16, #tpu.memory_space<vmem>>) attributes {dimension_semantics = [#tpu.dimension_semantics<parallel>], iteration_bounds = array<i64: 1>, scalar_prefetch = 0 : i64, scratch_operands = 0 : i64, tpu.core_type = #tpu.core_type<tc>, window_params = [{transform_indices = @transform_0, window_bounds = array<i64: 8, 64, 64>}, {transform_indices = @transform_1, window_bounds = array<i64: 64, 64>}, {pipeline_mode = #tpu.pipeline_mode<synchronous>, transform_indices = @transform_2, window_bounds = array<i64: 64, 128>}, {pipeline_mode = #tpu.pipeline_mode<synchronous>, transform_indices = @transform_3, window_bounds = array<i64: 64, 128>}, {pipeline_mode = #tpu.pipeline_mode<synchronous>, transform_indices = @transform_4, window_bounds = array<i64: 1, 128>}, {transform_indices = @transform_5, window_bounds = array<i64: 64, 128>}]} {
    %c0 = arith.constant 0 : index
    %c0_0 = arith.constant 0 : index
    %0 = vector.load %arg2[%c0, %c0_0] : memref<64x64xbf16, #tpu.memory_space<vmem>>, vector<64x64xbf16>
    %c0_1 = arith.constant 0 : index
    %c0_2 = arith.constant 0 : index
    %1 = vector.load %arg4[%c0_1, %c0_2] : memref<64x128xbf16, #tpu.memory_space<vmem>>, vector<64x128xbf16>
    %cst = arith.constant dense<0.000000e+00> : vector<64x128xf32>
    %2 = tpu.matmul %0, %1, %cst {dimension_numbers = #tpu.dot_dimension_numbers<[1], [0], [0], [1], [0, 0, 1, 1], [], []>} : vector<64x64xbf16>, vector<64x128xbf16>, vector<64x128xf32> -> vector<64x128xf32>
    %c0_3 = arith.constant 0 : index
    %c0_4 = arith.constant 0 : index
    %c0_5 = arith.constant 0 : index
    %3 = vector.load %arg1[%c0_3, %c0_4, %c0_5] : memref<8x64x64xbf16, #tpu.memory_space<vmem>>, vector<1x64x64xbf16>
    %4 = vector.shape_cast %3 : vector<1x64x64xbf16> to vector<64x64xbf16>
    %c0_6 = arith.constant 0 : index
    %c0_7 = arith.constant 0 : index
    %5 = vector.load %arg3[%c0_6, %c0_7] : memref<64x128xbf16, #tpu.memory_space<vmem>>, vector<64x128xbf16>
    %cst_8 = arith.constant dense<0.000000e+00> : vector<64x128xf32>
    %6 = tpu.matmul %4, %5, %cst_8 {dimension_numbers = #tpu.dot_dimension_numbers<[1], [0], [0], [1], [0, 0, 1, 1], [], []>} : vector<64x64xbf16>, vector<64x128xbf16>, vector<64x128xf32> -> vector<64x128xf32>
    %c1 = arith.constant 1 : index
    %c0_9 = arith.constant 0 : index
    %c0_10 = arith.constant 0 : index
    %7 = vector.load %arg1[%c1, %c0_9, %c0_10] : memref<8x64x64xbf16, #tpu.memory_space<vmem>>, vector<1x64x64xbf16>
    %8 = vector.shape_cast %7 : vector<1x64x64xbf16> to vector<64x64xbf16>
    %c0_11 = arith.constant 0 : index
    %c0_12 = arith.constant 0 : index
    %9 = vector.load %arg3[%c0_11, %c0_12] : memref<64x128xbf16, #tpu.memory_space<vmem>>, vector<64x128xbf16>
    %cst_13 = arith.constant dense<0.000000e+00> : vector<64x128xf32>
    %10 = tpu.matmul %8, %9, %cst_13 {dimension_numbers = #tpu.dot_dimension_numbers<[1], [0], [0], [1], [0, 0, 1, 1], [], []>} : vector<64x64xbf16>, vector<64x128xbf16>, vector<64x128xf32> -> vector<64x128xf32>
    %11 = arith.maximumf %6, %10 : vector<64x128xf32>
    %c2 = arith.constant 2 : index
    %c0_14 = arith.constant 0 : index
    %c0_15 = arith.constant 0 : index
    %12 = vector.load %arg1[%c2, %c0_14, %c0_15] : memref<8x64x64xbf16, #tpu.memory_space<vmem>>, vector<1x64x64xbf16>
    %13 = vector.shape_cast %12 : vector<1x64x64xbf16> to vector<64x64xbf16>
    %c0_16 = arith.constant 0 : index
    %c0_17 = arith.constant 0 : index
    %14 = vector.load %arg3[%c0_16, %c0_17] : memref<64x128xbf16, #tpu.memory_space<vmem>>, vector<64x128xbf16>
    %cst_18 = arith.constant dense<0.000000e+00> : vector<64x128xf32>
    %15 = tpu.matmul %13, %14, %cst_18 {dimension_numbers = #tpu.dot_dimension_numbers<[1], [0], [0], [1], [0, 0, 1, 1], [], []>} : vector<64x64xbf16>, vector<64x128xbf16>, vector<64x128xf32> -> vector<64x128xf32>
    %16 = arith.maximumf %11, %15 : vector<64x128xf32>
    %c3 = arith.constant 3 : index
    %c0_19 = arith.constant 0 : index
    %c0_20 = arith.constant 0 : index
    %17 = vector.load %arg1[%c3, %c0_19, %c0_20] : memref<8x64x64xbf16, #tpu.memory_space<vmem>>, vector<1x64x64xbf16>
    %18 = vector.shape_cast %17 : vector<1x64x64xbf16> to vector<64x64xbf16>
    %c0_21 = arith.constant 0 : index
    %c0_22 = arith.constant 0 : index
    %19 = vector.load %arg3[%c0_21, %c0_22] : memref<64x128xbf16, #tpu.memory_space<vmem>>, vector<64x128xbf16>
    %cst_23 = arith.constant dense<0.000000e+00> : vector<64x128xf32>
    %20 = tpu.matmul %18, %19, %cst_23 {dimension_numbers = #tpu.dot_dimension_numbers<[1], [0], [0], [1], [0, 0, 1, 1], [], []>} : vector<64x64xbf16>, vector<64x128xbf16>, vector<64x128xf32> -> vector<64x128xf32>
    %21 = arith.maximumf %16, %20 : vector<64x128xf32>
    %c4 = arith.constant 4 : index
    %c0_24 = arith.constant 0 : index
    %c0_25 = arith.constant 0 : index
    %22 = vector.load %arg1[%c4, %c0_24, %c0_25] : memref<8x64x64xbf16, #tpu.memory_space<vmem>>, vector<1x64x64xbf16>
    %23 = vector.shape_cast %22 : vector<1x64x64xbf16> to vector<64x64xbf16>
    %c0_26 = arith.constant 0 : index
    %c0_27 = arith.constant 0 : index
    %24 = vector.load %arg3[%c0_26, %c0_27] : memref<64x128xbf16, #tpu.memory_space<vmem>>, vector<64x128xbf16>
    %cst_28 = arith.constant dense<0.000000e+00> : vector<64x128xf32>
    %25 = tpu.matmul %23, %24, %cst_28 {dimension_numbers = #tpu.dot_dimension_numbers<[1], [0], [0], [1], [0, 0, 1, 1], [], []>} : vector<64x64xbf16>, vector<64x128xbf16>, vector<64x128xf32> -> vector<64x128xf32>
    %26 = arith.maximumf %21, %25 : vector<64x128xf32>
    %c5 = arith.constant 5 : index
    %c0_29 = arith.constant 0 : index
    %c0_30 = arith.constant 0 : index
    %27 = vector.load %arg1[%c5, %c0_29, %c0_30] : memref<8x64x64xbf16, #tpu.memory_space<vmem>>, vector<1x64x64xbf16>
    %28 = vector.shape_cast %27 : vector<1x64x64xbf16> to vector<64x64xbf16>
    %c0_31 = arith.constant 0 : index
    %c0_32 = arith.constant 0 : index
    %29 = vector.load %arg3[%c0_31, %c0_32] : memref<64x128xbf16, #tpu.memory_space<vmem>>, vector<64x128xbf16>
    %cst_33 = arith.constant dense<0.000000e+00> : vector<64x128xf32>
    %30 = tpu.matmul %28, %29, %cst_33 {dimension_numbers = #tpu.dot_dimension_numbers<[1], [0], [0], [1], [0, 0, 1, 1], [], []>} : vector<64x64xbf16>, vector<64x128xbf16>, vector<64x128xf32> -> vector<64x128xf32>
    %31 = arith.maximumf %26, %30 : vector<64x128xf32>
    %c6 = arith.constant 6 : index
    %c0_34 = arith.constant 0 : index
    %c0_35 = arith.constant 0 : index
    %32 = vector.load %arg1[%c6, %c0_34, %c0_35] : memref<8x64x64xbf16, #tpu.memory_space<vmem>>, vector<1x64x64xbf16>
    %33 = vector.shape_cast %32 : vector<1x64x64xbf16> to vector<64x64xbf16>
    %c0_36 = arith.constant 0 : index
    %c0_37 = arith.constant 0 : index
    %34 = vector.load %arg3[%c0_36, %c0_37] : memref<64x128xbf16, #tpu.memory_space<vmem>>, vector<64x128xbf16>
    %cst_38 = arith.constant dense<0.000000e+00> : vector<64x128xf32>
    %35 = tpu.matmul %33, %34, %cst_38 {dimension_numbers = #tpu.dot_dimension_numbers<[1], [0], [0], [1], [0, 0, 1, 1], [], []>} : vector<64x64xbf16>, vector<64x128xbf16>, vector<64x128xf32> -> vector<64x128xf32>
    %36 = arith.maximumf %31, %35 : vector<64x128xf32>
    %c7 = arith.constant 7 : index
    %c0_39 = arith.constant 0 : index
    %c0_40 = arith.constant 0 : index
    %37 = vector.load %arg1[%c7, %c0_39, %c0_40] : memref<8x64x64xbf16, #tpu.memory_space<vmem>>, vector<1x64x64xbf16>
    %38 = vector.shape_cast %37 : vector<1x64x64xbf16> to vector<64x64xbf16>
    %c0_41 = arith.constant 0 : index
    %c0_42 = arith.constant 0 : index
    %39 = vector.load %arg3[%c0_41, %c0_42] : memref<64x128xbf16, #tpu.memory_space<vmem>>, vector<64x128xbf16>
    %cst_43 = arith.constant dense<0.000000e+00> : vector<64x128xf32>
    %40 = tpu.matmul %38, %39, %cst_43 {dimension_numbers = #tpu.dot_dimension_numbers<[1], [0], [0], [1], [0, 0, 1, 1], [], []>} : vector<64x64xbf16>, vector<64x128xbf16>, vector<64x128xf32> -> vector<64x128xf32>
    %41 = arith.maximumf %36, %40 : vector<64x128xf32>
    %42 = arith.addf %41, %2 : vector<64x128xf32>
    %c0_44 = arith.constant 0 : index
    %c0_45 = arith.constant 0 : index
    %43 = vector.load %arg5[%c0_44, %c0_45] : memref<1x128xf32, #tpu.memory_space<vmem>>, vector<1x128xf32>
    %44 = vector.broadcast %43 : vector<1x128xf32> to vector<64x128xf32>
    %45 = arith.addf %42, %44 : vector<64x128xf32>
    %cst_46 = arith.constant 0.000000e+00 : f32
    %46 = vector.broadcast %cst_46 : f32 to vector<64x128xf32>
    %47 = arith.cmpf ogt, %45, %46 : vector<64x128xf32>
    %cst_47 = arith.constant 2.000000e-01 : f32
    %48 = vector.broadcast %cst_47 : f32 to vector<64x128xf32>
    %49 = arith.mulf %48, %45 : vector<64x128xf32>
    %50 = arith.select %47, %45, %49 : vector<64x128xi1>, vector<64x128xf32>
    %51 = arith.truncf %50 : vector<64x128xf32> to vector<64x128xbf16>
    %c0_48 = arith.constant 0 : index
    %c0_49 = arith.constant 0 : index
    %52 = vector.load %arg6[%c0_48, %c0_49] : memref<64x128xbf16, #tpu.memory_space<vmem>>, vector<64x128xbf16>
    tpu.vector_store %arg6[%c0_48, %c0_49], %51 {strides = array<i32>} : memref<64x128xbf16, #tpu.memory_space<vmem>>, vector<64x128xbf16>,
    return
  }
  func.func @transform_0(%arg0: i32) -> (i32, i32, i32) {
    %c0_i32 = arith.constant 0 : i32
    %c0_i32_0 = arith.constant 0 : i32
    %c0_i32_1 = arith.constant 0 : i32
    return %c0_i32, %arg0, %c0_i32_0 : i32, i32, i32
  }
  func.func @transform_1(%arg0: i32) -> (i32, i32) {
    %c0_i32 = arith.constant 0 : i32
    %c0_i32_0 = arith.constant 0 : i32
    return %arg0, %c0_i32 : i32, i32
  }
  func.func @transform_2(%arg0: i32) -> (i32, i32) {
    %c0_i32 = arith.constant 0 : i32
    %c0_i32_0 = arith.constant 0 : i32
    %c0_i32_1 = arith.constant 0 : i32
    return %c0_i32, %c0_i32_0 : i32, i32
  }
  func.func @transform_3(%arg0: i32) -> (i32, i32) {
    %c0_i32 = arith.constant 0 : i32
    %c0_i32_0 = arith.constant 0 : i32
    %c0_i32_1 = arith.constant 0 : i32
    return %c0_i32, %c0_i32_0 : i32, i32
  }
  func.func @transform_4(%arg0: i32) -> (i32, i32) {
    %c0_i32 = arith.constant 0 : i32
    %c0_i32_0 = arith.constant 0 : i32
    %c0_i32_1 = arith.constant 0 : i32
    return %c0_i32, %c0_i32_0 : i32, i32
  }
  func.func @transform_5(%arg0: i32) -> (i32, i32) {
    %c0_i32 = arith.constant 0 : i32
    %c0_i32_0 = arith.constant 0 : i32
    return %arg0, %c0_i32 : i32, i32
  }
}

module attributes {stable_mosaic.version = 11 : i64} {
  func.func @edgeconv_kernel(%arg0: i32, %arg1: memref<8x64x128xbf16, #tpu.memory_space<vmem>>, %arg2: memref<64x128xbf16, #tpu.memory_space<vmem>>, %arg3: memref<128x256xbf16, #tpu.memory_space<vmem>>, %arg4: memref<128x256xbf16, #tpu.memory_space<vmem>>, %arg5: memref<1x256xf32, #tpu.memory_space<vmem>>, %arg6: memref<64x256xbf16, #tpu.memory_space<vmem>>) attributes {dimension_semantics = [#tpu.dimension_semantics<parallel>], iteration_bounds = array<i64: 1>, scalar_prefetch = 0 : i64, scratch_operands = 0 : i64, tpu.core_type = #tpu.core_type<tc>, window_params = [{transform_indices = @transform_0, window_bounds = array<i64: 8, 64, 128>}, {transform_indices = @transform_1, window_bounds = array<i64: 64, 128>}, {pipeline_mode = #tpu.pipeline_mode<synchronous>, transform_indices = @transform_2, window_bounds = array<i64: 128, 256>}, {pipeline_mode = #tpu.pipeline_mode<synchronous>, transform_indices = @transform_3, window_bounds = array<i64: 128, 256>}, {pipeline_mode = #tpu.pipeline_mode<synchronous>, transform_indices = @transform_4, window_bounds = array<i64: 1, 256>}, {transform_indices = @transform_5, window_bounds = array<i64: 64, 256>}]} {
    %c0 = arith.constant 0 : index
    %c0_0 = arith.constant 0 : index
    %0 = vector.load %arg2[%c0, %c0_0] : memref<64x128xbf16, #tpu.memory_space<vmem>>, vector<64x128xbf16>
    %c0_1 = arith.constant 0 : index
    %c0_2 = arith.constant 0 : index
    %1 = vector.load %arg4[%c0_1, %c0_2] : memref<128x256xbf16, #tpu.memory_space<vmem>>, vector<128x256xbf16>
    %cst = arith.constant dense<0.000000e+00> : vector<64x256xf32>
    %2 = tpu.matmul %0, %1, %cst {dimension_numbers = #tpu.dot_dimension_numbers<[1], [0], [0], [1], [0, 0, 1, 1], [], []>} : vector<64x128xbf16>, vector<128x256xbf16>, vector<64x256xf32> -> vector<64x256xf32>
    %c0_3 = arith.constant 0 : index
    %c0_4 = arith.constant 0 : index
    %c0_5 = arith.constant 0 : index
    %3 = vector.load %arg1[%c0_3, %c0_4, %c0_5] : memref<8x64x128xbf16, #tpu.memory_space<vmem>>, vector<1x64x128xbf16>
    %4 = vector.shape_cast %3 : vector<1x64x128xbf16> to vector<64x128xbf16>
    %c0_6 = arith.constant 0 : index
    %c0_7 = arith.constant 0 : index
    %5 = vector.load %arg3[%c0_6, %c0_7] : memref<128x256xbf16, #tpu.memory_space<vmem>>, vector<128x256xbf16>
    %cst_8 = arith.constant dense<0.000000e+00> : vector<64x256xf32>
    %6 = tpu.matmul %4, %5, %cst_8 {dimension_numbers = #tpu.dot_dimension_numbers<[1], [0], [0], [1], [0, 0, 1, 1], [], []>} : vector<64x128xbf16>, vector<128x256xbf16>, vector<64x256xf32> -> vector<64x256xf32>
    %c1 = arith.constant 1 : index
    %c0_9 = arith.constant 0 : index
    %c0_10 = arith.constant 0 : index
    %7 = vector.load %arg1[%c1, %c0_9, %c0_10] : memref<8x64x128xbf16, #tpu.memory_space<vmem>>, vector<1x64x128xbf16>
    %8 = vector.shape_cast %7 : vector<1x64x128xbf16> to vector<64x128xbf16>
    %c0_11 = arith.constant 0 : index
    %c0_12 = arith.constant 0 : index
    %9 = vector.load %arg3[%c0_11, %c0_12] : memref<128x256xbf16, #tpu.memory_space<vmem>>, vector<128x256xbf16>
    %cst_13 = arith.constant dense<0.000000e+00> : vector<64x256xf32>
    %10 = tpu.matmul %8, %9, %cst_13 {dimension_numbers = #tpu.dot_dimension_numbers<[1], [0], [0], [1], [0, 0, 1, 1], [], []>} : vector<64x128xbf16>, vector<128x256xbf16>, vector<64x256xf32> -> vector<64x256xf32>
    %11 = arith.maximumf %6, %10 : vector<64x256xf32>
    %c2 = arith.constant 2 : index
    %c0_14 = arith.constant 0 : index
    %c0_15 = arith.constant 0 : index
    %12 = vector.load %arg1[%c2, %c0_14, %c0_15] : memref<8x64x128xbf16, #tpu.memory_space<vmem>>, vector<1x64x128xbf16>
    %13 = vector.shape_cast %12 : vector<1x64x128xbf16> to vector<64x128xbf16>
    %c0_16 = arith.constant 0 : index
    %c0_17 = arith.constant 0 : index
    %14 = vector.load %arg3[%c0_16, %c0_17] : memref<128x256xbf16, #tpu.memory_space<vmem>>, vector<128x256xbf16>
    %cst_18 = arith.constant dense<0.000000e+00> : vector<64x256xf32>
    %15 = tpu.matmul %13, %14, %cst_18 {dimension_numbers = #tpu.dot_dimension_numbers<[1], [0], [0], [1], [0, 0, 1, 1], [], []>} : vector<64x128xbf16>, vector<128x256xbf16>, vector<64x256xf32> -> vector<64x256xf32>
    %16 = arith.maximumf %11, %15 : vector<64x256xf32>
    %c3 = arith.constant 3 : index
    %c0_19 = arith.constant 0 : index
    %c0_20 = arith.constant 0 : index
    %17 = vector.load %arg1[%c3, %c0_19, %c0_20] : memref<8x64x128xbf16, #tpu.memory_space<vmem>>, vector<1x64x128xbf16>
    %18 = vector.shape_cast %17 : vector<1x64x128xbf16> to vector<64x128xbf16>
    %c0_21 = arith.constant 0 : index
    %c0_22 = arith.constant 0 : index
    %19 = vector.load %arg3[%c0_21, %c0_22] : memref<128x256xbf16, #tpu.memory_space<vmem>>, vector<128x256xbf16>
    %cst_23 = arith.constant dense<0.000000e+00> : vector<64x256xf32>
    %20 = tpu.matmul %18, %19, %cst_23 {dimension_numbers = #tpu.dot_dimension_numbers<[1], [0], [0], [1], [0, 0, 1, 1], [], []>} : vector<64x128xbf16>, vector<128x256xbf16>, vector<64x256xf32> -> vector<64x256xf32>
    %21 = arith.maximumf %16, %20 : vector<64x256xf32>
    %c4 = arith.constant 4 : index
    %c0_24 = arith.constant 0 : index
    %c0_25 = arith.constant 0 : index
    %22 = vector.load %arg1[%c4, %c0_24, %c0_25] : memref<8x64x128xbf16, #tpu.memory_space<vmem>>, vector<1x64x128xbf16>
    %23 = vector.shape_cast %22 : vector<1x64x128xbf16> to vector<64x128xbf16>
    %c0_26 = arith.constant 0 : index
    %c0_27 = arith.constant 0 : index
    %24 = vector.load %arg3[%c0_26, %c0_27] : memref<128x256xbf16, #tpu.memory_space<vmem>>, vector<128x256xbf16>
    %cst_28 = arith.constant dense<0.000000e+00> : vector<64x256xf32>
    %25 = tpu.matmul %23, %24, %cst_28 {dimension_numbers = #tpu.dot_dimension_numbers<[1], [0], [0], [1], [0, 0, 1, 1], [], []>} : vector<64x128xbf16>, vector<128x256xbf16>, vector<64x256xf32> -> vector<64x256xf32>
    %26 = arith.maximumf %21, %25 : vector<64x256xf32>
    %c5 = arith.constant 5 : index
    %c0_29 = arith.constant 0 : index
    %c0_30 = arith.constant 0 : index
    %27 = vector.load %arg1[%c5, %c0_29, %c0_30] : memref<8x64x128xbf16, #tpu.memory_space<vmem>>, vector<1x64x128xbf16>
    %28 = vector.shape_cast %27 : vector<1x64x128xbf16> to vector<64x128xbf16>
    %c0_31 = arith.constant 0 : index
    %c0_32 = arith.constant 0 : index
    %29 = vector.load %arg3[%c0_31, %c0_32] : memref<128x256xbf16, #tpu.memory_space<vmem>>, vector<128x256xbf16>
    %cst_33 = arith.constant dense<0.000000e+00> : vector<64x256xf32>
    %30 = tpu.matmul %28, %29, %cst_33 {dimension_numbers = #tpu.dot_dimension_numbers<[1], [0], [0], [1], [0, 0, 1, 1], [], []>} : vector<64x128xbf16>, vector<128x256xbf16>, vector<64x256xf32> -> vector<64x256xf32>
    %31 = arith.maximumf %26, %30 : vector<64x256xf32>
    %c6 = arith.constant 6 : index
    %c0_34 = arith.constant 0 : index
    %c0_35 = arith.constant 0 : index
    %32 = vector.load %arg1[%c6, %c0_34, %c0_35] : memref<8x64x128xbf16, #tpu.memory_space<vmem>>, vector<1x64x128xbf16>
    %33 = vector.shape_cast %32 : vector<1x64x128xbf16> to vector<64x128xbf16>
    %c0_36 = arith.constant 0 : index
    %c0_37 = arith.constant 0 : index
    %34 = vector.load %arg3[%c0_36, %c0_37] : memref<128x256xbf16, #tpu.memory_space<vmem>>, vector<128x256xbf16>
    %cst_38 = arith.constant dense<0.000000e+00> : vector<64x256xf32>
    %35 = tpu.matmul %33, %34, %cst_38 {dimension_numbers = #tpu.dot_dimension_numbers<[1], [0], [0], [1], [0, 0, 1, 1], [], []>} : vector<64x128xbf16>, vector<128x256xbf16>, vector<64x256xf32> -> vector<64x256xf32>
    %36 = arith.maximumf %31, %35 : vector<64x256xf32>
    %c7 = arith.constant 7 : index
    %c0_39 = arith.constant 0 : index
    %c0_40 = arith.constant 0 : index
    %37 = vector.load %arg1[%c7, %c0_39, %c0_40] : memref<8x64x128xbf16, #tpu.memory_space<vmem>>, vector<1x64x128xbf16>
    %38 = vector.shape_cast %37 : vector<1x64x128xbf16> to vector<64x128xbf16>
    %c0_41 = arith.constant 0 : index
    %c0_42 = arith.constant 0 : index
    %39 = vector.load %arg3[%c0_41, %c0_42] : memref<128x256xbf16, #tpu.memory_space<vmem>>, vector<128x256xbf16>
    %cst_43 = arith.constant dense<0.000000e+00> : vector<64x256xf32>
    %40 = tpu.matmul %38, %39, %cst_43 {dimension_numbers = #tpu.dot_dimension_numbers<[1], [0], [0], [1], [0, 0, 1, 1], [], []>} : vector<64x128xbf16>, vector<128x256xbf16>, vector<64x256xf32> -> vector<64x256xf32>
    %41 = arith.maximumf %36, %40 : vector<64x256xf32>
    %42 = arith.addf %41, %2 : vector<64x256xf32>
    %c0_44 = arith.constant 0 : index
    %c0_45 = arith.constant 0 : index
    %43 = vector.load %arg5[%c0_44, %c0_45] : memref<1x256xf32, #tpu.memory_space<vmem>>, vector<1x256xf32>
    %44 = vector.broadcast %43 : vector<1x256xf32> to vector<64x256xf32>
    %45 = arith.addf %42, %44 : vector<64x256xf32>
    %cst_46 = arith.constant 0.000000e+00 : f32
    %46 = vector.broadcast %cst_46 : f32 to vector<64x256xf32>
    %47 = arith.cmpf ogt, %45, %46 : vector<64x256xf32>
    %cst_47 = arith.constant 2.000000e-01 : f32
    %48 = vector.broadcast %cst_47 : f32 to vector<64x256xf32>
    %49 = arith.mulf %48, %45 : vector<64x256xf32>
    %50 = arith.select %47, %45, %49 : vector<64x256xi1>, vector<64x256xf32>
    %51 = arith.truncf %50 : vector<64x256xf32> to vector<64x256xbf16>
    %c0_48 = arith.constant 0 : index
    %c0_49 = arith.constant 0 : index
    %52 = vector.load %arg6[%c0_48, %c0_49] : memref<64x256xbf16, #tpu.memory_space<vmem>>, vector<64x256xbf16>
    tpu.vector_store %arg6[%c0_48, %c0_49], %51 {strides = array<i32>} : memref<64x256xbf16, #tpu.memory_space<vmem>>, vector<64x256xbf16>,
    return
  }
  func.func @transform_0(%arg0: i32) -> (i32, i32, i32) {
    %c0_i32 = arith.constant 0 : i32
    %c0_i32_0 = arith.constant 0 : i32
    %c0_i32_1 = arith.constant 0 : i32
    return %c0_i32, %arg0, %c0_i32_0 : i32, i32, i32
  }
  func.func @transform_1(%arg0: i32) -> (i32, i32) {
    %c0_i32 = arith.constant 0 : i32
    %c0_i32_0 = arith.constant 0 : i32
    return %arg0, %c0_i32 : i32, i32
  }
  func.func @transform_2(%arg0: i32) -> (i32, i32) {
    %c0_i32 = arith.constant 0 : i32
    %c0_i32_0 = arith.constant 0 : i32
    %c0_i32_1 = arith.constant 0 : i32
    return %c0_i32, %c0_i32_0 : i32, i32
  }
  func.func @transform_3(%arg0: i32) -> (i32, i32) {
    %c0_i32 = arith.constant 0 : i32
    %c0_i32_0 = arith.constant 0 : i32
    %c0_i32_1 = arith.constant 0 : i32
    return %c0_i32, %c0_i32_0 : i32, i32
  }
  func.func @transform_4(%arg0: i32) -> (i32, i32) {
    %c0_i32 = arith.constant 0 : i32
    %c0_i32_0 = arith.constant 0 : i32
    %c0_i32_1 = arith.constant 0 : i32
    return %c0_i32, %c0_i32_0 : i32, i32
  }
  func.func @transform_5(%arg0: i32) -> (i32, i32) {
    %c0_i32 = arith.constant 0 : i32
    %c0_i32_0 = arith.constant 0 : i32
    return %arg0, %c0_i32 : i32, i32
  }
}

module attributes {stable_mosaic.version = 11 : i64} {
  func.func @conv5_pool_kernel(%arg0: i32, %arg1: i32, %arg2: memref<1x32x64xbf16, #tpu.memory_space<vmem>>, %arg3: memref<1x32x64xbf16, #tpu.memory_space<vmem>>, %arg4: memref<1x32x128xbf16, #tpu.memory_space<vmem>>, %arg5: memref<1x32x256xbf16, #tpu.memory_space<vmem>>, %arg6: memref<64x64xbf16, #tpu.memory_space<vmem>>, %arg7: memref<64x64xbf16, #tpu.memory_space<vmem>>, %arg8: memref<128x64xbf16, #tpu.memory_space<vmem>>, %arg9: memref<256x64xbf16, #tpu.memory_space<vmem>>, %arg10: memref<1x64xf32, #tpu.memory_space<vmem>>, %arg11: memref<1x1x64xf32, #tpu.memory_space<vmem>>, %arg12: memref<1x1x64xf32, #tpu.memory_space<vmem>>) attributes {dimension_semantics = [#tpu.dimension_semantics<parallel>, #tpu.dimension_semantics<arbitrary>], iteration_bounds = array<i64: 2, 1>, scalar_prefetch = 0 : i64, scratch_operands = 0 : i64, tpu.core_type = #tpu.core_type<tc>, window_params = [{transform_indices = @transform_0, window_bounds = array<i64: 1, 32, 64>}, {transform_indices = @transform_1, window_bounds = array<i64: 1, 32, 64>}, {transform_indices = @transform_2, window_bounds = array<i64: 1, 32, 128>}, {transform_indices = @transform_3, window_bounds = array<i64: 1, 32, 256>}, {pipeline_mode = #tpu.pipeline_mode<synchronous>, transform_indices = @transform_4, window_bounds = array<i64: 64, 64>}, {pipeline_mode = #tpu.pipeline_mode<synchronous>, transform_indices = @transform_5, window_bounds = array<i64: 64, 64>}, {pipeline_mode = #tpu.pipeline_mode<synchronous>, transform_indices = @transform_6, window_bounds = array<i64: 128, 64>}, {pipeline_mode = #tpu.pipeline_mode<synchronous>, transform_indices = @transform_7, window_bounds = array<i64: 256, 64>}, {pipeline_mode = #tpu.pipeline_mode<synchronous>, transform_indices = @transform_8, window_bounds = array<i64: 1, 64>}, {transform_indices = @transform_9, window_bounds = array<i64: 1, 1, 64>}, {transform_indices = @transform_10, window_bounds = array<i64: 1, 1, 64>}]} {
    %c0 = arith.constant 0 : index
    %c0_0 = arith.constant 0 : index
    %c0_1 = arith.constant 0 : index
    %0 = vector.load %arg2[%c0, %c0_0, %c0_1] : memref<1x32x64xbf16, #tpu.memory_space<vmem>>, vector<1x32x64xbf16>
    %1 = vector.shape_cast %0 : vector<1x32x64xbf16> to vector<32x64xbf16>
    %c0_2 = arith.constant 0 : index
    %c0_3 = arith.constant 0 : index
    %2 = vector.load %arg6[%c0_2, %c0_3] : memref<64x64xbf16, #tpu.memory_space<vmem>>, vector<64x64xbf16>
    %cst = arith.constant dense<0.000000e+00> : vector<32x64xf32>
    %3 = tpu.matmul %1, %2, %cst {dimension_numbers = #tpu.dot_dimension_numbers<[1], [0], [0], [1], [0, 0, 1, 1], [], []>} : vector<32x64xbf16>, vector<64x64xbf16>, vector<32x64xf32> -> vector<32x64xf32>
    %c0_4 = arith.constant 0 : index
    %c0_5 = arith.constant 0 : index
    %c0_6 = arith.constant 0 : index
    %4 = vector.load %arg3[%c0_4, %c0_5, %c0_6] : memref<1x32x64xbf16, #tpu.memory_space<vmem>>, vector<1x32x64xbf16>
    %5 = vector.shape_cast %4 : vector<1x32x64xbf16> to vector<32x64xbf16>
    %c0_7 = arith.constant 0 : index
    %c0_8 = arith.constant 0 : index
    %6 = vector.load %arg7[%c0_7, %c0_8] : memref<64x64xbf16, #tpu.memory_space<vmem>>, vector<64x64xbf16>
    %cst_9 = arith.constant dense<0.000000e+00> : vector<32x64xf32>
    %7 = tpu.matmul %5, %6, %cst_9 {dimension_numbers = #tpu.dot_dimension_numbers<[1], [0], [0], [1], [0, 0, 1, 1], [], []>} : vector<32x64xbf16>, vector<64x64xbf16>, vector<32x64xf32> -> vector<32x64xf32>
    %8 = arith.addf %3, %7 : vector<32x64xf32>
    %c0_10 = arith.constant 0 : index
    %c0_11 = arith.constant 0 : index
    %c0_12 = arith.constant 0 : index
    %9 = vector.load %arg4[%c0_10, %c0_11, %c0_12] : memref<1x32x128xbf16, #tpu.memory_space<vmem>>, vector<1x32x128xbf16>
    %10 = vector.shape_cast %9 : vector<1x32x128xbf16> to vector<32x128xbf16>
    %c0_13 = arith.constant 0 : index
    %c0_14 = arith.constant 0 : index
    %11 = vector.load %arg8[%c0_13, %c0_14] : memref<128x64xbf16, #tpu.memory_space<vmem>>, vector<128x64xbf16>
    %cst_15 = arith.constant dense<0.000000e+00> : vector<32x64xf32>
    %12 = tpu.matmul %10, %11, %cst_15 {dimension_numbers = #tpu.dot_dimension_numbers<[1], [0], [0], [1], [0, 0, 1, 1], [], []>} : vector<32x128xbf16>, vector<128x64xbf16>, vector<32x64xf32> -> vector<32x64xf32>
    %13 = arith.addf %8, %12 : vector<32x64xf32>
    %c0_16 = arith.constant 0 : index
    %c0_17 = arith.constant 0 : index
    %c0_18 = arith.constant 0 : index
    %14 = vector.load %arg5[%c0_16, %c0_17, %c0_18] : memref<1x32x256xbf16, #tpu.memory_space<vmem>>, vector<1x32x256xbf16>
    %15 = vector.shape_cast %14 : vector<1x32x256xbf16> to vector<32x256xbf16>
    %c0_19 = arith.constant 0 : index
    %c0_20 = arith.constant 0 : index
    %16 = vector.load %arg9[%c0_19, %c0_20] : memref<256x64xbf16, #tpu.memory_space<vmem>>, vector<256x64xbf16>
    %cst_21 = arith.constant dense<0.000000e+00> : vector<32x64xf32>
    %17 = tpu.matmul %15, %16, %cst_21 {dimension_numbers = #tpu.dot_dimension_numbers<[1], [0], [0], [1], [0, 0, 1, 1], [], []>} : vector<32x256xbf16>, vector<256x64xbf16>, vector<32x64xf32> -> vector<32x64xf32>
    %18 = arith.addf %13, %17 : vector<32x64xf32>
    %c0_22 = arith.constant 0 : index
    %c0_23 = arith.constant 0 : index
    %19 = vector.load %arg10[%c0_22, %c0_23] : memref<1x64xf32, #tpu.memory_space<vmem>>, vector<1x64xf32>
    %20 = vector.broadcast %19 : vector<1x64xf32> to vector<32x64xf32>
    %21 = arith.addf %18, %20 : vector<32x64xf32>
    %cst_24 = arith.constant 0.000000e+00 : f32
    %22 = vector.broadcast %cst_24 : f32 to vector<32x64xf32>
    %23 = arith.cmpf ogt, %21, %22 : vector<32x64xf32>
    %cst_25 = arith.constant 2.000000e-01 : f32
    %24 = vector.broadcast %cst_25 : f32 to vector<32x64xf32>
    %25 = arith.mulf %24, %21 : vector<32x64xf32>
    %26 = arith.select %23, %21, %25 : vector<32x64xi1>, vector<32x64xf32>
    %cst_26 = arith.constant dense<0xFF800000> : vector<64xf32>
    %27 = vector.multi_reduction <maximumf>, %26, %cst_26 [0] : vector<32x64xf32> to vector<64xf32>
    %28 = vector.shape_cast %27 : vector<64xf32> to vector<1x64xf32>
    %cst_27 = arith.constant dense<0.000000e+00> : vector<64xf32>
    %29 = vector.multi_reduction <add>, %26, %cst_27 [0] : vector<32x64xf32> to vector<64xf32>
    %30 = vector.shape_cast %29 : vector<64xf32> to vector<1x64xf32>
    %c0_i32 = arith.constant 0 : i32
    %31 = arith.cmpi eq, %arg1, %c0_i32 : i32
    %32 = arith.extui %31 : i1 to i32
    %c0_i32_28 = arith.constant 0 : i32
    %33 = arith.cmpi ne, %32, %c0_i32_28 : i32
    scf.if %33 {
      %c0_33 = arith.constant 0 : index
      %c0_34 = arith.constant 0 : index
      %c0_35 = arith.constant 0 : index
      %40 = vector.load %arg11[%c0_33, %c0_34, %c0_35] : memref<1x1x64xf32, #tpu.memory_space<vmem>>, vector<1x1x64xf32>
      %41 = vector.shape_cast %40 : vector<1x1x64xf32> to vector<1x64xf32>
      %42 = vector.shape_cast %28 : vector<1x64xf32> to vector<1x1x64xf32>
      tpu.vector_store %arg11[%c0_33, %c0_34, %c0_35], %42 {strides = array<i32>} : memref<1x1x64xf32, #tpu.memory_space<vmem>>, vector<1x1x64xf32>,
      %c0_36 = arith.constant 0 : index
      %c0_37 = arith.constant 0 : index
      %c0_38 = arith.constant 0 : index
      %43 = vector.load %arg12[%c0_36, %c0_37, %c0_38] : memref<1x1x64xf32, #tpu.memory_space<vmem>>, vector<1x1x64xf32>
      %44 = vector.shape_cast %43 : vector<1x1x64xf32> to vector<1x64xf32>
      %45 = vector.shape_cast %30 : vector<1x64xf32> to vector<1x1x64xf32>
      tpu.vector_store %arg12[%c0_36, %c0_37, %c0_38], %45 {strides = array<i32>} : memref<1x1x64xf32, #tpu.memory_space<vmem>>, vector<1x1x64xf32>,
    } else {
    }
    %c0_i32_29 = arith.constant 0 : i32
    %34 = arith.cmpi sgt, %arg1, %c0_i32_29 : i32
    %35 = arith.extui %34 : i1 to i32
    %c0_i32_30 = arith.constant 0 : i32
    %36 = arith.cmpi ne, %35, %c0_i32_30 : i32
    scf.if %36 {
      %c0_33 = arith.constant 0 : index
      %c0_34 = arith.constant 0 : index
      %c0_35 = arith.constant 0 : index
      %40 = vector.load %arg11[%c0_33, %c0_34, %c0_35] : memref<1x1x64xf32, #tpu.memory_space<vmem>>, vector<1x1x64xf32>
      %41 = vector.shape_cast %40 : vector<1x1x64xf32> to vector<1x64xf32>
      %42 = arith.maximumf %41, %28 : vector<1x64xf32>
      %c0_36 = arith.constant 0 : index
      %c0_37 = arith.constant 0 : index
      %c0_38 = arith.constant 0 : index
      %43 = vector.load %arg11[%c0_36, %c0_37, %c0_38] : memref<1x1x64xf32, #tpu.memory_space<vmem>>, vector<1x1x64xf32>
      %44 = vector.shape_cast %43 : vector<1x1x64xf32> to vector<1x64xf32>
      %45 = vector.shape_cast %42 : vector<1x64xf32> to vector<1x1x64xf32>
      tpu.vector_store %arg11[%c0_36, %c0_37, %c0_38], %45 {strides = array<i32>} : memref<1x1x64xf32, #tpu.memory_space<vmem>>, vector<1x1x64xf32>,
      %c0_39 = arith.constant 0 : index
      %c0_40 = arith.constant 0 : index
      %c0_41 = arith.constant 0 : index
      %46 = vector.load %arg12[%c0_39, %c0_40, %c0_41] : memref<1x1x64xf32, #tpu.memory_space<vmem>>, vector<1x1x64xf32>
      %47 = vector.shape_cast %46 : vector<1x1x64xf32> to vector<1x64xf32>
      %48 = arith.addf %47, %30 : vector<1x64xf32>
      %c0_42 = arith.constant 0 : index
      %c0_43 = arith.constant 0 : index
      %c0_44 = arith.constant 0 : index
      %49 = vector.load %arg12[%c0_42, %c0_43, %c0_44] : memref<1x1x64xf32, #tpu.memory_space<vmem>>, vector<1x1x64xf32>
      %50 = vector.shape_cast %49 : vector<1x1x64xf32> to vector<1x64xf32>
      %51 = vector.shape_cast %48 : vector<1x64xf32> to vector<1x1x64xf32>
      tpu.vector_store %arg12[%c0_42, %c0_43, %c0_44], %51 {strides = array<i32>} : memref<1x1x64xf32, #tpu.memory_space<vmem>>, vector<1x1x64xf32>,
    } else {
    }
    %c0_i32_31 = arith.constant 0 : i32
    %37 = arith.cmpi eq, %arg1, %c0_i32_31 : i32
    %38 = arith.extui %37 : i1 to i32
    %c0_i32_32 = arith.constant 0 : i32
    %39 = arith.cmpi ne, %38, %c0_i32_32 : i32
    scf.if %39 {
      %c0_33 = arith.constant 0 : index
      %c0_34 = arith.constant 0 : index
      %c0_35 = arith.constant 0 : index
      %40 = vector.load %arg12[%c0_33, %c0_34, %c0_35] : memref<1x1x64xf32, #tpu.memory_space<vmem>>, vector<1x1x64xf32>
      %41 = vector.shape_cast %40 : vector<1x1x64xf32> to vector<1x64xf32>
      %cst_36 = arith.constant 3.125000e-02 : f32
      %42 = vector.broadcast %cst_36 : f32 to vector<1x64xf32>
      %43 = arith.mulf %41, %42 : vector<1x64xf32>
      %c0_37 = arith.constant 0 : index
      %c0_38 = arith.constant 0 : index
      %c0_39 = arith.constant 0 : index
      %44 = vector.load %arg12[%c0_37, %c0_38, %c0_39] : memref<1x1x64xf32, #tpu.memory_space<vmem>>, vector<1x1x64xf32>
      %45 = vector.shape_cast %44 : vector<1x1x64xf32> to vector<1x64xf32>
      %46 = vector.shape_cast %43 : vector<1x64xf32> to vector<1x1x64xf32>
      tpu.vector_store %arg12[%c0_37, %c0_38, %c0_39], %46 {strides = array<i32>} : memref<1x1x64xf32, #tpu.memory_space<vmem>>, vector<1x1x64xf32>,
    } else {
    }
    return
  }
  func.func @transform_0(%arg0: i32, %arg1: i32) -> (i32, i32, i32) {
    %c0_i32 = arith.constant 0 : i32
    %c0_i32_0 = arith.constant 0 : i32
    return %arg0, %arg1, %c0_i32 : i32, i32, i32
  }
  func.func @transform_1(%arg0: i32, %arg1: i32) -> (i32, i32, i32) {
    %c0_i32 = arith.constant 0 : i32
    %c0_i32_0 = arith.constant 0 : i32
    return %arg0, %arg1, %c0_i32 : i32, i32, i32
  }
  func.func @transform_2(%arg0: i32, %arg1: i32) -> (i32, i32, i32) {
    %c0_i32 = arith.constant 0 : i32
    %c0_i32_0 = arith.constant 0 : i32
    return %arg0, %arg1, %c0_i32 : i32, i32, i32
  }
  func.func @transform_3(%arg0: i32, %arg1: i32) -> (i32, i32, i32) {
    %c0_i32 = arith.constant 0 : i32
    %c0_i32_0 = arith.constant 0 : i32
    return %arg0, %arg1, %c0_i32 : i32, i32, i32
  }
  func.func @transform_4(%arg0: i32, %arg1: i32) -> (i32, i32) {
    %c0_i32 = arith.constant 0 : i32
    %c0_i32_0 = arith.constant 0 : i32
    %c0_i32_1 = arith.constant 0 : i32
    return %c0_i32, %c0_i32_0 : i32, i32
  }
  func.func @transform_5(%arg0: i32, %arg1: i32) -> (i32, i32) {
    %c0_i32 = arith.constant 0 : i32
    %c0_i32_0 = arith.constant 0 : i32
    %c0_i32_1 = arith.constant 0 : i32
    return %c0_i32, %c0_i32_0 : i32, i32
  }
  func.func @transform_6(%arg0: i32, %arg1: i32) -> (i32, i32) {
    %c0_i32 = arith.constant 0 : i32
    %c0_i32_0 = arith.constant 0 : i32
    %c0_i32_1 = arith.constant 0 : i32
    return %c0_i32, %c0_i32_0 : i32, i32
  }
  func.func @transform_7(%arg0: i32, %arg1: i32) -> (i32, i32) {
    %c0_i32 = arith.constant 0 : i32
    %c0_i32_0 = arith.constant 0 : i32
    %c0_i32_1 = arith.constant 0 : i32
    return %c0_i32, %c0_i32_0 : i32, i32
  }
  func.func @transform_8(%arg0: i32, %arg1: i32) -> (i32, i32) {
    %c0_i32 = arith.constant 0 : i32
    %c0_i32_0 = arith.constant 0 : i32
    %c0_i32_1 = arith.constant 0 : i32
    return %c0_i32, %c0_i32_0 : i32, i32
  }
  func.func @transform_9(%arg0: i32, %arg1: i32) -> (i32, i32, i32) {
    %c0_i32 = arith.constant 0 : i32
    %c0_i32_0 = arith.constant 0 : i32
    %c0_i32_1 = arith.constant 0 : i32
    return %arg0, %c0_i32, %c0_i32_0 : i32, i32, i32
  }
  func.func @transform_10(%arg0: i32, %arg1: i32) -> (i32, i32, i32) {
    %c0_i32 = arith.constant 0 : i32
    %c0_i32_0 = arith.constant 0 : i32
    %c0_i32_1 = arith.constant 0 : i32
    return %arg0, %c0_i32, %c0_i32_0 : i32, i32, i32
  }
}

module attributes {stable_mosaic.version = 11 : i64} {
  func.func @head_kernel(%arg0: i32, %arg1: memref<2x128xf32, #tpu.memory_space<vmem>>, %arg2: memref<128x512xbf16, #tpu.memory_space<vmem>>, %arg3: memref<1x512xf32, #tpu.memory_space<vmem>>, %arg4: memref<512x256xbf16, #tpu.memory_space<vmem>>, %arg5: memref<1x256xf32, #tpu.memory_space<vmem>>, %arg6: memref<256x40xbf16, #tpu.memory_space<vmem>>, %arg7: memref<1x40xf32, #tpu.memory_space<vmem>>, %arg8: memref<2x40xf32, #tpu.memory_space<vmem>>) attributes {dimension_semantics = [#tpu.dimension_semantics<arbitrary>], iteration_bounds = array<i64: 1>, scalar_prefetch = 0 : i64, scratch_operands = 0 : i64, tpu.core_type = #tpu.core_type<tc>, window_params = [{pipeline_mode = #tpu.pipeline_mode<synchronous>, transform_indices = @transform_0, window_bounds = array<i64: 2, 128>}, {pipeline_mode = #tpu.pipeline_mode<synchronous>, transform_indices = @transform_1, window_bounds = array<i64: 128, 512>}, {pipeline_mode = #tpu.pipeline_mode<synchronous>, transform_indices = @transform_2, window_bounds = array<i64: 1, 512>}, {pipeline_mode = #tpu.pipeline_mode<synchronous>, transform_indices = @transform_3, window_bounds = array<i64: 512, 256>}, {pipeline_mode = #tpu.pipeline_mode<synchronous>, transform_indices = @transform_4, window_bounds = array<i64: 1, 256>}, {pipeline_mode = #tpu.pipeline_mode<synchronous>, transform_indices = @transform_5, window_bounds = array<i64: 256, 40>}, {pipeline_mode = #tpu.pipeline_mode<synchronous>, transform_indices = @transform_6, window_bounds = array<i64: 1, 40>}, {pipeline_mode = #tpu.pipeline_mode<synchronous>, transform_indices = @transform_7, window_bounds = array<i64: 2, 40>}]} {
    %c0 = arith.constant 0 : index
    %c0_0 = arith.constant 0 : index
    %0 = vector.load %arg1[%c0, %c0_0] : memref<2x128xf32, #tpu.memory_space<vmem>>, vector<2x128xf32>
    %1 = arith.truncf %0 : vector<2x128xf32> to vector<2x128xbf16>
    %c0_1 = arith.constant 0 : index
    %c0_2 = arith.constant 0 : index
    %2 = vector.load %arg2[%c0_1, %c0_2] : memref<128x512xbf16, #tpu.memory_space<vmem>>, vector<128x512xbf16>
    %cst = arith.constant dense<0.000000e+00> : vector<2x512xf32>
    %3 = tpu.matmul %1, %2, %cst {dimension_numbers = #tpu.dot_dimension_numbers<[1], [0], [0], [1], [0, 0, 1, 1], [], []>} : vector<2x128xbf16>, vector<128x512xbf16>, vector<2x512xf32> -> vector<2x512xf32>
    %c0_3 = arith.constant 0 : index
    %c0_4 = arith.constant 0 : index
    %4 = vector.load %arg3[%c0_3, %c0_4] : memref<1x512xf32, #tpu.memory_space<vmem>>, vector<1x512xf32>
    %5 = vector.broadcast %4 : vector<1x512xf32> to vector<2x512xf32>
    %6 = arith.addf %3, %5 : vector<2x512xf32>
    %cst_5 = arith.constant 0.000000e+00 : f32
    %7 = vector.broadcast %cst_5 : f32 to vector<2x512xf32>
    %8 = arith.cmpf ogt, %6, %7 : vector<2x512xf32>
    %cst_6 = arith.constant 2.000000e-01 : f32
    %9 = vector.broadcast %cst_6 : f32 to vector<2x512xf32>
    %10 = arith.mulf %9, %6 : vector<2x512xf32>
    %11 = arith.select %8, %6, %10 : vector<2x512xi1>, vector<2x512xf32>
    %12 = arith.truncf %11 : vector<2x512xf32> to vector<2x512xbf16>
    %c0_7 = arith.constant 0 : index
    %c0_8 = arith.constant 0 : index
    %13 = vector.load %arg4[%c0_7, %c0_8] : memref<512x256xbf16, #tpu.memory_space<vmem>>, vector<512x256xbf16>
    %cst_9 = arith.constant dense<0.000000e+00> : vector<2x256xf32>
    %14 = tpu.matmul %12, %13, %cst_9 {dimension_numbers = #tpu.dot_dimension_numbers<[1], [0], [0], [1], [0, 0, 1, 1], [], []>} : vector<2x512xbf16>, vector<512x256xbf16>, vector<2x256xf32> -> vector<2x256xf32>
    %c0_10 = arith.constant 0 : index
    %c0_11 = arith.constant 0 : index
    %15 = vector.load %arg5[%c0_10, %c0_11] : memref<1x256xf32, #tpu.memory_space<vmem>>, vector<1x256xf32>
    %16 = vector.broadcast %15 : vector<1x256xf32> to vector<2x256xf32>
    %17 = arith.addf %14, %16 : vector<2x256xf32>
    %cst_12 = arith.constant 0.000000e+00 : f32
    %18 = vector.broadcast %cst_12 : f32 to vector<2x256xf32>
    %19 = arith.cmpf ogt, %17, %18 : vector<2x256xf32>
    %cst_13 = arith.constant 2.000000e-01 : f32
    %20 = vector.broadcast %cst_13 : f32 to vector<2x256xf32>
    %21 = arith.mulf %20, %17 : vector<2x256xf32>
    %22 = arith.select %19, %17, %21 : vector<2x256xi1>, vector<2x256xf32>
    %23 = arith.truncf %22 : vector<2x256xf32> to vector<2x256xbf16>
    %c0_14 = arith.constant 0 : index
    %c0_15 = arith.constant 0 : index
    %24 = vector.load %arg6[%c0_14, %c0_15] : memref<256x40xbf16, #tpu.memory_space<vmem>>, vector<256x40xbf16>
    %cst_16 = arith.constant dense<0.000000e+00> : vector<2x40xf32>
    %25 = tpu.matmul %23, %24, %cst_16 {dimension_numbers = #tpu.dot_dimension_numbers<[1], [0], [0], [1], [0, 0, 1, 1], [], []>} : vector<2x256xbf16>, vector<256x40xbf16>, vector<2x40xf32> -> vector<2x40xf32>
    %c0_17 = arith.constant 0 : index
    %c0_18 = arith.constant 0 : index
    %26 = vector.load %arg7[%c0_17, %c0_18] : memref<1x40xf32, #tpu.memory_space<vmem>>, vector<1x40xf32>
    %27 = vector.broadcast %26 : vector<1x40xf32> to vector<2x40xf32>
    %28 = arith.addf %25, %27 : vector<2x40xf32>
    %c0_19 = arith.constant 0 : index
    %c0_20 = arith.constant 0 : index
    %29 = vector.load %arg8[%c0_19, %c0_20] : memref<2x40xf32, #tpu.memory_space<vmem>>, vector<2x40xf32>
    tpu.vector_store %arg8[%c0_19, %c0_20], %28 {strides = array<i32>} : memref<2x40xf32, #tpu.memory_space<vmem>>, vector<2x40xf32>,
    return
  }
  func.func @transform_0(%arg0: i32) -> (i32, i32) {
    %c0_i32 = arith.constant 0 : i32
    %c0_i32_0 = arith.constant 0 : i32
    %c0_i32_1 = arith.constant 0 : i32
    return %c0_i32, %c0_i32_0 : i32, i32
  }
  func.func @transform_1(%arg0: i32) -> (i32, i32) {
    %c0_i32 = arith.constant 0 : i32
    %c0_i32_0 = arith.constant 0 : i32
    %c0_i32_1 = arith.constant 0 : i32
    return %c0_i32, %c0_i32_0 : i32, i32
  }
  func.func @transform_2(%arg0: i32) -> (i32, i32) {
    %c0_i32 = arith.constant 0 : i32
    %c0_i32_0 = arith.constant 0 : i32
    %c0_i32_1 = arith.constant 0 : i32
    return %c0_i32, %c0_i32_0 : i32, i32
  }
  func.func @transform_3(%arg0: i32) -> (i32, i32) {
    %c0_i32 = arith.constant 0 : i32
    %c0_i32_0 = arith.constant 0 : i32
    %c0_i32_1 = arith.constant 0 : i32
    return %c0_i32, %c0_i32_0 : i32, i32
  }
  func.func @transform_4(%arg0: i32) -> (i32, i32) {
    %c0_i32 = arith.constant 0 : i32
    %c0_i32_0 = arith.constant 0 : i32
    %c0_i32_1 = arith.constant 0 : i32
    return %c0_i32, %c0_i32_0 : i32, i32
  }
  func.func @transform_5(%arg0: i32) -> (i32, i32) {
    %c0_i32 = arith.constant 0 : i32
    %c0_i32_0 = arith.constant 0 : i32
    %c0_i32_1 = arith.constant 0 : i32
    return %c0_i32, %c0_i32_0 : i32, i32
  }
  func.func @transform_6(%arg0: i32) -> (i32, i32) {
    %c0_i32 = arith.constant 0 : i32
    %c0_i32_0 = arith.constant 0 : i32
    %c0_i32_1 = arith.constant 0 : i32
    return %c0_i32, %c0_i32_0 : i32, i32
  }
  func.func @transform_7(%arg0: i32) -> (i32, i32) {
    %c0_i32 = arith.constant 0 : i32
    %c0_i32_0 = arith.constant 0 : i32
    %c0_i32_1 = arith.constant 0 : i32
    return %c0_i32, %c0_i32_0 : i32, i32
  }
}

</mosaic_0001>

<llo_original>
// kernel: custom-call.2
$region0: #{custom-call.2}
  %s0 = inlined_call_operand.vmem [shape: f32[2,2,2], index: 0, kind: input, shape index: {}]
  %s1 = inlined_call_operand.vmem [shape: f32[2,2,2], index: 1, kind: input, shape index: {}]
  %s2 = inlined_call_operand.vmem [shape: f32[2,2,2], index: 2, kind: input, shape index: {}]
  %s3 = inlined_call_operand.vmem [shape: f32[2,2,2], index: 3, kind: input, shape index: {}]
  %s4 = inlined_call_operand.vmem [shape: f32[2,2], index: 4, kind: output, shape index: {0}]
  %s5 = inlined_call_operand.vmem [shape: f32[2,2], index: 5, kind: output, shape index: {1}]
  %s6 = inlined_call_operand.vmem [shape: f32[2,2,2], index: 6, kind: output, shape index: {2}]
  %s7 = inlined_call_operand.vmem [shape: f32[2,2,2], index: 7, kind: output, shape index: {3}]
  %s8 = inlined_call_operand.vmem [shape: f32[2,2,2], index: 8, kind: output, shape index: {4}]
  %s9 = inlined_call_operand.vmem [shape: f32[2,2,2], index: 9, kind: output, shape index: {5}]
  %10 = xla_tuple %s4, %s5, %s6, %s7, %s8, %s9
  $region1: #{custom-call.2} parent=0
    #allocation0 [shape = 'u8[4096]{0}', space=vmem, size = 0x1000, scoped, tag = 'operand span for operand 0']
    #allocation1 [shape = 'u8[2048]{0}', space=vmem, size = 0x800, scoped, tag = 'packed  for operand 0']
    #allocation2 [shape = 'u8[4096]{0}', space=vmem, size = 0x1000, scoped, tag = 'operand span for operand 1']
    #allocation3 [shape = 'u8[2048]{0}', space=vmem, size = 0x800, scoped, tag = 'packed  for operand 1']
    #allocation4 [shape = 'u8[4096]{0}', space=vmem, size = 0x1000, scoped, tag = 'operand span for operand 2']
    #allocation5 [shape = 'u8[2048]{0}', space=vmem, size = 0x800, scoped, tag = 'packed  for operand 2']
    #allocation6 [shape = 'u8[4096]{0}', space=vmem, size = 0x1000, scoped, tag = 'operand span for operand 3']
    #allocation7 [shape = 'u8[2048]{0}', space=vmem, size = 0x800, scoped, tag = 'packed  for operand 3']
    #allocation8 [shape = 'u8[4096]{0}', space=vmem, size = 0x1000, scoped, tag = 'operand span for operand 4']
    #allocation9 [shape = 'u8[2048]{0}', space=vmem, size = 0x800, scoped, tag = 'packed  for operand 4']
    #allocation10 [shape = 'u8[4096]{0}', space=vmem, size = 0x1000, scoped, tag = 'operand span for operand 5']
    #allocation11 [shape = 'u8[2048]{0}', space=vmem, size = 0x800, scoped, tag = 'packed  for operand 5']
    #allocation12 [shape = 'u8[4096]{0}', space=vmem, size = 0x1000, scoped, tag = 'operand span for operand 6']
    #allocation13 [shape = 'u8[2048]{0}', space=vmem, size = 0x800, scoped, tag = 'packed  for operand 6']
    #allocation14 [shape = 'u8[4096]{0}', space=vmem, size = 0x1000, scoped, tag = 'operand span for operand 7']
    #allocation15 [shape = 'u8[2048]{0}', space=vmem, size = 0x800, scoped, tag = 'packed  for operand 7']
    #allocation16 [shape = 'u8[4096]{0}', space=vmem, size = 0x1000, scoped, tag = 'operand span for operand 8']
    #allocation17 [shape = 'u8[2048]{0}', space=vmem, size = 0x800, scoped, tag = 'packed  for operand 8']
    #allocation18 [shape = 'u8[4096]{0}', space=vmem, size = 0x1000, scoped, tag = 'operand span for operand 9']
    #allocation19 [shape = 'u8[2048]{0}', space=vmem, size = 0x800, scoped, tag = 'packed  for operand 9']
    loop: start=0, step=1, limit=4
    $region2: #{custom-call.2} parent=1 // loop_pre_header
      _
    $region3: #{custom-call.2} parent=1 // loop_header
      %s12 = sphi 0, %s16
      %p13 = scmp.ge.s32.totalorder %s12, 4
      %s24 = sphi 0, %s26
      %s27 = sphi 0, %s24
      %s28 = sphi 0, %s27
      %s44 = sphi 0, %s28
      %s52 = sphi 0, %s54
      %s55 = sphi 0, %s52
      %s56 = sphi 0, %s55
      %s72 = sphi 0, %s56
    $region4: #{custom-call.2} parent=1 // loop_header_branch
      %15 = sbr.rel (%p13) target = $region8
    $region5: #{custom-call.2} parent=1 // loop_body
      %s17 = ssub.s32 %s12, 1
      %s18 = ssub.s32 %s12, 2
      %s19 = sadd.s32 %s12, 1
      %s20 = sshrl.u32 %s12, 3
      %s21 = sshrl.u32 %s19, 3
      %s22 = ssub.s32 %s20, %s21
      %p23 = scmp.eq.s32.totalorder %s22, 0
      %s25 = sadd.s32 %s24, 1
      %s26 = scalar_select %p23, %s24, %s25
      %p29 = pneg %p23
      %p30 = scmp.eq.s32.totalorder %s12, 1
      %p31 = por %p29, %p30
      %p32 = scmp.ne.s32.totalorder %s24, %s27
      %p33 = scmp.eq.s32.totalorder %s12, 0
      %p34 = por %p32, %p33
      %p35 = scmp.ne.s32.totalorder %s24, %s27
      %p36 = scmp.eq.s32.totalorder %s17, 1
      %p37 = por %p35, %p36
      %p38 = scmp.ne.s32.totalorder %s27, %s28
      %p39 = scmp.eq.s32.totalorder %s17, 0
      %p40 = por %p38, %p39
      %p41 = scmp.ne.s32.totalorder %s27, %s28
      %p42 = scmp.eq.s32.totalorder %s18, 1
      %p43 = por %p41, %p42
      %p45 = scmp.ne.s32.totalorder %s28, %s44
      %p46 = scmp.eq.s32.totalorder %s18, 0
      %p47 = por %p45, %p46
      %s48 = sshrl.u32 %s12, 3
      %s49 = sshrl.u32 %s19, 3
      %s50 = ssub.s32 %s48, %s49
      %p51 = scmp.eq.s32.totalorder %s50, 0
      %s53 = sadd.s32 %s52, 1
      %s54 = scalar_select %p51, %s52, %s53
      %p57 = pneg %p51
      %p58 = scmp.eq.s32.totalorder %s12, 1
      %p59 = por %p57, %p58
      %p60 = scmp.ne.s32.totalorder %s52, %s55
      %p61 = scmp.eq.s32.totalorder %s12, 0
      %p62 = por %p60, %p61
      %p63 = scmp.ne.s32.totalorder %s52, %s55
      %p64 = scmp.eq.s32.totalorder %s17, 1
      %p65 = por %p63, %p64
      %p66 = scmp.ne.s32.totalorder %s55, %s56
      %p67 = scmp.eq.s32.totalorder %s17, 0
      %p68 = por %p66, %p67
      %p69 = scmp.ne.s32.totalorder %s55, %s56
      %p70 = scmp.eq.s32.totalorder %s18, 1
      %p71 = por %p69, %p70
      %p73 = scmp.ne.s32.totalorder %s56, %s72
      %p74 = scmp.eq.s32.totalorder %s18, 0
      %p75 = por %p73, %p74
      %p76 = scmp.le.s32.totalorder 1, %s12
      %p77 = scmp.lt.s32.totalorder %s12, 3
      %p78 = pnand %p76, %p77
      %p79 = pneg %p78
      // Predicated region
      $region9: #{custom-call.2} parent=5 // pred_check
        _
      $region10: #{custom-call.2} parent=5 // pred_check_branch
        %81 = sbr.rel (%p78) target = $region12
      $region11: #{custom-call.2} parent=5 // pred_region
        %s82 = ssub.s32 %s12, 1
      $region12: #{custom-call.2} parent=5 // pred_fallthru
        _
      %p83 = scmp.lt.s32.totalorder %s12, 2
      // Predicated region
      $region13: #{custom-call.2} parent=5 // pred_check
        %p84 = pneg %p83
      $region14: #{custom-call.2} parent=5 // pred_check_branch
        %86 = sbr.rel (%p84) target = $region16
      $region15: #{custom-call.2} parent=5 // pred_region
        %s87 = sand.u32 %s12, 1
        %s88 = sand.u32 %s12, 1
        %s89 = smul.addr %s88, 2
        %s90 = scalar_lea.vmem [#allocation1], %s89
        %s91 = smul.addr %s12, 2
        %s92 = scalar_lea.vmem %s0, %s91
        // Predicated region
        $region17: #{custom-call.2} parent=15 // pred_check
          _
        $region18: #{custom-call.2} parent=15 // pred_check_branch
          %94 = sbr.rel (0) target = $region20
        $region19: #{custom-call.2} parent=15 // pred_region
          // Predicated region
          $region21: #{custom-call.2} parent=19 // pred_check
            _
          $region22: #{custom-call.2} parent=19 // pred_check_branch
            %96 = sbr.rel target = $region24
          $region23: #{custom-call.2} parent=19 // pred_region
            // Predicated region
            $region36: #{custom-call.2} parent=23 // pred_check
              _
            $region37: #{custom-call.2} parent=23 // pred_check_branch
              %112 = sbr.rel (0) target = $region39
            $region38: #{custom-call.2} parent=23 // pred_region
              %s114 = ssub.s32 4, 1
              loop: start=0, step=1, limit=1
              $region40: #{custom-call.2} parent=38 // loop_pre_header
                _
              $region41: #{custom-call.2} parent=38 // loop_header
                %s116 = sphi 0, %s120
                %p117 = scmp.ge.s32.totalorder %s116, 1
                %s121 = sphi %s92, %s92
                %s122 = sphi %s90, %s90
              $region42: #{custom-call.2} parent=38 // loop_header_branch
                %119 = sbr.rel (%p117) target = $region46
              $region43: #{custom-call.2} parent=38 // loop_body
                %v123 = vld [vmem:[%s121] sm:%s114]
                %124 = vst [vmem:[%s122] sm:%s114] %v123
              $region44: #{custom-call.2} parent=38 // loop_footer
                %s120 = sadd.s32 1, %s116
              $region45: #{custom-call.2} parent=38 // loop_footer_branch
                %115 = sbr.rel target = $region41
              $region46: #{custom-call.2} parent=38 // loop_exit
                _
            $region39: #{custom-call.2} parent=23 // pred_fallthru
              _
          $region24: #{custom-call.2} parent=19 // pred_fallthru
            _
          // Predicated region
          $region25: #{custom-call.2} parent=19 // pred_check
            _
          $region26: #{custom-call.2} parent=19 // pred_check_branch
            %98 = sbr.rel (0) target = $region28
          $region27: #{custom-call.2} parent=19 // pred_region
            %s100 = ssub.s32 4, 1
            loop: start=0, step=1, limit=1
            $region29: #{custom-call.2} parent=27 // loop_pre_header
              _
            $region30: #{custom-call.2} parent=27 // loop_header
              %s102 = sphi 0, %s106
              %p103 = scmp.ge.s32.totalorder %s102, 1
              %s107 = sphi %s92, %s92
              %s108 = sphi %s90, %s90
            $region31: #{custom-call.2} parent=27 // loop_header_branch
              %105 = sbr.rel (%p103) target = $region35
            $region32: #{custom-call.2} parent=27 // loop_body
              %v109 = vld [vmem:[%s107] sm:%s100]
              %110 = vst [vmem:[%s108] sm:%s100] %v109
            $region33: #{custom-call.2} parent=27 // loop_footer
              %s106 = sadd.s32 1, %s102
            $region34: #{custom-call.2} parent=27 // loop_footer_branch
              %101 = sbr.rel target = $region30
            $region35: #{custom-call.2} parent=27 // loop_exit
              _
          $region28: #{custom-call.2} parent=19 // pred_fallthru
            _
        $region20: #{custom-call.2} parent=15 // pred_fallthru
          _
        %125 = vnop
        %s126 = sand.u32 %s12, 1
        %s127 = sand.u32 %s12, 1
        %s128 = smul.addr %s127, 2
        %s129 = scalar_lea.vmem [#allocation3], %s128
        %s130 = smul.addr %s12, 2
        %s131 = scalar_lea.vmem %s1, %s130
        // Predicated region
        $region47: #{custom-call.2} parent=15 // pred_check
          _
        $region48: #{custom-call.2} parent=15 // pred_check_branch
          %133 = sbr.rel (0) target = $region50
        $region49: #{custom-call.2} parent=15 // pred_region
          // Predicated region
          $region51: #{custom-call.2} parent=49 // pred_check
            _
          $region52: #{custom-call.2} parent=49 // pred_check_branch
            %135 = sbr.rel target = $region54
          $region53: #{custom-call.2} parent=49 // pred_region
            // Predicated region
            $region66: #{custom-call.2} parent=53 // pred_check
              _
            $region67: #{custom-call.2} parent=53 // pred_check_branch
              %151 = sbr.rel (0) target = $region69
            $region68: #{custom-call.2} parent=53 // pred_region
              %s153 = ssub.s32 4, 1
              loop: start=0, step=1, limit=1
              $region70: #{custom-call.2} parent=68 // loop_pre_header
                _
              $region71: #{custom-call.2} parent=68 // loop_header
                %s155 = sphi 0, %s159
                %p156 = scmp.ge.s32.totalorder %s155, 1
                %s160 = sphi %s131, %s131
                %s161 = sphi %s129, %s129
              $region72: #{custom-call.2} parent=68 // loop_header_branch
                %158 = sbr.rel (%p156) target = $region76
              $region73: #{custom-call.2} parent=68 // loop_body
                %v162 = vld [vmem:[%s160] sm:%s153]
                %163 = vst [vmem:[%s161] sm:%s153] %v162
              $region74: #{custom-call.2} parent=68 // loop_footer
                %s159 = sadd.s32 1, %s155
              $region75: #{custom-call.2} parent=68 // loop_footer_branch
                %154 = sbr.rel target = $region71
              $region76: #{custom-call.2} parent=68 // loop_exit
                _
            $region69: #{custom-call.2} parent=53 // pred_fallthru
              _
          $region54: #{custom-call.2} parent=49 // pred_fallthru
            _
          // Predicated region
          $region55: #{custom-call.2} parent=49 // pred_check
            _
          $region56: #{custom-call.2} parent=49 // pred_check_branch
            %137 = sbr.rel (0) target = $region58
          $region57: #{custom-call.2} parent=49 // pred_region
            %s139 = ssub.s32 4, 1
            loop: start=0, step=1, limit=1
            $region59: #{custom-call.2} parent=57 // loop_pre_header
              _
            $region60: #{custom-call.2} parent=57 // loop_header
              %s141 = sphi 0, %s145
              %p142 = scmp.ge.s32.totalorder %s141, 1
              %s146 = sphi %s131, %s131
              %s147 = sphi %s129, %s129
            $region61: #{custom-call.2} parent=57 // loop_header_branch
              %144 = sbr.rel (%p142) target = $region65
            $region62: #{custom-call.2} parent=57 // loop_body
              %v148 = vld [vmem:[%s146] sm:%s139]
              %149 = vst [vmem:[%s147] sm:%s139] %v148
            $region63: #{custom-call.2} parent=57 // loop_footer
              %s145 = sadd.s32 1, %s141
            $region64: #{custom-call.2} parent=57 // loop_footer_branch
              %140 = sbr.rel target = $region60
            $region65: #{custom-call.2} parent=57 // loop_exit
              _
          $region58: #{custom-call.2} parent=49 // pred_fallthru
            _
        $region50: #{custom-call.2} parent=15 // pred_fallthru
          _
        %164 = vnop
        %s165 = sand.u32 %s12, 1
        %s166 = sand.u32 %s12, 1
        %s167 = smul.addr %s166, 2
        %s168 = scalar_lea.vmem [#allocation5], %s167
        %s169 = smul.addr %s12, 2
        %s170 = scalar_lea.vmem %s2, %s169
        // Predicated region
        $region77: #{custom-call.2} parent=15 // pred_check
          _
        $region78: #{custom-call.2} parent=15 // pred_check_branch
          %172 = sbr.rel (0) target = $region80
        $region79: #{custom-call.2} parent=15 // pred_region
          // Predicated region
          $region81: #{custom-call.2} parent=79 // pred_check
            _
          $region82: #{custom-call.2} parent=79 // pred_check_branch
            %174 = sbr.rel target = $region84
          $region83: #{custom-call.2} parent=79 // pred_region
            // Predicated region
            $region96: #{custom-call.2} parent=83 // pred_check
              _
            $region97: #{custom-call.2} parent=83 // pred_check_branch
              %190 = sbr.rel (0) target = $region99
            $region98: #{custom-call.2} parent=83 // pred_region
              %s192 = ssub.s32 4, 1
              loop: start=0, step=1, limit=1
              $region100: #{custom-call.2} parent=98 // loop_pre_header
                _
              $region101: #{custom-call.2} parent=98 // loop_header
                %s194 = sphi 0, %s198
                %p195 = scmp.ge.s32.totalorder %s194, 1
                %s199 = sphi %s170, %s170
                %s200 = sphi %s168, %s168
              $region102: #{custom-call.2} parent=98 // loop_header_branch
                %197 = sbr.rel (%p195) target = $region106
              $region103: #{custom-call.2} parent=98 // loop_body
                %v201 = vld [vmem:[%s199] sm:%s192]
                %202 = vst [vmem:[%s200] sm:%s192] %v201
              $region104: #{custom-call.2} parent=98 // loop_footer
                %s198 = sadd.s32 1, %s194
              $region105: #{custom-call.2} parent=98 // loop_footer_branch
                %193 = sbr.rel target = $region101
              $region106: #{custom-call.2} parent=98 // loop_exit
                _
            $region99: #{custom-call.2} parent=83 // pred_fallthru
              _
          $region84: #{custom-call.2} parent=79 // pred_fallthru
            _
          // Predicated region
          $region85: #{custom-call.2} parent=79 // pred_check
            _
          $region86: #{custom-call.2} parent=79 // pred_check_branch
            %176 = sbr.rel (0) target = $region88
          $region87: #{custom-call.2} parent=79 // pred_region
            %s178 = ssub.s32 4, 1
            loop: start=0, step=1, limit=1
            $region89: #{custom-call.2} parent=87 // loop_pre_header
              _
            $region90: #{custom-call.2} parent=87 // loop_header
              %s180 = sphi 0, %s184
              %p181 = scmp.ge.s32.totalorder %s180, 1
              %s185 = sphi %s170, %s170
              %s186 = sphi %s168, %s168
            $region91: #{custom-call.2} parent=87 // loop_header_branch
              %183 = sbr.rel (%p181) target = $region95
            $region92: #{custom-call.2} parent=87 // loop_body
              %v187 = vld [vmem:[%s185] sm:%s178]
              %188 = vst [vmem:[%s186] sm:%s178] %v187
            $region93: #{custom-call.2} parent=87 // loop_footer
              %s184 = sadd.s32 1, %s180
            $region94: #{custom-call.2} parent=87 // loop_footer_branch
              %179 = sbr.rel target = $region90
            $region95: #{custom-call.2} parent=87 // loop_exit
              _
          $region88: #{custom-call.2} parent=79 // pred_fallthru
            _
        $region80: #{custom-call.2} parent=15 // pred_fallthru
          _
        %203 = vnop
        %s204 = sand.u32 %s12, 1
        %s205 = sand.u32 %s12, 1
        %s206 = smul.addr %s205, 2
        %s207 = scalar_lea.vmem [#allocation7], %s206
        %s208 = smul.addr %s12, 2
        %s209 = scalar_lea.vmem %s3, %s208
        // Predicated region
        $region107: #{custom-call.2} parent=15 // pred_check
          _
        $region108: #{custom-call.2} parent=15 // pred_check_branch
          %211 = sbr.rel (0) target = $region110
        $region109: #{custom-call.2} parent=15 // pred_region
          // Predicated region
          $region111: #{custom-call.2} parent=109 // pred_check
            _
          $region112: #{custom-call.2} parent=109 // pred_check_branch
            %213 = sbr.rel target = $region114
          $region113: #{custom-call.2} parent=109 // pred_region
            // Predicated region
            $region126: #{custom-call.2} parent=113 // pred_check
              _
            $region127: #{custom-call.2} parent=113 // pred_check_branch
              %229 = sbr.rel (0) target = $region129
            $region128: #{custom-call.2} parent=113 // pred_region
              %s231 = ssub.s32 4, 1
              loop: start=0, step=1, limit=1
              $region130: #{custom-call.2} parent=128 // loop_pre_header
                _
              $region131: #{custom-call.2} parent=128 // loop_header
                %s233 = sphi 0, %s237
                %p234 = scmp.ge.s32.totalorder %s233, 1
                %s238 = sphi %s209, %s209
                %s239 = sphi %s207, %s207
              $region132: #{custom-call.2} parent=128 // loop_header_branch
                %236 = sbr.rel (%p234) target = $region136
              $region133: #{custom-call.2} parent=128 // loop_body
                %v240 = vld [vmem:[%s238] sm:%s231]
                %241 = vst [vmem:[%s239] sm:%s231] %v240
              $region134: #{custom-call.2} parent=128 // loop_footer
                %s237 = sadd.s32 1, %s233
              $region135: #{custom-call.2} parent=128 // loop_footer_branch
                %232 = sbr.rel target = $region131
              $region136: #{custom-call.2} parent=128 // loop_exit
                _
            $region129: #{custom-call.2} parent=113 // pred_fallthru
              _
          $region114: #{custom-call.2} parent=109 // pred_fallthru
            _
          // Predicated region
          $region115: #{custom-call.2} parent=109 // pred_check
            _
          $region116: #{custom-call.2} parent=109 // pred_check_branch
            %215 = sbr.rel (0) target = $region118
          $region117: #{custom-call.2} parent=109 // pred_region
            %s217 = ssub.s32 4, 1
            loop: start=0, step=1, limit=1
            $region119: #{custom-call.2} parent=117 // loop_pre_header
              _
            $region120: #{custom-call.2} parent=117 // loop_header
              %s219 = sphi 0, %s223
              %p220 = scmp.ge.s32.totalorder %s219, 1
              %s224 = sphi %s209, %s209
              %s225 = sphi %s207, %s207
            $region121: #{custom-call.2} parent=117 // loop_header_branch
              %222 = sbr.rel (%p220) target = $region125
            $region122: #{custom-call.2} parent=117 // loop_body
              %v226 = vld [vmem:[%s224] sm:%s217]
              %227 = vst [vmem:[%s225] sm:%s217] %v226
            $region123: #{custom-call.2} parent=117 // loop_footer
              %s223 = sadd.s32 1, %s219
            $region124: #{custom-call.2} parent=117 // loop_footer_branch
              %218 = sbr.rel target = $region120
            $region125: #{custom-call.2} parent=117 // loop_exit
              _
          $region118: #{custom-call.2} parent=109 // pred_fallthru
            _
        $region110: #{custom-call.2} parent=15 // pred_fallthru
          _
        %242 = vnop
      $region16: #{custom-call.2} parent=5 // pred_fallthru
        _
      %p243 = scmp.le.s32.totalorder 1, %s12
      %p244 = scmp.lt.s32.totalorder %s12, 3
      %p245 = pnand %p243, %p244
      %p246 = pneg %p245
      // Predicated region
      $region137: #{custom-call.2} parent=5 // pred_check
        _
      $region138: #{custom-call.2} parent=5 // pred_check_branch
        %248 = sbr.rel (%p245) target = $region140
      $region139: #{custom-call.2} parent=5 // pred_region
        #allocation20 [shape = 'f32[2,2]{1,0}', space=vmem, size = 0x1000, scoped, tag = 'a top-left matrix']
        #allocation21 [shape = 'f32[2,2]{1,0}', space=vmem, size = 0x1000, scoped, tag = 'a top-right matrix']
        #allocation22 [shape = 'f32[2,2]{1,0}', space=vmem, size = 0x1000, scoped, tag = 'a bottom-left matrix']
        #allocation23 [shape = 'f32[2,2]{1,0}', space=vmem, size = 0x1000, scoped, tag = 'a bottom-right matrix']
        %s249 = ssub.s32 %s12, 1
        %s250 = sand.u32 %s17, 1
        %s251 = sand.u32 %s17, 1
        %s252 = smul.addr %s251, 2
        %s253 = scalar_lea.vmem [#allocation1], %s252
        %s254 = sand.u32 %s17, 1
        %s255 = sand.u32 %s17, 1
        %s256 = smul.addr %s255, 2
        %s257 = scalar_lea.vmem [#allocation3], %s256
        %s258 = sand.u32 %s17, 1
        %s259 = sand.u32 %s17, 1
        %s260 = smul.addr %s259, 2
        %s261 = scalar_lea.vmem [#allocation5], %s260
        %s262 = sand.u32 %s17, 1
        %s263 = sand.u32 %s17, 1
        %s264 = smul.addr %s263, 2
        %s265 = scalar_lea.vmem [#allocation7], %s264
        %s266 = sand.u32 %s17, 1
        %s267 = sand.u32 %s17, 1
        %s268 = smul.addr %s267, 2
        %s269 = scalar_lea.vmem [#allocation1], %s268
        %s270 = sand.u32 %s17, 1
        %s271 = sand.u32 %s17, 1
        %s272 = smul.addr %s271, 2
        %s273 = scalar_lea.vmem [#allocation3], %s272
        %s274 = sand.u32 %s17, 1
        %s275 = sand.u32 %s17, 1
        %s276 = smul.addr %s275, 2
        %s277 = scalar_lea.vmem [#allocation5], %s276
        %s278 = sand.u32 %s17, 1
        %s279 = sand.u32 %s17, 1
        %s280 = smul.addr %s279, 2
        %s281 = scalar_lea.vmem [#allocation7], %s280
        %p282 = pneg %p40
        %p283 = pneg %p37
        %s284 = sand.u32 %s27, 1
        %s285 = sand.u32 %s27, 1
        %s286 = smul.addr %s285, 2
        %s287 = scalar_lea.vmem [#allocation9], %s286
        %p288 = pneg %p68
        %p289 = pneg %p65
        %s290 = sand.u32 %s55, 1
        %s291 = sand.u32 %s55, 1
        %s292 = smul.addr %s291, 2
        %s293 = scalar_lea.vmem [#allocation11], %s292
        %s294 = sand.u32 %s17, 1
        %s295 = sand.u32 %s17, 1
        %s296 = smul.addr %s295, 2
        %s297 = scalar_lea.vmem [#allocation13], %s296
        %s298 = sand.u32 %s17, 1
        %s299 = sand.u32 %s17, 1
        %s300 = smul.addr %s299, 2
        %s301 = scalar_lea.vmem [#allocation15], %s300
        %s302 = sand.u32 %s17, 1
        %s303 = sand.u32 %s17, 1
        %s304 = smul.addr %s303, 2
        %s305 = scalar_lea.vmem [#allocation17], %s304
        %s306 = sand.u32 %s17, 1
        %s307 = sand.u32 %s17, 1
        %s308 = smul.addr %s307, 2
        %s309 = scalar_lea.vmem [#allocation19], %s308
        %s311 = sshll.u32 1, 2
        %s312 = ssub.s32 %s311, 1
        %v313 = vld [vmem:[%s269] sm:%s312]
        %314 = vst [vmem:[#allocation0] sm:%s312] %v313
        %s316 = sshll.u32 1, 2
        %s317 = ssub.s32 %s316, 1
        %v318 = vld [vmem:[%s273] sm:%s317]
        %319 = vst [vmem:[#allocation2] sm:%s317] %v318
        %s321 = sshll.u32 1, 2
        %s322 = ssub.s32 %s321, 1
        %v323 = vld [vmem:[%s277] sm:%s322]
        %324 = vst [vmem:[#allocation4] sm:%s322] %v323
        %s326 = sshll.u32 1, 2
        %s327 = ssub.s32 %s326, 1
        %v328 = vld [vmem:[%s281] sm:%s327]
        %329 = vst [vmem:[#allocation6] sm:%s327] %v328
        %s330 = sshrl.u32 %s17, 3
        %s331 = sshrl.u32 %s17, 3
        %s332 = smov [#allocation20]
        %v333 = vld [vmem:[#allocation0] sm:$0xff]
        %334 = vst [vmem:[%s332] sm:$0xff] %v333
        %s335 = smov [#allocation21]
        %v336 = vld [vmem:[#allocation2] sm:$0xff]
        %337 = vst [vmem:[%s335] sm:$0xff] %v336
        %s338 = smov [#allocation22]
        %v339 = vld [vmem:[#allocation4] sm:$0xff]
        %340 = vst [vmem:[%s338] sm:$0xff] %v339
        %s341 = smov [#allocation23]
        %v342 = vld [vmem:[#allocation6] sm:$0xff]
        %343 = vst [vmem:[%s341] sm:$0xff] %v342
        %344 = vst [vmem:[#allocation12] sm:$0xff] 0.0
        %345 = vst [vmem:[#allocation14] sm:$0xff] 0.0
        %346 = vst [vmem:[#allocation16] sm:$0xff] 0.0
        %347 = vst [vmem:[#allocation18] sm:$0xff] 0.0
        %s348 = smov [#allocation12]
        %v349 = vlaneseq
        %v350 = vand.u32 %v349, 127
        %v351 = vmov %v350
        %v352 = vlaneseq
        %v353 = vshrl.u32 %v352, 7
        %v354 = vmov %v353
        %v355 = vld [vmem:[%s348] sm:$0x3]
        %vm358 = vcmp.eq.s32.totalorder %v354, %v351
        %v359 = vsel %vm358, 1.0, %v355
        %360 = vst [vmem:[%s348] sm:$0x3] %v359
        %s361 = smov [#allocation18]
        %v362 = vlaneseq
        %v363 = vand.u32 %v362, 127
        %v364 = vmov %v363
        %v365 = vlaneseq
        %v366 = vshrl.u32 %v365, 7
        %v367 = vmov %v366
        %v368 = vld [vmem:[%s361] sm:$0x3]
        %vm371 = vcmp.eq.s32.totalorder %v367, %v364
        %v372 = vsel %vm371, 1.0, %v368
        %373 = vst [vmem:[%s361] sm:$0x3] %v372
        // While loop
        $region141: #{custom-call.2} parent=139 // loop_pre_header
          _
        $region142: #{custom-call.2} parent=139 // loop_header
          %s375 = sphi 0, %s917
          %v376 = vlaneseq
          %v377 = vand.u32 %v376, 127
          %v378 = vmov %v377
          %v379 = vlaneseq
          %v380 = vshrl.u32 %v379, 7
          %v381 = vmov %v380
          %s382 = smov [#allocation20]
          %v383 = vlaneseq
          %v384 = vand.u32 %v383, 127
          %vm385 = vcmp.ge.s32.totalorder %v384, 0
          %vm386 = vcmp.lt.s32.totalorder %v384, 2
          %vm387 = vmand %vm385, %vm386
          %v388 = vld [vmem:[%s382] sm:$0x3]
          %v389 = vsel %vm387, %v388, 0.0
          %v390 = vmul.f32 %v389, %v389
          %vm393 = vcmp.eq.s32.totalorder %v381, %v378
          %v394 = vsel %vm393, 0.0, %v390
          %v395 = vlaneseq
          %v396 = vand.u32 %v395, 127
          %v397 = vmov %v396
          %v398 = vlaneseq
          %v399 = vshrl.u32 %v398, 7
          %v400 = vmov %v399
          %s401 = smov [#allocation21]
          %v402 = vlaneseq
          %v403 = vand.u32 %v402, 127
          %vm404 = vcmp.ge.s32.totalorder %v403, 0
          %vm405 = vcmp.lt.s32.totalorder %v403, 2
          %vm406 = vmand %vm404, %vm405
          %v407 = vld [vmem:[%s401] sm:$0x3]
          %v408 = vsel %vm406, %v407, 0.0
          %v409 = vmul.f32 %v408, %v408
          %v410 = vadd.f32 %v394, %v409
          %v411 = vadd.f32 %v390, %v409
          %v412 = vlaneseq
          %v413 = vand.u32 %v412, 127
          %v414 = vmov %v413
          %v415 = vlaneseq
          %v416 = vshrl.u32 %v415, 7
          %v417 = vmov %v416
          %s418 = smov [#allocation22]
          %v419 = vlaneseq
          %v420 = vand.u32 %v419, 127
          %vm421 = vcmp.ge.s32.totalorder %v420, 0
          %vm422 = vcmp.lt.s32.totalorder %v420, 2
          %vm423 = vmand %vm421, %vm422
          %v424 = vld [vmem:[%s418] sm:$0x3]
          %v425 = vsel %vm423, %v424, 0.0
          %v426 = vmul.f32 %v425, %v425
          %v427 = vadd.f32 %v410, %v426
          %v428 = vadd.f32 %v411, %v426
          %v429 = vlaneseq
          %v430 = vand.u32 %v429, 127
          %v431 = vmov %v430
          %v432 = vlaneseq
          %v433 = vshrl.u32 %v432, 7
          %v434 = vmov %v433
          %s435 = smov [#allocation23]
          %v436 = vlaneseq
          %v437 = vand.u32 %v436, 127
          %vm438 = vcmp.ge.s32.totalorder %v437, 0
          %vm439 = vcmp.lt.s32.totalorder %v437, 2
          %vm440 = vmand %vm438, %vm439
          %v441 = vld [vmem:[%s435] sm:$0x3]
          %v442 = vsel %vm440, %v441, 0.0
          %v443 = vmul.f32 %v442, %v442
          %vm446 = vcmp.eq.s32.totalorder %v434, %v431
          %v447 = vsel %vm446, 0.0, %v443
          %v448 = vadd.f32 %v427, %v447
          %v449 = vadd.f32 %v428, %v443
          %450 = vadd.xlane.f32.xlu0 %v449
          %v451 = vpop.xlane.xlu0 %450
          %v452 = vrot.slane %v451, 4
          %v453 = vadd.f32 %v451, %v452
          %v454 = vrot.slane %v453, 2
          %v455 = vadd.f32 %v453, %v454
          %v456 = vrot.slane %v455, 1
          %v457 = vadd.f32 %v455, %v456
          %458 = vadd.xlane.f32.xlu0 %v448
          %v459 = vpop.xlane.xlu0 %458
          %v460 = vrot.slane %v459, 4
          %v461 = vadd.f32 %v459, %v460
          %v462 = vrot.slane %v461, 2
          %v463 = vadd.f32 %v461, %v462
          %v464 = vrot.slane %v463, 1
          %v465 = vadd.f32 %v463, %v464
          %s466 = vtos %v465
          %s467 = vtos %v457
          %s468 = smul.f32 1e-10, %s467
          %p469 = scmp.le.f32.partialorder %s466, %s468
          %p470 = scmp.ge.s32.totalorder %s375, 15
          %p471 = por %p469, %p470
        $region143: #{custom-call.2} parent=139 // loop_header_branch
          %919 = sbr.rel (%p471) target = $region147
        $region144: #{custom-call.2} parent=139 // loop_body
          loop: start=0, step=1, limit=3
          $region148: #{custom-call.2} parent=144 // loop_pre_header
            _
          $region149: #{custom-call.2} parent=144 // loop_header
            %s473 = sphi 0, %s477
            %p474 = scmp.ge.s32.totalorder %s473, 3
          $region150: #{custom-call.2} parent=144 // loop_header_branch
            %476 = sbr.rel (%p474) target = $region154
          $region151: #{custom-call.2} parent=144 // loop_body
            #allocation24 [shape = 'f32[1024]{0}', space=vmem, size = 0x1000, scoped, tag = 'a_tl_diag vmem']
            #allocation25 [shape = 'f32[1024]{0}', space=vmem, size = 0x1000, scoped, tag = 'a_tr_diag vmem']
            #allocation26 [shape = 'f32[1024]{0}', space=vmem, size = 0x1000, scoped, tag = 'a_br_diag vmem']
            #allocation27 [shape = 'f32[1024]{0}', space=vmem, size = 0x1000, scoped, tag = 'rt1 vmem']
            #allocation28 [shape = 'f32[1024]{0}', space=vmem, size = 0x1000, scoped, tag = 'rt2 vmem']
            #allocation29 [shape = 'f32[1024]{0}', space=vmem, size = 0x1000, scoped, tag = 'c vmem']
            #allocation30 [shape = 'f32[1024]{0}', space=vmem, size = 0x1000, scoped, tag = 's vmem']
            #allocation31 [shape = 'f32[4096]{0}', space=vmem, size = 0x4000, scoped, tag = 'c broadcast']
            #allocation32 [shape = 'f32[4096]{0}', space=vmem, size = 0x4000, scoped, tag = 's broadcast']
            %s478 = smov [#allocation20]
            %s479 = smov [#allocation24]
            %v480 = vlaneseq
            %v481 = vand.u32 %v480, 127
            %v482 = vmov %v481
            %v483 = vlaneseq
            %v484 = vshrl.u32 %v483, 7
            %v485 = vmov %v484
            %v486 = vld [vmem:[%s478] sm:$0x3]
            %vm489 = vcmp.eq.s32.totalorder %v485, %v482
            %v490 = vsel %vm489, %v486, 0.0
            %v491 = vrot.slane %v490, 4
            %v492 = vadd.f32 %v490, %v491
            %v493 = vrot.slane %v492, 2
            %v494 = vadd.f32 %v492, %v493
            %v495 = vrot.slane %v494, 1
            %v496 = vadd.f32 %v494, %v495
            %497 = vst [vmem:[%s479] sm:$0x1] %v496
            %s498 = smov [#allocation21]
            %s499 = smov [#allocation25]
            %v500 = vlaneseq
            %v501 = vand.u32 %v500, 127
            %v502 = vmov %v501
            %v503 = vlaneseq
            %v504 = vshrl.u32 %v503, 7
            %v505 = vmov %v504
            %v506 = vld [vmem:[%s498] sm:$0x3]
            %vm509 = vcmp.eq.s32.totalorder %v505, %v502
            %v510 = vsel %vm509, %v506, 0.0
            %v511 = vrot.slane %v510, 4
            %v512 = vadd.f32 %v510, %v511
            %v513 = vrot.slane %v512, 2
            %v514 = vadd.f32 %v512, %v513
            %v515 = vrot.slane %v514, 1
            %v516 = vadd.f32 %v514, %v515
            %517 = vst [vmem:[%s499] sm:$0x1] %v516
            %s518 = smov [#allocation23]
            %s519 = smov [#allocation26]
            %v520 = vlaneseq
            %v521 = vand.u32 %v520, 127
            %v522 = vmov %v521
            %v523 = vlaneseq
            %v524 = vshrl.u32 %v523, 7
            %v525 = vmov %v524
            %v526 = vld [vmem:[%s518] sm:$0x3]
            %vm529 = vcmp.eq.s32.totalorder %v525, %v522
            %v530 = vsel %vm529, %v526, 0.0
            %v531 = vrot.slane %v530, 4
            %v532 = vadd.f32 %v530, %v531
            %v533 = vrot.slane %v532, 2
            %v534 = vadd.f32 %v532, %v533
            %v535 = vrot.slane %v534, 1
            %v536 = vadd.f32 %v534, %v535
            %537 = vst [vmem:[%s519] sm:$0x1] %v536
            %s538 = smov [#allocation29]
            %s539 = smov [#allocation30]
            %s540 = smov [#allocation24]
            %v541 = vld [vmem:[%s540] sm:$0xff]
            %s542 = smov [#allocation25]
            %v543 = vld [vmem:[%s542] sm:$0xff]
            %s544 = smov [#allocation26]
            %v545 = vld [vmem:[%s544] sm:$0xff]
            %v546 = vsub.f32 %v545, %v541
            %v547 = vmul.f32 2.0, %v543
            %v548 = vrcp.pop %v547
            %v549 = vmul.f32 %v546, %v548
            %vm550 = vcmp.ge.f32.partialorder %v549, 0.0
            %v551 = vmul.f32 %v549, %v549
            %v552 = vadd.f32 1.0, %v551
            %v553 = vrsqrt.pop %v552
            %v554 = vmul.f32 %v552, %v553
            %vm555 = vcmp.eq.f32.partialorder %v552, inf
            %v556 = vsel %vm555, %v552, %v554
            %vm557 = vcmp.eq.f32.partialorder %v552, 0.0
            %v558 = vand.u32 %v552, 2147483648
            %v559 = vsel %vm557, %v558, %v556
            %v560 = vxor.u32 %v559, 2147483648
            %v561 = vsel %vm550, %v559, %v560
            %v562 = vadd.f32 %v549, %v561
            %v563 = vrcp.pop %v562
            %v564 = vand.u32 2147483647, %v541
            %v565 = vand.u32 2147483647, %v543
            %v566 = vand.u32 2147483647, %v545
            %v567 = vmin.f32 %v564, %v566
            %v568 = vmul.f32 1.1920929e-08, %v567
            %vm569 = vcmp.le.f32.partialorder %v565, %v568
            %v570 = vsel %vm569, 0.0, %v563
            %v571 = vmul.f32 %v570, %v570
            %v572 = vadd.f32 1.0, %v571
            %v573 = vrsqrt.pop %v572
            %v574 = vmul.f32 %v570, %v573
            %v575 = vmul.f32 %v570, %v543
            %v576 = vsub.f32 %v541, %v575
            %v577 = vmul.f32 %v570, %v543
            %v578 = vadd.f32 %v545, %v577
            %s579 = smov [#allocation27]
            %580 = vst [vmem:[%s579] sm:$0xff] %v576
            %s581 = smov [#allocation28]
            %582 = vst [vmem:[%s581] sm:$0xff] %v578
            %s583 = smov %s538
            %584 = vst [vmem:[%s583] sm:$0xff] %v573
            %s585 = smov %s539
            %586 = vst [vmem:[%s585] sm:$0xff] %v574
            %s587 = smov [#allocation29]
            %v588 = vld [vmem:[%s587] ss:$0 sm:$0xff]
            %v589 = vlaneseq
            %v590 = vand.u32 %v589, 127
            %v591 = vmov %v590
            %v592 = vlaneseq
            %v593 = vshrl.u32 %v592, 7
            %v594 = vmov %v593
            %vm596 = vcmp.eq.s32.totalorder %v594, %v591
            %v597 = vsel %vm596, %v588, 0.0
            %598 = vadd.xlane.f32.xlu0 %v597
            %v599 = vpop.xlane.xlu0 %598
            %s600 = smov [#allocation31]
            %601 = vst [vmem:[%s600] sm:$0xff] %v599
            %s602 = smov [#allocation30]
            %v603 = vld [vmem:[%s602] ss:$0 sm:$0xff]
            %v604 = vlaneseq
            %v605 = vand.u32 %v604, 127
            %v606 = vmov %v605
            %v607 = vlaneseq
            %v608 = vshrl.u32 %v607, 7
            %v609 = vmov %v608
            %vm611 = vcmp.eq.s32.totalorder %v609, %v606
            %v612 = vsel %vm611, %v603, 0.0
            %613 = vadd.xlane.f32.xlu0 %v612
            %v614 = vpop.xlane.xlu0 %613
            %s615 = smov [#allocation32]
            %616 = vst [vmem:[%s615] sm:$0xff] %v614
            %s617 = smov [#allocation31]
            %v618 = vld [vmem:[%s617] sm:$0xff]
            %s619 = smov [#allocation32]
            %v620 = vld [vmem:[%s619] sm:$0xff]
            %s621 = smov [#allocation20]
            %s622 = smov [#allocation21]
            %s623 = smov [#allocation22]
            %s624 = smov [#allocation23]
            %v625 = vld [vmem:[%s621] sm:$0x3]
            %v626 = vld [vmem:[%s622] sm:$0x3]
            %v627 = vld [vmem:[%s623] sm:$0x3]
            %v628 = vld [vmem:[%s624] sm:$0x3]
            %v629 = vmul.f32 %v618, %v625
            %v630 = vmul.f32 %v620, %v627
            %v631 = vsub.f32 %v629, %v630
            %v632 = vmul.f32 %v618, %v626
            %v633 = vmul.f32 %v620, %v628
            %v634 = vsub.f32 %v632, %v633
            %v635 = vmul.f32 %v620, %v625
            %v636 = vmul.f32 %v618, %v627
            %v637 = vadd.f32 %v635, %v636
            %v638 = vmul.f32 %v620, %v626
            %v639 = vmul.f32 %v618, %v628
            %v640 = vadd.f32 %v638, %v639
            %641 = vst [vmem:[%s621] sm:$0x3] %v631
            %642 = vst [vmem:[%s622] sm:$0x3] %v634
            %643 = vst [vmem:[%s623] sm:$0x3] %v637
            %644 = vst [vmem:[%s624] sm:$0x3] %v640
            %s645 = smov [#allocation29]
            %v646 = vld [vmem:[%s645] ss:$0 sm:$0xff]
            %s647 = smov [#allocation30]
            %v648 = vld [vmem:[%s647] ss:$0 sm:$0xff]
            %s649 = smov [#allocation20]
            %s650 = smov [#allocation21]
            %s651 = smov [#allocation22]
            %s652 = smov [#allocation23]
            %v653 = vld [vmem:[%s649] sm:$0x3]
            %v654 = vld [vmem:[%s650] sm:$0x3]
            %v655 = vld [vmem:[%s651] sm:$0x3]
            %v656 = vld [vmem:[%s652] sm:$0x3]
            %v657 = vmul.f32 %v646, %v653
            %v658 = vmul.f32 %v648, %v654
            %v659 = vsub.f32 %v657, %v658
            %v660 = vmul.f32 %v648, %v653
            %v661 = vmul.f32 %v646, %v654
            %v662 = vadd.f32 %v660, %v661
            %v663 = vmul.f32 %v646, %v655
            %v664 = vmul.f32 %v648, %v656
            %v665 = vsub.f32 %v663, %v664
            %v666 = vmul.f32 %v648, %v655
            %v667 = vmul.f32 %v646, %v656
            %v668 = vadd.f32 %v666, %v667
            %669 = vst [vmem:[%s649] sm:$0x3] %v659
            %670 = vst [vmem:[%s650] sm:$0x3] %v662
            %671 = vst [vmem:[%s651] sm:$0x3] %v665
            %672 = vst [vmem:[%s652] sm:$0x3] %v668
            %s673 = smov [#allocation20]
            %s674 = smov [#allocation27]
            %v675 = vlaneseq
            %v676 = vand.u32 %v675, 127
            %v677 = vmov %v676
            %v678 = vlaneseq
            %v679 = vshrl.u32 %v678, 7
            %v680 = vmov %v679
            %v681 = vld [vmem:[%s674] ss:$0 sm:$0xff]
            %v682 = vld [vmem:[%s673] sm:$0x3]
            %vm685 = vcmp.eq.s32.totalorder %v680, %v677
            %v686 = vsel %vm685, %v681, %v682
            %687 = vst [vmem:[%s673] sm:$0x3] %v686
            %s688 = smov [#allocation21]
            %v689 = vlaneseq
            %v690 = vand.u32 %v689, 127
            %v691 = vmov %v690
            %v692 = vlaneseq
            %v693 = vshrl.u32 %v692, 7
            %v694 = vmov %v693
            %v695 = vld [vmem:[%s688] sm:$0x3]
            %vm698 = vcmp.eq.s32.totalorder %v694, %v691
            %v699 = vsel %vm698, 0.0, %v695
            %700 = vst [vmem:[%s688] sm:$0x3] %v699
            %s701 = smov [#allocation22]
            %v702 = vlaneseq
            %v703 = vand.u32 %v702, 127
            %v704 = vmov %v703
            %v705 = vlaneseq
            %v706 = vshrl.u32 %v705, 7
            %v707 = vmov %v706
            %v708 = vld [vmem:[%s701] sm:$0x3]
            %vm711 = vcmp.eq.s32.totalorder %v707, %v704
            %v712 = vsel %vm711, 0.0, %v708
            %713 = vst [vmem:[%s701] sm:$0x3] %v712
            %s714 = smov [#allocation23]
            %s715 = smov [#allocation28]
            %v716 = vlaneseq
            %v717 = vand.u32 %v716, 127
            %v718 = vmov %v717
            %v719 = vlaneseq
            %v720 = vshrl.u32 %v719, 7
            %v721 = vmov %v720
            %v722 = vld [vmem:[%s715] ss:$0 sm:$0xff]
            %v723 = vld [vmem:[%s714] sm:$0x3]
            %vm726 = vcmp.eq.s32.totalorder %v721, %v718
            %v727 = vsel %vm726, %v722, %v723
            %728 = vst [vmem:[%s714] sm:$0x3] %v727
            %s729 = smov [#allocation20]
            %s730 = smov [#allocation21]
            %v731 = vld [vmem:[%s730] sm:$0x3]
            %732 = vrot.lane.b32.xlu0 %v731, 1
            %v733 = vpop.permute.xlu0 %732
            %v734 = vld [vmem:[%s729] sm:$0x3]
            %v735 = vld [vmem:[%s729] sm:$0x3]
            %736 = vrot.lane.b32.xlu0 %v735, 1
            %v737 = vpop.permute.xlu0 %736
            %v738 = vlaneseq
            %v739 = vand.u32 %v738, 127
            %vm740 = vcmp.eq.s32.totalorder %v739, 0
            %v741 = vsel %vm740, %v735, %v737
            %v742 = vlaneseq
            %v743 = vand.u32 %v742, 127
            %vm744 = vcmp.eq.s32.totalorder %v743, 1
            %v745 = vsel %vm744, %v733, %v741
            %v746 = vlaneseq
            %v747 = vand.u32 %v746, 127
            %vm748 = vcmp.ge.s32.totalorder %v747, 0
            %vm749 = vcmp.lt.s32.totalorder %v747, 2
            %vm750 = vmand %vm748, %vm749
            %v751 = vsel %vm750, %v745, 0.0
            %v752 = vld [vmem:[%s730] sm:$0x3]
            %753 = vrot.lane.b32.xlu0 %v752, 127
            %v754 = vpop.permute.xlu0 %753
            %v755 = vlaneseq
            %v756 = vand.u32 %v755, 127
            %vm757 = vcmp.eq.s32.totalorder %v756, 1
            %v758 = vsel %vm757, %v734, %v754
            %759 = vst [vmem:[%s729] sm:$0x3] %v751
            %760 = vst [vmem:[%s730] sm:$0x3] %v758
            %s761 = smov [#allocation22]
            %s762 = smov [#allocation23]
            %v763 = vld [vmem:[%s762] sm:$0x3]
            %764 = vrot.lane.b32.xlu0 %v763, 1
            %v765 = vpop.permute.xlu0 %764
            %v766 = vld [vmem:[%s761] sm:$0x3]
            %v767 = vld [vmem:[%s761] sm:$0x3]
            %768 = vrot.lane.b32.xlu0 %v767, 1
            %v769 = vpop.permute.xlu0 %768
            %v770 = vlaneseq
            %v771 = vand.u32 %v770, 127
            %vm772 = vcmp.eq.s32.totalorder %v771, 0
            %v773 = vsel %vm772, %v767, %v769
            %v774 = vlaneseq
            %v775 = vand.u32 %v774, 127
            %vm776 = vcmp.eq.s32.totalorder %v775, 1
            %v777 = vsel %vm776, %v765, %v773
            %v778 = vlaneseq
            %v779 = vand.u32 %v778, 127
            %vm780 = vcmp.ge.s32.totalorder %v779, 0
            %vm781 = vcmp.lt.s32.totalorder %v779, 2
            %vm782 = vmand %vm780, %vm781
            %v783 = vsel %vm782, %v777, 0.0
            %v784 = vld [vmem:[%s762] sm:$0x3]
            %785 = vrot.lane.b32.xlu0 %v784, 127
            %v786 = vpop.permute.xlu0 %785
            %v787 = vlaneseq
            %v788 = vand.u32 %v787, 127
            %vm789 = vcmp.eq.s32.totalorder %v788, 1
            %v790 = vsel %vm789, %v766, %v786
            %791 = vst [vmem:[%s761] sm:$0x3] %v783
            %792 = vst [vmem:[%s762] sm:$0x3] %v790
            %s793 = smov [#allocation20]
            %s794 = smov [#allocation22]
            %v795 = vld [vmem:[%s793] ss:$0 sm:$0xff]
            %s797 = scalar_lea.vmem %s793, 4294967295
            %v798 = vld [vmem:[%s797] sm:$0x2]
            %v799 = vlaneseq
            %v800 = vshrl.u32 %v799, 7
            %vm801 = vcmp.eq.s32.totalorder %v800, 0
            %v802 = vsel %vm801, %v795, %v798
            %s803 = scalar_lea.vmem %s793, 1
            %v804 = vld [vmem:[%s803] ss:$0 sm:$0xff]
            %805 = vst [vmem:[%s793] sm:$0x3] %v802
            %v806 = vld [vmem:[%s794] ss:$0 sm:$0xff]
            %s807 = scalar_lea.vmem %s793, 1
            %808 = vst [vmem:[%s807] sm:$0x1] %v806
            %s809 = scalar_lea.vmem %s794, 1
            %v810 = vld [vmem:[%s809] sm:$0x1]
            %v811 = vlaneseq
            %v812 = vshrl.u32 %v811, 7
            %vm813 = vcmp.eq.s32.totalorder %v812, 1
            %v814 = vsel %vm813, %v804, %v810
            %v815 = vld [vmem:[%s794] ss:$0 sm:$0xff]
            %816 = vst [vmem:[%s794] sm:$0x3] %v814
            %s817 = smov [#allocation21]
            %s818 = smov [#allocation23]
            %v819 = vld [vmem:[%s817] ss:$0 sm:$0xff]
            %s821 = scalar_lea.vmem %s817, 4294967295
            %v822 = vld [vmem:[%s821] sm:$0x2]
            %v823 = vlaneseq
            %v824 = vshrl.u32 %v823, 7
            %vm825 = vcmp.eq.s32.totalorder %v824, 0
            %v826 = vsel %vm825, %v819, %v822
            %s827 = scalar_lea.vmem %s817, 1
            %v828 = vld [vmem:[%s827] ss:$0 sm:$0xff]
            %829 = vst [vmem:[%s817] sm:$0x3] %v826
            %v830 = vld [vmem:[%s818] ss:$0 sm:$0xff]
            %s831 = scalar_lea.vmem %s817, 1
            %832 = vst [vmem:[%s831] sm:$0x1] %v830
            %s833 = scalar_lea.vmem %s818, 1
            %v834 = vld [vmem:[%s833] sm:$0x1]
            %v835 = vlaneseq
            %v836 = vshrl.u32 %v835, 7
            %vm837 = vcmp.eq.s32.totalorder %v836, 1
            %v838 = vsel %vm837, %v828, %v834
            %v839 = vld [vmem:[%s818] ss:$0 sm:$0xff]
            %840 = vst [vmem:[%s818] sm:$0x3] %v838
            %s841 = smov [#allocation31]
            %v842 = vld [vmem:[%s841] sm:$0xff]
            %s843 = smov [#allocation32]
            %v844 = vld [vmem:[%s843] sm:$0xff]
            %s845 = smov [#allocation12]
            %s846 = smov [#allocation14]
            %s847 = smov [#allocation16]
            %s848 = smov [#allocation18]
            %v849 = vld [vmem:[%s845] sm:$0x3]
            %v850 = vld [vmem:[%s846] sm:$0x3]
            %v851 = vld [vmem:[%s847] sm:$0x3]
            %v852 = vld [vmem:[%s848] sm:$0x3]
            %v853 = vmul.f32 %v842, %v849
            %v854 = vmul.f32 %v844, %v851
            %v855 = vsub.f32 %v853, %v854
            %v856 = vmul.f32 %v842, %v850
            %v857 = vmul.f32 %v844, %v852
            %v858 = vsub.f32 %v856, %v857
            %v859 = vmul.f32 %v844, %v849
            %v860 = vmul.f32 %v842, %v851
            %v861 = vadd.f32 %v859, %v860
            %v862 = vmul.f32 %v844, %v850
            %v863 = vmul.f32 %v842, %v852
            %v864 = vadd.f32 %v862, %v863
            %865 = vst [vmem:[%s845] sm:$0x3] %v855
            %866 = vst [vmem:[%s846] sm:$0x3] %v858
            %867 = vst [vmem:[%s847] sm:$0x3] %v861
            %868 = vst [vmem:[%s848] sm:$0x3] %v864
            %s869 = smov [#allocation12]
            %s870 = smov [#allocation16]
            %v871 = vld [vmem:[%s869] ss:$0 sm:$0xff]
            %s873 = scalar_lea.vmem %s869, 4294967295
            %v874 = vld [vmem:[%s873] sm:$0x2]
            %v875 = vlaneseq
            %v876 = vshrl.u32 %v875, 7
            %vm877 = vcmp.eq.s32.totalorder %v876, 0
            %v878 = vsel %vm877, %v871, %v874
            %s879 = scalar_lea.vmem %s869, 1
            %v880 = vld [vmem:[%s879] ss:$0 sm:$0xff]
            %881 = vst [vmem:[%s869] sm:$0x3] %v878
            %v882 = vld [vmem:[%s870] ss:$0 sm:$0xff]
            %s883 = scalar_lea.vmem %s869, 1
            %884 = vst [vmem:[%s883] sm:$0x1] %v882
            %s885 = scalar_lea.vmem %s870, 1
            %v886 = vld [vmem:[%s885] sm:$0x1]
            %v887 = vlaneseq
            %v888 = vshrl.u32 %v887, 7
            %vm889 = vcmp.eq.s32.totalorder %v888, 1
            %v890 = vsel %vm889, %v880, %v886
            %v891 = vld [vmem:[%s870] ss:$0 sm:$0xff]
            %892 = vst [vmem:[%s870] sm:$0x3] %v890
            %s893 = smov [#allocation14]
            %s894 = smov [#allocation18]
            %v895 = vld [vmem:[%s893] ss:$0 sm:$0xff]
            %s897 = scalar_lea.vmem %s893, 4294967295
            %v898 = vld [vmem:[%s897] sm:$0x2]
            %v899 = vlaneseq
            %v900 = vshrl.u32 %v899, 7
            %vm901 = vcmp.eq.s32.totalorder %v900, 0
            %v902 = vsel %vm901, %v895, %v898
            %s903 = scalar_lea.vmem %s893, 1
            %v904 = vld [vmem:[%s903] ss:$0 sm:$0xff]
            %905 = vst [vmem:[%s893] sm:$0x3] %v902
            %v906 = vld [vmem:[%s894] ss:$0 sm:$0xff]
            %s907 = scalar_lea.vmem %s893, 1
            %908 = vst [vmem:[%s907] sm:$0x1] %v906
            %s909 = scalar_lea.vmem %s894, 1
            %v910 = vld [vmem:[%s909] sm:$0x1]
            %v911 = vlaneseq
            %v912 = vshrl.u32 %v911, 7
            %vm913 = vcmp.eq.s32.totalorder %v912, 1
            %v914 = vsel %vm913, %v904, %v910
            %v915 = vld [vmem:[%s894] ss:$0 sm:$0xff]
            %916 = vst [vmem:[%s894] sm:$0x3] %v914
          $region152: #{custom-call.2} parent=144 // loop_footer
            %s477 = sadd.s32 1, %s473
          $region153: #{custom-call.2} parent=144 // loop_footer_branch
            %472 = sbr.rel target = $region149
          $region154: #{custom-call.2} parent=144 // loop_exit
            _
          %s917 = sadd.s32 %s375, 1
        $region145: #{custom-call.2} parent=139 // loop_footer
          _
        $region146: #{custom-call.2} parent=139 // loop_footer_branch
          %374 = sbr.rel target = $region142
        $region147: #{custom-call.2} parent=139 // loop_exit
          _
        %s920 = sand.u32 %s17, 7
        %s921 = scalar_lea.vmem [#allocation8], %s920
        %s922 = sand.u32 %s17, 7
        %s923 = scalar_lea.vmem [#allocation10], %s922
        %s924 = smov [#allocation20]
        %s925 = smov %s921
        %v926 = vlaneseq
        %v927 = vand.u32 %v926, 127
        %v928 = vmov %v927
        %v929 = vlaneseq
        %v930 = vshrl.u32 %v929, 7
        %v931 = vmov %v930
        %v932 = vld [vmem:[%s924] sm:$0x3]
        %vm935 = vcmp.eq.s32.totalorder %v931, %v928
        %v936 = vsel %vm935, %v932, 0.0
        %v937 = vrot.slane %v936, 4
        %v938 = vadd.f32 %v936, %v937
        %v939 = vrot.slane %v938, 2
        %v940 = vadd.f32 %v938, %v939
        %v941 = vrot.slane %v940, 1
        %v942 = vadd.f32 %v940, %v941
        %943 = vst [vmem:[%s925] sm:$0x1] %v942
        %s944 = smov [#allocation23]
        %s945 = smov %s923
        %v946 = vlaneseq
        %v947 = vand.u32 %v946, 127
        %v948 = vmov %v947
        %v949 = vlaneseq
        %v950 = vshrl.u32 %v949, 7
        %v951 = vmov %v950
        %v952 = vld [vmem:[%s944] sm:$0x3]
        %vm955 = vcmp.eq.s32.totalorder %v951, %v948
        %v956 = vsel %vm955, %v952, 0.0
        %v957 = vrot.slane %v956, 4
        %v958 = vadd.f32 %v956, %v957
        %v959 = vrot.slane %v958, 2
        %v960 = vadd.f32 %v958, %v959
        %v961 = vrot.slane %v960, 1
        %v962 = vadd.f32 %v960, %v961
        %963 = vst [vmem:[%s945] sm:$0x1] %v962
        %s965 = sshll.u32 1, 2
        %s966 = ssub.s32 %s965, 1
        %v968 = vld [vmem:[#allocation8] sm:%s966]
        %s969 = sshll.u32 1, 2
        %s970 = ssub.s32 %s969, 1
        %971 = vst [vmem:[%s287] sm:%s970] %v968
        %s973 = sshll.u32 1, 2
        %s974 = ssub.s32 %s973, 1
        %v976 = vld [vmem:[#allocation10] sm:%s974]
        %s977 = sshll.u32 1, 2
        %s978 = ssub.s32 %s977, 1
        %979 = vst [vmem:[%s293] sm:%s978] %v976
        %s981 = sshll.u32 1, 2
        %s982 = ssub.s32 %s981, 1
        %v984 = vld [vmem:[#allocation12] sm:%s982]
        %s985 = sshll.u32 1, 2
        %s986 = ssub.s32 %s985, 1
        %987 = vst [vmem:[%s297] sm:%s986] %v984
        %s989 = sshll.u32 1, 2
        %s990 = ssub.s32 %s989, 1
        %v992 = vld [vmem:[#allocation14] sm:%s990]
        %s993 = sshll.u32 1, 2
        %s994 = ssub.s32 %s993, 1
        %995 = vst [vmem:[%s301] sm:%s994] %v992
        %s997 = sshll.u32 1, 2
        %s998 = ssub.s32 %s997, 1
        %v1000 = vld [vmem:[#allocation16] sm:%s998]
        %s1001 = sshll.u32 1, 2
        %s1002 = ssub.s32 %s1001, 1
        %1003 = vst [vmem:[%s305] sm:%s1002] %v1000
        %s1005 = sshll.u32 1, 2
        %s1006 = ssub.s32 %s1005, 1
        %v1008 = vld [vmem:[#allocation18] sm:%s1006]
        %s1009 = sshll.u32 1, 2
        %s1010 = ssub.s32 %s1009, 1
        %1011 = vst [vmem:[%s309] sm:%s1010] %v1008
        %s1012 = sand.u32 %s27, 1
        %s1013 = sand.u32 %s27, 1
        %s1014 = smul.addr %s1013, 2
        %s1015 = scalar_lea.vmem [#allocation9], %s1014
        %s1016 = sand.u32 %s55, 1
        %s1017 = sand.u32 %s55, 1
        %s1018 = smul.addr %s1017, 2
        %s1019 = scalar_lea.vmem [#allocation11], %s1018
        %s1020 = sand.u32 %s17, 1
        %s1021 = sand.u32 %s17, 1
        %s1022 = smul.addr %s1021, 2
        %s1023 = scalar_lea.vmem [#allocation13], %s1022
        %s1024 = sand.u32 %s17, 1
        %s1025 = sand.u32 %s17, 1
        %s1026 = smul.addr %s1025, 2
        %s1027 = scalar_lea.vmem [#allocation15], %s1026
        %s1028 = sand.u32 %s17, 1
        %s1029 = sand.u32 %s17, 1
        %s1030 = smul.addr %s1029, 2
        %s1031 = scalar_lea.vmem [#allocation17], %s1030
        %s1032 = sand.u32 %s17, 1
        %s1033 = sand.u32 %s17, 1
        %s1034 = smul.addr %s1033, 2
        %s1035 = scalar_lea.vmem [#allocation19], %s1034
        // Predicated region
        $region155: #{custom-call.2} parent=139 // pred_check
          %p1036 = pneg %p37
        $region156: #{custom-call.2} parent=139 // pred_check_branch
          %1038 = sbr.rel (%p1036) target = $region158
        $region157: #{custom-call.2} parent=139 // pred_region
          %s1039 = sshrl.u32 %s17, 3
          %s1040 = smul.addr %s1039, 2
          %s1041 = scalar_lea.vmem %s4, %s1040
          // Predicated region
          $region159: #{custom-call.2} parent=157 // pred_check
            _
          $region160: #{custom-call.2} parent=157 // pred_check_branch
            %1043 = sbr.rel (0) target = $region162
          $region161: #{custom-call.2} parent=157 // pred_region
            // Predicated region
            $region163: #{custom-call.2} parent=161 // pred_check
              _
            $region164: #{custom-call.2} parent=161 // pred_check_branch
              %1045 = sbr.rel target = $region166
            $region165: #{custom-call.2} parent=161 // pred_region
              // Predicated region
              $region178: #{custom-call.2} parent=165 // pred_check
                _
              $region179: #{custom-call.2} parent=165 // pred_check_branch
                %1061 = sbr.rel (0) target = $region181
              $region180: #{custom-call.2} parent=165 // pred_region
                %s1063 = ssub.s32 4, 1
                loop: start=0, step=1, limit=1
                $region182: #{custom-call.2} parent=180 // loop_pre_header
                  _
                $region183: #{custom-call.2} parent=180 // loop_header
                  %s1065 = sphi 0, %s1069
                  %p1066 = scmp.ge.s32.totalorder %s1065, 1
                  %s1070 = sphi %s1015, %s1015
                  %s1071 = sphi %s1041, %s1041
                $region184: #{custom-call.2} parent=180 // loop_header_branch
                  %1068 = sbr.rel (%p1066) target = $region188
                $region185: #{custom-call.2} parent=180 // loop_body
                  %v1072 = vld [vmem:[%s1070] sm:%s1063]
                  %1073 = vst [vmem:[%s1071] sm:%s1063] %v1072
                $region186: #{custom-call.2} parent=180 // loop_footer
                  %s1069 = sadd.s32 1, %s1065
                $region187: #{custom-call.2} parent=180 // loop_footer_branch
                  %1064 = sbr.rel target = $region183
                $region188: #{custom-call.2} parent=180 // loop_exit
                  _
              $region181: #{custom-call.2} parent=165 // pred_fallthru
                _
            $region166: #{custom-call.2} parent=161 // pred_fallthru
              _
            // Predicated region
            $region167: #{custom-call.2} parent=161 // pred_check
              _
            $region168: #{custom-call.2} parent=161 // pred_check_branch
              %1047 = sbr.rel (0) target = $region170
            $region169: #{custom-call.2} parent=161 // pred_region
              %s1049 = ssub.s32 4, 1
              loop: start=0, step=1, limit=1
              $region171: #{custom-call.2} parent=169 // loop_pre_header
                _
              $region172: #{custom-call.2} parent=169 // loop_header
                %s1051 = sphi 0, %s1055
                %p1052 = scmp.ge.s32.totalorder %s1051, 1
                %s1056 = sphi %s1015, %s1015
                %s1057 = sphi %s1041, %s1041
              $region173: #{custom-call.2} parent=169 // loop_header_branch
                %1054 = sbr.rel (%p1052) target = $region177
              $region174: #{custom-call.2} parent=169 // loop_body
                %v1058 = vld [vmem:[%s1056] sm:%s1049]
                %1059 = vst [vmem:[%s1057] sm:%s1049] %v1058
              $region175: #{custom-call.2} parent=169 // loop_footer
                %s1055 = sadd.s32 1, %s1051
              $region176: #{custom-call.2} parent=169 // loop_footer_branch
                %1050 = sbr.rel target = $region172
              $region177: #{custom-call.2} parent=169 // loop_exit
                _
            $region170: #{custom-call.2} parent=161 // pred_fallthru
              _
          $region162: #{custom-call.2} parent=157 // pred_fallthru
            _
          %1074 = vnop
        $region158: #{custom-call.2} parent=139 // pred_fallthru
          _
        // Predicated region
        $region189: #{custom-call.2} parent=139 // pred_check
          %p1075 = pneg %p65
        $region190: #{custom-call.2} parent=139 // pred_check_branch
          %1077 = sbr.rel (%p1075) target = $region192
        $region191: #{custom-call.2} parent=139 // pred_region
          %s1078 = sshrl.u32 %s17, 3
          %s1079 = smul.addr %s1078, 2
          %s1080 = scalar_lea.vmem %s5, %s1079
          // Predicated region
          $region193: #{custom-call.2} parent=191 // pred_check
            _
          $region194: #{custom-call.2} parent=191 // pred_check_branch
            %1082 = sbr.rel (0) target = $region196
          $region195: #{custom-call.2} parent=191 // pred_region
            // Predicated region
            $region197: #{custom-call.2} parent=195 // pred_check
              _
            $region198: #{custom-call.2} parent=195 // pred_check_branch
              %1084 = sbr.rel target = $region200
            $region199: #{custom-call.2} parent=195 // pred_region
              // Predicated region
              $region212: #{custom-call.2} parent=199 // pred_check
                _
              $region213: #{custom-call.2} parent=199 // pred_check_branch
                %1100 = sbr.rel (0) target = $region215
              $region214: #{custom-call.2} parent=199 // pred_region
                %s1102 = ssub.s32 4, 1
                loop: start=0, step=1, limit=1
                $region216: #{custom-call.2} parent=214 // loop_pre_header
                  _
                $region217: #{custom-call.2} parent=214 // loop_header
                  %s1104 = sphi 0, %s1108
                  %p1105 = scmp.ge.s32.totalorder %s1104, 1
                  %s1109 = sphi %s1019, %s1019
                  %s1110 = sphi %s1080, %s1080
                $region218: #{custom-call.2} parent=214 // loop_header_branch
                  %1107 = sbr.rel (%p1105) target = $region222
                $region219: #{custom-call.2} parent=214 // loop_body
                  %v1111 = vld [vmem:[%s1109] sm:%s1102]
                  %1112 = vst [vmem:[%s1110] sm:%s1102] %v1111
                $region220: #{custom-call.2} parent=214 // loop_footer
                  %s1108 = sadd.s32 1, %s1104
                $region221: #{custom-call.2} parent=214 // loop_footer_branch
                  %1103 = sbr.rel target = $region217
                $region222: #{custom-call.2} parent=214 // loop_exit
                  _
              $region215: #{custom-call.2} parent=199 // pred_fallthru
                _
            $region200: #{custom-call.2} parent=195 // pred_fallthru
              _
            // Predicated region
            $region201: #{custom-call.2} parent=195 // pred_check
              _
            $region202: #{custom-call.2} parent=195 // pred_check_branch
              %1086 = sbr.rel (0) target = $region204
            $region203: #{custom-call.2} parent=195 // pred_region
              %s1088 = ssub.s32 4, 1
              loop: start=0, step=1, limit=1
              $region205: #{custom-call.2} parent=203 // loop_pre_header
                _
              $region206: #{custom-call.2} parent=203 // loop_header
                %s1090 = sphi 0, %s1094
                %p1091 = scmp.ge.s32.totalorder %s1090, 1
                %s1095 = sphi %s1019, %s1019
                %s1096 = sphi %s1080, %s1080
              $region207: #{custom-call.2} parent=203 // loop_header_branch
                %1093 = sbr.rel (%p1091) target = $region211
              $region208: #{custom-call.2} parent=203 // loop_body
                %v1097 = vld [vmem:[%s1095] sm:%s1088]
                %1098 = vst [vmem:[%s1096] sm:%s1088] %v1097
              $region209: #{custom-call.2} parent=203 // loop_footer
                %s1094 = sadd.s32 1, %s1090
              $region210: #{custom-call.2} parent=203 // loop_footer_branch
                %1089 = sbr.rel target = $region206
              $region211: #{custom-call.2} parent=203 // loop_exit
                _
            $region204: #{custom-call.2} parent=195 // pred_fallthru
              _
          $region196: #{custom-call.2} parent=191 // pred_fallthru
            _
          %1113 = vnop
        $region192: #{custom-call.2} parent=139 // pred_fallthru
          _
        %s1114 = smul.addr %s17, 2
        %s1115 = scalar_lea.vmem %s6, %s1114
        // Predicated region
        $region223: #{custom-call.2} parent=139 // pred_check
          _
        $region224: #{custom-call.2} parent=139 // pred_check_branch
          %1117 = sbr.rel (0) target = $region226
        $region225: #{custom-call.2} parent=139 // pred_region
          // Predicated region
          $region227: #{custom-call.2} parent=225 // pred_check
            _
          $region228: #{custom-call.2} parent=225 // pred_check_branch
            %1119 = sbr.rel target = $region230
          $region229: #{custom-call.2} parent=225 // pred_region
            // Predicated region
            $region242: #{custom-call.2} parent=229 // pred_check
              _
            $region243: #{custom-call.2} parent=229 // pred_check_branch
              %1135 = sbr.rel (0) target = $region245
            $region244: #{custom-call.2} parent=229 // pred_region
              %s1137 = ssub.s32 4, 1
              loop: start=0, step=1, limit=1
              $region246: #{custom-call.2} parent=244 // loop_pre_header
                _
              $region247: #{custom-call.2} parent=244 // loop_header
                %s1139 = sphi 0, %s1143
                %p1140 = scmp.ge.s32.totalorder %s1139, 1
                %s1144 = sphi %s1023, %s1023
                %s1145 = sphi %s1115, %s1115
              $region248: #{custom-call.2} parent=244 // loop_header_branch
                %1142 = sbr.rel (%p1140) target = $region252
              $region249: #{custom-call.2} parent=244 // loop_body
                %v1146 = vld [vmem:[%s1144] sm:%s1137]
                %1147 = vst [vmem:[%s1145] sm:%s1137] %v1146
              $region250: #{custom-call.2} parent=244 // loop_footer
                %s1143 = sadd.s32 1, %s1139
              $region251: #{custom-call.2} parent=244 // loop_footer_branch
                %1138 = sbr.rel target = $region247
              $region252: #{custom-call.2} parent=244 // loop_exit
                _
            $region245: #{custom-call.2} parent=229 // pred_fallthru
              _
          $region230: #{custom-call.2} parent=225 // pred_fallthru
            _
          // Predicated region
          $region231: #{custom-call.2} parent=225 // pred_check
            _
          $region232: #{custom-call.2} parent=225 // pred_check_branch
            %1121 = sbr.rel (0) target = $region234
          $region233: #{custom-call.2} parent=225 // pred_region
            %s1123 = ssub.s32 4, 1
            loop: start=0, step=1, limit=1
            $region235: #{custom-call.2} parent=233 // loop_pre_header
              _
            $region236: #{custom-call.2} parent=233 // loop_header
              %s1125 = sphi 0, %s1129
              %p1126 = scmp.ge.s32.totalorder %s1125, 1
              %s1130 = sphi %s1023, %s1023
              %s1131 = sphi %s1115, %s1115
            $region237: #{custom-call.2} parent=233 // loop_header_branch
              %1128 = sbr.rel (%p1126) target = $region241
            $region238: #{custom-call.2} parent=233 // loop_body
              %v1132 = vld [vmem:[%s1130] sm:%s1123]
              %1133 = vst [vmem:[%s1131] sm:%s1123] %v1132
            $region239: #{custom-call.2} parent=233 // loop_footer
              %s1129 = sadd.s32 1, %s1125
            $region240: #{custom-call.2} parent=233 // loop_footer_branch
              %1124 = sbr.rel target = $region236
            $region241: #{custom-call.2} parent=233 // loop_exit
              _
          $region234: #{custom-call.2} parent=225 // pred_fallthru
            _
        $region226: #{custom-call.2} parent=139 // pred_fallthru
          _
        %1148 = vnop
        %s1149 = smul.addr %s17, 2
        %s1150 = scalar_lea.vmem %s7, %s1149
        // Predicated region
        $region253: #{custom-call.2} parent=139 // pred_check
          _
        $region254: #{custom-call.2} parent=139 // pred_check_branch
          %1152 = sbr.rel (0) target = $region256
        $region255: #{custom-call.2} parent=139 // pred_region
          // Predicated region
          $region257: #{custom-call.2} parent=255 // pred_check
            _
          $region258: #{custom-call.2} parent=255 // pred_check_branch
            %1154 = sbr.rel target = $region260
          $region259: #{custom-call.2} parent=255 // pred_region
            // Predicated region
            $region272: #{custom-call.2} parent=259 // pred_check
              _
            $region273: #{custom-call.2} parent=259 // pred_check_branch
              %1170 = sbr.rel (0) target = $region275
            $region274: #{custom-call.2} parent=259 // pred_region
              %s1172 = ssub.s32 4, 1
              loop: start=0, step=1, limit=1
              $region276: #{custom-call.2} parent=274 // loop_pre_header
                _
              $region277: #{custom-call.2} parent=274 // loop_header
                %s1174 = sphi 0, %s1178
                %p1175 = scmp.ge.s32.totalorder %s1174, 1
                %s1179 = sphi %s1027, %s1027
                %s1180 = sphi %s1150, %s1150
              $region278: #{custom-call.2} parent=274 // loop_header_branch
                %1177 = sbr.rel (%p1175) target = $region282
              $region279: #{custom-call.2} parent=274 // loop_body
                %v1181 = vld [vmem:[%s1179] sm:%s1172]
                %1182 = vst [vmem:[%s1180] sm:%s1172] %v1181
              $region280: #{custom-call.2} parent=274 // loop_footer
                %s1178 = sadd.s32 1, %s1174
              $region281: #{custom-call.2} parent=274 // loop_footer_branch
                %1173 = sbr.rel target = $region277
              $region282: #{custom-call.2} parent=274 // loop_exit
                _
            $region275: #{custom-call.2} parent=259 // pred_fallthru
              _
          $region260: #{custom-call.2} parent=255 // pred_fallthru
            _
          // Predicated region
          $region261: #{custom-call.2} parent=255 // pred_check
            _
          $region262: #{custom-call.2} parent=255 // pred_check_branch
            %1156 = sbr.rel (0) target = $region264
          $region263: #{custom-call.2} parent=255 // pred_region
            %s1158 = ssub.s32 4, 1
            loop: start=0, step=1, limit=1
            $region265: #{custom-call.2} parent=263 // loop_pre_header
              _
            $region266: #{custom-call.2} parent=263 // loop_header
              %s1160 = sphi 0, %s1164
              %p1161 = scmp.ge.s32.totalorder %s1160, 1
              %s1165 = sphi %s1027, %s1027
              %s1166 = sphi %s1150, %s1150
            $region267: #{custom-call.2} parent=263 // loop_header_branch
              %1163 = sbr.rel (%p1161) target = $region271
            $region268: #{custom-call.2} parent=263 // loop_body
              %v1167 = vld [vmem:[%s1165] sm:%s1158]
              %1168 = vst [vmem:[%s1166] sm:%s1158] %v1167
            $region269: #{custom-call.2} parent=263 // loop_footer
              %s1164 = sadd.s32 1, %s1160
            $region270: #{custom-call.2} parent=263 // loop_footer_branch
              %1159 = sbr.rel target = $region266
            $region271: #{custom-call.2} parent=263 // loop_exit
              _
          $region264: #{custom-call.2} parent=255 // pred_fallthru
            _
        $region256: #{custom-call.2} parent=139 // pred_fallthru
          _
        %1183 = vnop
        %s1184 = smul.addr %s17, 2
        %s1185 = scalar_lea.vmem %s8, %s1184
        // Predicated region
        $region283: #{custom-call.2} parent=139 // pred_check
          _
        $region284: #{custom-call.2} parent=139 // pred_check_branch
          %1187 = sbr.rel (0) target = $region286
        $region285: #{custom-call.2} parent=139 // pred_region
          // Predicated region
          $region287: #{custom-call.2} parent=285 // pred_check
            _
          $region288: #{custom-call.2} parent=285 // pred_check_branch
            %1189 = sbr.rel target = $region290
          $region289: #{custom-call.2} parent=285 // pred_region
            // Predicated region
            $region302: #{custom-call.2} parent=289 // pred_check
              _
            $region303: #{custom-call.2} parent=289 // pred_check_branch
              %1205 = sbr.rel (0) target = $region305
            $region304: #{custom-call.2} parent=289 // pred_region
              %s1207 = ssub.s32 4, 1
              loop: start=0, step=1, limit=1
              $region306: #{custom-call.2} parent=304 // loop_pre_header
                _
              $region307: #{custom-call.2} parent=304 // loop_header
                %s1209 = sphi 0, %s1213
                %p1210 = scmp.ge.s32.totalorder %s1209, 1
                %s1214 = sphi %s1031, %s1031
                %s1215 = sphi %s1185, %s1185
              $region308: #{custom-call.2} parent=304 // loop_header_branch
                %1212 = sbr.rel (%p1210) target = $region312
              $region309: #{custom-call.2} parent=304 // loop_body
                %v1216 = vld [vmem:[%s1214] sm:%s1207]
                %1217 = vst [vmem:[%s1215] sm:%s1207] %v1216
              $region310: #{custom-call.2} parent=304 // loop_footer
                %s1213 = sadd.s32 1, %s1209
              $region311: #{custom-call.2} parent=304 // loop_footer_branch
                %1208 = sbr.rel target = $region307
              $region312: #{custom-call.2} parent=304 // loop_exit
                _
            $region305: #{custom-call.2} parent=289 // pred_fallthru
              _
          $region290: #{custom-call.2} parent=285 // pred_fallthru
            _
          // Predicated region
          $region291: #{custom-call.2} parent=285 // pred_check
            _
          $region292: #{custom-call.2} parent=285 // pred_check_branch
            %1191 = sbr.rel (0) target = $region294
          $region293: #{custom-call.2} parent=285 // pred_region
            %s1193 = ssub.s32 4, 1
            loop: start=0, step=1, limit=1
            $region295: #{custom-call.2} parent=293 // loop_pre_header
              _
            $region296: #{custom-call.2} parent=293 // loop_header
              %s1195 = sphi 0, %s1199
              %p1196 = scmp.ge.s32.totalorder %s1195, 1
              %s1200 = sphi %s1031, %s1031
              %s1201 = sphi %s1185, %s1185
            $region297: #{custom-call.2} parent=293 // loop_header_branch
              %1198 = sbr.rel (%p1196) target = $region301
            $region298: #{custom-call.2} parent=293 // loop_body
              %v1202 = vld [vmem:[%s1200] sm:%s1193]
              %1203 = vst [vmem:[%s1201] sm:%s1193] %v1202
            $region299: #{custom-call.2} parent=293 // loop_footer
              %s1199 = sadd.s32 1, %s1195
            $region300: #{custom-call.2} parent=293 // loop_footer_branch
              %1194 = sbr.rel target = $region296
            $region301: #{custom-call.2} parent=293 // loop_exit
              _
          $region294: #{custom-call.2} parent=285 // pred_fallthru
            _
        $region286: #{custom-call.2} parent=139 // pred_fallthru
          _
        %1218 = vnop
        %s1219 = smul.addr %s17, 2
        %s1220 = scalar_lea.vmem %s9, %s1219
        // Predicated region
        $region313: #{custom-call.2} parent=139 // pred_check
          _
        $region314: #{custom-call.2} parent=139 // pred_check_branch
          %1222 = sbr.rel (0) target = $region316
        $region315: #{custom-call.2} parent=139 // pred_region
          // Predicated region
          $region317: #{custom-call.2} parent=315 // pred_check
            _
          $region318: #{custom-call.2} parent=315 // pred_check_branch
            %1224 = sbr.rel target = $region320
          $region319: #{custom-call.2} parent=315 // pred_region
            // Predicated region
            $region332: #{custom-call.2} parent=319 // pred_check
              _
            $region333: #{custom-call.2} parent=319 // pred_check_branch
              %1240 = sbr.rel (0) target = $region335
            $region334: #{custom-call.2} parent=319 // pred_region
              %s1242 = ssub.s32 4, 1
              loop: start=0, step=1, limit=1
              $region336: #{custom-call.2} parent=334 // loop_pre_header
                _
              $region337: #{custom-call.2} parent=334 // loop_header
                %s1244 = sphi 0, %s1248
                %p1245 = scmp.ge.s32.totalorder %s1244, 1
                %s1249 = sphi %s1035, %s1035
                %s1250 = sphi %s1220, %s1220
              $region338: #{custom-call.2} parent=334 // loop_header_branch
                %1247 = sbr.rel (%p1245) target = $region342
              $region339: #{custom-call.2} parent=334 // loop_body
                %v1251 = vld [vmem:[%s1249] sm:%s1242]
                %1252 = vst [vmem:[%s1250] sm:%s1242] %v1251
              $region340: #{custom-call.2} parent=334 // loop_footer
                %s1248 = sadd.s32 1, %s1244
              $region341: #{custom-call.2} parent=334 // loop_footer_branch
                %1243 = sbr.rel target = $region337
              $region342: #{custom-call.2} parent=334 // loop_exit
                _
            $region335: #{custom-call.2} parent=319 // pred_fallthru
              _
          $region320: #{custom-call.2} parent=315 // pred_fallthru
            _
          // Predicated region
          $region321: #{custom-call.2} parent=315 // pred_check
            _
          $region322: #{custom-call.2} parent=315 // pred_check_branch
            %1226 = sbr.rel (0) target = $region324
          $region323: #{custom-call.2} parent=315 // pred_region
            %s1228 = ssub.s32 4, 1
            loop: start=0, step=1, limit=1
            $region325: #{custom-call.2} parent=323 // loop_pre_header
              _
            $region326: #{custom-call.2} parent=323 // loop_header
              %s1230 = sphi 0, %s1234
              %p1231 = scmp.ge.s32.totalorder %s1230, 1
              %s1235 = sphi %s1035, %s1035
              %s1236 = sphi %s1220, %s1220
            $region327: #{custom-call.2} parent=323 // loop_header_branch
              %1233 = sbr.rel (%p1231) target = $region331
            $region328: #{custom-call.2} parent=323 // loop_body
              %v1237 = vld [vmem:[%s1235] sm:%s1228]
              %1238 = vst [vmem:[%s1236] sm:%s1228] %v1237
            $region329: #{custom-call.2} parent=323 // loop_footer
              %s1234 = sadd.s32 1, %s1230
            $region330: #{custom-call.2} parent=323 // loop_footer_branch
              %1229 = sbr.rel target = $region326
            $region331: #{custom-call.2} parent=323 // loop_exit
              _
          $region324: #{custom-call.2} parent=315 // pred_fallthru
            _
        $region316: #{custom-call.2} parent=139 // pred_fallthru
          _
        %1253 = vnop
      $region140: #{custom-call.2} parent=5 // pred_fallthru
        _
      %p1254 = scmp.le.s32.totalorder 2, %s12
      // Predicated region
      $region343: #{custom-call.2} parent=5 // pred_check
        %p1255 = pneg %p1254
      $region344: #{custom-call.2} parent=5 // pred_check_branch
        %1257 = sbr.rel (%p1255) target = $region346
      $region345: #{custom-call.2} parent=5 // pred_region
        %s1258 = ssub.s32 %s12, 2
        // Predicated region
        $region347: #{custom-call.2} parent=345 // pred_check
          %p1259 = pneg %p43
        $region348: #{custom-call.2} parent=345 // pred_check_branch
          %1261 = sbr.rel (%p1259) target = $region350
        $region349: #{custom-call.2} parent=345 // pred_region
          %s1262 = sand.u32 %s28, 1
          %s1263 = sand.u32 %s28, 1
          %s1264 = smul.addr %s1263, 2
          %s1265 = scalar_lea.vmem [#allocation9], %s1264
        $region350: #{custom-call.2} parent=345 // pred_fallthru
          _
        // Predicated region
        $region351: #{custom-call.2} parent=345 // pred_check
          %p1266 = pneg %p71
        $region352: #{custom-call.2} parent=345 // pred_check_branch
          %1268 = sbr.rel (%p1266) target = $region354
        $region353: #{custom-call.2} parent=345 // pred_region
          %s1269 = sand.u32 %s56, 1
          %s1270 = sand.u32 %s56, 1
          %s1271 = smul.addr %s1270, 2
          %s1272 = scalar_lea.vmem [#allocation11], %s1271
        $region354: #{custom-call.2} parent=345 // pred_fallthru
          _
        %s1273 = sand.u32 %s18, 1
        %s1274 = sand.u32 %s18, 1
        %s1275 = smul.addr %s1274, 2
        %s1276 = scalar_lea.vmem [#allocation13], %s1275
        %s1277 = sand.u32 %s18, 1
        %s1278 = sand.u32 %s18, 1
        %s1279 = smul.addr %s1278, 2
        %s1280 = scalar_lea.vmem [#allocation15], %s1279
        %s1281 = sand.u32 %s18, 1
        %s1282 = sand.u32 %s18, 1
        %s1283 = smul.addr %s1282, 2
        %s1284 = scalar_lea.vmem [#allocation17], %s1283
        %s1285 = sand.u32 %s18, 1
        %s1286 = sand.u32 %s18, 1
        %s1287 = smul.addr %s1286, 2
        %s1288 = scalar_lea.vmem [#allocation19], %s1287
      $region346: #{custom-call.2} parent=5 // pred_fallthru
        _
    $region6: #{custom-call.2} parent=1 // loop_footer
      %s16 = sadd.s32 1, %s12
    $region7: #{custom-call.2} parent=1 // loop_footer_branch
      %11 = sbr.rel target = $region3
    $region8: #{custom-call.2} parent=1 // loop_exit
      _

// kernel: sub.45
$region0: #{sub.45}
  %s0 = inlined_call_operand.vmem [shape: f32[64], index: 0, kind: input, shape index: {}]
  %s1 = inlined_call_operand.vmem [shape: f32[2,32], index: 1, kind: output, shape index: {}]
  $region1: #{sub.45} parent=0
    #allocation0 [shape = 'u8[4096]{0}', space=vmem, size = 0x1000, scoped, tag = 'scoped mem for output reshape']
    #allocation1 [shape = 'u8[4096]{0}', space=vmem, size = 0x1000, scoped, tag = 'scoped mem for input reshape']
    %s3 = sshll.u32 1, 1
    %s4 = ssub.s32 %s3, 1
    %v5 = vld [vmem:[%s0] sm:%s4]
    %6 = vst [vmem:[#allocation1] sm:%s4] %v5
    %v7 = vld [vmem:[#allocation1] sm:$0x1]
    %vm8 = vcmask 261120
    %9 = vst.msk [vmem:[#allocation0] sm:$0x1] %vm8, %v7
    %v10 = vld [vmem:[#allocation1] sm:$0x1]
    %11 = vrot.lane.b32.xlu0 %v10, 96
    %v12 = vpop.permute.xlu0 %11
    %vm13 = vcmask 261120
    %s14 = scalar_lea.vmem [#allocation0], 1
    %15 = vst.msk [vmem:[%s14] sm:$0x1] %vm13, %v12
    %s17 = sshll.u32 1, 2
    %s18 = ssub.s32 %s17, 1
    %v20 = vld [vmem:[#allocation0] sm:%s18]
    %s21 = sshll.u32 1, 2
    %s22 = ssub.s32 %s21, 1
    %23 = vst [vmem:[%s1] sm:%s22] %v20

// kernel: dgcnn_forward.6
$region0: #{dgcnn_forward.6}
  #allocation0 [shape = 'u32[]', space=smem, size = 0x4, offset = 0x4, fixed_abs, tag = 'smem constant byte address 0x4 - core index']
  #allocation1 [shape = 'u32[144,128]{1,0:T(1,128)}', space=vmem, size = 0x12000, scoped, tag = 'internal scratch']
  %s0 = inlined_call_operand.vmem [shape: bf16[8,64,3], index: 0, kind: input, shape index: {}]
  %s1 = inlined_call_operand.vmem [shape: bf16[64,3], index: 1, kind: input, shape index: {}]
  %s2 = inlined_call_operand.vmem [shape: bf16[3,64], index: 2, kind: input, shape index: {}]
  %s3 = inlined_call_operand.vmem [shape: bf16[3,64], index: 3, kind: input, shape index: {}]
  %s4 = inlined_call_operand.vmem [shape: f32[1,64], index: 4, kind: input, shape index: {}]
  %s5 = inlined_call_operand.vmem [shape: bf16[64,64], index: 5, kind: output, shape index: {}]
  %s6 = sld [smem:[#allocation0]]
  $region30: #{dgcnn_forward.6} parent=0
    _
  %s8 = ssub.s32 1, %s6
  %s9 = scalar_select 0, %s8, %s6
  // Predicated region
  $region2: #{dgcnn_forward.6} parent=0 // pred_check
    _
  $region3: #{dgcnn_forward.6} parent=0 // pred_check_branch
    %11 = sbr.rel (0) target = $region5
  $region4: #{dgcnn_forward.6} parent=0 // pred_region
    _
  $region5: #{dgcnn_forward.6} parent=0 // pred_fallthru
    _
  // Predicated region
  $region6: #{dgcnn_forward.6} parent=0 // pred_check
    _
  $region7: #{dgcnn_forward.6} parent=0 // pred_check_branch
    %13 = sbr.rel (0) target = $region9
  $region8: #{dgcnn_forward.6} parent=0 // pred_region
    _
  $region9: #{dgcnn_forward.6} parent=0 // pred_fallthru
    _
  // Predicated region
  $region10: #{dgcnn_forward.6} parent=0 // pred_check
    _
  $region11: #{dgcnn_forward.6} parent=0 // pred_check_branch
    %15 = sbr.rel (0) target = $region13
  $region12: #{dgcnn_forward.6} parent=0 // pred_region
    _
  $region13: #{dgcnn_forward.6} parent=0 // pred_fallthru
    _
  // Predicated region
  $region14: #{dgcnn_forward.6} parent=0 // pred_check
    _
  $region15: #{dgcnn_forward.6} parent=0 // pred_check_branch
    %17 = sbr.rel (0) target = $region17
  $region16: #{dgcnn_forward.6} parent=0 // pred_region
    _
  $region17: #{dgcnn_forward.6} parent=0 // pred_fallthru
    _
  // Predicated region
  $region18: #{dgcnn_forward.6} parent=0 // pred_check
    _
  $region19: #{dgcnn_forward.6} parent=0 // pred_check_branch
    %19 = sbr.rel (0) target = $region21
  $region20: #{dgcnn_forward.6} parent=0 // pred_region
    _
  $region21: #{dgcnn_forward.6} parent=0 // pred_fallthru
    _
  %v21 = vld [vmem:[%s1] sm:$0xf]
  %v22 = vld [vmem:[%s1 + $0x4] sm:$0xf]
  %v23 = vld [vmem:[%s1 + $0x8] sm:$0xf]
  %v24 = vld [vmem:[%s1 + $0xc] sm:$0xf]
  %v25 = vld [vmem:[%s1 + $0x10] sm:$0xf]
  %v26 = vld [vmem:[%s1 + $0x14] sm:$0xf]
  %v27 = vld [vmem:[%s1 + $0x18] sm:$0xf]
  %v28 = vld [vmem:[%s1 + $0x1c] sm:$0xf]
  %v29 = vld [vmem:[%s3] sm:$0x3]
  %v38 = vunpack.c.l.b16 %v21
  %v39 = vunpack.c.l.b16 %v22
  %v40 = vunpack.c.l.b16 %v23
  %v41 = vunpack.c.l.b16 %v24
  %v42 = vunpack.c.l.b16 %v25
  %v43 = vunpack.c.l.b16 %v26
  %v44 = vunpack.c.l.b16 %v27
  %v45 = vunpack.c.l.b16 %v28
  %v46 = vpack.c.b16 %v39, %v38
  %v47 = vpack.c.b16 %v41, %v40
  %v48 = vpack.c.b16 %v43, %v42
  %v49 = vpack.c.b16 %v45, %v44
  %vm50 = vcmask 23552
  %v52 = vsel %vm50, %v46, 0
  %v55 = vsel %vm50, %v47, 0
  %v58 = vsel %vm50, %v48, 0
  %v61 = vsel %vm50, %v49, 0
  %vm63 = vcmask 1040384
  %vm64 = vcmask 1041408
  %v65 = vsel %vm63, 4294967295, 65535
  %v66 = vsel %vm64, %v65, 0
  %v68 = vand.u32 %v29, %v66
  %70 = vmatprep.subr.bf16.mxu0 0
  %71 = vmatpush1.bf16.msra.mxu0 0
  %72 = vmatprep.subr.bf16.mxu0 0
  %73 = vmatpush1.bf16.msra.mxu0 0
  %74 = vmatprep.subr.bf16.mxu0 0
  %75 = vmatpush1.bf16.msra.mxu0 0
  %76 = vmatprep.subr.bf16.mxu0 0
  %77 = vmatpush1.bf16.msra.mxu0 0
  %78 = vmatprep.subr.bf16.mxu0 0
  %79 = vmatpush1.bf16.msra.mxu0 0
  %80 = vmatprep.subr.bf16.mxu0 0
  %81 = vmatpush1.bf16.msra.mxu0 0
  %82 = vmatprep.subr.bf16.mxu0 0
  %83 = vmatpush1.bf16.msra.mxu0 0
  %84 = vmatprep.subr.bf16.mxu0 0
  %85 = vmatpush1.bf16.msra.mxu0 %v68
  %86 = vmatprep.subr.bf16.mxu0 0
  %87 = vmatpush2.bf16.msra.mxu0 0
  %88 = vmatprep.subr.bf16.mxu0 0
  %89 = vmatpush2.bf16.msra.mxu0 0
  %90 = vmatprep.subr.bf16.mxu0 0
  %91 = vmatpush2.bf16.msra.mxu0 0
  %92 = vmatprep.subr.bf16.mxu0 0
  %93 = vmatpush2.bf16.msra.mxu0 0
  %94 = vmatprep.subr.bf16.mxu0 0
  %95 = vmatpush2.bf16.msra.mxu0 0
  %96 = vmatprep.subr.bf16.mxu0 0
  %97 = vmatpush2.bf16.msra.mxu0 0
  %98 = vmatprep.subr.bf16.mxu0 0
  %99 = vmatpush2.bf16.msra.mxu0 0
  %100 = vmatprep.subr.bf16.mxu0 0
  %101 = vmatpush2.bf16.msra.mxu0 0
  %102 = vmatprep.mubr.bf16.mxu0 0
  %103 = vmatmul.mubr.bf16.gmra.mxu0 %v52
  %v104 = vpop.f32.mrf.mxu0
  %v105 = vadd.f32 0.0, %v104
  %v106 = vpop.f32.mrf.mxu0
  %v107 = vpop.f32.mrf.mxu0
  %v108 = vadd.f32 0.0, %v107
  %v109 = vpop.f32.mrf.mxu0
  %110 = vmatprep.mubr.bf16.mxu0 0
  %111 = vmatmul.mubr.bf16.gmra.mxu0 %v55
  %v112 = vpop.f32.mrf.mxu0
  %v113 = vadd.f32 0.0, %v112
  %v114 = vpop.f32.mrf.mxu0
  %v115 = vpop.f32.mrf.mxu0
  %v116 = vadd.f32 0.0, %v115
  %v117 = vpop.f32.mrf.mxu0
  %118 = vmatprep.mubr.bf16.mxu0 0
  %119 = vmatmul.mubr.bf16.gmra.mxu0 %v58
  %v120 = vpop.f32.mrf.mxu0
  %v121 = vadd.f32 0.0, %v120
  %v122 = vpop.f32.mrf.mxu0
  %v123 = vpop.f32.mrf.mxu0
  %v124 = vadd.f32 0.0, %v123
  %v125 = vpop.f32.mrf.mxu0
  %126 = vmatprep.mubr.bf16.mxu0 0
  %127 = vmatmul.mubr.bf16.gmra.mxu0 %v61
  %v128 = vpop.f32.mrf.mxu0
  %v129 = vadd.f32 0.0, %v128
  %v130 = vpop.f32.mrf.mxu0
  %v131 = vpop.f32.mrf.mxu0
  %v132 = vadd.f32 0.0, %v131
  %v133 = vpop.f32.mrf.mxu0
  %134 = vdwg.mxu0
  %v135 = vld [vmem:[%s0] sm:$0xf]
  %v136 = vld [vmem:[%s0 + $0x4] sm:$0xf]
  %v137 = vld [vmem:[%s0 + $0x8] sm:$0xf]
  %v138 = vld [vmem:[%s0 + $0xc] sm:$0xf]
  %v139 = vld [vmem:[%s0 + $0x10] sm:$0xf]
  %v140 = vld [vmem:[%s0 + $0x14] sm:$0xf]
  %v141 = vld [vmem:[%s0 + $0x18] sm:$0xf]
  %v142 = vld [vmem:[%s0 + $0x1c] sm:$0xf]
  %v143 = vld [vmem:[%s2] sm:$0x3]
  %v152 = vunpack.c.l.b16 %v135
  %v153 = vunpack.c.l.b16 %v136
  %v154 = vunpack.c.l.b16 %v137
  %v155 = vunpack.c.l.b16 %v138
  %v156 = vunpack.c.l.b16 %v139
  %v157 = vunpack.c.l.b16 %v140
  %v158 = vunpack.c.l.b16 %v141
  %v159 = vunpack.c.l.b16 %v142
  %v160 = vpack.c.b16 %v153, %v152
  %v161 = vpack.c.b16 %v155, %v154
  %v162 = vpack.c.b16 %v157, %v156
  %v163 = vpack.c.b16 %v159, %v158
  %v165 = vsel %vm50, %v160, 0
  %v168 = vsel %vm50, %v161, 0
  %v171 = vsel %vm50, %v162, 0
  %v174 = vsel %vm50, %v163, 0
  %v177 = vand.u32 %v143, %v66
  %179 = vmatprep.subr.bf16.mxu0 0
  %180 = vmatpush1.bf16.msra.mxu0 0
  %181 = vmatprep.subr.bf16.mxu0 0
  %182 = vmatpush1.bf16.msra.mxu0 0
  %183 = vmatprep.subr.bf16.mxu0 0
  %184 = vmatpush1.bf16.msra.mxu0 0
  %185 = vmatprep.subr.bf16.mxu0 0
  %186 = vmatpush1.bf16.msra.mxu0 0
  %187 = vmatprep.subr.bf16.mxu0 0
  %188 = vmatpush1.bf16.msra.mxu0 0
  %189 = vmatprep.subr.bf16.mxu0 0
  %190 = vmatpush1.bf16.msra.mxu0 0
  %191 = vmatprep.subr.bf16.mxu0 0
  %192 = vmatpush1.bf16.msra.mxu0 0
  %193 = vmatprep.subr.bf16.mxu0 0
  %194 = vmatpush1.bf16.msra.mxu0 %v177
  %195 = vmatprep.subr.bf16.mxu0 0
  %196 = vmatpush2.bf16.msra.mxu0 0
  %197 = vmatprep.subr.bf16.mxu0 0
  %198 = vmatpush2.bf16.msra.mxu0 0
  %199 = vmatprep.subr.bf16.mxu0 0
  %200 = vmatpush2.bf16.msra.mxu0 0
  %201 = vmatprep.subr.bf16.mxu0 0
  %202 = vmatpush2.bf16.msra.mxu0 0
  %203 = vmatprep.subr.bf16.mxu0 0
  %204 = vmatpush2.bf16.msra.mxu0 0
  %205 = vmatprep.subr.bf16.mxu0 0
  %206 = vmatpush2.bf16.msra.mxu0 0
  %207 = vmatprep.subr.bf16.mxu0 0
  %208 = vmatpush2.bf16.msra.mxu0 0
  %209 = vmatprep.subr.bf16.mxu0 0
  %210 = vmatpush2.bf16.msra.mxu0 0
  %211 = vmatprep.mubr.bf16.mxu0 0
  %212 = vmatmul.mubr.bf16.gmra.mxu0 %v165
  %v213 = vpop.f32.mrf.mxu0
  %v214 = vadd.f32 0.0, %v213
  %v215 = vpop.f32.mrf.mxu0
  %v216 = vpop.f32.mrf.mxu0
  %v217 = vadd.f32 0.0, %v216
  %v218 = vpop.f32.mrf.mxu0
  %219 = vmatprep.mubr.bf16.mxu0 0
  %220 = vmatmul.mubr.bf16.gmra.mxu0 %v168
  %v221 = vpop.f32.mrf.mxu0
  %v222 = vadd.f32 0.0, %v221
  %v223 = vpop.f32.mrf.mxu0
  %v224 = vpop.f32.mrf.mxu0
  %v225 = vadd.f32 0.0, %v224
  %v226 = vpop.f32.mrf.mxu0
  %227 = vmatprep.mubr.bf16.mxu0 0
  %228 = vmatmul.mubr.bf16.gmra.mxu0 %v171
  %v229 = vpop.f32.mrf.mxu0
  %v230 = vadd.f32 0.0, %v229
  %v231 = vpop.f32.mrf.mxu0
  %v232 = vpop.f32.mrf.mxu0
  %v233 = vadd.f32 0.0, %v232
  %v234 = vpop.f32.mrf.mxu0
  %235 = vmatprep.mubr.bf16.mxu0 0
  %236 = vmatmul.mubr.bf16.gmra.mxu0 %v174
  %v237 = vpop.f32.mrf.mxu0
  %v238 = vadd.f32 0.0, %v237
  %v239 = vpop.f32.mrf.mxu0
  %v240 = vpop.f32.mrf.mxu0
  %v241 = vadd.f32 0.0, %v240
  %v242 = vpop.f32.mrf.mxu0
  %243 = vdwg.mxu0
  %s244 = scalar_lea.vmem %s0, 32
  %v245 = vld [vmem:[%s244] sm:$0xf]
  %v246 = vld [vmem:[%s244 + $0x4] sm:$0xf]
  %v247 = vld [vmem:[%s244 + $0x8] sm:$0xf]
  %v248 = vld [vmem:[%s244 + $0xc] sm:$0xf]
  %v249 = vld [vmem:[%s244 + $0x10] sm:$0xf]
  %v250 = vld [vmem:[%s244 + $0x14] sm:$0xf]
  %v251 = vld [vmem:[%s244 + $0x18] sm:$0xf]
  %v252 = vld [vmem:[%s244 + $0x1c] sm:$0xf]
  %v261 = vunpack.c.l.b16 %v245
  %v262 = vunpack.c.l.b16 %v246
  %v263 = vunpack.c.l.b16 %v247
  %v264 = vunpack.c.l.b16 %v248
  %v265 = vunpack.c.l.b16 %v249
  %v266 = vunpack.c.l.b16 %v250
  %v267 = vunpack.c.l.b16 %v251
  %v268 = vunpack.c.l.b16 %v252
  %v269 = vpack.c.b16 %v262, %v261
  %v270 = vpack.c.b16 %v264, %v263
  %v271 = vpack.c.b16 %v266, %v265
  %v272 = vpack.c.b16 %v268, %v267
  %v274 = vsel %vm50, %v269, 0
  %v277 = vsel %vm50, %v270, 0
  %v280 = vsel %vm50, %v271, 0
  %v283 = vsel %vm50, %v272, 0
  %285 = vmatprep.subr.bf16.mxu0 0
  %286 = vmatpush1.bf16.msra.mxu0 0
  %287 = vmatprep.subr.bf16.mxu0 0
  %288 = vmatpush1.bf16.msra.mxu0 0
  %289 = vmatprep.subr.bf16.mxu0 0
  %290 = vmatpush1.bf16.msra.mxu0 0
  %291 = vmatprep.subr.bf16.mxu0 0
  %292 = vmatpush1.bf16.msra.mxu0 0
  %293 = vmatprep.subr.bf16.mxu0 0
  %294 = vmatpush1.bf16.msra.mxu0 0
  %295 = vmatprep.subr.bf16.mxu0 0
  %296 = vmatpush1.bf16.msra.mxu0 0
  %297 = vmatprep.subr.bf16.mxu0 0
  %298 = vmatpush1.bf16.msra.mxu0 0
  %299 = vmatprep.subr.bf16.mxu0 0
  %300 = vmatpush1.bf16.msra.mxu0 %v177
  %301 = vmatprep.subr.bf16.mxu0 0
  %302 = vmatpush2.bf16.msra.mxu0 0
  %303 = vmatprep.subr.bf16.mxu0 0
  %304 = vmatpush2.bf16.msra.mxu0 0
  %305 = vmatprep.subr.bf16.mxu0 0
  %306 = vmatpush2.bf16.msra.mxu0 0
  %307 = vmatprep.subr.bf16.mxu0 0
  %308 = vmatpush2.bf16.msra.mxu0 0
  %309 = vmatprep.subr.bf16.mxu0 0
  %310 = vmatpush2.bf16.msra.mxu0 0
  %311 = vmatprep.subr.bf16.mxu0 0
  %312 = vmatpush2.bf16.msra.mxu0 0
  %313 = vmatprep.subr.bf16.mxu0 0
  %314 = vmatpush2.bf16.msra.mxu0 0
  %315 = vmatprep.subr.bf16.mxu0 0
  %316 = vmatpush2.bf16.msra.mxu0 0
  %317 = vmatprep.mubr.bf16.mxu0 0
  %318 = vmatmul.mubr.bf16.gmra.mxu0 %v274
  %v319 = vpop.f32.mrf.mxu0
  %v320 = vadd.f32 0.0, %v319
  %v321 = vpop.f32.mrf.mxu0
  %v322 = vpop.f32.mrf.mxu0
  %v323 = vadd.f32 0.0, %v322
  %v324 = vpop.f32.mrf.mxu0
  %325 = vmatprep.mubr.bf16.mxu0 0
  %326 = vmatmul.mubr.bf16.gmra.mxu0 %v277
  %v327 = vpop.f32.mrf.mxu0
  %v328 = vadd.f32 0.0, %v327
  %v329 = vpop.f32.mrf.mxu0
  %v330 = vpop.f32.mrf.mxu0
  %v331 = vadd.f32 0.0, %v330
  %v332 = vpop.f32.mrf.mxu0
  %333 = vmatprep.mubr.bf16.mxu0 0
  %334 = vmatmul.mubr.bf16.gmra.mxu0 %v280
  %v335 = vpop.f32.mrf.mxu0
  %v336 = vadd.f32 0.0, %v335
  %v337 = vpop.f32.mrf.mxu0
  %v338 = vpop.f32.mrf.mxu0
  %v339 = vadd.f32 0.0, %v338
  %v340 = vpop.f32.mrf.mxu0
  %341 = vmatprep.mubr.bf16.mxu0 0
  %342 = vmatmul.mubr.bf16.gmra.mxu0 %v283
  %v343 = vpop.f32.mrf.mxu0
  %v344 = vadd.f32 0.0, %v343
  %v345 = vpop.f32.mrf.mxu0
  %v346 = vpop.f32.mrf.mxu0
  %v347 = vadd.f32 0.0, %v346
  %v348 = vpop.f32.mrf.mxu0
  %349 = vdwg.mxu0
  %v350 = vmax.f32 %v214, %v320
  %v351 = vmax.f32 %v217, %v323
  %v352 = vmax.f32 %v222, %v328
  %v353 = vmax.f32 %v225, %v331
  %v354 = vmax.f32 %v230, %v336
  %v355 = vmax.f32 %v233, %v339
  %v356 = vmax.f32 %v238, %v344
  %v357 = vmax.f32 %v241, %v347
  %s358 = scalar_lea.vmem %s0, 64
  %v359 = vld [vmem:[%s358] sm:$0xf]
  %v360 = vld [vmem:[%s358 + $0x4] sm:$0xf]
  %v361 = vld [vmem:[%s358 + $0x8] sm:$0xf]
  %v362 = vld [vmem:[%s358 + $0xc] sm:$0xf]
  %v363 = vld [vmem:[%s358 + $0x10] sm:$0xf]
  %v364 = vld [vmem:[%s358 + $0x14] sm:$0xf]
  %v365 = vld [vmem:[%s358 + $0x18] sm:$0xf]
  %v366 = vld [vmem:[%s358 + $0x1c] sm:$0xf]
  %v375 = vunpack.c.l.b16 %v359
  %v376 = vunpack.c.l.b16 %v360
  %v377 = vunpack.c.l.b16 %v361
  %v378 = vunpack.c.l.b16 %v362
  %v379 = vunpack.c.l.b16 %v363
  %v380 = vunpack.c.l.b16 %v364
  %v381 = vunpack.c.l.b16 %v365
  %v382 = vunpack.c.l.b16 %v366
  %v383 = vpack.c.b16 %v376, %v375
  %v384 = vpack.c.b16 %v378, %v377
  %v385 = vpack.c.b16 %v380, %v379
  %v386 = vpack.c.b16 %v382, %v381
  %v388 = vsel %vm50, %v383, 0
  %v391 = vsel %vm50, %v384, 0
  %v394 = vsel %vm50, %v385, 0
  %v397 = vsel %vm50, %v386, 0
  %399 = vmatprep.subr.bf16.mxu0 0
  %400 = vmatpush1.bf16.msra.mxu0 0
  %401 = vmatprep.subr.bf16.mxu0 0
  %402 = vmatpush1.bf16.msra.mxu0 0
  %403 = vmatprep.subr.bf16.mxu0 0
  %404 = vmatpush1.bf16.msra.mxu0 0
  %405 = vmatprep.subr.bf16.mxu0 0
  %406 = vmatpush1.bf16.msra.mxu0 0
  %407 = vmatprep.subr.bf16.mxu0 0
  %408 = vmatpush1.bf16.msra.mxu0 0
  %409 = vmatprep.subr.bf16.mxu0 0
  %410 = vmatpush1.bf16.msra.mxu0 0
  %411 = vmatprep.subr.bf16.mxu0 0
  %412 = vmatpush1.bf16.msra.mxu0 0
  %413 = vmatprep.subr.bf16.mxu0 0
  %414 = vmatpush1.bf16.msra.mxu0 %v177
  %415 = vmatprep.subr.bf16.mxu0 0
  %416 = vmatpush2.bf16.msra.mxu0 0
  %417 = vmatprep.subr.bf16.mxu0 0
  %418 = vmatpush2.bf16.msra.mxu0 0
  %419 = vmatprep.subr.bf16.mxu0 0
  %420 = vmatpush2.bf16.msra.mxu0 0
  %421 = vmatprep.subr.bf16.mxu0 0
  %422 = vmatpush2.bf16.msra.mxu0 0
  %423 = vmatprep.subr.bf16.mxu0 0
  %424 = vmatpush2.bf16.msra.mxu0 0
  %425 = vmatprep.subr.bf16.mxu0 0
  %426 = vmatpush2.bf16.msra.mxu0 0
  %427 = vmatprep.subr.bf16.mxu0 0
  %428 = vmatpush2.bf16.msra.mxu0 0
  %429 = vmatprep.subr.bf16.mxu0 0
  %430 = vmatpush2.bf16.msra.mxu0 0
  %431 = vmatprep.mubr.bf16.mxu0 0
  %432 = vmatmul.mubr.bf16.gmra.mxu0 %v388
  %v433 = vpop.f32.mrf.mxu0
  %v434 = vadd.f32 0.0, %v433
  %v435 = vpop.f32.mrf.mxu0
  %v436 = vpop.f32.mrf.mxu0
  %v437 = vadd.f32 0.0, %v436
  %v438 = vpop.f32.mrf.mxu0
  %439 = vmatprep.mubr.bf16.mxu0 0
  %440 = vmatmul.mubr.bf16.gmra.mxu0 %v391
  %v441 = vpop.f32.mrf.mxu0
  %v442 = vadd.f32 0.0, %v441
  %v443 = vpop.f32.mrf.mxu0
  %v444 = vpop.f32.mrf.mxu0
  %v445 = vadd.f32 0.0, %v444
  %v446 = vpop.f32.mrf.mxu0
  %447 = vmatprep.mubr.bf16.mxu0 0
  %448 = vmatmul.mubr.bf16.gmra.mxu0 %v394
  %v449 = vpop.f32.mrf.mxu0
  %v450 = vadd.f32 0.0, %v449
  %v451 = vpop.f32.mrf.mxu0
  %v452 = vpop.f32.mrf.mxu0
  %v453 = vadd.f32 0.0, %v452
  %v454 = vpop.f32.mrf.mxu0
  %455 = vmatprep.mubr.bf16.mxu0 0
  %456 = vmatmul.mubr.bf16.gmra.mxu0 %v397
  %v457 = vpop.f32.mrf.mxu0
  %v458 = vadd.f32 0.0, %v457
  %v459 = vpop.f32.mrf.mxu0
  %v460 = vpop.f32.mrf.mxu0
  %v461 = vadd.f32 0.0, %v460
  %v462 = vpop.f32.mrf.mxu0
  %463 = vdwg.mxu0
  %v464 = vmax.f32 %v350, %v434
  %v465 = vmax.f32 %v351, %v437
  %v466 = vmax.f32 %v352, %v442
  %v467 = vmax.f32 %v353, %v445
  %v468 = vmax.f32 %v354, %v450
  %v469 = vmax.f32 %v355, %v453
  %v470 = vmax.f32 %v356, %v458
  %v471 = vmax.f32 %v357, %v461
  %s472 = scalar_lea.vmem %s0, 96
  %v473 = vld [vmem:[%s472] sm:$0xf]
  %v474 = vld [vmem:[%s472 + $0x4] sm:$0xf]
  %v475 = vld [vmem:[%s472 + $0x8] sm:$0xf]
  %v476 = vld [vmem:[%s472 + $0xc] sm:$0xf]
  %v477 = vld [vmem:[%s472 + $0x10] sm:$0xf]
  %v478 = vld [vmem:[%s472 + $0x14] sm:$0xf]
  %v479 = vld [vmem:[%s472 + $0x18] sm:$0xf]
  %v480 = vld [vmem:[%s472 + $0x1c] sm:$0xf]
  %v489 = vunpack.c.l.b16 %v473
  %v490 = vunpack.c.l.b16 %v474
  %v491 = vunpack.c.l.b16 %v475
  %v492 = vunpack.c.l.b16 %v476
  %v493 = vunpack.c.l.b16 %v477
  %v494 = vunpack.c.l.b16 %v478
  %v495 = vunpack.c.l.b16 %v479
  %v496 = vunpack.c.l.b16 %v480
  %v497 = vpack.c.b16 %v490, %v489
  %v498 = vpack.c.b16 %v492, %v491
  %v499 = vpack.c.b16 %v494, %v493
  %v500 = vpack.c.b16 %v496, %v495
  %v502 = vsel %vm50, %v497, 0
  %v505 = vsel %vm50, %v498, 0
  %v508 = vsel %vm50, %v499, 0
  %v511 = vsel %vm50, %v500, 0
  %513 = vmatprep.subr.bf16.mxu0 0
  %514 = vmatpush1.bf16.msra.mxu0 0
  %515 = vmatprep.subr.bf16.mxu0 0
  %516 = vmatpush1.bf16.msra.mxu0 0
  %517 = vmatprep.subr.bf16.mxu0 0
  %518 = vmatpush1.bf16.msra.mxu0 0
  %519 = vmatprep.subr.bf16.mxu0 0
  %520 = vmatpush1.bf16.msra.mxu0 0
  %521 = vmatprep.subr.bf16.mxu0 0
  %522 = vmatpush1.bf16.msra.mxu0 0
  %523 = vmatprep.subr.bf16.mxu0 0
  %524 = vmatpush1.bf16.msra.mxu0 0
  %525 = vmatprep.subr.bf16.mxu0 0
  %526 = vmatpush1.bf16.msra.mxu0 0
  %527 = vmatprep.subr.bf16.mxu0 0
  %528 = vmatpush1.bf16.msra.mxu0 %v177
  %529 = vmatprep.subr.bf16.mxu0 0
  %530 = vmatpush2.bf16.msra.mxu0 0
  %531 = vmatprep.subr.bf16.mxu0 0
  %532 = vmatpush2.bf16.msra.mxu0 0
  %533 = vmatprep.subr.bf16.mxu0 0
  %534 = vmatpush2.bf16.msra.mxu0 0
  %535 = vmatprep.subr.bf16.mxu0 0
  %536 = vmatpush2.bf16.msra.mxu0 0
  %537 = vmatprep.subr.bf16.mxu0 0
  %538 = vmatpush2.bf16.msra.mxu0 0
  %539 = vmatprep.subr.bf16.mxu0 0
  %540 = vmatpush2.bf16.msra.mxu0 0
  %541 = vmatprep.subr.bf16.mxu0 0
  %542 = vmatpush2.bf16.msra.mxu0 0
  %543 = vmatprep.subr.bf16.mxu0 0
  %544 = vmatpush2.bf16.msra.mxu0 0
  %545 = vmatprep.mubr.bf16.mxu0 0
  %546 = vmatmul.mubr.bf16.gmra.mxu0 %v502
  %v547 = vpop.f32.mrf.mxu0
  %v548 = vadd.f32 0.0, %v547
  %v549 = vpop.f32.mrf.mxu0
  %v550 = vpop.f32.mrf.mxu0
  %v551 = vadd.f32 0.0, %v550
  %v552 = vpop.f32.mrf.mxu0
  %553 = vmatprep.mubr.bf16.mxu0 0
  %554 = vmatmul.mubr.bf16.gmra.mxu0 %v505
  %v555 = vpop.f32.mrf.mxu0
  %v556 = vadd.f32 0.0, %v555
  %v557 = vpop.f32.mrf.mxu0
  %v558 = vpop.f32.mrf.mxu0
  %v559 = vadd.f32 0.0, %v558
  %v560 = vpop.f32.mrf.mxu0
  %561 = vmatprep.mubr.bf16.mxu0 0
  %562 = vmatmul.mubr.bf16.gmra.mxu0 %v508
  %v563 = vpop.f32.mrf.mxu0
  %v564 = vadd.f32 0.0, %v563
  %v565 = vpop.f32.mrf.mxu0
  %v566 = vpop.f32.mrf.mxu0
  %v567 = vadd.f32 0.0, %v566
  %v568 = vpop.f32.mrf.mxu0
  %569 = vmatprep.mubr.bf16.mxu0 0
  %570 = vmatmul.mubr.bf16.gmra.mxu0 %v511
  %v571 = vpop.f32.mrf.mxu0
  %v572 = vadd.f32 0.0, %v571
  %v573 = vpop.f32.mrf.mxu0
  %v574 = vpop.f32.mrf.mxu0
  %v575 = vadd.f32 0.0, %v574
  %v576 = vpop.f32.mrf.mxu0
  %577 = vdwg.mxu0
  %v578 = vmax.f32 %v464, %v548
  %v579 = vmax.f32 %v465, %v551
  %v580 = vmax.f32 %v466, %v556
  %v581 = vmax.f32 %v467, %v559
  %v582 = vmax.f32 %v468, %v564
  %v583 = vmax.f32 %v469, %v567
  %v584 = vmax.f32 %v470, %v572
  %v585 = vmax.f32 %v471, %v575
  %s586 = scalar_lea.vmem %s0, 128
  %v587 = vld [vmem:[%s586] sm:$0xf]
  %v588 = vld [vmem:[%s586 + $0x4] sm:$0xf]
  %v589 = vld [vmem:[%s586 + $0x8] sm:$0xf]
  %v590 = vld [vmem:[%s586 + $0xc] sm:$0xf]
  %v591 = vld [vmem:[%s586 + $0x10] sm:$0xf]
  %v592 = vld [vmem:[%s586 + $0x14] sm:$0xf]
  %v593 = vld [vmem:[%s586 + $0x18] sm:$0xf]
  %v594 = vld [vmem:[%s586 + $0x1c] sm:$0xf]
  %v603 = vunpack.c.l.b16 %v587
  %v604 = vunpack.c.l.b16 %v588
  %v605 = vunpack.c.l.b16 %v589
  %v606 = vunpack.c.l.b16 %v590
  %v607 = vunpack.c.l.b16 %v591
  %v608 = vunpack.c.l.b16 %v592
  %v609 = vunpack.c.l.b16 %v593
  %v610 = vunpack.c.l.b16 %v594
  %v611 = vpack.c.b16 %v604, %v603
  %v612 = vpack.c.b16 %v606, %v605
  %v613 = vpack.c.b16 %v608, %v607
  %v614 = vpack.c.b16 %v610, %v609
  %v616 = vsel %vm50, %v611, 0
  %v619 = vsel %vm50, %v612, 0
  %v622 = vsel %vm50, %v613, 0
  %v625 = vsel %vm50, %v614, 0
  %627 = vmatprep.subr.bf16.mxu0 0
  %628 = vmatpush1.bf16.msra.mxu0 0
  %629 = vmatprep.subr.bf16.mxu0 0
  %630 = vmatpush1.bf16.msra.mxu0 0
  %631 = vmatprep.subr.bf16.mxu0 0
  %632 = vmatpush1.bf16.msra.mxu0 0
  %633 = vmatprep.subr.bf16.mxu0 0
  %634 = vmatpush1.bf16.msra.mxu0 0
  %635 = vmatprep.subr.bf16.mxu0 0
  %636 = vmatpush1.bf16.msra.mxu0 0
  %637 = vmatprep.subr.bf16.mxu0 0
  %638 = vmatpush1.bf16.msra.mxu0 0
  %639 = vmatprep.subr.bf16.mxu0 0
  %640 = vmatpush1.bf16.msra.mxu0 0
  %641 = vmatprep.subr.bf16.mxu0 0
  %642 = vmatpush1.bf16.msra.mxu0 %v177
  %643 = vmatprep.subr.bf16.mxu0 0
  %644 = vmatpush2.bf16.msra.mxu0 0
  %645 = vmatprep.subr.bf16.mxu0 0
  %646 = vmatpush2.bf16.msra.mxu0 0
  %647 = vmatprep.subr.bf16.mxu0 0
  %648 = vmatpush2.bf16.msra.mxu0 0
  %649 = vmatprep.subr.bf16.mxu0 0
  %650 = vmatpush2.bf16.msra.mxu0 0
  %651 = vmatprep.subr.bf16.mxu0 0
  %652 = vmatpush2.bf16.msra.mxu0 0
  %653 = vmatprep.subr.bf16.mxu0 0
  %654 = vmatpush2.bf16.msra.mxu0 0
  %655 = vmatprep.subr.bf16.mxu0 0
  %656 = vmatpush2.bf16.msra.mxu0 0
  %657 = vmatprep.subr.bf16.mxu0 0
  %658 = vmatpush2.bf16.msra.mxu0 0
  %659 = vmatprep.mubr.bf16.mxu0 0
  %660 = vmatmul.mubr.bf16.gmra.mxu0 %v616
  %v661 = vpop.f32.mrf.mxu0
  %v662 = vadd.f32 0.0, %v661
  %v663 = vpop.f32.mrf.mxu0
  %v664 = vpop.f32.mrf.mxu0
  %v665 = vadd.f32 0.0, %v664
  %v666 = vpop.f32.mrf.mxu0
  %667 = vmatprep.mubr.bf16.mxu0 0
  %668 = vmatmul.mubr.bf16.gmra.mxu0 %v619
  %v669 = vpop.f32.mrf.mxu0
  %v670 = vadd.f32 0.0, %v669
  %v671 = vpop.f32.mrf.mxu0
  %v672 = vpop.f32.mrf.mxu0
  %v673 = vadd.f32 0.0, %v672
  %v674 = vpop.f32.mrf.mxu0
  %675 = vmatprep.mubr.bf16.mxu0 0
  %676 = vmatmul.mubr.bf16.gmra.mxu0 %v622
  %v677 = vpop.f32.mrf.mxu0
  %v678 = vadd.f32 0.0, %v677
  %v679 = vpop.f32.mrf.mxu0
  %v680 = vpop.f32.mrf.mxu0
  %v681 = vadd.f32 0.0, %v680
  %v682 = vpop.f32.mrf.mxu0
  %683 = vmatprep.mubr.bf16.mxu0 0
  %684 = vmatmul.mubr.bf16.gmra.mxu0 %v625
  %v685 = vpop.f32.mrf.mxu0
  %v686 = vadd.f32 0.0, %v685
  %v687 = vpop.f32.mrf.mxu0
  %v688 = vpop.f32.mrf.mxu0
  %v689 = vadd.f32 0.0, %v688
  %v690 = vpop.f32.mrf.mxu0
  %691 = vdwg.mxu0
  %v692 = vmax.f32 %v578, %v662
  %v693 = vmax.f32 %v579, %v665
  %v694 = vmax.f32 %v580, %v670
  %v695 = vmax.f32 %v581, %v673
  %v696 = vmax.f32 %v582, %v678
  %v697 = vmax.f32 %v583, %v681
  %v698 = vmax.f32 %v584, %v686
  %v699 = vmax.f32 %v585, %v689
  %s700 = scalar_lea.vmem %s0, 160
  %v701 = vld [vmem:[%s700] sm:$0xf]
  %v702 = vld [vmem:[%s700 + $0x4] sm:$0xf]
  %v703 = vld [vmem:[%s700 + $0x8] sm:$0xf]
  %v704 = vld [vmem:[%s700 + $0xc] sm:$0xf]
  %v705 = vld [vmem:[%s700 + $0x10] sm:$0xf]
  %v706 = vld [vmem:[%s700 + $0x14] sm:$0xf]
  %v707 = vld [vmem:[%s700 + $0x18] sm:$0xf]
  %v708 = vld [vmem:[%s700 + $0x1c] sm:$0xf]
  %v717 = vunpack.c.l.b16 %v701
  %v718 = vunpack.c.l.b16 %v702
  %v719 = vunpack.c.l.b16 %v703
  %v720 = vunpack.c.l.b16 %v704
  %v721 = vunpack.c.l.b16 %v705
  %v722 = vunpack.c.l.b16 %v706
  %v723 = vunpack.c.l.b16 %v707
  %v724 = vunpack.c.l.b16 %v708
  %v725 = vpack.c.b16 %v718, %v717
  %v726 = vpack.c.b16 %v720, %v719
  %v727 = vpack.c.b16 %v722, %v721
  %v728 = vpack.c.b16 %v724, %v723
  %v730 = vsel %vm50, %v725, 0
  %v733 = vsel %vm50, %v726, 0
  %v736 = vsel %vm50, %v727, 0
  %v739 = vsel %vm50, %v728, 0
  %741 = vmatprep.subr.bf16.mxu0 0
  %742 = vmatpush1.bf16.msra.mxu0 0
  %743 = vmatprep.subr.bf16.mxu0 0
  %744 = vmatpush1.bf16.msra.mxu0 0
  %745 = vmatprep.subr.bf16.mxu0 0
  %746 = vmatpush1.bf16.msra.mxu0 0
  %747 = vmatprep.subr.bf16.mxu0 0
  %748 = vmatpush1.bf16.msra.mxu0 0
  %749 = vmatprep.subr.bf16.mxu0 0
  %750 = vmatpush1.bf16.msra.mxu0 0
  %751 = vmatprep.subr.bf16.mxu0 0
  %752 = vmatpush1.bf16.msra.mxu0 0
  %753 = vmatprep.subr.bf16.mxu0 0
  %754 = vmatpush1.bf16.msra.mxu0 0
  %755 = vmatprep.subr.bf16.mxu0 0
  %756 = vmatpush1.bf16.msra.mxu0 %v177
  %757 = vmatprep.subr.bf16.mxu0 0
  %758 = vmatpush2.bf16.msra.mxu0 0
  %759 = vmatprep.subr.bf16.mxu0 0
  %760 = vmatpush2.bf16.msra.mxu0 0
  %761 = vmatprep.subr.bf16.mxu0 0
  %762 = vmatpush2.bf16.msra.mxu0 0
  %763 = vmatprep.subr.bf16.mxu0 0
  %764 = vmatpush2.bf16.msra.mxu0 0
  %765 = vmatprep.subr.bf16.mxu0 0
  %766 = vmatpush2.bf16.msra.mxu0 0
  %767 = vmatprep.subr.bf16.mxu0 0
  %768 = vmatpush2.bf16.msra.mxu0 0
  %769 = vmatprep.subr.bf16.mxu0 0
  %770 = vmatpush2.bf16.msra.mxu0 0
  %771 = vmatprep.subr.bf16.mxu0 0
  %772 = vmatpush2.bf16.msra.mxu0 0
  %773 = vmatprep.mubr.bf16.mxu0 0
  %774 = vmatmul.mubr.bf16.gmra.mxu0 %v730
  %v775 = vpop.f32.mrf.mxu0
  %v776 = vadd.f32 0.0, %v775
  %v777 = vpop.f32.mrf.mxu0
  %v778 = vpop.f32.mrf.mxu0
  %v779 = vadd.f32 0.0, %v778
  %v780 = vpop.f32.mrf.mxu0
  %781 = vmatprep.mubr.bf16.mxu0 0
  %782 = vmatmul.mubr.bf16.gmra.mxu0 %v733
  %v783 = vpop.f32.mrf.mxu0
  %v784 = vadd.f32 0.0, %v783
  %v785 = vpop.f32.mrf.mxu0
  %v786 = vpop.f32.mrf.mxu0
  %v787 = vadd.f32 0.0, %v786
  %v788 = vpop.f32.mrf.mxu0
  %789 = vmatprep.mubr.bf16.mxu0 0
  %790 = vmatmul.mubr.bf16.gmra.mxu0 %v736
  %v791 = vpop.f32.mrf.mxu0
  %v792 = vadd.f32 0.0, %v791
  %v793 = vpop.f32.mrf.mxu0
  %v794 = vpop.f32.mrf.mxu0
  %v795 = vadd.f32 0.0, %v794
  %v796 = vpop.f32.mrf.mxu0
  %797 = vmatprep.mubr.bf16.mxu0 0
  %798 = vmatmul.mubr.bf16.gmra.mxu0 %v739
  %v799 = vpop.f32.mrf.mxu0
  %v800 = vadd.f32 0.0, %v799
  %v801 = vpop.f32.mrf.mxu0
  %v802 = vpop.f32.mrf.mxu0
  %v803 = vadd.f32 0.0, %v802
  %v804 = vpop.f32.mrf.mxu0
  %805 = vdwg.mxu0
  %v806 = vmax.f32 %v692, %v776
  %v807 = vmax.f32 %v693, %v779
  %v808 = vmax.f32 %v694, %v784
  %v809 = vmax.f32 %v695, %v787
  %v810 = vmax.f32 %v696, %v792
  %v811 = vmax.f32 %v697, %v795
  %v812 = vmax.f32 %v698, %v800
  %v813 = vmax.f32 %v699, %v803
  %s814 = scalar_lea.vmem %s0, 192
  %v815 = vld [vmem:[%s814] sm:$0xf]
  %v816 = vld [vmem:[%s814 + $0x4] sm:$0xf]
  %v817 = vld [vmem:[%s814 + $0x8] sm:$0xf]
  %v818 = vld [vmem:[%s814 + $0xc] sm:$0xf]
  %v819 = vld [vmem:[%s814 + $0x10] sm:$0xf]
  %v820 = vld [vmem:[%s814 + $0x14] sm:$0xf]
  %v821 = vld [vmem:[%s814 + $0x18] sm:$0xf]
  %v822 = vld [vmem:[%s814 + $0x1c] sm:$0xf]
  %v831 = vunpack.c.l.b16 %v815
  %v832 = vunpack.c.l.b16 %v816
  %v833 = vunpack.c.l.b16 %v817
  %v834 = vunpack.c.l.b16 %v818
  %v835 = vunpack.c.l.b16 %v819
  %v836 = vunpack.c.l.b16 %v820
  %v837 = vunpack.c.l.b16 %v821
  %v838 = vunpack.c.l.b16 %v822
  %v839 = vpack.c.b16 %v832, %v831
  %v840 = vpack.c.b16 %v834, %v833
  %v841 = vpack.c.b16 %v836, %v835
  %v842 = vpack.c.b16 %v838, %v837
  %v844 = vsel %vm50, %v839, 0
  %v847 = vsel %vm50, %v840, 0
  %v850 = vsel %vm50, %v841, 0
  %v853 = vsel %vm50, %v842, 0
  %855 = vmatprep.subr.bf16.mxu0 0
  %856 = vmatpush1.bf16.msra.mxu0 0
  %857 = vmatprep.subr.bf16.mxu0 0
  %858 = vmatpush1.bf16.msra.mxu0 0
  %859 = vmatprep.subr.bf16.mxu0 0
  %860 = vmatpush1.bf16.msra.mxu0 0
  %861 = vmatprep.subr.bf16.mxu0 0
  %862 = vmatpush1.bf16.msra.mxu0 0
  %863 = vmatprep.subr.bf16.mxu0 0
  %864 = vmatpush1.bf16.msra.mxu0 0
  %865 = vmatprep.subr.bf16.mxu0 0
  %866 = vmatpush1.bf16.msra.mxu0 0
  %867 = vmatprep.subr.bf16.mxu0 0
  %868 = vmatpush1.bf16.msra.mxu0 0
  %869 = vmatprep.subr.bf16.mxu0 0
  %870 = vmatpush1.bf16.msra.mxu0 %v177
  %871 = vmatprep.subr.bf16.mxu0 0
  %872 = vmatpush2.bf16.msra.mxu0 0
  %873 = vmatprep.subr.bf16.mxu0 0
  %874 = vmatpush2.bf16.msra.mxu0 0
  %875 = vmatprep.subr.bf16.mxu0 0
  %876 = vmatpush2.bf16.msra.mxu0 0
  %877 = vmatprep.subr.bf16.mxu0 0
  %878 = vmatpush2.bf16.msra.mxu0 0
  %879 = vmatprep.subr.bf16.mxu0 0
  %880 = vmatpush2.bf16.msra.mxu0 0
  %881 = vmatprep.subr.bf16.mxu0 0
  %882 = vmatpush2.bf16.msra.mxu0 0
  %883 = vmatprep.subr.bf16.mxu0 0
  %884 = vmatpush2.bf16.msra.mxu0 0
  %885 = vmatprep.subr.bf16.mxu0 0
  %886 = vmatpush2.bf16.msra.mxu0 0
  %887 = vmatprep.mubr.bf16.mxu0 0
  %888 = vmatmul.mubr.bf16.gmra.mxu0 %v844
  %v889 = vpop.f32.mrf.mxu0
  %v890 = vadd.f32 0.0, %v889
  %v891 = vpop.f32.mrf.mxu0
  %v892 = vpop.f32.mrf.mxu0
  %v893 = vadd.f32 0.0, %v892
  %v894 = vpop.f32.mrf.mxu0
  %895 = vmatprep.mubr.bf16.mxu0 0
  %896 = vmatmul.mubr.bf16.gmra.mxu0 %v847
  %v897 = vpop.f32.mrf.mxu0
  %v898 = vadd.f32 0.0, %v897
  %v899 = vpop.f32.mrf.mxu0
  %v900 = vpop.f32.mrf.mxu0
  %v901 = vadd.f32 0.0, %v900
  %v902 = vpop.f32.mrf.mxu0
  %903 = vmatprep.mubr.bf16.mxu0 0
  %904 = vmatmul.mubr.bf16.gmra.mxu0 %v850
  %v905 = vpop.f32.mrf.mxu0
  %v906 = vadd.f32 0.0, %v905
  %v907 = vpop.f32.mrf.mxu0
  %v908 = vpop.f32.mrf.mxu0
  %v909 = vadd.f32 0.0, %v908
  %v910 = vpop.f32.mrf.mxu0
  %911 = vmatprep.mubr.bf16.mxu0 0
  %912 = vmatmul.mubr.bf16.gmra.mxu0 %v853
  %v913 = vpop.f32.mrf.mxu0
  %v914 = vadd.f32 0.0, %v913
  %v915 = vpop.f32.mrf.mxu0
  %v916 = vpop.f32.mrf.mxu0
  %v917 = vadd.f32 0.0, %v916
  %v918 = vpop.f32.mrf.mxu0
  %919 = vdwg.mxu0
  %v920 = vmax.f32 %v806, %v890
  %v921 = vmax.f32 %v807, %v893
  %v922 = vmax.f32 %v808, %v898
  %v923 = vmax.f32 %v809, %v901
  %v924 = vmax.f32 %v810, %v906
  %v925 = vmax.f32 %v811, %v909
  %v926 = vmax.f32 %v812, %v914
  %v927 = vmax.f32 %v813, %v917
  %s928 = scalar_lea.vmem %s0, 224
  %v929 = vld [vmem:[%s928] sm:$0xf]
  %v930 = vld [vmem:[%s928 + $0x4] sm:$0xf]
  %v931 = vld [vmem:[%s928 + $0x8] sm:$0xf]
  %v932 = vld [vmem:[%s928 + $0xc] sm:$0xf]
  %v933 = vld [vmem:[%s928 + $0x10] sm:$0xf]
  %v934 = vld [vmem:[%s928 + $0x14] sm:$0xf]
  %v935 = vld [vmem:[%s928 + $0x18] sm:$0xf]
  %v936 = vld [vmem:[%s928 + $0x1c] sm:$0xf]
  %v945 = vunpack.c.l.b16 %v929
  %v946 = vunpack.c.l.b16 %v930
  %v947 = vunpack.c.l.b16 %v931
  %v948 = vunpack.c.l.b16 %v932
  %v949 = vunpack.c.l.b16 %v933
  %v950 = vunpack.c.l.b16 %v934
  %v951 = vunpack.c.l.b16 %v935
  %v952 = vunpack.c.l.b16 %v936
  %v953 = vpack.c.b16 %v946, %v945
  %v954 = vpack.c.b16 %v948, %v947
  %v955 = vpack.c.b16 %v950, %v949
  %v956 = vpack.c.b16 %v952, %v951
  %v958 = vsel %vm50, %v953, 0
  %v961 = vsel %vm50, %v954, 0
  %v964 = vsel %vm50, %v955, 0
  %v967 = vsel %vm50, %v956, 0
  %969 = vmatprep.subr.bf16.mxu0 0
  %970 = vmatpush1.bf16.msra.mxu0 0
  %971 = vmatprep.subr.bf16.mxu0 0
  %972 = vmatpush1.bf16.msra.mxu0 0
  %973 = vmatprep.subr.bf16.mxu0 0
  %974 = vmatpush1.bf16.msra.mxu0 0
  %975 = vmatprep.subr.bf16.mxu0 0
  %976 = vmatpush1.bf16.msra.mxu0 0
  %977 = vmatprep.subr.bf16.mxu0 0
  %978 = vmatpush1.bf16.msra.mxu0 0
  %979 = vmatprep.subr.bf16.mxu0 0
  %980 = vmatpush1.bf16.msra.mxu0 0
  %981 = vmatprep.subr.bf16.mxu0 0
  %982 = vmatpush1.bf16.msra.mxu0 0
  %983 = vmatprep.subr.bf16.mxu0 0
  %984 = vmatpush1.bf16.msra.mxu0 %v177
  %985 = vmatprep.subr.bf16.mxu0 0
  %986 = vmatpush2.bf16.msra.mxu0 0
  %987 = vmatprep.subr.bf16.mxu0 0
  %988 = vmatpush2.bf16.msra.mxu0 0
  %989 = vmatprep.subr.bf16.mxu0 0
  %990 = vmatpush2.bf16.msra.mxu0 0
  %991 = vmatprep.subr.bf16.mxu0 0
  %992 = vmatpush2.bf16.msra.mxu0 0
  %993 = vmatprep.subr.bf16.mxu0 0
  %994 = vmatpush2.bf16.msra.mxu0 0
  %995 = vmatprep.subr.bf16.mxu0 0
  %996 = vmatpush2.bf16.msra.mxu0 0
  %997 = vmatprep.subr.bf16.mxu0 0
  %998 = vmatpush2.bf16.msra.mxu0 0
  %999 = vmatprep.subr.bf16.mxu0 0
  %1000 = vmatpush2.bf16.msra.mxu0 0
  %1001 = vmatprep.mubr.bf16.mxu0 0
  %1002 = vmatmul.mubr.bf16.gmra.mxu0 %v958
  %v1003 = vpop.f32.mrf.mxu0
  %v1004 = vadd.f32 0.0, %v1003
  %v1005 = vpop.f32.mrf.mxu0
  %v1006 = vpop.f32.mrf.mxu0
  %v1007 = vadd.f32 0.0, %v1006
  %v1008 = vpop.f32.mrf.mxu0
  %1009 = vmatprep.mubr.bf16.mxu0 0
  %1010 = vmatmul.mubr.bf16.gmra.mxu0 %v961
  %v1011 = vpop.f32.mrf.mxu0
  %v1012 = vadd.f32 0.0, %v1011
  %v1013 = vpop.f32.mrf.mxu0
  %v1014 = vpop.f32.mrf.mxu0
  %v1015 = vadd.f32 0.0, %v1014
  %v1016 = vpop.f32.mrf.mxu0
  %1017 = vmatprep.mubr.bf16.mxu0 0
  %1018 = vmatmul.mubr.bf16.gmra.mxu0 %v964
  %v1019 = vpop.f32.mrf.mxu0
  %v1020 = vadd.f32 0.0, %v1019
  %v1021 = vpop.f32.mrf.mxu0
  %v1022 = vpop.f32.mrf.mxu0
  %v1023 = vadd.f32 0.0, %v1022
  %v1024 = vpop.f32.mrf.mxu0
  %1025 = vmatprep.mubr.bf16.mxu0 0
  %1026 = vmatmul.mubr.bf16.gmra.mxu0 %v967
  %v1027 = vpop.f32.mrf.mxu0
  %v1028 = vadd.f32 0.0, %v1027
  %v1029 = vpop.f32.mrf.mxu0
  %v1030 = vpop.f32.mrf.mxu0
  %v1031 = vadd.f32 0.0, %v1030
  %v1032 = vpop.f32.mrf.mxu0
  %1033 = vdwg.mxu0
  %v1034 = vmax.f32 %v920, %v1004
  %v1035 = vmax.f32 %v921, %v1007
  %v1036 = vmax.f32 %v922, %v1012
  %v1037 = vmax.f32 %v923, %v1015
  %v1038 = vmax.f32 %v924, %v1020
  %v1039 = vmax.f32 %v925, %v1023
  %v1040 = vmax.f32 %v926, %v1028
  %v1041 = vmax.f32 %v927, %v1031
  %v1042 = vadd.f32 %v1034, %v105
  %v1043 = vadd.f32 %v1035, %v108
  %v1044 = vadd.f32 %v1036, %v113
  %v1045 = vadd.f32 %v1037, %v116
  %v1046 = vadd.f32 %v1038, %v121
  %v1047 = vadd.f32 %v1039, %v124
  %v1048 = vadd.f32 %v1040, %v129
  %v1049 = vadd.f32 %v1041, %v132
  %v1050 = vld [vmem:[%s4] sm:$0x1]
  %v1052 = vlaneseq
  %v1053 = vshrl.u32 %v1052, 7
  %v1054 = vsub.s32 0, %v1053
  %v1055 = vrot.slane %v1050, %v1054
  %v1057 = vadd.f32 %v1042, %v1055
  %v1058 = vadd.f32 %v1043, %v1055
  %v1059 = vadd.f32 %v1044, %v1055
  %v1060 = vadd.f32 %v1045, %v1055
  %v1061 = vadd.f32 %v1046, %v1055
  %v1062 = vadd.f32 %v1047, %v1055
  %v1063 = vadd.f32 %v1048, %v1055
  %v1064 = vadd.f32 %v1049, %v1055
  %vm1065 = vcmp.gt.f32.partialorder %v1057, 0.0
  %vm1066 = vcmp.gt.f32.partialorder %v1058, 0.0
  %vm1067 = vcmp.gt.f32.partialorder %v1059, 0.0
  %vm1068 = vcmp.gt.f32.partialorder %v1060, 0.0
  %vm1069 = vcmp.gt.f32.partialorder %v1061, 0.0
  %vm1070 = vcmp.gt.f32.partialorder %v1062, 0.0
  %vm1071 = vcmp.gt.f32.partialorder %v1063, 0.0
  %vm1072 = vcmp.gt.f32.partialorder %v1064, 0.0
  %v1073 = vmul.f32 %v1057, 0.2
  %v1074 = vmul.f32 %v1058, 0.2
  %v1075 = vmul.f32 %v1059, 0.2
  %v1076 = vmul.f32 %v1060, 0.2
  %v1077 = vmul.f32 %v1061, 0.2
  %v1078 = vmul.f32 %v1062, 0.2
  %v1079 = vmul.f32 %v1063, 0.2
  %v1080 = vmul.f32 %v1064, 0.2
  %v1081 = vsel %vm1065, %v1057, %v1073
  %v1082 = vsel %vm1066, %v1058, %v1074
  %v1083 = vsel %vm1067, %v1059, %v1075
  %v1084 = vsel %vm1068, %v1060, %v1076
  %v1085 = vsel %vm1069, %v1061, %v1077
  %v1086 = vsel %vm1070, %v1062, %v1078
  %v1087 = vsel %vm1071, %v1063, %v1079
  %v1088 = vsel %vm1072, %v1064, %v1080
  %v1089 = vpack.c.bf16 %v1082, %v1081
  %v1090 = vpack.c.bf16 %v1084, %v1083
  %v1091 = vpack.c.bf16 %v1086, %v1085
  %v1092 = vpack.c.bf16 %v1088, %v1087
  %v1097 = vunpack.c.l.b16 %v1089
  %v1098 = vunpack.c.h.b16 %v1089
  %v1099 = vunpack.c.l.b16 %v1090
  %v1100 = vunpack.c.h.b16 %v1090
  %v1101 = vunpack.c.l.b16 %v1091
  %v1102 = vunpack.c.h.b16 %v1091
  %v1103 = vunpack.c.l.b16 %v1092
  %v1104 = vunpack.c.h.b16 %v1092
  %v1105 = vpack.c.b16 %v1097, %v1097
  %v1106 = vpack.c.b16 %v1098, %v1098
  %v1107 = vpack.c.b16 %v1099, %v1099
  %v1108 = vpack.c.b16 %v1100, %v1100
  %v1109 = vpack.c.b16 %v1101, %v1101
  %v1110 = vpack.c.b16 %v1102, %v1102
  %v1111 = vpack.c.b16 %v1103, %v1103
  %v1112 = vpack.c.b16 %v1104, %v1104
  %vm1121 = vcmask 519168
  %1122 = vst.msk [vmem:[%s5] sm:$0xf] %vm1121, %v1105
  %1123 = vst.msk [vmem:[%s5 + $0x4] sm:$0xf] %vm1121, %v1106
  %1124 = vst.msk [vmem:[%s5 + $0x8] sm:$0xf] %vm1121, %v1107
  %1125 = vst.msk [vmem:[%s5 + $0xc] sm:$0xf] %vm1121, %v1108
  %1126 = vst.msk [vmem:[%s5 + $0x10] sm:$0xf] %vm1121, %v1109
  %1127 = vst.msk [vmem:[%s5 + $0x14] sm:$0xf] %vm1121, %v1110
  %1128 = vst.msk [vmem:[%s5 + $0x18] sm:$0xf] %vm1121, %v1111
  %1129 = vst.msk [vmem:[%s5 + $0x1c] sm:$0xf] %vm1121, %v1112
  // Predicated region
  $region22: #{dgcnn_forward.6} parent=0 // pred_check
    _
  $region23: #{dgcnn_forward.6} parent=0 // pred_check_branch
    %1131 = sbr.rel (0) target = $region25
  $region24: #{dgcnn_forward.6} parent=0 // pred_region
    _
  $region25: #{dgcnn_forward.6} parent=0 // pred_fallthru
    _
  // Predicated region
  $region26: #{dgcnn_forward.6} parent=0 // pred_check
    _
  $region27: #{dgcnn_forward.6} parent=0 // pred_check_branch
    %1133 = sbr.rel (0) target = $region29
  $region28: #{dgcnn_forward.6} parent=0 // pred_region
    _
  $region29: #{dgcnn_forward.6} parent=0 // pred_fallthru
    _

// kernel: dgcnn_forward.7
$region0: #{dgcnn_forward.7}
  #allocation0 [shape = 'u32[]', space=smem, size = 0x4, offset = 0x4, fixed_abs, tag = 'smem constant byte address 0x4 - core index']
  #allocation1 [shape = 'u32[144,128]{1,0:T(1,128)}', space=vmem, size = 0x12000, scoped, tag = 'internal scratch']
  %s0 = inlined_call_operand.vmem [shape: bf16[8,64,64], index: 0, kind: input, shape index: {}]
  %s1 = inlined_call_operand.vmem [shape: bf16[64,64], index: 1, kind: input, shape index: {}]
  %s2 = inlined_call_operand.vmem [shape: bf16[64,64], index: 2, kind: input, shape index: {}]
  %s3 = inlined_call_operand.vmem [shape: bf16[64,64], index: 3, kind: input, shape index: {}]
  %s4 = inlined_call_operand.vmem [shape: f32[1,64], index: 4, kind: input, shape index: {}]
  %s5 = inlined_call_operand.vmem [shape: bf16[64,64], index: 5, kind: output, shape index: {}]
  %s6 = sld [smem:[#allocation0]]
  $region30: #{dgcnn_forward.7} parent=0
    _
  %s8 = ssub.s32 1, %s6
  %s9 = scalar_select 0, %s8, %s6
  // Predicated region
  $region2: #{dgcnn_forward.7} parent=0 // pred_check
    _
  $region3: #{dgcnn_forward.7} parent=0 // pred_check_branch
    %11 = sbr.rel (0) target = $region5
  $region4: #{dgcnn_forward.7} parent=0 // pred_region
    _
  $region5: #{dgcnn_forward.7} parent=0 // pred_fallthru
    _
  // Predicated region
  $region6: #{dgcnn_forward.7} parent=0 // pred_check
    _
  $region7: #{dgcnn_forward.7} parent=0 // pred_check_branch
    %13 = sbr.rel (0) target = $region9
  $region8: #{dgcnn_forward.7} parent=0 // pred_region
    _
  $region9: #{dgcnn_forward.7} parent=0 // pred_fallthru
    _
  // Predicated region
  $region10: #{dgcnn_forward.7} parent=0 // pred_check
    _
  $region11: #{dgcnn_forward.7} parent=0 // pred_check_branch
    %15 = sbr.rel (0) target = $region13
  $region12: #{dgcnn_forward.7} parent=0 // pred_region
    _
  $region13: #{dgcnn_forward.7} parent=0 // pred_fallthru
    _
  // Predicated region
  $region14: #{dgcnn_forward.7} parent=0 // pred_check
    _
  $region15: #{dgcnn_forward.7} parent=0 // pred_check_branch
    %17 = sbr.rel (0) target = $region17
  $region16: #{dgcnn_forward.7} parent=0 // pred_region
    _
  $region17: #{dgcnn_forward.7} parent=0 // pred_fallthru
    _
  // Predicated region
  $region18: #{dgcnn_forward.7} parent=0 // pred_check
    _
  $region19: #{dgcnn_forward.7} parent=0 // pred_check_branch
    %19 = sbr.rel (0) target = $region21
  $region20: #{dgcnn_forward.7} parent=0 // pred_region
    _
  $region21: #{dgcnn_forward.7} parent=0 // pred_fallthru
    _
  %v21 = vld [vmem:[%s1] sm:$0xf]
  %v22 = vld [vmem:[%s1 + $0x4] sm:$0xf]
  %v23 = vld [vmem:[%s1 + $0x8] sm:$0xf]
  %v24 = vld [vmem:[%s1 + $0xc] sm:$0xf]
  %v25 = vld [vmem:[%s1 + $0x10] sm:$0xf]
  %v26 = vld [vmem:[%s1 + $0x14] sm:$0xf]
  %v27 = vld [vmem:[%s1 + $0x18] sm:$0xf]
  %v28 = vld [vmem:[%s1 + $0x1c] sm:$0xf]
  %v29 = vld [vmem:[%s3] sm:$0xf]
  %v30 = vld [vmem:[%s3 + $0x4] sm:$0xf]
  %v31 = vld [vmem:[%s3 + $0x8] sm:$0xf]
  %v32 = vld [vmem:[%s3 + $0xc] sm:$0xf]
  %v33 = vld [vmem:[%s3 + $0x10] sm:$0xf]
  %v34 = vld [vmem:[%s3 + $0x14] sm:$0xf]
  %v35 = vld [vmem:[%s3 + $0x18] sm:$0xf]
  %v36 = vld [vmem:[%s3 + $0x1c] sm:$0xf]
  %v45 = vunpack.c.l.b16 %v21
  %v46 = vunpack.c.l.b16 %v22
  %v47 = vunpack.c.l.b16 %v23
  %v48 = vunpack.c.l.b16 %v24
  %v49 = vunpack.c.l.b16 %v25
  %v50 = vunpack.c.l.b16 %v26
  %v51 = vunpack.c.l.b16 %v27
  %v52 = vunpack.c.l.b16 %v28
  %v53 = vpack.c.b16 %v46, %v45
  %v54 = vpack.c.b16 %v48, %v47
  %v55 = vpack.c.b16 %v50, %v49
  %v56 = vpack.c.b16 %v52, %v51
  %v65 = vunpack.c.l.b16 %v29
  %v66 = vunpack.c.l.b16 %v30
  %v67 = vunpack.c.l.b16 %v31
  %v68 = vunpack.c.l.b16 %v32
  %v69 = vunpack.c.l.b16 %v33
  %v70 = vunpack.c.l.b16 %v34
  %v71 = vunpack.c.l.b16 %v35
  %v72 = vunpack.c.l.b16 %v36
  %v73 = vpack.c.b16 %v66, %v65
  %v74 = vpack.c.b16 %v68, %v67
  %v75 = vpack.c.b16 %v70, %v69
  %v76 = vpack.c.b16 %v72, %v71
  %vm81 = vcmask 523264
  %v83 = vsel %vm81, %v53, 0
  %v86 = vsel %vm81, %v54, 0
  %v89 = vsel %vm81, %v55, 0
  %v92 = vsel %vm81, %v56, 0
  %94 = vmatprep.subr.bf16.mxu0 0
  %95 = vmatpush1.bf16.msra.mxu0 0
  %96 = vmatprep.subr.bf16.mxu0 0
  %97 = vmatpush1.bf16.msra.mxu0 0
  %98 = vmatprep.subr.bf16.mxu0 0
  %99 = vmatpush1.bf16.msra.mxu0 0
  %100 = vmatprep.subr.bf16.mxu0 0
  %101 = vmatpush1.bf16.msra.mxu0 0
  %102 = vmatprep.subr.bf16.mxu0 0
  %103 = vmatpush1.bf16.msra.mxu0 %v76
  %104 = vmatprep.subr.bf16.mxu0 0
  %105 = vmatpush1.bf16.msra.mxu0 %v75
  %106 = vmatprep.subr.bf16.mxu0 0
  %107 = vmatpush1.bf16.msra.mxu0 %v74
  %108 = vmatprep.subr.bf16.mxu0 0
  %109 = vmatpush1.bf16.msra.mxu0 %v73
  %110 = vmatprep.subr.bf16.mxu0 0
  %111 = vmatpush2.bf16.msra.mxu0 0
  %112 = vmatprep.subr.bf16.mxu0 0
  %113 = vmatpush2.bf16.msra.mxu0 0
  %114 = vmatprep.subr.bf16.mxu0 0
  %115 = vmatpush2.bf16.msra.mxu0 0
  %116 = vmatprep.subr.bf16.mxu0 0
  %117 = vmatpush2.bf16.msra.mxu0 0
  %118 = vmatprep.subr.bf16.mxu0 0
  %119 = vmatpush2.bf16.msra.mxu0 0
  %120 = vmatprep.subr.bf16.mxu0 0
  %121 = vmatpush2.bf16.msra.mxu0 0
  %122 = vmatprep.subr.bf16.mxu0 0
  %123 = vmatpush2.bf16.msra.mxu0 0
  %124 = vmatprep.subr.bf16.mxu0 0
  %125 = vmatpush2.bf16.msra.mxu0 0
  %126 = vmatprep.mubr.bf16.mxu0 0
  %127 = vmatmul.mubr.bf16.gmra.mxu0 %v83
  %v128 = vpop.f32.mrf.mxu0
  %v129 = vadd.f32 0.0, %v128
  %v130 = vpop.f32.mrf.mxu0
  %v131 = vpop.f32.mrf.mxu0
  %v132 = vadd.f32 0.0, %v131
  %v133 = vpop.f32.mrf.mxu0
  %134 = vmatprep.mubr.bf16.mxu0 0
  %135 = vmatmul.mubr.bf16.gmra.mxu0 %v86
  %v136 = vpop.f32.mrf.mxu0
  %v137 = vadd.f32 0.0, %v136
  %v138 = vpop.f32.mrf.mxu0
  %v139 = vpop.f32.mrf.mxu0
  %v140 = vadd.f32 0.0, %v139
  %v141 = vpop.f32.mrf.mxu0
  %142 = vmatprep.mubr.bf16.mxu0 0
  %143 = vmatmul.mubr.bf16.gmra.mxu0 %v89
  %v144 = vpop.f32.mrf.mxu0
  %v145 = vadd.f32 0.0, %v144
  %v146 = vpop.f32.mrf.mxu0
  %v147 = vpop.f32.mrf.mxu0
  %v148 = vadd.f32 0.0, %v147
  %v149 = vpop.f32.mrf.mxu0
  %150 = vmatprep.mubr.bf16.mxu0 0
  %151 = vmatmul.mubr.bf16.gmra.mxu0 %v92
  %v152 = vpop.f32.mrf.mxu0
  %v153 = vadd.f32 0.0, %v152
  %v154 = vpop.f32.mrf.mxu0
  %v155 = vpop.f32.mrf.mxu0
  %v156 = vadd.f32 0.0, %v155
  %v157 = vpop.f32.mrf.mxu0
  %158 = vdwg.mxu0
  %v159 = vld [vmem:[%s0] sm:$0xf]
  %v160 = vld [vmem:[%s0 + $0x4] sm:$0xf]
  %v161 = vld [vmem:[%s0 + $0x8] sm:$0xf]
  %v162 = vld [vmem:[%s0 + $0xc] sm:$0xf]
  %v163 = vld [vmem:[%s0 + $0x10] sm:$0xf]
  %v164 = vld [vmem:[%s0 + $0x14] sm:$0xf]
  %v165 = vld [vmem:[%s0 + $0x18] sm:$0xf]
  %v166 = vld [vmem:[%s0 + $0x1c] sm:$0xf]
  %v167 = vld [vmem:[%s2] sm:$0xf]
  %v168 = vld [vmem:[%s2 + $0x4] sm:$0xf]
  %v169 = vld [vmem:[%s2 + $0x8] sm:$0xf]
  %v170 = vld [vmem:[%s2 + $0xc] sm:$0xf]
  %v171 = vld [vmem:[%s2 + $0x10] sm:$0xf]
  %v172 = vld [vmem:[%s2 + $0x14] sm:$0xf]
  %v173 = vld [vmem:[%s2 + $0x18] sm:$0xf]
  %v174 = vld [vmem:[%s2 + $0x1c] sm:$0xf]
  %v183 = vunpack.c.l.b16 %v159
  %v184 = vunpack.c.l.b16 %v160
  %v185 = vunpack.c.l.b16 %v161
  %v186 = vunpack.c.l.b16 %v162
  %v187 = vunpack.c.l.b16 %v163
  %v188 = vunpack.c.l.b16 %v164
  %v189 = vunpack.c.l.b16 %v165
  %v190 = vunpack.c.l.b16 %v166
  %v191 = vpack.c.b16 %v184, %v183
  %v192 = vpack.c.b16 %v186, %v185
  %v193 = vpack.c.b16 %v188, %v187
  %v194 = vpack.c.b16 %v190, %v189
  %v203 = vunpack.c.l.b16 %v167
  %v204 = vunpack.c.l.b16 %v168
  %v205 = vunpack.c.l.b16 %v169
  %v206 = vunpack.c.l.b16 %v170
  %v207 = vunpack.c.l.b16 %v171
  %v208 = vunpack.c.l.b16 %v172
  %v209 = vunpack.c.l.b16 %v173
  %v210 = vunpack.c.l.b16 %v174
  %v211 = vpack.c.b16 %v204, %v203
  %v212 = vpack.c.b16 %v206, %v205
  %v213 = vpack.c.b16 %v208, %v207
  %v214 = vpack.c.b16 %v210, %v209
  %v220 = vsel %vm81, %v191, 0
  %v223 = vsel %vm81, %v192, 0
  %v226 = vsel %vm81, %v193, 0
  %v229 = vsel %vm81, %v194, 0
  %231 = vmatprep.subr.bf16.mxu0 0
  %232 = vmatpush1.bf16.msra.mxu0 0
  %233 = vmatprep.subr.bf16.mxu0 0
  %234 = vmatpush1.bf16.msra.mxu0 0
  %235 = vmatprep.subr.bf16.mxu0 0
  %236 = vmatpush1.bf16.msra.mxu0 0
  %237 = vmatprep.subr.bf16.mxu0 0
  %238 = vmatpush1.bf16.msra.mxu0 0
  %239 = vmatprep.subr.bf16.mxu0 0
  %240 = vmatpush1.bf16.msra.mxu0 %v214
  %241 = vmatprep.subr.bf16.mxu0 0
  %242 = vmatpush1.bf16.msra.mxu0 %v213
  %243 = vmatprep.subr.bf16.mxu0 0
  %244 = vmatpush1.bf16.msra.mxu0 %v212
  %245 = vmatprep.subr.bf16.mxu0 0
  %246 = vmatpush1.bf16.msra.mxu0 %v211
  %247 = vmatprep.subr.bf16.mxu0 0
  %248 = vmatpush2.bf16.msra.mxu0 0
  %249 = vmatprep.subr.bf16.mxu0 0
  %250 = vmatpush2.bf16.msra.mxu0 0
  %251 = vmatprep.subr.bf16.mxu0 0
  %252 = vmatpush2.bf16.msra.mxu0 0
  %253 = vmatprep.subr.bf16.mxu0 0
  %254 = vmatpush2.bf16.msra.mxu0 0
  %255 = vmatprep.subr.bf16.mxu0 0
  %256 = vmatpush2.bf16.msra.mxu0 0
  %257 = vmatprep.subr.bf16.mxu0 0
  %258 = vmatpush2.bf16.msra.mxu0 0
  %259 = vmatprep.subr.bf16.mxu0 0
  %260 = vmatpush2.bf16.msra.mxu0 0
  %261 = vmatprep.subr.bf16.mxu0 0
  %262 = vmatpush2.bf16.msra.mxu0 0
  %263 = vmatprep.mubr.bf16.mxu0 0
  %264 = vmatmul.mubr.bf16.gmra.mxu0 %v220
  %v265 = vpop.f32.mrf.mxu0
  %v266 = vadd.f32 0.0, %v265
  %v267 = vpop.f32.mrf.mxu0
  %v268 = vpop.f32.mrf.mxu0
  %v269 = vadd.f32 0.0, %v268
  %v270 = vpop.f32.mrf.mxu0
  %271 = vmatprep.mubr.bf16.mxu0 0
  %272 = vmatmul.mubr.bf16.gmra.mxu0 %v223
  %v273 = vpop.f32.mrf.mxu0
  %v274 = vadd.f32 0.0, %v273
  %v275 = vpop.f32.mrf.mxu0
  %v276 = vpop.f32.mrf.mxu0
  %v277 = vadd.f32 0.0, %v276
  %v278 = vpop.f32.mrf.mxu0
  %279 = vmatprep.mubr.bf16.mxu0 0
  %280 = vmatmul.mubr.bf16.gmra.mxu0 %v226
  %v281 = vpop.f32.mrf.mxu0
  %v282 = vadd.f32 0.0, %v281
  %v283 = vpop.f32.mrf.mxu0
  %v284 = vpop.f32.mrf.mxu0
  %v285 = vadd.f32 0.0, %v284
  %v286 = vpop.f32.mrf.mxu0
  %287 = vmatprep.mubr.bf16.mxu0 0
  %288 = vmatmul.mubr.bf16.gmra.mxu0 %v229
  %v289 = vpop.f32.mrf.mxu0
  %v290 = vadd.f32 0.0, %v289
  %v291 = vpop.f32.mrf.mxu0
  %v292 = vpop.f32.mrf.mxu0
  %v293 = vadd.f32 0.0, %v292
  %v294 = vpop.f32.mrf.mxu0
  %295 = vdwg.mxu0
  %s296 = scalar_lea.vmem %s0, 32
  %v297 = vld [vmem:[%s296] sm:$0xf]
  %v298 = vld [vmem:[%s296 + $0x4] sm:$0xf]
  %v299 = vld [vmem:[%s296 + $0x8] sm:$0xf]
  %v300 = vld [vmem:[%s296 + $0xc] sm:$0xf]
  %v301 = vld [vmem:[%s296 + $0x10] sm:$0xf]
  %v302 = vld [vmem:[%s296 + $0x14] sm:$0xf]
  %v303 = vld [vmem:[%s296 + $0x18] sm:$0xf]
  %v304 = vld [vmem:[%s296 + $0x1c] sm:$0xf]
  %v313 = vunpack.c.l.b16 %v297
  %v314 = vunpack.c.l.b16 %v298
  %v315 = vunpack.c.l.b16 %v299
  %v316 = vunpack.c.l.b16 %v300
  %v317 = vunpack.c.l.b16 %v301
  %v318 = vunpack.c.l.b16 %v302
  %v319 = vunpack.c.l.b16 %v303
  %v320 = vunpack.c.l.b16 %v304
  %v321 = vpack.c.b16 %v314, %v313
  %v322 = vpack.c.b16 %v316, %v315
  %v323 = vpack.c.b16 %v318, %v317
  %v324 = vpack.c.b16 %v320, %v319
  %v326 = vsel %vm81, %v321, 0
  %v329 = vsel %vm81, %v322, 0
  %v332 = vsel %vm81, %v323, 0
  %v335 = vsel %vm81, %v324, 0
  %337 = vmatprep.subr.bf16.mxu0 0
  %338 = vmatpush1.bf16.msra.mxu0 0
  %339 = vmatprep.subr.bf16.mxu0 0
  %340 = vmatpush1.bf16.msra.mxu0 0
  %341 = vmatprep.subr.bf16.mxu0 0
  %342 = vmatpush1.bf16.msra.mxu0 0
  %343 = vmatprep.subr.bf16.mxu0 0
  %344 = vmatpush1.bf16.msra.mxu0 0
  %345 = vmatprep.subr.bf16.mxu0 0
  %346 = vmatpush1.bf16.msra.mxu0 %v214
  %347 = vmatprep.subr.bf16.mxu0 0
  %348 = vmatpush1.bf16.msra.mxu0 %v213
  %349 = vmatprep.subr.bf16.mxu0 0
  %350 = vmatpush1.bf16.msra.mxu0 %v212
  %351 = vmatprep.subr.bf16.mxu0 0
  %352 = vmatpush1.bf16.msra.mxu0 %v211
  %353 = vmatprep.subr.bf16.mxu0 0
  %354 = vmatpush2.bf16.msra.mxu0 0
  %355 = vmatprep.subr.bf16.mxu0 0
  %356 = vmatpush2.bf16.msra.mxu0 0
  %357 = vmatprep.subr.bf16.mxu0 0
  %358 = vmatpush2.bf16.msra.mxu0 0
  %359 = vmatprep.subr.bf16.mxu0 0
  %360 = vmatpush2.bf16.msra.mxu0 0
  %361 = vmatprep.subr.bf16.mxu0 0
  %362 = vmatpush2.bf16.msra.mxu0 0
  %363 = vmatprep.subr.bf16.mxu0 0
  %364 = vmatpush2.bf16.msra.mxu0 0
  %365 = vmatprep.subr.bf16.mxu0 0
  %366 = vmatpush2.bf16.msra.mxu0 0
  %367 = vmatprep.subr.bf16.mxu0 0
  %368 = vmatpush2.bf16.msra.mxu0 0
  %369 = vmatprep.mubr.bf16.mxu0 0
  %370 = vmatmul.mubr.bf16.gmra.mxu0 %v326
  %v371 = vpop.f32.mrf.mxu0
  %v372 = vadd.f32 0.0, %v371
  %v373 = vpop.f32.mrf.mxu0
  %v374 = vpop.f32.mrf.mxu0
  %v375 = vadd.f32 0.0, %v374
  %v376 = vpop.f32.mrf.mxu0
  %377 = vmatprep.mubr.bf16.mxu0 0
  %378 = vmatmul.mubr.bf16.gmra.mxu0 %v329
  %v379 = vpop.f32.mrf.mxu0
  %v380 = vadd.f32 0.0, %v379
  %v381 = vpop.f32.mrf.mxu0
  %v382 = vpop.f32.mrf.mxu0
  %v383 = vadd.f32 0.0, %v382
  %v384 = vpop.f32.mrf.mxu0
  %385 = vmatprep.mubr.bf16.mxu0 0
  %386 = vmatmul.mubr.bf16.gmra.mxu0 %v332
  %v387 = vpop.f32.mrf.mxu0
  %v388 = vadd.f32 0.0, %v387
  %v389 = vpop.f32.mrf.mxu0
  %v390 = vpop.f32.mrf.mxu0
  %v391 = vadd.f32 0.0, %v390
  %v392 = vpop.f32.mrf.mxu0
  %393 = vmatprep.mubr.bf16.mxu0 0
  %394 = vmatmul.mubr.bf16.gmra.mxu0 %v335
  %v395 = vpop.f32.mrf.mxu0
  %v396 = vadd.f32 0.0, %v395
  %v397 = vpop.f32.mrf.mxu0
  %v398 = vpop.f32.mrf.mxu0
  %v399 = vadd.f32 0.0, %v398
  %v400 = vpop.f32.mrf.mxu0
  %401 = vdwg.mxu0
  %v402 = vmax.f32 %v266, %v372
  %v403 = vmax.f32 %v269, %v375
  %v404 = vmax.f32 %v274, %v380
  %v405 = vmax.f32 %v277, %v383
  %v406 = vmax.f32 %v282, %v388
  %v407 = vmax.f32 %v285, %v391
  %v408 = vmax.f32 %v290, %v396
  %v409 = vmax.f32 %v293, %v399
  %s410 = scalar_lea.vmem %s0, 64
  %v411 = vld [vmem:[%s410] sm:$0xf]
  %v412 = vld [vmem:[%s410 + $0x4] sm:$0xf]
  %v413 = vld [vmem:[%s410 + $0x8] sm:$0xf]
  %v414 = vld [vmem:[%s410 + $0xc] sm:$0xf]
  %v415 = vld [vmem:[%s410 + $0x10] sm:$0xf]
  %v416 = vld [vmem:[%s410 + $0x14] sm:$0xf]
  %v417 = vld [vmem:[%s410 + $0x18] sm:$0xf]
  %v418 = vld [vmem:[%s410 + $0x1c] sm:$0xf]
  %v427 = vunpack.c.l.b16 %v411
  %v428 = vunpack.c.l.b16 %v412
  %v429 = vunpack.c.l.b16 %v413
  %v430 = vunpack.c.l.b16 %v414
  %v431 = vunpack.c.l.b16 %v415
  %v432 = vunpack.c.l.b16 %v416
  %v433 = vunpack.c.l.b16 %v417
  %v434 = vunpack.c.l.b16 %v418
  %v435 = vpack.c.b16 %v428, %v427
  %v436 = vpack.c.b16 %v430, %v429
  %v437 = vpack.c.b16 %v432, %v431
  %v438 = vpack.c.b16 %v434, %v433
  %v440 = vsel %vm81, %v435, 0
  %v443 = vsel %vm81, %v436, 0
  %v446 = vsel %vm81, %v437, 0
  %v449 = vsel %vm81, %v438, 0
  %451 = vmatprep.subr.bf16.mxu0 0
  %452 = vmatpush1.bf16.msra.mxu0 0
  %453 = vmatprep.subr.bf16.mxu0 0
  %454 = vmatpush1.bf16.msra.mxu0 0
  %455 = vmatprep.subr.bf16.mxu0 0
  %456 = vmatpush1.bf16.msra.mxu0 0
  %457 = vmatprep.subr.bf16.mxu0 0
  %458 = vmatpush1.bf16.msra.mxu0 0
  %459 = vmatprep.subr.bf16.mxu0 0
  %460 = vmatpush1.bf16.msra.mxu0 %v214
  %461 = vmatprep.subr.bf16.mxu0 0
  %462 = vmatpush1.bf16.msra.mxu0 %v213
  %463 = vmatprep.subr.bf16.mxu0 0
  %464 = vmatpush1.bf16.msra.mxu0 %v212
  %465 = vmatprep.subr.bf16.mxu0 0
  %466 = vmatpush1.bf16.msra.mxu0 %v211
  %467 = vmatprep.subr.bf16.mxu0 0
  %468 = vmatpush2.bf16.msra.mxu0 0
  %469 = vmatprep.subr.bf16.mxu0 0
  %470 = vmatpush2.bf16.msra.mxu0 0
  %471 = vmatprep.subr.bf16.mxu0 0
  %472 = vmatpush2.bf16.msra.mxu0 0
  %473 = vmatprep.subr.bf16.mxu0 0
  %474 = vmatpush2.bf16.msra.mxu0 0
  %475 = vmatprep.subr.bf16.mxu0 0
  %476 = vmatpush2.bf16.msra.mxu0 0
  %477 = vmatprep.subr.bf16.mxu0 0
  %478 = vmatpush2.bf16.msra.mxu0 0
  %479 = vmatprep.subr.bf16.mxu0 0
  %480 = vmatpush2.bf16.msra.mxu0 0
  %481 = vmatprep.subr.bf16.mxu0 0
  %482 = vmatpush2.bf16.msra.mxu0 0
  %483 = vmatprep.mubr.bf16.mxu0 0
  %484 = vmatmul.mubr.bf16.gmra.mxu0 %v440
  %v485 = vpop.f32.mrf.mxu0
  %v486 = vadd.f32 0.0, %v485
  %v487 = vpop.f32.mrf.mxu0
  %v488 = vpop.f32.mrf.mxu0
  %v489 = vadd.f32 0.0, %v488
  %v490 = vpop.f32.mrf.mxu0
  %491 = vmatprep.mubr.bf16.mxu0 0
  %492 = vmatmul.mubr.bf16.gmra.mxu0 %v443
  %v493 = vpop.f32.mrf.mxu0
  %v494 = vadd.f32 0.0, %v493
  %v495 = vpop.f32.mrf.mxu0
  %v496 = vpop.f32.mrf.mxu0
  %v497 = vadd.f32 0.0, %v496
  %v498 = vpop.f32.mrf.mxu0
  %499 = vmatprep.mubr.bf16.mxu0 0
  %500 = vmatmul.mubr.bf16.gmra.mxu0 %v446
  %v501 = vpop.f32.mrf.mxu0
  %v502 = vadd.f32 0.0, %v501
  %v503 = vpop.f32.mrf.mxu0
  %v504 = vpop.f32.mrf.mxu0
  %v505 = vadd.f32 0.0, %v504
  %v506 = vpop.f32.mrf.mxu0
  %507 = vmatprep.mubr.bf16.mxu0 0
  %508 = vmatmul.mubr.bf16.gmra.mxu0 %v449
  %v509 = vpop.f32.mrf.mxu0
  %v510 = vadd.f32 0.0, %v509
  %v511 = vpop.f32.mrf.mxu0
  %v512 = vpop.f32.mrf.mxu0
  %v513 = vadd.f32 0.0, %v512
  %v514 = vpop.f32.mrf.mxu0
  %515 = vdwg.mxu0
  %v516 = vmax.f32 %v402, %v486
  %v517 = vmax.f32 %v403, %v489
  %v518 = vmax.f32 %v404, %v494
  %v519 = vmax.f32 %v405, %v497
  %v520 = vmax.f32 %v406, %v502
  %v521 = vmax.f32 %v407, %v505
  %v522 = vmax.f32 %v408, %v510
  %v523 = vmax.f32 %v409, %v513
  %s524 = scalar_lea.vmem %s0, 96
  %v525 = vld [vmem:[%s524] sm:$0xf]
  %v526 = vld [vmem:[%s524 + $0x4] sm:$0xf]
  %v527 = vld [vmem:[%s524 + $0x8] sm:$0xf]
  %v528 = vld [vmem:[%s524 + $0xc] sm:$0xf]
  %v529 = vld [vmem:[%s524 + $0x10] sm:$0xf]
  %v530 = vld [vmem:[%s524 + $0x14] sm:$0xf]
  %v531 = vld [vmem:[%s524 + $0x18] sm:$0xf]
  %v532 = vld [vmem:[%s524 + $0x1c] sm:$0xf]
  %v541 = vunpack.c.l.b16 %v525
  %v542 = vunpack.c.l.b16 %v526
  %v543 = vunpack.c.l.b16 %v527
  %v544 = vunpack.c.l.b16 %v528
  %v545 = vunpack.c.l.b16 %v529
  %v546 = vunpack.c.l.b16 %v530
  %v547 = vunpack.c.l.b16 %v531
  %v548 = vunpack.c.l.b16 %v532
  %v549 = vpack.c.b16 %v542, %v541
  %v550 = vpack.c.b16 %v544, %v543
  %v551 = vpack.c.b16 %v546, %v545
  %v552 = vpack.c.b16 %v548, %v547
  %v554 = vsel %vm81, %v549, 0
  %v557 = vsel %vm81, %v550, 0
  %v560 = vsel %vm81, %v551, 0
  %v563 = vsel %vm81, %v552, 0
  %565 = vmatprep.subr.bf16.mxu0 0
  %566 = vmatpush1.bf16.msra.mxu0 0
  %567 = vmatprep.subr.bf16.mxu0 0
  %568 = vmatpush1.bf16.msra.mxu0 0
  %569 = vmatprep.subr.bf16.mxu0 0
  %570 = vmatpush1.bf16.msra.mxu0 0
  %571 = vmatprep.subr.bf16.mxu0 0
  %572 = vmatpush1.bf16.msra.mxu0 0
  %573 = vmatprep.subr.bf16.mxu0 0
  %574 = vmatpush1.bf16.msra.mxu0 %v214
  %575 = vmatprep.subr.bf16.mxu0 0
  %576 = vmatpush1.bf16.msra.mxu0 %v213
  %577 = vmatprep.subr.bf16.mxu0 0
  %578 = vmatpush1.bf16.msra.mxu0 %v212
  %579 = vmatprep.subr.bf16.mxu0 0
  %580 = vmatpush1.bf16.msra.mxu0 %v211
  %581 = vmatprep.subr.bf16.mxu0 0
  %582 = vmatpush2.bf16.msra.mxu0 0
  %583 = vmatprep.subr.bf16.mxu0 0
  %584 = vmatpush2.bf16.msra.mxu0 0
  %585 = vmatprep.subr.bf16.mxu0 0
  %586 = vmatpush2.bf16.msra.mxu0 0
  %587 = vmatprep.subr.bf16.mxu0 0
  %588 = vmatpush2.bf16.msra.mxu0 0
  %589 = vmatprep.subr.bf16.mxu0 0
  %590 = vmatpush2.bf16.msra.mxu0 0
  %591 = vmatprep.subr.bf16.mxu0 0
  %592 = vmatpush2.bf16.msra.mxu0 0
  %593 = vmatprep.subr.bf16.mxu0 0
  %594 = vmatpush2.bf16.msra.mxu0 0
  %595 = vmatprep.subr.bf16.mxu0 0
  %596 = vmatpush2.bf16.msra.mxu0 0
  %597 = vmatprep.mubr.bf16.mxu0 0
  %598 = vmatmul.mubr.bf16.gmra.mxu0 %v554
  %v599 = vpop.f32.mrf.mxu0
  %v600 = vadd.f32 0.0, %v599
  %v601 = vpop.f32.mrf.mxu0
  %v602 = vpop.f32.mrf.mxu0
  %v603 = vadd.f32 0.0, %v602
  %v604 = vpop.f32.mrf.mxu0
  %605 = vmatprep.mubr.bf16.mxu0 0
  %606 = vmatmul.mubr.bf16.gmra.mxu0 %v557
  %v607 = vpop.f32.mrf.mxu0
  %v608 = vadd.f32 0.0, %v607
  %v609 = vpop.f32.mrf.mxu0
  %v610 = vpop.f32.mrf.mxu0
  %v611 = vadd.f32 0.0, %v610
  %v612 = vpop.f32.mrf.mxu0
  %613 = vmatprep.mubr.bf16.mxu0 0
  %614 = vmatmul.mubr.bf16.gmra.mxu0 %v560
  %v615 = vpop.f32.mrf.mxu0
  %v616 = vadd.f32 0.0, %v615
  %v617 = vpop.f32.mrf.mxu0
  %v618 = vpop.f32.mrf.mxu0
  %v619 = vadd.f32 0.0, %v618
  %v620 = vpop.f32.mrf.mxu0
  %621 = vmatprep.mubr.bf16.mxu0 0
  %622 = vmatmul.mubr.bf16.gmra.mxu0 %v563
  %v623 = vpop.f32.mrf.mxu0
  %v624 = vadd.f32 0.0, %v623
  %v625 = vpop.f32.mrf.mxu0
  %v626 = vpop.f32.mrf.mxu0
  %v627 = vadd.f32 0.0, %v626
  %v628 = vpop.f32.mrf.mxu0
  %629 = vdwg.mxu0
  %v630 = vmax.f32 %v516, %v600
  %v631 = vmax.f32 %v517, %v603
  %v632 = vmax.f32 %v518, %v608
  %v633 = vmax.f32 %v519, %v611
  %v634 = vmax.f32 %v520, %v616
  %v635 = vmax.f32 %v521, %v619
  %v636 = vmax.f32 %v522, %v624
  %v637 = vmax.f32 %v523, %v627
  %s638 = scalar_lea.vmem %s0, 128
  %v639 = vld [vmem:[%s638] sm:$0xf]
  %v640 = vld [vmem:[%s638 + $0x4] sm:$0xf]
  %v641 = vld [vmem:[%s638 + $0x8] sm:$0xf]
  %v642 = vld [vmem:[%s638 + $0xc] sm:$0xf]
  %v643 = vld [vmem:[%s638 + $0x10] sm:$0xf]
  %v644 = vld [vmem:[%s638 + $0x14] sm:$0xf]
  %v645 = vld [vmem:[%s638 + $0x18] sm:$0xf]
  %v646 = vld [vmem:[%s638 + $0x1c] sm:$0xf]
  %v655 = vunpack.c.l.b16 %v639
  %v656 = vunpack.c.l.b16 %v640
  %v657 = vunpack.c.l.b16 %v641
  %v658 = vunpack.c.l.b16 %v642
  %v659 = vunpack.c.l.b16 %v643
  %v660 = vunpack.c.l.b16 %v644
  %v661 = vunpack.c.l.b16 %v645
  %v662 = vunpack.c.l.b16 %v646
  %v663 = vpack.c.b16 %v656, %v655
  %v664 = vpack.c.b16 %v658, %v657
  %v665 = vpack.c.b16 %v660, %v659
  %v666 = vpack.c.b16 %v662, %v661
  %v668 = vsel %vm81, %v663, 0
  %v671 = vsel %vm81, %v664, 0
  %v674 = vsel %vm81, %v665, 0
  %v677 = vsel %vm81, %v666, 0
  %679 = vmatprep.subr.bf16.mxu0 0
  %680 = vmatpush1.bf16.msra.mxu0 0
  %681 = vmatprep.subr.bf16.mxu0 0
  %682 = vmatpush1.bf16.msra.mxu0 0
  %683 = vmatprep.subr.bf16.mxu0 0
  %684 = vmatpush1.bf16.msra.mxu0 0
  %685 = vmatprep.subr.bf16.mxu0 0
  %686 = vmatpush1.bf16.msra.mxu0 0
  %687 = vmatprep.subr.bf16.mxu0 0
  %688 = vmatpush1.bf16.msra.mxu0 %v214
  %689 = vmatprep.subr.bf16.mxu0 0
  %690 = vmatpush1.bf16.msra.mxu0 %v213
  %691 = vmatprep.subr.bf16.mxu0 0
  %692 = vmatpush1.bf16.msra.mxu0 %v212
  %693 = vmatprep.subr.bf16.mxu0 0
  %694 = vmatpush1.bf16.msra.mxu0 %v211
  %695 = vmatprep.subr.bf16.mxu0 0
  %696 = vmatpush2.bf16.msra.mxu0 0
  %697 = vmatprep.subr.bf16.mxu0 0
  %698 = vmatpush2.bf16.msra.mxu0 0
  %699 = vmatprep.subr.bf16.mxu0 0
  %700 = vmatpush2.bf16.msra.mxu0 0
  %701 = vmatprep.subr.bf16.mxu0 0
  %702 = vmatpush2.bf16.msra.mxu0 0
  %703 = vmatprep.subr.bf16.mxu0 0
  %704 = vmatpush2.bf16.msra.mxu0 0
  %705 = vmatprep.subr.bf16.mxu0 0
  %706 = vmatpush2.bf16.msra.mxu0 0
  %707 = vmatprep.subr.bf16.mxu0 0
  %708 = vmatpush2.bf16.msra.mxu0 0
  %709 = vmatprep.subr.bf16.mxu0 0
  %710 = vmatpush2.bf16.msra.mxu0 0
  %711 = vmatprep.mubr.bf16.mxu0 0
  %712 = vmatmul.mubr.bf16.gmra.mxu0 %v668
  %v713 = vpop.f32.mrf.mxu0
  %v714 = vadd.f32 0.0, %v713
  %v715 = vpop.f32.mrf.mxu0
  %v716 = vpop.f32.mrf.mxu0
  %v717 = vadd.f32 0.0, %v716
  %v718 = vpop.f32.mrf.mxu0
  %719 = vmatprep.mubr.bf16.mxu0 0
  %720 = vmatmul.mubr.bf16.gmra.mxu0 %v671
  %v721 = vpop.f32.mrf.mxu0
  %v722 = vadd.f32 0.0, %v721
  %v723 = vpop.f32.mrf.mxu0
  %v724 = vpop.f32.mrf.mxu0
  %v725 = vadd.f32 0.0, %v724
  %v726 = vpop.f32.mrf.mxu0
  %727 = vmatprep.mubr.bf16.mxu0 0
  %728 = vmatmul.mubr.bf16.gmra.mxu0 %v674
  %v729 = vpop.f32.mrf.mxu0
  %v730 = vadd.f32 0.0, %v729
  %v731 = vpop.f32.mrf.mxu0
  %v732 = vpop.f32.mrf.mxu0
  %v733 = vadd.f32 0.0, %v732
  %v734 = vpop.f32.mrf.mxu0
  %735 = vmatprep.mubr.bf16.mxu0 0
  %736 = vmatmul.mubr.bf16.gmra.mxu0 %v677
  %v737 = vpop.f32.mrf.mxu0
  %v738 = vadd.f32 0.0, %v737
  %v739 = vpop.f32.mrf.mxu0
  %v740 = vpop.f32.mrf.mxu0
  %v741 = vadd.f32 0.0, %v740
  %v742 = vpop.f32.mrf.mxu0
  %743 = vdwg.mxu0
  %v744 = vmax.f32 %v630, %v714
  %v745 = vmax.f32 %v631, %v717
  %v746 = vmax.f32 %v632, %v722
  %v747 = vmax.f32 %v633, %v725
  %v748 = vmax.f32 %v634, %v730
  %v749 = vmax.f32 %v635, %v733
  %v750 = vmax.f32 %v636, %v738
  %v751 = vmax.f32 %v637, %v741
  %s752 = scalar_lea.vmem %s0, 160
  %v753 = vld [vmem:[%s752] sm:$0xf]
  %v754 = vld [vmem:[%s752 + $0x4] sm:$0xf]
  %v755 = vld [vmem:[%s752 + $0x8] sm:$0xf]
  %v756 = vld [vmem:[%s752 + $0xc] sm:$0xf]
  %v757 = vld [vmem:[%s752 + $0x10] sm:$0xf]
  %v758 = vld [vmem:[%s752 + $0x14] sm:$0xf]
  %v759 = vld [vmem:[%s752 + $0x18] sm:$0xf]
  %v760 = vld [vmem:[%s752 + $0x1c] sm:$0xf]
  %v769 = vunpack.c.l.b16 %v753
  %v770 = vunpack.c.l.b16 %v754
  %v771 = vunpack.c.l.b16 %v755
  %v772 = vunpack.c.l.b16 %v756
  %v773 = vunpack.c.l.b16 %v757
  %v774 = vunpack.c.l.b16 %v758
  %v775 = vunpack.c.l.b16 %v759
  %v776 = vunpack.c.l.b16 %v760
  %v777 = vpack.c.b16 %v770, %v769
  %v778 = vpack.c.b16 %v772, %v771
  %v779 = vpack.c.b16 %v774, %v773
  %v780 = vpack.c.b16 %v776, %v775
  %v782 = vsel %vm81, %v777, 0
  %v785 = vsel %vm81, %v778, 0
  %v788 = vsel %vm81, %v779, 0
  %v791 = vsel %vm81, %v780, 0
  %793 = vmatprep.subr.bf16.mxu0 0
  %794 = vmatpush1.bf16.msra.mxu0 0
  %795 = vmatprep.subr.bf16.mxu0 0
  %796 = vmatpush1.bf16.msra.mxu0 0
  %797 = vmatprep.subr.bf16.mxu0 0
  %798 = vmatpush1.bf16.msra.mxu0 0
  %799 = vmatprep.subr.bf16.mxu0 0
  %800 = vmatpush1.bf16.msra.mxu0 0
  %801 = vmatprep.subr.bf16.mxu0 0
  %802 = vmatpush1.bf16.msra.mxu0 %v214
  %803 = vmatprep.subr.bf16.mxu0 0
  %804 = vmatpush1.bf16.msra.mxu0 %v213
  %805 = vmatprep.subr.bf16.mxu0 0
  %806 = vmatpush1.bf16.msra.mxu0 %v212
  %807 = vmatprep.subr.bf16.mxu0 0
  %808 = vmatpush1.bf16.msra.mxu0 %v211
  %809 = vmatprep.subr.bf16.mxu0 0
  %810 = vmatpush2.bf16.msra.mxu0 0
  %811 = vmatprep.subr.bf16.mxu0 0
  %812 = vmatpush2.bf16.msra.mxu0 0
  %813 = vmatprep.subr.bf16.mxu0 0
  %814 = vmatpush2.bf16.msra.mxu0 0
  %815 = vmatprep.subr.bf16.mxu0 0
  %816 = vmatpush2.bf16.msra.mxu0 0
  %817 = vmatprep.subr.bf16.mxu0 0
  %818 = vmatpush2.bf16.msra.mxu0 0
  %819 = vmatprep.subr.bf16.mxu0 0
  %820 = vmatpush2.bf16.msra.mxu0 0
  %821 = vmatprep.subr.bf16.mxu0 0
  %822 = vmatpush2.bf16.msra.mxu0 0
  %823 = vmatprep.subr.bf16.mxu0 0
  %824 = vmatpush2.bf16.msra.mxu0 0
  %825 = vmatprep.mubr.bf16.mxu0 0
  %826 = vmatmul.mubr.bf16.gmra.mxu0 %v782
  %v827 = vpop.f32.mrf.mxu0
  %v828 = vadd.f32 0.0, %v827
  %v829 = vpop.f32.mrf.mxu0
  %v830 = vpop.f32.mrf.mxu0
  %v831 = vadd.f32 0.0, %v830
  %v832 = vpop.f32.mrf.mxu0
  %833 = vmatprep.mubr.bf16.mxu0 0
  %834 = vmatmul.mubr.bf16.gmra.mxu0 %v785
  %v835 = vpop.f32.mrf.mxu0
  %v836 = vadd.f32 0.0, %v835
  %v837 = vpop.f32.mrf.mxu0
  %v838 = vpop.f32.mrf.mxu0
  %v839 = vadd.f32 0.0, %v838
  %v840 = vpop.f32.mrf.mxu0
  %841 = vmatprep.mubr.bf16.mxu0 0
  %842 = vmatmul.mubr.bf16.gmra.mxu0 %v788
  %v843 = vpop.f32.mrf.mxu0
  %v844 = vadd.f32 0.0, %v843
  %v845 = vpop.f32.mrf.mxu0
  %v846 = vpop.f32.mrf.mxu0
  %v847 = vadd.f32 0.0, %v846
  %v848 = vpop.f32.mrf.mxu0
  %849 = vmatprep.mubr.bf16.mxu0 0
  %850 = vmatmul.mubr.bf16.gmra.mxu0 %v791
  %v851 = vpop.f32.mrf.mxu0
  %v852 = vadd.f32 0.0, %v851
  %v853 = vpop.f32.mrf.mxu0
  %v854 = vpop.f32.mrf.mxu0
  %v855 = vadd.f32 0.0, %v854
  %v856 = vpop.f32.mrf.mxu0
  %857 = vdwg.mxu0
  %v858 = vmax.f32 %v744, %v828
  %v859 = vmax.f32 %v745, %v831
  %v860 = vmax.f32 %v746, %v836
  %v861 = vmax.f32 %v747, %v839
  %v862 = vmax.f32 %v748, %v844
  %v863 = vmax.f32 %v749, %v847
  %v864 = vmax.f32 %v750, %v852
  %v865 = vmax.f32 %v751, %v855
  %s866 = scalar_lea.vmem %s0, 192
  %v867 = vld [vmem:[%s866] sm:$0xf]
  %v868 = vld [vmem:[%s866 + $0x4] sm:$0xf]
  %v869 = vld [vmem:[%s866 + $0x8] sm:$0xf]
  %v870 = vld [vmem:[%s866 + $0xc] sm:$0xf]
  %v871 = vld [vmem:[%s866 + $0x10] sm:$0xf]
  %v872 = vld [vmem:[%s866 + $0x14] sm:$0xf]
  %v873 = vld [vmem:[%s866 + $0x18] sm:$0xf]
  %v874 = vld [vmem:[%s866 + $0x1c] sm:$0xf]
  %v883 = vunpack.c.l.b16 %v867
  %v884 = vunpack.c.l.b16 %v868
  %v885 = vunpack.c.l.b16 %v869
  %v886 = vunpack.c.l.b16 %v870
  %v887 = vunpack.c.l.b16 %v871
  %v888 = vunpack.c.l.b16 %v872
  %v889 = vunpack.c.l.b16 %v873
  %v890 = vunpack.c.l.b16 %v874
  %v891 = vpack.c.b16 %v884, %v883
  %v892 = vpack.c.b16 %v886, %v885
  %v893 = vpack.c.b16 %v888, %v887
  %v894 = vpack.c.b16 %v890, %v889
  %v896 = vsel %vm81, %v891, 0
  %v899 = vsel %vm81, %v892, 0
  %v902 = vsel %vm81, %v893, 0
  %v905 = vsel %vm81, %v894, 0
  %907 = vmatprep.subr.bf16.mxu0 0
  %908 = vmatpush1.bf16.msra.mxu0 0
  %909 = vmatprep.subr.bf16.mxu0 0
  %910 = vmatpush1.bf16.msra.mxu0 0
  %911 = vmatprep.subr.bf16.mxu0 0
  %912 = vmatpush1.bf16.msra.mxu0 0
  %913 = vmatprep.subr.bf16.mxu0 0
  %914 = vmatpush1.bf16.msra.mxu0 0
  %915 = vmatprep.subr.bf16.mxu0 0
  %916 = vmatpush1.bf16.msra.mxu0 %v214
  %917 = vmatprep.subr.bf16.mxu0 0
  %918 = vmatpush1.bf16.msra.mxu0 %v213
  %919 = vmatprep.subr.bf16.mxu0 0
  %920 = vmatpush1.bf16.msra.mxu0 %v212
  %921 = vmatprep.subr.bf16.mxu0 0
  %922 = vmatpush1.bf16.msra.mxu0 %v211
  %923 = vmatprep.subr.bf16.mxu0 0
  %924 = vmatpush2.bf16.msra.mxu0 0
  %925 = vmatprep.subr.bf16.mxu0 0
  %926 = vmatpush2.bf16.msra.mxu0 0
  %927 = vmatprep.subr.bf16.mxu0 0
  %928 = vmatpush2.bf16.msra.mxu0 0
  %929 = vmatprep.subr.bf16.mxu0 0
  %930 = vmatpush2.bf16.msra.mxu0 0
  %931 = vmatprep.subr.bf16.mxu0 0
  %932 = vmatpush2.bf16.msra.mxu0 0
  %933 = vmatprep.subr.bf16.mxu0 0
  %934 = vmatpush2.bf16.msra.mxu0 0
  %935 = vmatprep.subr.bf16.mxu0 0
  %936 = vmatpush2.bf16.msra.mxu0 0
  %937 = vmatprep.subr.bf16.mxu0 0
  %938 = vmatpush2.bf16.msra.mxu0 0
  %939 = vmatprep.mubr.bf16.mxu0 0
  %940 = vmatmul.mubr.bf16.gmra.mxu0 %v896
  %v941 = vpop.f32.mrf.mxu0
  %v942 = vadd.f32 0.0, %v941
  %v943 = vpop.f32.mrf.mxu0
  %v944 = vpop.f32.mrf.mxu0
  %v945 = vadd.f32 0.0, %v944
  %v946 = vpop.f32.mrf.mxu0
  %947 = vmatprep.mubr.bf16.mxu0 0
  %948 = vmatmul.mubr.bf16.gmra.mxu0 %v899
  %v949 = vpop.f32.mrf.mxu0
  %v950 = vadd.f32 0.0, %v949
  %v951 = vpop.f32.mrf.mxu0
  %v952 = vpop.f32.mrf.mxu0
  %v953 = vadd.f32 0.0, %v952
  %v954 = vpop.f32.mrf.mxu0
  %955 = vmatprep.mubr.bf16.mxu0 0
  %956 = vmatmul.mubr.bf16.gmra.mxu0 %v902
  %v957 = vpop.f32.mrf.mxu0
  %v958 = vadd.f32 0.0, %v957
  %v959 = vpop.f32.mrf.mxu0
  %v960 = vpop.f32.mrf.mxu0
  %v961 = vadd.f32 0.0, %v960
  %v962 = vpop.f32.mrf.mxu0
  %963 = vmatprep.mubr.bf16.mxu0 0
  %964 = vmatmul.mubr.bf16.gmra.mxu0 %v905
  %v965 = vpop.f32.mrf.mxu0
  %v966 = vadd.f32 0.0, %v965
  %v967 = vpop.f32.mrf.mxu0
  %v968 = vpop.f32.mrf.mxu0
  %v969 = vadd.f32 0.0, %v968
  %v970 = vpop.f32.mrf.mxu0
  %971 = vdwg.mxu0
  %v972 = vmax.f32 %v858, %v942
  %v973 = vmax.f32 %v859, %v945
  %v974 = vmax.f32 %v860, %v950
  %v975 = vmax.f32 %v861, %v953
  %v976 = vmax.f32 %v862, %v958
  %v977 = vmax.f32 %v863, %v961
  %v978 = vmax.f32 %v864, %v966
  %v979 = vmax.f32 %v865, %v969
  %s980 = scalar_lea.vmem %s0, 224
  %v981 = vld [vmem:[%s980] sm:$0xf]
  %v982 = vld [vmem:[%s980 + $0x4] sm:$0xf]
  %v983 = vld [vmem:[%s980 + $0x8] sm:$0xf]
  %v984 = vld [vmem:[%s980 + $0xc] sm:$0xf]
  %v985 = vld [vmem:[%s980 + $0x10] sm:$0xf]
  %v986 = vld [vmem:[%s980 + $0x14] sm:$0xf]
  %v987 = vld [vmem:[%s980 + $0x18] sm:$0xf]
  %v988 = vld [vmem:[%s980 + $0x1c] sm:$0xf]
  %v997 = vunpack.c.l.b16 %v981
  %v998 = vunpack.c.l.b16 %v982
  %v999 = vunpack.c.l.b16 %v983
  %v1000 = vunpack.c.l.b16 %v984
  %v1001 = vunpack.c.l.b16 %v985
  %v1002 = vunpack.c.l.b16 %v986
  %v1003 = vunpack.c.l.b16 %v987
  %v1004 = vunpack.c.l.b16 %v988
  %v1005 = vpack.c.b16 %v998, %v997
  %v1006 = vpack.c.b16 %v1000, %v999
  %v1007 = vpack.c.b16 %v1002, %v1001
  %v1008 = vpack.c.b16 %v1004, %v1003
  %v1010 = vsel %vm81, %v1005, 0
  %v1013 = vsel %vm81, %v1006, 0
  %v1016 = vsel %vm81, %v1007, 0
  %v1019 = vsel %vm81, %v1008, 0
  %1021 = vmatprep.subr.bf16.mxu0 0
  %1022 = vmatpush1.bf16.msra.mxu0 0
  %1023 = vmatprep.subr.bf16.mxu0 0
  %1024 = vmatpush1.bf16.msra.mxu0 0
  %1025 = vmatprep.subr.bf16.mxu0 0
  %1026 = vmatpush1.bf16.msra.mxu0 0
  %1027 = vmatprep.subr.bf16.mxu0 0
  %1028 = vmatpush1.bf16.msra.mxu0 0
  %1029 = vmatprep.subr.bf16.mxu0 0
  %1030 = vmatpush1.bf16.msra.mxu0 %v214
  %1031 = vmatprep.subr.bf16.mxu0 0
  %1032 = vmatpush1.bf16.msra.mxu0 %v213
  %1033 = vmatprep.subr.bf16.mxu0 0
  %1034 = vmatpush1.bf16.msra.mxu0 %v212
  %1035 = vmatprep.subr.bf16.mxu0 0
  %1036 = vmatpush1.bf16.msra.mxu0 %v211
  %1037 = vmatprep.subr.bf16.mxu0 0
  %1038 = vmatpush2.bf16.msra.mxu0 0
  %1039 = vmatprep.subr.bf16.mxu0 0
  %1040 = vmatpush2.bf16.msra.mxu0 0
  %1041 = vmatprep.subr.bf16.mxu0 0
  %1042 = vmatpush2.bf16.msra.mxu0 0
  %1043 = vmatprep.subr.bf16.mxu0 0
  %1044 = vmatpush2.bf16.msra.mxu0 0
  %1045 = vmatprep.subr.bf16.mxu0 0
  %1046 = vmatpush2.bf16.msra.mxu0 0
  %1047 = vmatprep.subr.bf16.mxu0 0
  %1048 = vmatpush2.bf16.msra.mxu0 0
  %1049 = vmatprep.subr.bf16.mxu0 0
  %1050 = vmatpush2.bf16.msra.mxu0 0
  %1051 = vmatprep.subr.bf16.mxu0 0
  %1052 = vmatpush2.bf16.msra.mxu0 0
  %1053 = vmatprep.mubr.bf16.mxu0 0
  %1054 = vmatmul.mubr.bf16.gmra.mxu0 %v1010
  %v1055 = vpop.f32.mrf.mxu0
  %v1056 = vadd.f32 0.0, %v1055
  %v1057 = vpop.f32.mrf.mxu0
  %v1058 = vpop.f32.mrf.mxu0
  %v1059 = vadd.f32 0.0, %v1058
  %v1060 = vpop.f32.mrf.mxu0
  %1061 = vmatprep.mubr.bf16.mxu0 0
  %1062 = vmatmul.mubr.bf16.gmra.mxu0 %v1013
  %v1063 = vpop.f32.mrf.mxu0
  %v1064 = vadd.f32 0.0, %v1063
  %v1065 = vpop.f32.mrf.mxu0
  %v1066 = vpop.f32.mrf.mxu0
  %v1067 = vadd.f32 0.0, %v1066
  %v1068 = vpop.f32.mrf.mxu0
  %1069 = vmatprep.mubr.bf16.mxu0 0
  %1070 = vmatmul.mubr.bf16.gmra.mxu0 %v1016
  %v1071 = vpop.f32.mrf.mxu0
  %v1072 = vadd.f32 0.0, %v1071
  %v1073 = vpop.f32.mrf.mxu0
  %v1074 = vpop.f32.mrf.mxu0
  %v1075 = vadd.f32 0.0, %v1074
  %v1076 = vpop.f32.mrf.mxu0
  %1077 = vmatprep.mubr.bf16.mxu0 0
  %1078 = vmatmul.mubr.bf16.gmra.mxu0 %v1019
  %v1079 = vpop.f32.mrf.mxu0
  %v1080 = vadd.f32 0.0, %v1079
  %v1081 = vpop.f32.mrf.mxu0
  %v1082 = vpop.f32.mrf.mxu0
  %v1083 = vadd.f32 0.0, %v1082
  %v1084 = vpop.f32.mrf.mxu0
  %1085 = vdwg.mxu0
  %v1086 = vmax.f32 %v972, %v1056
  %v1087 = vmax.f32 %v973, %v1059
  %v1088 = vmax.f32 %v974, %v1064
  %v1089 = vmax.f32 %v975, %v1067
  %v1090 = vmax.f32 %v976, %v1072
  %v1091 = vmax.f32 %v977, %v1075
  %v1092 = vmax.f32 %v978, %v1080
  %v1093 = vmax.f32 %v979, %v1083
  %v1094 = vadd.f32 %v1086, %v129
  %v1095 = vadd.f32 %v1087, %v132
  %v1096 = vadd.f32 %v1088, %v137
  %v1097 = vadd.f32 %v1089, %v140
  %v1098 = vadd.f32 %v1090, %v145
  %v1099 = vadd.f32 %v1091, %v148
  %v1100 = vadd.f32 %v1092, %v153
  %v1101 = vadd.f32 %v1093, %v156
  %v1102 = vld [vmem:[%s4] sm:$0x1]
  %v1104 = vlaneseq
  %v1105 = vshrl.u32 %v1104, 7
  %v1106 = vsub.s32 0, %v1105
  %v1107 = vrot.slane %v1102, %v1106
  %v1109 = vadd.f32 %v1094, %v1107
  %v1110 = vadd.f32 %v1095, %v1107
  %v1111 = vadd.f32 %v1096, %v1107
  %v1112 = vadd.f32 %v1097, %v1107
  %v1113 = vadd.f32 %v1098, %v1107
  %v1114 = vadd.f32 %v1099, %v1107
  %v1115 = vadd.f32 %v1100, %v1107
  %v1116 = vadd.f32 %v1101, %v1107
  %vm1117 = vcmp.gt.f32.partialorder %v1109, 0.0
  %vm1118 = vcmp.gt.f32.partialorder %v1110, 0.0
  %vm1119 = vcmp.gt.f32.partialorder %v1111, 0.0
  %vm1120 = vcmp.gt.f32.partialorder %v1112, 0.0
  %vm1121 = vcmp.gt.f32.partialorder %v1113, 0.0
  %vm1122 = vcmp.gt.f32.partialorder %v1114, 0.0
  %vm1123 = vcmp.gt.f32.partialorder %v1115, 0.0
  %vm1124 = vcmp.gt.f32.partialorder %v1116, 0.0
  %v1125 = vmul.f32 %v1109, 0.2
  %v1126 = vmul.f32 %v1110, 0.2
  %v1127 = vmul.f32 %v1111, 0.2
  %v1128 = vmul.f32 %v1112, 0.2
  %v1129 = vmul.f32 %v1113, 0.2
  %v1130 = vmul.f32 %v1114, 0.2
  %v1131 = vmul.f32 %v1115, 0.2
  %v1132 = vmul.f32 %v1116, 0.2
  %v1133 = vsel %vm1117, %v1109, %v1125
  %v1134 = vsel %vm1118, %v1110, %v1126
  %v1135 = vsel %vm1119, %v1111, %v1127
  %v1136 = vsel %vm1120, %v1112, %v1128
  %v1137 = vsel %vm1121, %v1113, %v1129
  %v1138 = vsel %vm1122, %v1114, %v1130
  %v1139 = vsel %vm1123, %v1115, %v1131
  %v1140 = vsel %vm1124, %v1116, %v1132
  %v1141 = vpack.c.bf16 %v1134, %v1133
  %v1142 = vpack.c.bf16 %v1136, %v1135
  %v1143 = vpack.c.bf16 %v1138, %v1137
  %v1144 = vpack.c.bf16 %v1140, %v1139
  %v1149 = vunpack.c.l.b16 %v1141
  %v1150 = vunpack.c.h.b16 %v1141
  %v1151 = vunpack.c.l.b16 %v1142
  %v1152 = vunpack.c.h.b16 %v1142
  %v1153 = vunpack.c.l.b16 %v1143
  %v1154 = vunpack.c.h.b16 %v1143
  %v1155 = vunpack.c.l.b16 %v1144
  %v1156 = vunpack.c.h.b16 %v1144
  %v1157 = vpack.c.b16 %v1149, %v1149
  %v1158 = vpack.c.b16 %v1150, %v1150
  %v1159 = vpack.c.b16 %v1151, %v1151
  %v1160 = vpack.c.b16 %v1152, %v1152
  %v1161 = vpack.c.b16 %v1153, %v1153
  %v1162 = vpack.c.b16 %v1154, %v1154
  %v1163 = vpack.c.b16 %v1155, %v1155
  %v1164 = vpack.c.b16 %v1156, %v1156
  %vm1173 = vcmask 519168
  %1174 = vst.msk [vmem:[%s5] sm:$0xf] %vm1173, %v1157
  %1175 = vst.msk [vmem:[%s5 + $0x4] sm:$0xf] %vm1173, %v1158
  %1176 = vst.msk [vmem:[%s5 + $0x8] sm:$0xf] %vm1173, %v1159
  %1177 = vst.msk [vmem:[%s5 + $0xc] sm:$0xf] %vm1173, %v1160
  %1178 = vst.msk [vmem:[%s5 + $0x10] sm:$0xf] %vm1173, %v1161
  %1179 = vst.msk [vmem:[%s5 + $0x14] sm:$0xf] %vm1173, %v1162
  %1180 = vst.msk [vmem:[%s5 + $0x18] sm:$0xf] %vm1173, %v1163
  %1181 = vst.msk [vmem:[%s5 + $0x1c] sm:$0xf] %vm1173, %v1164
  // Predicated region
  $region22: #{dgcnn_forward.7} parent=0 // pred_check
    _
  $region23: #{dgcnn_forward.7} parent=0 // pred_check_branch
    %1183 = sbr.rel (0) target = $region25
  $region24: #{dgcnn_forward.7} parent=0 // pred_region
    _
  $region25: #{dgcnn_forward.7} parent=0 // pred_fallthru
    _
  // Predicated region
  $region26: #{dgcnn_forward.7} parent=0 // pred_check
    _
  $region27: #{dgcnn_forward.7} parent=0 // pred_check_branch
    %1185 = sbr.rel (0) target = $region29
  $region28: #{dgcnn_forward.7} parent=0 // pred_region
    _
  $region29: #{dgcnn_forward.7} parent=0 // pred_fallthru
    _

// kernel: dgcnn_forward.8
$region0: #{dgcnn_forward.8}
  #allocation0 [shape = 'u32[]', space=smem, size = 0x4, offset = 0x4, fixed_abs, tag = 'smem constant byte address 0x4 - core index']
  #allocation1 [shape = 'u32[144,128]{1,0:T(1,128)}', space=vmem, size = 0x12000, scoped, tag = 'internal scratch']
  %s0 = inlined_call_operand.vmem [shape: bf16[8,64,64], index: 0, kind: input, shape index: {}]
  %s1 = inlined_call_operand.vmem [shape: bf16[64,64], index: 1, kind: input, shape index: {}]
  %s2 = inlined_call_operand.vmem [shape: bf16[64,128], index: 2, kind: input, shape index: {}]
  %s3 = inlined_call_operand.vmem [shape: bf16[64,128], index: 3, kind: input, shape index: {}]
  %s4 = inlined_call_operand.vmem [shape: f32[1,128], index: 4, kind: input, shape index: {}]
  %s5 = inlined_call_operand.vmem [shape: bf16[64,128], index: 5, kind: output, shape index: {}]
  %s6 = sld [smem:[#allocation0]]
  $region30: #{dgcnn_forward.8} parent=0
    _
  %s8 = ssub.s32 1, %s6
  %s9 = scalar_select 0, %s8, %s6
  // Predicated region
  $region2: #{dgcnn_forward.8} parent=0 // pred_check
    _
  $region3: #{dgcnn_forward.8} parent=0 // pred_check_branch
    %11 = sbr.rel (0) target = $region5
  $region4: #{dgcnn_forward.8} parent=0 // pred_region
    _
  $region5: #{dgcnn_forward.8} parent=0 // pred_fallthru
    _
  // Predicated region
  $region6: #{dgcnn_forward.8} parent=0 // pred_check
    _
  $region7: #{dgcnn_forward.8} parent=0 // pred_check_branch
    %13 = sbr.rel (0) target = $region9
  $region8: #{dgcnn_forward.8} parent=0 // pred_region
    _
  $region9: #{dgcnn_forward.8} parent=0 // pred_fallthru
    _
  // Predicated region
  $region10: #{dgcnn_forward.8} parent=0 // pred_check
    _
  $region11: #{dgcnn_forward.8} parent=0 // pred_check_branch
    %15 = sbr.rel (0) target = $region13
  $region12: #{dgcnn_forward.8} parent=0 // pred_region
    _
  $region13: #{dgcnn_forward.8} parent=0 // pred_fallthru
    _
  // Predicated region
  $region14: #{dgcnn_forward.8} parent=0 // pred_check
    _
  $region15: #{dgcnn_forward.8} parent=0 // pred_check_branch
    %17 = sbr.rel (0) target = $region17
  $region16: #{dgcnn_forward.8} parent=0 // pred_region
    _
  $region17: #{dgcnn_forward.8} parent=0 // pred_fallthru
    _
  // Predicated region
  $region18: #{dgcnn_forward.8} parent=0 // pred_check
    _
  $region19: #{dgcnn_forward.8} parent=0 // pred_check_branch
    %19 = sbr.rel (0) target = $region21
  $region20: #{dgcnn_forward.8} parent=0 // pred_region
    _
  $region21: #{dgcnn_forward.8} parent=0 // pred_fallthru
    _
  %v21 = vld [vmem:[%s1] sm:$0xf]
  %v22 = vld [vmem:[%s1 + $0x4] sm:$0xf]
  %v23 = vld [vmem:[%s1 + $0x8] sm:$0xf]
  %v24 = vld [vmem:[%s1 + $0xc] sm:$0xf]
  %v25 = vld [vmem:[%s1 + $0x10] sm:$0xf]
  %v26 = vld [vmem:[%s1 + $0x14] sm:$0xf]
  %v27 = vld [vmem:[%s1 + $0x18] sm:$0xf]
  %v28 = vld [vmem:[%s1 + $0x1c] sm:$0xf]
  %v29 = vld [vmem:[%s3] sm:$0xf]
  %v30 = vld [vmem:[%s3 + $0x4] sm:$0xf]
  %v31 = vld [vmem:[%s3 + $0x8] sm:$0xf]
  %v32 = vld [vmem:[%s3 + $0xc] sm:$0xf]
  %v33 = vld [vmem:[%s3 + $0x10] sm:$0xf]
  %v34 = vld [vmem:[%s3 + $0x14] sm:$0xf]
  %v35 = vld [vmem:[%s3 + $0x18] sm:$0xf]
  %v36 = vld [vmem:[%s3 + $0x1c] sm:$0xf]
  %v45 = vunpack.c.l.b16 %v21
  %v46 = vunpack.c.l.b16 %v22
  %v47 = vunpack.c.l.b16 %v23
  %v48 = vunpack.c.l.b16 %v24
  %v49 = vunpack.c.l.b16 %v25
  %v50 = vunpack.c.l.b16 %v26
  %v51 = vunpack.c.l.b16 %v27
  %v52 = vunpack.c.l.b16 %v28
  %v53 = vpack.c.b16 %v46, %v45
  %v54 = vpack.c.b16 %v48, %v47
  %v55 = vpack.c.b16 %v50, %v49
  %v56 = vpack.c.b16 %v52, %v51
  %v65 = vunpack.c.l.b16 %v29
  %v66 = vunpack.c.l.b16 %v30
  %v67 = vunpack.c.l.b16 %v31
  %v68 = vunpack.c.l.b16 %v32
  %v69 = vunpack.c.l.b16 %v33
  %v70 = vunpack.c.l.b16 %v34
  %v71 = vunpack.c.l.b16 %v35
  %v72 = vunpack.c.l.b16 %v36
  %v73 = vpack.c.b16 %v66, %v65
  %v74 = vpack.c.b16 %v68, %v67
  %v75 = vpack.c.b16 %v70, %v69
  %v76 = vpack.c.b16 %v72, %v71
  %vm81 = vcmask 523264
  %v83 = vsel %vm81, %v53, 0
  %v86 = vsel %vm81, %v54, 0
  %v89 = vsel %vm81, %v55, 0
  %v92 = vsel %vm81, %v56, 0
  %94 = vmatprep.subr.bf16.mxu0 0
  %95 = vmatpush1.bf16.msra.mxu0 0
  %96 = vmatprep.subr.bf16.mxu0 0
  %97 = vmatpush1.bf16.msra.mxu0 0
  %98 = vmatprep.subr.bf16.mxu0 0
  %99 = vmatpush1.bf16.msra.mxu0 0
  %100 = vmatprep.subr.bf16.mxu0 0
  %101 = vmatpush1.bf16.msra.mxu0 0
  %102 = vmatprep.subr.bf16.mxu0 0
  %103 = vmatpush1.bf16.msra.mxu0 %v76
  %104 = vmatprep.subr.bf16.mxu0 0
  %105 = vmatpush1.bf16.msra.mxu0 %v75
  %106 = vmatprep.subr.bf16.mxu0 0
  %107 = vmatpush1.bf16.msra.mxu0 %v74
  %108 = vmatprep.subr.bf16.mxu0 0
  %109 = vmatpush1.bf16.msra.mxu0 %v73
  %110 = vmatprep.subr.bf16.mxu0 0
  %111 = vmatpush2.bf16.msra.mxu0 0
  %112 = vmatprep.subr.bf16.mxu0 0
  %113 = vmatpush2.bf16.msra.mxu0 0
  %114 = vmatprep.subr.bf16.mxu0 0
  %115 = vmatpush2.bf16.msra.mxu0 0
  %116 = vmatprep.subr.bf16.mxu0 0
  %117 = vmatpush2.bf16.msra.mxu0 0
  %118 = vmatprep.subr.bf16.mxu0 0
  %119 = vmatpush2.bf16.msra.mxu0 0
  %120 = vmatprep.subr.bf16.mxu0 0
  %121 = vmatpush2.bf16.msra.mxu0 0
  %122 = vmatprep.subr.bf16.mxu0 0
  %123 = vmatpush2.bf16.msra.mxu0 0
  %124 = vmatprep.subr.bf16.mxu0 0
  %125 = vmatpush2.bf16.msra.mxu0 0
  %126 = vmatprep.mubr.bf16.mxu0 0
  %127 = vmatmul.mubr.bf16.gmra.mxu0 %v83
  %v128 = vpop.f32.mrf.mxu0
  %v129 = vadd.f32 0.0, %v128
  %v130 = vpop.f32.mrf.mxu0
  %v131 = vpop.f32.mrf.mxu0
  %v132 = vadd.f32 0.0, %v131
  %v133 = vpop.f32.mrf.mxu0
  %134 = vmatprep.mubr.bf16.mxu0 0
  %135 = vmatmul.mubr.bf16.gmra.mxu0 %v86
  %v136 = vpop.f32.mrf.mxu0
  %v137 = vadd.f32 0.0, %v136
  %v138 = vpop.f32.mrf.mxu0
  %v139 = vpop.f32.mrf.mxu0
  %v140 = vadd.f32 0.0, %v139
  %v141 = vpop.f32.mrf.mxu0
  %142 = vmatprep.mubr.bf16.mxu0 0
  %143 = vmatmul.mubr.bf16.gmra.mxu0 %v89
  %v144 = vpop.f32.mrf.mxu0
  %v145 = vadd.f32 0.0, %v144
  %v146 = vpop.f32.mrf.mxu0
  %v147 = vpop.f32.mrf.mxu0
  %v148 = vadd.f32 0.0, %v147
  %v149 = vpop.f32.mrf.mxu0
  %150 = vmatprep.mubr.bf16.mxu0 0
  %151 = vmatmul.mubr.bf16.gmra.mxu0 %v92
  %v152 = vpop.f32.mrf.mxu0
  %v153 = vadd.f32 0.0, %v152
  %v154 = vpop.f32.mrf.mxu0
  %v155 = vpop.f32.mrf.mxu0
  %v156 = vadd.f32 0.0, %v155
  %v157 = vpop.f32.mrf.mxu0
  %158 = vdwg.mxu0
  %v159 = vld [vmem:[%s0] sm:$0xf]
  %v160 = vld [vmem:[%s0 + $0x4] sm:$0xf]
  %v161 = vld [vmem:[%s0 + $0x8] sm:$0xf]
  %v162 = vld [vmem:[%s0 + $0xc] sm:$0xf]
  %v163 = vld [vmem:[%s0 + $0x10] sm:$0xf]
  %v164 = vld [vmem:[%s0 + $0x14] sm:$0xf]
  %v165 = vld [vmem:[%s0 + $0x18] sm:$0xf]
  %v166 = vld [vmem:[%s0 + $0x1c] sm:$0xf]
  %v167 = vld [vmem:[%s2] sm:$0xf]
  %v168 = vld [vmem:[%s2 + $0x4] sm:$0xf]
  %v169 = vld [vmem:[%s2 + $0x8] sm:$0xf]
  %v170 = vld [vmem:[%s2 + $0xc] sm:$0xf]
  %v171 = vld [vmem:[%s2 + $0x10] sm:$0xf]
  %v172 = vld [vmem:[%s2 + $0x14] sm:$0xf]
  %v173 = vld [vmem:[%s2 + $0x18] sm:$0xf]
  %v174 = vld [vmem:[%s2 + $0x1c] sm:$0xf]
  %v183 = vunpack.c.l.b16 %v159
  %v184 = vunpack.c.l.b16 %v160
  %v185 = vunpack.c.l.b16 %v161
  %v186 = vunpack.c.l.b16 %v162
  %v187 = vunpack.c.l.b16 %v163
  %v188 = vunpack.c.l.b16 %v164
  %v189 = vunpack.c.l.b16 %v165
  %v190 = vunpack.c.l.b16 %v166
  %v191 = vpack.c.b16 %v184, %v183
  %v192 = vpack.c.b16 %v186, %v185
  %v193 = vpack.c.b16 %v188, %v187
  %v194 = vpack.c.b16 %v190, %v189
  %v203 = vunpack.c.l.b16 %v167
  %v204 = vunpack.c.l.b16 %v168
  %v205 = vunpack.c.l.b16 %v169
  %v206 = vunpack.c.l.b16 %v170
  %v207 = vunpack.c.l.b16 %v171
  %v208 = vunpack.c.l.b16 %v172
  %v209 = vunpack.c.l.b16 %v173
  %v210 = vunpack.c.l.b16 %v174
  %v211 = vpack.c.b16 %v204, %v203
  %v212 = vpack.c.b16 %v206, %v205
  %v213 = vpack.c.b16 %v208, %v207
  %v214 = vpack.c.b16 %v210, %v209
  %v220 = vsel %vm81, %v191, 0
  %v223 = vsel %vm81, %v192, 0
  %v226 = vsel %vm81, %v193, 0
  %v229 = vsel %vm81, %v194, 0
  %231 = vmatprep.subr.bf16.mxu0 0
  %232 = vmatpush1.bf16.msra.mxu0 0
  %233 = vmatprep.subr.bf16.mxu0 0
  %234 = vmatpush1.bf16.msra.mxu0 0
  %235 = vmatprep.subr.bf16.mxu0 0
  %236 = vmatpush1.bf16.msra.mxu0 0
  %237 = vmatprep.subr.bf16.mxu0 0
  %238 = vmatpush1.bf16.msra.mxu0 0
  %239 = vmatprep.subr.bf16.mxu0 0
  %240 = vmatpush1.bf16.msra.mxu0 %v214
  %241 = vmatprep.subr.bf16.mxu0 0
  %242 = vmatpush1.bf16.msra.mxu0 %v213
  %243 = vmatprep.subr.bf16.mxu0 0
  %244 = vmatpush1.bf16.msra.mxu0 %v212
  %245 = vmatprep.subr.bf16.mxu0 0
  %246 = vmatpush1.bf16.msra.mxu0 %v211
  %247 = vmatprep.subr.bf16.mxu0 0
  %248 = vmatpush2.bf16.msra.mxu0 0
  %249 = vmatprep.subr.bf16.mxu0 0
  %250 = vmatpush2.bf16.msra.mxu0 0
  %251 = vmatprep.subr.bf16.mxu0 0
  %252 = vmatpush2.bf16.msra.mxu0 0
  %253 = vmatprep.subr.bf16.mxu0 0
  %254 = vmatpush2.bf16.msra.mxu0 0
  %255 = vmatprep.subr.bf16.mxu0 0
  %256 = vmatpush2.bf16.msra.mxu0 0
  %257 = vmatprep.subr.bf16.mxu0 0
  %258 = vmatpush2.bf16.msra.mxu0 0
  %259 = vmatprep.subr.bf16.mxu0 0
  %260 = vmatpush2.bf16.msra.mxu0 0
  %261 = vmatprep.subr.bf16.mxu0 0
  %262 = vmatpush2.bf16.msra.mxu0 0
  %263 = vmatprep.mubr.bf16.mxu0 0
  %264 = vmatmul.mubr.bf16.gmra.mxu0 %v220
  %v265 = vpop.f32.mrf.mxu0
  %v266 = vadd.f32 0.0, %v265
  %v267 = vpop.f32.mrf.mxu0
  %v268 = vpop.f32.mrf.mxu0
  %v269 = vadd.f32 0.0, %v268
  %v270 = vpop.f32.mrf.mxu0
  %271 = vmatprep.mubr.bf16.mxu0 0
  %272 = vmatmul.mubr.bf16.gmra.mxu0 %v223
  %v273 = vpop.f32.mrf.mxu0
  %v274 = vadd.f32 0.0, %v273
  %v275 = vpop.f32.mrf.mxu0
  %v276 = vpop.f32.mrf.mxu0
  %v277 = vadd.f32 0.0, %v276
  %v278 = vpop.f32.mrf.mxu0
  %279 = vmatprep.mubr.bf16.mxu0 0
  %280 = vmatmul.mubr.bf16.gmra.mxu0 %v226
  %v281 = vpop.f32.mrf.mxu0
  %v282 = vadd.f32 0.0, %v281
  %v283 = vpop.f32.mrf.mxu0
  %v284 = vpop.f32.mrf.mxu0
  %v285 = vadd.f32 0.0, %v284
  %v286 = vpop.f32.mrf.mxu0
  %287 = vmatprep.mubr.bf16.mxu0 0
  %288 = vmatmul.mubr.bf16.gmra.mxu0 %v229
  %v289 = vpop.f32.mrf.mxu0
  %v290 = vadd.f32 0.0, %v289
  %v291 = vpop.f32.mrf.mxu0
  %v292 = vpop.f32.mrf.mxu0
  %v293 = vadd.f32 0.0, %v292
  %v294 = vpop.f32.mrf.mxu0
  %295 = vdwg.mxu0
  %s296 = scalar_lea.vmem %s0, 32
  %v297 = vld [vmem:[%s296] sm:$0xf]
  %v298 = vld [vmem:[%s296 + $0x4] sm:$0xf]
  %v299 = vld [vmem:[%s296 + $0x8] sm:$0xf]
  %v300 = vld [vmem:[%s296 + $0xc] sm:$0xf]
  %v301 = vld [vmem:[%s296 + $0x10] sm:$0xf]
  %v302 = vld [vmem:[%s296 + $0x14] sm:$0xf]
  %v303 = vld [vmem:[%s296 + $0x18] sm:$0xf]
  %v304 = vld [vmem:[%s296 + $0x1c] sm:$0xf]
  %v313 = vunpack.c.l.b16 %v297
  %v314 = vunpack.c.l.b16 %v298
  %v315 = vunpack.c.l.b16 %v299
  %v316 = vunpack.c.l.b16 %v300
  %v317 = vunpack.c.l.b16 %v301
  %v318 = vunpack.c.l.b16 %v302
  %v319 = vunpack.c.l.b16 %v303
  %v320 = vunpack.c.l.b16 %v304
  %v321 = vpack.c.b16 %v314, %v313
  %v322 = vpack.c.b16 %v316, %v315
  %v323 = vpack.c.b16 %v318, %v317
  %v324 = vpack.c.b16 %v320, %v319
  %v326 = vsel %vm81, %v321, 0
  %v329 = vsel %vm81, %v322, 0
  %v332 = vsel %vm81, %v323, 0
  %v335 = vsel %vm81, %v324, 0
  %337 = vmatprep.subr.bf16.mxu0 0
  %338 = vmatpush1.bf16.msra.mxu0 0
  %339 = vmatprep.subr.bf16.mxu0 0
  %340 = vmatpush1.bf16.msra.mxu0 0
  %341 = vmatprep.subr.bf16.mxu0 0
  %342 = vmatpush1.bf16.msra.mxu0 0
  %343 = vmatprep.subr.bf16.mxu0 0
  %344 = vmatpush1.bf16.msra.mxu0 0
  %345 = vmatprep.subr.bf16.mxu0 0
  %346 = vmatpush1.bf16.msra.mxu0 %v214
  %347 = vmatprep.subr.bf16.mxu0 0
  %348 = vmatpush1.bf16.msra.mxu0 %v213
  %349 = vmatprep.subr.bf16.mxu0 0
  %350 = vmatpush1.bf16.msra.mxu0 %v212
  %351 = vmatprep.subr.bf16.mxu0 0
  %352 = vmatpush1.bf16.msra.mxu0 %v211
  %353 = vmatprep.subr.bf16.mxu0 0
  %354 = vmatpush2.bf16.msra.mxu0 0
  %355 = vmatprep.subr.bf16.mxu0 0
  %356 = vmatpush2.bf16.msra.mxu0 0
  %357 = vmatprep.subr.bf16.mxu0 0
  %358 = vmatpush2.bf16.msra.mxu0 0
  %359 = vmatprep.subr.bf16.mxu0 0
  %360 = vmatpush2.bf16.msra.mxu0 0
  %361 = vmatprep.subr.bf16.mxu0 0
  %362 = vmatpush2.bf16.msra.mxu0 0
  %363 = vmatprep.subr.bf16.mxu0 0
  %364 = vmatpush2.bf16.msra.mxu0 0
  %365 = vmatprep.subr.bf16.mxu0 0
  %366 = vmatpush2.bf16.msra.mxu0 0
  %367 = vmatprep.subr.bf16.mxu0 0
  %368 = vmatpush2.bf16.msra.mxu0 0
  %369 = vmatprep.mubr.bf16.mxu0 0
  %370 = vmatmul.mubr.bf16.gmra.mxu0 %v326
  %v371 = vpop.f32.mrf.mxu0
  %v372 = vadd.f32 0.0, %v371
  %v373 = vpop.f32.mrf.mxu0
  %v374 = vpop.f32.mrf.mxu0
  %v375 = vadd.f32 0.0, %v374
  %v376 = vpop.f32.mrf.mxu0
  %377 = vmatprep.mubr.bf16.mxu0 0
  %378 = vmatmul.mubr.bf16.gmra.mxu0 %v329
  %v379 = vpop.f32.mrf.mxu0
  %v380 = vadd.f32 0.0, %v379
  %v381 = vpop.f32.mrf.mxu0
  %v382 = vpop.f32.mrf.mxu0
  %v383 = vadd.f32 0.0, %v382
  %v384 = vpop.f32.mrf.mxu0
  %385 = vmatprep.mubr.bf16.mxu0 0
  %386 = vmatmul.mubr.bf16.gmra.mxu0 %v332
  %v387 = vpop.f32.mrf.mxu0
  %v388 = vadd.f32 0.0, %v387
  %v389 = vpop.f32.mrf.mxu0
  %v390 = vpop.f32.mrf.mxu0
  %v391 = vadd.f32 0.0, %v390
  %v392 = vpop.f32.mrf.mxu0
  %393 = vmatprep.mubr.bf16.mxu0 0
  %394 = vmatmul.mubr.bf16.gmra.mxu0 %v335
  %v395 = vpop.f32.mrf.mxu0
  %v396 = vadd.f32 0.0, %v395
  %v397 = vpop.f32.mrf.mxu0
  %v398 = vpop.f32.mrf.mxu0
  %v399 = vadd.f32 0.0, %v398
  %v400 = vpop.f32.mrf.mxu0
  %401 = vdwg.mxu0
  %v402 = vmax.f32 %v266, %v372
  %v403 = vmax.f32 %v269, %v375
  %v404 = vmax.f32 %v274, %v380
  %v405 = vmax.f32 %v277, %v383
  %v406 = vmax.f32 %v282, %v388
  %v407 = vmax.f32 %v285, %v391
  %v408 = vmax.f32 %v290, %v396
  %v409 = vmax.f32 %v293, %v399
  %s410 = scalar_lea.vmem %s0, 64
  %v411 = vld [vmem:[%s410] sm:$0xf]
  %v412 = vld [vmem:[%s410 + $0x4] sm:$0xf]
  %v413 = vld [vmem:[%s410 + $0x8] sm:$0xf]
  %v414 = vld [vmem:[%s410 + $0xc] sm:$0xf]
  %v415 = vld [vmem:[%s410 + $0x10] sm:$0xf]
  %v416 = vld [vmem:[%s410 + $0x14] sm:$0xf]
  %v417 = vld [vmem:[%s410 + $0x18] sm:$0xf]
  %v418 = vld [vmem:[%s410 + $0x1c] sm:$0xf]
  %v427 = vunpack.c.l.b16 %v411
  %v428 = vunpack.c.l.b16 %v412
  %v429 = vunpack.c.l.b16 %v413
  %v430 = vunpack.c.l.b16 %v414
  %v431 = vunpack.c.l.b16 %v415
  %v432 = vunpack.c.l.b16 %v416
  %v433 = vunpack.c.l.b16 %v417
  %v434 = vunpack.c.l.b16 %v418
  %v435 = vpack.c.b16 %v428, %v427
  %v436 = vpack.c.b16 %v430, %v429
  %v437 = vpack.c.b16 %v432, %v431
  %v438 = vpack.c.b16 %v434, %v433
  %v440 = vsel %vm81, %v435, 0
  %v443 = vsel %vm81, %v436, 0
  %v446 = vsel %vm81, %v437, 0
  %v449 = vsel %vm81, %v438, 0
  %451 = vmatprep.subr.bf16.mxu0 0
  %452 = vmatpush1.bf16.msra.mxu0 0
  %453 = vmatprep.subr.bf16.mxu0 0
  %454 = vmatpush1.bf16.msra.mxu0 0
  %455 = vmatprep.subr.bf16.mxu0 0
  %456 = vmatpush1.bf16.msra.mxu0 0
  %457 = vmatprep.subr.bf16.mxu0 0
  %458 = vmatpush1.bf16.msra.mxu0 0
  %459 = vmatprep.subr.bf16.mxu0 0
  %460 = vmatpush1.bf16.msra.mxu0 %v214
  %461 = vmatprep.subr.bf16.mxu0 0
  %462 = vmatpush1.bf16.msra.mxu0 %v213
  %463 = vmatprep.subr.bf16.mxu0 0
  %464 = vmatpush1.bf16.msra.mxu0 %v212
  %465 = vmatprep.subr.bf16.mxu0 0
  %466 = vmatpush1.bf16.msra.mxu0 %v211
  %467 = vmatprep.subr.bf16.mxu0 0
  %468 = vmatpush2.bf16.msra.mxu0 0
  %469 = vmatprep.subr.bf16.mxu0 0
  %470 = vmatpush2.bf16.msra.mxu0 0
  %471 = vmatprep.subr.bf16.mxu0 0
  %472 = vmatpush2.bf16.msra.mxu0 0
  %473 = vmatprep.subr.bf16.mxu0 0
  %474 = vmatpush2.bf16.msra.mxu0 0
  %475 = vmatprep.subr.bf16.mxu0 0
  %476 = vmatpush2.bf16.msra.mxu0 0
  %477 = vmatprep.subr.bf16.mxu0 0
  %478 = vmatpush2.bf16.msra.mxu0 0
  %479 = vmatprep.subr.bf16.mxu0 0
  %480 = vmatpush2.bf16.msra.mxu0 0
  %481 = vmatprep.subr.bf16.mxu0 0
  %482 = vmatpush2.bf16.msra.mxu0 0
  %483 = vmatprep.mubr.bf16.mxu0 0
  %484 = vmatmul.mubr.bf16.gmra.mxu0 %v440
  %v485 = vpop.f32.mrf.mxu0
  %v486 = vadd.f32 0.0, %v485
  %v487 = vpop.f32.mrf.mxu0
  %v488 = vpop.f32.mrf.mxu0
  %v489 = vadd.f32 0.0, %v488
  %v490 = vpop.f32.mrf.mxu0
  %491 = vmatprep.mubr.bf16.mxu0 0
  %492 = vmatmul.mubr.bf16.gmra.mxu0 %v443
  %v493 = vpop.f32.mrf.mxu0
  %v494 = vadd.f32 0.0, %v493
  %v495 = vpop.f32.mrf.mxu0
  %v496 = vpop.f32.mrf.mxu0
  %v497 = vadd.f32 0.0, %v496
  %v498 = vpop.f32.mrf.mxu0
  %499 = vmatprep.mubr.bf16.mxu0 0
  %500 = vmatmul.mubr.bf16.gmra.mxu0 %v446
  %v501 = vpop.f32.mrf.mxu0
  %v502 = vadd.f32 0.0, %v501
  %v503 = vpop.f32.mrf.mxu0
  %v504 = vpop.f32.mrf.mxu0
  %v505 = vadd.f32 0.0, %v504
  %v506 = vpop.f32.mrf.mxu0
  %507 = vmatprep.mubr.bf16.mxu0 0
  %508 = vmatmul.mubr.bf16.gmra.mxu0 %v449
  %v509 = vpop.f32.mrf.mxu0
  %v510 = vadd.f32 0.0, %v509
  %v511 = vpop.f32.mrf.mxu0
  %v512 = vpop.f32.mrf.mxu0
  %v513 = vadd.f32 0.0, %v512
  %v514 = vpop.f32.mrf.mxu0
  %515 = vdwg.mxu0
  %v516 = vmax.f32 %v402, %v486
  %v517 = vmax.f32 %v403, %v489
  %v518 = vmax.f32 %v404, %v494
  %v519 = vmax.f32 %v405, %v497
  %v520 = vmax.f32 %v406, %v502
  %v521 = vmax.f32 %v407, %v505
  %v522 = vmax.f32 %v408, %v510
  %v523 = vmax.f32 %v409, %v513
  %s524 = scalar_lea.vmem %s0, 96
  %v525 = vld [vmem:[%s524] sm:$0xf]
  %v526 = vld [vmem:[%s524 + $0x4] sm:$0xf]
  %v527 = vld [vmem:[%s524 + $0x8] sm:$0xf]
  %v528 = vld [vmem:[%s524 + $0xc] sm:$0xf]
  %v529 = vld [vmem:[%s524 + $0x10] sm:$0xf]
  %v530 = vld [vmem:[%s524 + $0x14] sm:$0xf]
  %v531 = vld [vmem:[%s524 + $0x18] sm:$0xf]
  %v532 = vld [vmem:[%s524 + $0x1c] sm:$0xf]
  %v541 = vunpack.c.l.b16 %v525
  %v542 = vunpack.c.l.b16 %v526
  %v543 = vunpack.c.l.b16 %v527
  %v544 = vunpack.c.l.b16 %v528
  %v545 = vunpack.c.l.b16 %v529
  %v546 = vunpack.c.l.b16 %v530
  %v547 = vunpack.c.l.b16 %v531
  %v548 = vunpack.c.l.b16 %v532
  %v549 = vpack.c.b16 %v542, %v541
  %v550 = vpack.c.b16 %v544, %v543
  %v551 = vpack.c.b16 %v546, %v545
  %v552 = vpack.c.b16 %v548, %v547
  %v554 = vsel %vm81, %v549, 0
  %v557 = vsel %vm81, %v550, 0
  %v560 = vsel %vm81, %v551, 0
  %v563 = vsel %vm81, %v552, 0
  %565 = vmatprep.subr.bf16.mxu0 0
  %566 = vmatpush1.bf16.msra.mxu0 0
  %567 = vmatprep.subr.bf16.mxu0 0
  %568 = vmatpush1.bf16.msra.mxu0 0
  %569 = vmatprep.subr.bf16.mxu0 0
  %570 = vmatpush1.bf16.msra.mxu0 0
  %571 = vmatprep.subr.bf16.mxu0 0
  %572 = vmatpush1.bf16.msra.mxu0 0
  %573 = vmatprep.subr.bf16.mxu0 0
  %574 = vmatpush1.bf16.msra.mxu0 %v214
  %575 = vmatprep.subr.bf16.mxu0 0
  %576 = vmatpush1.bf16.msra.mxu0 %v213
  %577 = vmatprep.subr.bf16.mxu0 0
  %578 = vmatpush1.bf16.msra.mxu0 %v212
  %579 = vmatprep.subr.bf16.mxu0 0
  %580 = vmatpush1.bf16.msra.mxu0 %v211
  %581 = vmatprep.subr.bf16.mxu0 0
  %582 = vmatpush2.bf16.msra.mxu0 0
  %583 = vmatprep.subr.bf16.mxu0 0
  %584 = vmatpush2.bf16.msra.mxu0 0
  %585 = vmatprep.subr.bf16.mxu0 0
  %586 = vmatpush2.bf16.msra.mxu0 0
  %587 = vmatprep.subr.bf16.mxu0 0
  %588 = vmatpush2.bf16.msra.mxu0 0
  %589 = vmatprep.subr.bf16.mxu0 0
  %590 = vmatpush2.bf16.msra.mxu0 0
  %591 = vmatprep.subr.bf16.mxu0 0
  %592 = vmatpush2.bf16.msra.mxu0 0
  %593 = vmatprep.subr.bf16.mxu0 0
  %594 = vmatpush2.bf16.msra.mxu0 0
  %595 = vmatprep.subr.bf16.mxu0 0
  %596 = vmatpush2.bf16.msra.mxu0 0
  %597 = vmatprep.mubr.bf16.mxu0 0
  %598 = vmatmul.mubr.bf16.gmra.mxu0 %v554
  %v599 = vpop.f32.mrf.mxu0
  %v600 = vadd.f32 0.0, %v599
  %v601 = vpop.f32.mrf.mxu0
  %v602 = vpop.f32.mrf.mxu0
  %v603 = vadd.f32 0.0, %v602
  %v604 = vpop.f32.mrf.mxu0
  %605 = vmatprep.mubr.bf16.mxu0 0
  %606 = vmatmul.mubr.bf16.gmra.mxu0 %v557
  %v607 = vpop.f32.mrf.mxu0
  %v608 = vadd.f32 0.0, %v607
  %v609 = vpop.f32.mrf.mxu0
  %v610 = vpop.f32.mrf.mxu0
  %v611 = vadd.f32 0.0, %v610
  %v612 = vpop.f32.mrf.mxu0
  %613 = vmatprep.mubr.bf16.mxu0 0
  %614 = vmatmul.mubr.bf16.gmra.mxu0 %v560
  %v615 = vpop.f32.mrf.mxu0
  %v616 = vadd.f32 0.0, %v615
  %v617 = vpop.f32.mrf.mxu0
  %v618 = vpop.f32.mrf.mxu0
  %v619 = vadd.f32 0.0, %v618
  %v620 = vpop.f32.mrf.mxu0
  %621 = vmatprep.mubr.bf16.mxu0 0
  %622 = vmatmul.mubr.bf16.gmra.mxu0 %v563
  %v623 = vpop.f32.mrf.mxu0
  %v624 = vadd.f32 0.0, %v623
  %v625 = vpop.f32.mrf.mxu0
  %v626 = vpop.f32.mrf.mxu0
  %v627 = vadd.f32 0.0, %v626
  %v628 = vpop.f32.mrf.mxu0
  %629 = vdwg.mxu0
  %v630 = vmax.f32 %v516, %v600
  %v631 = vmax.f32 %v517, %v603
  %v632 = vmax.f32 %v518, %v608
  %v633 = vmax.f32 %v519, %v611
  %v634 = vmax.f32 %v520, %v616
  %v635 = vmax.f32 %v521, %v619
  %v636 = vmax.f32 %v522, %v624
  %v637 = vmax.f32 %v523, %v627
  %s638 = scalar_lea.vmem %s0, 128
  %v639 = vld [vmem:[%s638] sm:$0xf]
  %v640 = vld [vmem:[%s638 + $0x4] sm:$0xf]
  %v641 = vld [vmem:[%s638 + $0x8] sm:$0xf]
  %v642 = vld [vmem:[%s638 + $0xc] sm:$0xf]
  %v643 = vld [vmem:[%s638 + $0x10] sm:$0xf]
  %v644 = vld [vmem:[%s638 + $0x14] sm:$0xf]
  %v645 = vld [vmem:[%s638 + $0x18] sm:$0xf]
  %v646 = vld [vmem:[%s638 + $0x1c] sm:$0xf]
  %v655 = vunpack.c.l.b16 %v639
  %v656 = vunpack.c.l.b16 %v640
  %v657 = vunpack.c.l.b16 %v641
  %v658 = vunpack.c.l.b16 %v642
  %v659 = vunpack.c.l.b16 %v643
  %v660 = vunpack.c.l.b16 %v644
  %v661 = vunpack.c.l.b16 %v645
  %v662 = vunpack.c.l.b16 %v646
  %v663 = vpack.c.b16 %v656, %v655
  %v664 = vpack.c.b16 %v658, %v657
  %v665 = vpack.c.b16 %v660, %v659
  %v666 = vpack.c.b16 %v662, %v661
  %v668 = vsel %vm81, %v663, 0
  %v671 = vsel %vm81, %v664, 0
  %v674 = vsel %vm81, %v665, 0
  %v677 = vsel %vm81, %v666, 0
  %679 = vmatprep.subr.bf16.mxu0 0
  %680 = vmatpush1.bf16.msra.mxu0 0
  %681 = vmatprep.subr.bf16.mxu0 0
  %682 = vmatpush1.bf16.msra.mxu0 0
  %683 = vmatprep.subr.bf16.mxu0 0
  %684 = vmatpush1.bf16.msra.mxu0 0
  %685 = vmatprep.subr.bf16.mxu0 0
  %686 = vmatpush1.bf16.msra.mxu0 0
  %687 = vmatprep.subr.bf16.mxu0 0
  %688 = vmatpush1.bf16.msra.mxu0 %v214
  %689 = vmatprep.subr.bf16.mxu0 0
  %690 = vmatpush1.bf16.msra.mxu0 %v213
  %691 = vmatprep.subr.bf16.mxu0 0
  %692 = vmatpush1.bf16.msra.mxu0 %v212
  %693 = vmatprep.subr.bf16.mxu0 0
  %694 = vmatpush1.bf16.msra.mxu0 %v211
  %695 = vmatprep.subr.bf16.mxu0 0
  %696 = vmatpush2.bf16.msra.mxu0 0
  %697 = vmatprep.subr.bf16.mxu0 0
  %698 = vmatpush2.bf16.msra.mxu0 0
  %699 = vmatprep.subr.bf16.mxu0 0
  %700 = vmatpush2.bf16.msra.mxu0 0
  %701 = vmatprep.subr.bf16.mxu0 0
  %702 = vmatpush2.bf16.msra.mxu0 0
  %703 = vmatprep.subr.bf16.mxu0 0
  %704 = vmatpush2.bf16.msra.mxu0 0
  %705 = vmatprep.subr.bf16.mxu0 0
  %706 = vmatpush2.bf16.msra.mxu0 0
  %707 = vmatprep.subr.bf16.mxu0 0
  %708 = vmatpush2.bf16.msra.mxu0 0
  %709 = vmatprep.subr.bf16.mxu0 0
  %710 = vmatpush2.bf16.msra.mxu0 0
  %711 = vmatprep.mubr.bf16.mxu0 0
  %712 = vmatmul.mubr.bf16.gmra.mxu0 %v668
  %v713 = vpop.f32.mrf.mxu0
  %v714 = vadd.f32 0.0, %v713
  %v715 = vpop.f32.mrf.mxu0
  %v716 = vpop.f32.mrf.mxu0
  %v717 = vadd.f32 0.0, %v716
  %v718 = vpop.f32.mrf.mxu0
  %719 = vmatprep.mubr.bf16.mxu0 0
  %720 = vmatmul.mubr.bf16.gmra.mxu0 %v671
  %v721 = vpop.f32.mrf.mxu0
  %v722 = vadd.f32 0.0, %v721
  %v723 = vpop.f32.mrf.mxu0
  %v724 = vpop.f32.mrf.mxu0
  %v725 = vadd.f32 0.0, %v724
  %v726 = vpop.f32.mrf.mxu0
  %727 = vmatprep.mubr.bf16.mxu0 0
  %728 = vmatmul.mubr.bf16.gmra.mxu0 %v674
  %v729 = vpop.f32.mrf.mxu0
  %v730 = vadd.f32 0.0, %v729
  %v731 = vpop.f32.mrf.mxu0
  %v732 = vpop.f32.mrf.mxu0
  %v733 = vadd.f32 0.0, %v732
  %v734 = vpop.f32.mrf.mxu0
  %735 = vmatprep.mubr.bf16.mxu0 0
  %736 = vmatmul.mubr.bf16.gmra.mxu0 %v677
  %v737 = vpop.f32.mrf.mxu0
  %v738 = vadd.f32 0.0, %v737
  %v739 = vpop.f32.mrf.mxu0
  %v740 = vpop.f32.mrf.mxu0
  %v741 = vadd.f32 0.0, %v740
  %v742 = vpop.f32.mrf.mxu0
  %743 = vdwg.mxu0
  %v744 = vmax.f32 %v630, %v714
  %v745 = vmax.f32 %v631, %v717
  %v746 = vmax.f32 %v632, %v722
  %v747 = vmax.f32 %v633, %v725
  %v748 = vmax.f32 %v634, %v730
  %v749 = vmax.f32 %v635, %v733
  %v750 = vmax.f32 %v636, %v738
  %v751 = vmax.f32 %v637, %v741
  %s752 = scalar_lea.vmem %s0, 160
  %v753 = vld [vmem:[%s752] sm:$0xf]
  %v754 = vld [vmem:[%s752 + $0x4] sm:$0xf]
  %v755 = vld [vmem:[%s752 + $0x8] sm:$0xf]
  %v756 = vld [vmem:[%s752 + $0xc] sm:$0xf]
  %v757 = vld [vmem:[%s752 + $0x10] sm:$0xf]
  %v758 = vld [vmem:[%s752 + $0x14] sm:$0xf]
  %v759 = vld [vmem:[%s752 + $0x18] sm:$0xf]
  %v760 = vld [vmem:[%s752 + $0x1c] sm:$0xf]
  %v769 = vunpack.c.l.b16 %v753
  %v770 = vunpack.c.l.b16 %v754
  %v771 = vunpack.c.l.b16 %v755
  %v772 = vunpack.c.l.b16 %v756
  %v773 = vunpack.c.l.b16 %v757
  %v774 = vunpack.c.l.b16 %v758
  %v775 = vunpack.c.l.b16 %v759
  %v776 = vunpack.c.l.b16 %v760
  %v777 = vpack.c.b16 %v770, %v769
  %v778 = vpack.c.b16 %v772, %v771
  %v779 = vpack.c.b16 %v774, %v773
  %v780 = vpack.c.b16 %v776, %v775
  %v782 = vsel %vm81, %v777, 0
  %v785 = vsel %vm81, %v778, 0
  %v788 = vsel %vm81, %v779, 0
  %v791 = vsel %vm81, %v780, 0
  %793 = vmatprep.subr.bf16.mxu0 0
  %794 = vmatpush1.bf16.msra.mxu0 0
  %795 = vmatprep.subr.bf16.mxu0 0
  %796 = vmatpush1.bf16.msra.mxu0 0
  %797 = vmatprep.subr.bf16.mxu0 0
  %798 = vmatpush1.bf16.msra.mxu0 0
  %799 = vmatprep.subr.bf16.mxu0 0
  %800 = vmatpush1.bf16.msra.mxu0 0
  %801 = vmatprep.subr.bf16.mxu0 0
  %802 = vmatpush1.bf16.msra.mxu0 %v214
  %803 = vmatprep.subr.bf16.mxu0 0
  %804 = vmatpush1.bf16.msra.mxu0 %v213
  %805 = vmatprep.subr.bf16.mxu0 0
  %806 = vmatpush1.bf16.msra.mxu0 %v212
  %807 = vmatprep.subr.bf16.mxu0 0
  %808 = vmatpush1.bf16.msra.mxu0 %v211
  %809 = vmatprep.subr.bf16.mxu0 0
  %810 = vmatpush2.bf16.msra.mxu0 0
  %811 = vmatprep.subr.bf16.mxu0 0
  %812 = vmatpush2.bf16.msra.mxu0 0
  %813 = vmatprep.subr.bf16.mxu0 0
  %814 = vmatpush2.bf16.msra.mxu0 0
  %815 = vmatprep.subr.bf16.mxu0 0
  %816 = vmatpush2.bf16.msra.mxu0 0
  %817 = vmatprep.subr.bf16.mxu0 0
  %818 = vmatpush2.bf16.msra.mxu0 0
  %819 = vmatprep.subr.bf16.mxu0 0
  %820 = vmatpush2.bf16.msra.mxu0 0
  %821 = vmatprep.subr.bf16.mxu0 0
  %822 = vmatpush2.bf16.msra.mxu0 0
  %823 = vmatprep.subr.bf16.mxu0 0
  %824 = vmatpush2.bf16.msra.mxu0 0
  %825 = vmatprep.mubr.bf16.mxu0 0
  %826 = vmatmul.mubr.bf16.gmra.mxu0 %v782
  %v827 = vpop.f32.mrf.mxu0
  %v828 = vadd.f32 0.0, %v827
  %v829 = vpop.f32.mrf.mxu0
  %v830 = vpop.f32.mrf.mxu0
  %v831 = vadd.f32 0.0, %v830
  %v832 = vpop.f32.mrf.mxu0
  %833 = vmatprep.mubr.bf16.mxu0 0
  %834 = vmatmul.mubr.bf16.gmra.mxu0 %v785
  %v835 = vpop.f32.mrf.mxu0
  %v836 = vadd.f32 0.0, %v835
  %v837 = vpop.f32.mrf.mxu0
  %v838 = vpop.f32.mrf.mxu0
  %v839 = vadd.f32 0.0, %v838
  %v840 = vpop.f32.mrf.mxu0
  %841 = vmatprep.mubr.bf16.mxu0 0
  %842 = vmatmul.mubr.bf16.gmra.mxu0 %v788
  %v843 = vpop.f32.mrf.mxu0
  %v844 = vadd.f32 0.0, %v843
  %v845 = vpop.f32.mrf.mxu0
  %v846 = vpop.f32.mrf.mxu0
  %v847 = vadd.f32 0.0, %v846
  %v848 = vpop.f32.mrf.mxu0
  %849 = vmatprep.mubr.bf16.mxu0 0
  %850 = vmatmul.mubr.bf16.gmra.mxu0 %v791
  %v851 = vpop.f32.mrf.mxu0
  %v852 = vadd.f32 0.0, %v851
  %v853 = vpop.f32.mrf.mxu0
  %v854 = vpop.f32.mrf.mxu0
  %v855 = vadd.f32 0.0, %v854
  %v856 = vpop.f32.mrf.mxu0
  %857 = vdwg.mxu0
  %v858 = vmax.f32 %v744, %v828
  %v859 = vmax.f32 %v745, %v831
  %v860 = vmax.f32 %v746, %v836
  %v861 = vmax.f32 %v747, %v839
  %v862 = vmax.f32 %v748, %v844
  %v863 = vmax.f32 %v749, %v847
  %v864 = vmax.f32 %v750, %v852
  %v865 = vmax.f32 %v751, %v855
  %s866 = scalar_lea.vmem %s0, 192
  %v867 = vld [vmem:[%s866] sm:$0xf]
  %v868 = vld [vmem:[%s866 + $0x4] sm:$0xf]
  %v869 = vld [vmem:[%s866 + $0x8] sm:$0xf]
  %v870 = vld [vmem:[%s866 + $0xc] sm:$0xf]
  %v871 = vld [vmem:[%s866 + $0x10] sm:$0xf]
  %v872 = vld [vmem:[%s866 + $0x14] sm:$0xf]
  %v873 = vld [vmem:[%s866 + $0x18] sm:$0xf]
  %v874 = vld [vmem:[%s866 + $0x1c] sm:$0xf]
  %v883 = vunpack.c.l.b16 %v867
  %v884 = vunpack.c.l.b16 %v868
  %v885 = vunpack.c.l.b16 %v869
  %v886 = vunpack.c.l.b16 %v870
  %v887 = vunpack.c.l.b16 %v871
  %v888 = vunpack.c.l.b16 %v872
  %v889 = vunpack.c.l.b16 %v873
  %v890 = vunpack.c.l.b16 %v874
  %v891 = vpack.c.b16 %v884, %v883
  %v892 = vpack.c.b16 %v886, %v885
  %v893 = vpack.c.b16 %v888, %v887
  %v894 = vpack.c.b16 %v890, %v889
  %v896 = vsel %vm81, %v891, 0
  %v899 = vsel %vm81, %v892, 0
  %v902 = vsel %vm81, %v893, 0
  %v905 = vsel %vm81, %v894, 0
  %907 = vmatprep.subr.bf16.mxu0 0
  %908 = vmatpush1.bf16.msra.mxu0 0
  %909 = vmatprep.subr.bf16.mxu0 0
  %910 = vmatpush1.bf16.msra.mxu0 0
  %911 = vmatprep.subr.bf16.mxu0 0
  %912 = vmatpush1.bf16.msra.mxu0 0
  %913 = vmatprep.subr.bf16.mxu0 0
  %914 = vmatpush1.bf16.msra.mxu0 0
  %915 = vmatprep.subr.bf16.mxu0 0
  %916 = vmatpush1.bf16.msra.mxu0 %v214
  %917 = vmatprep.subr.bf16.mxu0 0
  %918 = vmatpush1.bf16.msra.mxu0 %v213
  %919 = vmatprep.subr.bf16.mxu0 0
  %920 = vmatpush1.bf16.msra.mxu0 %v212
  %921 = vmatprep.subr.bf16.mxu0 0
  %922 = vmatpush1.bf16.msra.mxu0 %v211
  %923 = vmatprep.subr.bf16.mxu0 0
  %924 = vmatpush2.bf16.msra.mxu0 0
  %925 = vmatprep.subr.bf16.mxu0 0
  %926 = vmatpush2.bf16.msra.mxu0 0
  %927 = vmatprep.subr.bf16.mxu0 0
  %928 = vmatpush2.bf16.msra.mxu0 0
  %929 = vmatprep.subr.bf16.mxu0 0
  %930 = vmatpush2.bf16.msra.mxu0 0
  %931 = vmatprep.subr.bf16.mxu0 0
  %932 = vmatpush2.bf16.msra.mxu0 0
  %933 = vmatprep.subr.bf16.mxu0 0
  %934 = vmatpush2.bf16.msra.mxu0 0
  %935 = vmatprep.subr.bf16.mxu0 0
  %936 = vmatpush2.bf16.msra.mxu0 0
  %937 = vmatprep.subr.bf16.mxu0 0
  %938 = vmatpush2.bf16.msra.mxu0 0
  %939 = vmatprep.mubr.bf16.mxu0 0
  %940 = vmatmul.mubr.bf16.gmra.mxu0 %v896
  %v941 = vpop.f32.mrf.mxu0
  %v942 = vadd.f32 0.0, %v941
  %v943 = vpop.f32.mrf.mxu0
  %v944 = vpop.f32.mrf.mxu0
  %v945 = vadd.f32 0.0, %v944
  %v946 = vpop.f32.mrf.mxu0
  %947 = vmatprep.mubr.bf16.mxu0 0
  %948 = vmatmul.mubr.bf16.gmra.mxu0 %v899
  %v949 = vpop.f32.mrf.mxu0
  %v950 = vadd.f32 0.0, %v949
  %v951 = vpop.f32.mrf.mxu0
  %v952 = vpop.f32.mrf.mxu0
  %v953 = vadd.f32 0.0, %v952
  %v954 = vpop.f32.mrf.mxu0
  %955 = vmatprep.mubr.bf16.mxu0 0
  %956 = vmatmul.mubr.bf16.gmra.mxu0 %v902
  %v957 = vpop.f32.mrf.mxu0
  %v958 = vadd.f32 0.0, %v957
  %v959 = vpop.f32.mrf.mxu0
  %v960 = vpop.f32.mrf.mxu0
  %v961 = vadd.f32 0.0, %v960
  %v962 = vpop.f32.mrf.mxu0
  %963 = vmatprep.mubr.bf16.mxu0 0
  %964 = vmatmul.mubr.bf16.gmra.mxu0 %v905
  %v965 = vpop.f32.mrf.mxu0
  %v966 = vadd.f32 0.0, %v965
  %v967 = vpop.f32.mrf.mxu0
  %v968 = vpop.f32.mrf.mxu0
  %v969 = vadd.f32 0.0, %v968
  %v970 = vpop.f32.mrf.mxu0
  %971 = vdwg.mxu0
  %v972 = vmax.f32 %v858, %v942
  %v973 = vmax.f32 %v859, %v945
  %v974 = vmax.f32 %v860, %v950
  %v975 = vmax.f32 %v861, %v953
  %v976 = vmax.f32 %v862, %v958
  %v977 = vmax.f32 %v863, %v961
  %v978 = vmax.f32 %v864, %v966
  %v979 = vmax.f32 %v865, %v969
  %s980 = scalar_lea.vmem %s0, 224
  %v981 = vld [vmem:[%s980] sm:$0xf]
  %v982 = vld [vmem:[%s980 + $0x4] sm:$0xf]
  %v983 = vld [vmem:[%s980 + $0x8] sm:$0xf]
  %v984 = vld [vmem:[%s980 + $0xc] sm:$0xf]
  %v985 = vld [vmem:[%s980 + $0x10] sm:$0xf]
  %v986 = vld [vmem:[%s980 + $0x14] sm:$0xf]
  %v987 = vld [vmem:[%s980 + $0x18] sm:$0xf]
  %v988 = vld [vmem:[%s980 + $0x1c] sm:$0xf]
  %v997 = vunpack.c.l.b16 %v981
  %v998 = vunpack.c.l.b16 %v982
  %v999 = vunpack.c.l.b16 %v983
  %v1000 = vunpack.c.l.b16 %v984
  %v1001 = vunpack.c.l.b16 %v985
  %v1002 = vunpack.c.l.b16 %v986
  %v1003 = vunpack.c.l.b16 %v987
  %v1004 = vunpack.c.l.b16 %v988
  %v1005 = vpack.c.b16 %v998, %v997
  %v1006 = vpack.c.b16 %v1000, %v999
  %v1007 = vpack.c.b16 %v1002, %v1001
  %v1008 = vpack.c.b16 %v1004, %v1003
  %v1010 = vsel %vm81, %v1005, 0
  %v1013 = vsel %vm81, %v1006, 0
  %v1016 = vsel %vm81, %v1007, 0
  %v1019 = vsel %vm81, %v1008, 0
  %1021 = vmatprep.subr.bf16.mxu0 0
  %1022 = vmatpush1.bf16.msra.mxu0 0
  %1023 = vmatprep.subr.bf16.mxu0 0
  %1024 = vmatpush1.bf16.msra.mxu0 0
  %1025 = vmatprep.subr.bf16.mxu0 0
  %1026 = vmatpush1.bf16.msra.mxu0 0
  %1027 = vmatprep.subr.bf16.mxu0 0
  %1028 = vmatpush1.bf16.msra.mxu0 0
  %1029 = vmatprep.subr.bf16.mxu0 0
  %1030 = vmatpush1.bf16.msra.mxu0 %v214
  %1031 = vmatprep.subr.bf16.mxu0 0
  %1032 = vmatpush1.bf16.msra.mxu0 %v213
  %1033 = vmatprep.subr.bf16.mxu0 0
  %1034 = vmatpush1.bf16.msra.mxu0 %v212
  %1035 = vmatprep.subr.bf16.mxu0 0
  %1036 = vmatpush1.bf16.msra.mxu0 %v211
  %1037 = vmatprep.subr.bf16.mxu0 0
  %1038 = vmatpush2.bf16.msra.mxu0 0
  %1039 = vmatprep.subr.bf16.mxu0 0
  %1040 = vmatpush2.bf16.msra.mxu0 0
  %1041 = vmatprep.subr.bf16.mxu0 0
  %1042 = vmatpush2.bf16.msra.mxu0 0
  %1043 = vmatprep.subr.bf16.mxu0 0
  %1044 = vmatpush2.bf16.msra.mxu0 0
  %1045 = vmatprep.subr.bf16.mxu0 0
  %1046 = vmatpush2.bf16.msra.mxu0 0
  %1047 = vmatprep.subr.bf16.mxu0 0
  %1048 = vmatpush2.bf16.msra.mxu0 0
  %1049 = vmatprep.subr.bf16.mxu0 0
  %1050 = vmatpush2.bf16.msra.mxu0 0
  %1051 = vmatprep.subr.bf16.mxu0 0
  %1052 = vmatpush2.bf16.msra.mxu0 0
  %1053 = vmatprep.mubr.bf16.mxu0 0
  %1054 = vmatmul.mubr.bf16.gmra.mxu0 %v1010
  %v1055 = vpop.f32.mrf.mxu0
  %v1056 = vadd.f32 0.0, %v1055
  %v1057 = vpop.f32.mrf.mxu0
  %v1058 = vpop.f32.mrf.mxu0
  %v1059 = vadd.f32 0.0, %v1058
  %v1060 = vpop.f32.mrf.mxu0
  %1061 = vmatprep.mubr.bf16.mxu0 0
  %1062 = vmatmul.mubr.bf16.gmra.mxu0 %v1013
  %v1063 = vpop.f32.mrf.mxu0
  %v1064 = vadd.f32 0.0, %v1063
  %v1065 = vpop.f32.mrf.mxu0
  %v1066 = vpop.f32.mrf.mxu0
  %v1067 = vadd.f32 0.0, %v1066
  %v1068 = vpop.f32.mrf.mxu0
  %1069 = vmatprep.mubr.bf16.mxu0 0
  %1070 = vmatmul.mubr.bf16.gmra.mxu0 %v1016
  %v1071 = vpop.f32.mrf.mxu0
  %v1072 = vadd.f32 0.0, %v1071
  %v1073 = vpop.f32.mrf.mxu0
  %v1074 = vpop.f32.mrf.mxu0
  %v1075 = vadd.f32 0.0, %v1074
  %v1076 = vpop.f32.mrf.mxu0
  %1077 = vmatprep.mubr.bf16.mxu0 0
  %1078 = vmatmul.mubr.bf16.gmra.mxu0 %v1019
  %v1079 = vpop.f32.mrf.mxu0
  %v1080 = vadd.f32 0.0, %v1079
  %v1081 = vpop.f32.mrf.mxu0
  %v1082 = vpop.f32.mrf.mxu0
  %v1083 = vadd.f32 0.0, %v1082
  %v1084 = vpop.f32.mrf.mxu0
  %1085 = vdwg.mxu0
  %v1086 = vmax.f32 %v972, %v1056
  %v1087 = vmax.f32 %v973, %v1059
  %v1088 = vmax.f32 %v974, %v1064
  %v1089 = vmax.f32 %v975, %v1067
  %v1090 = vmax.f32 %v976, %v1072
  %v1091 = vmax.f32 %v977, %v1075
  %v1092 = vmax.f32 %v978, %v1080
  %v1093 = vmax.f32 %v979, %v1083
  %v1094 = vadd.f32 %v1086, %v129
  %v1095 = vadd.f32 %v1087, %v132
  %v1096 = vadd.f32 %v1088, %v137
  %v1097 = vadd.f32 %v1089, %v140
  %v1098 = vadd.f32 %v1090, %v145
  %v1099 = vadd.f32 %v1091, %v148
  %v1100 = vadd.f32 %v1092, %v153
  %v1101 = vadd.f32 %v1093, %v156
  %v1102 = vld [vmem:[%s4] sm:$0x1]
  %v1104 = vlaneseq
  %v1105 = vshrl.u32 %v1104, 7
  %v1106 = vsub.s32 0, %v1105
  %v1107 = vrot.slane %v1102, %v1106
  %v1109 = vadd.f32 %v1094, %v1107
  %v1110 = vadd.f32 %v1095, %v1107
  %v1111 = vadd.f32 %v1096, %v1107
  %v1112 = vadd.f32 %v1097, %v1107
  %v1113 = vadd.f32 %v1098, %v1107
  %v1114 = vadd.f32 %v1099, %v1107
  %v1115 = vadd.f32 %v1100, %v1107
  %v1116 = vadd.f32 %v1101, %v1107
  %vm1117 = vcmp.gt.f32.partialorder %v1109, 0.0
  %vm1118 = vcmp.gt.f32.partialorder %v1110, 0.0
  %vm1119 = vcmp.gt.f32.partialorder %v1111, 0.0
  %vm1120 = vcmp.gt.f32.partialorder %v1112, 0.0
  %vm1121 = vcmp.gt.f32.partialorder %v1113, 0.0
  %vm1122 = vcmp.gt.f32.partialorder %v1114, 0.0
  %vm1123 = vcmp.gt.f32.partialorder %v1115, 0.0
  %vm1124 = vcmp.gt.f32.partialorder %v1116, 0.0
  %v1125 = vmul.f32 %v1109, 0.2
  %v1126 = vmul.f32 %v1110, 0.2
  %v1127 = vmul.f32 %v1111, 0.2
  %v1128 = vmul.f32 %v1112, 0.2
  %v1129 = vmul.f32 %v1113, 0.2
  %v1130 = vmul.f32 %v1114, 0.2
  %v1131 = vmul.f32 %v1115, 0.2
  %v1132 = vmul.f32 %v1116, 0.2
  %v1133 = vsel %vm1117, %v1109, %v1125
  %v1134 = vsel %vm1118, %v1110, %v1126
  %v1135 = vsel %vm1119, %v1111, %v1127
  %v1136 = vsel %vm1120, %v1112, %v1128
  %v1137 = vsel %vm1121, %v1113, %v1129
  %v1138 = vsel %vm1122, %v1114, %v1130
  %v1139 = vsel %vm1123, %v1115, %v1131
  %v1140 = vsel %vm1124, %v1116, %v1132
  %v1141 = vpack.c.bf16 %v1134, %v1133
  %v1142 = vpack.c.bf16 %v1136, %v1135
  %v1143 = vpack.c.bf16 %v1138, %v1137
  %v1144 = vpack.c.bf16 %v1140, %v1139
  %v1149 = vunpack.c.l.b16 %v1141
  %v1150 = vunpack.c.h.b16 %v1141
  %v1151 = vunpack.c.l.b16 %v1142
  %v1152 = vunpack.c.h.b16 %v1142
  %v1153 = vunpack.c.l.b16 %v1143
  %v1154 = vunpack.c.h.b16 %v1143
  %v1155 = vunpack.c.l.b16 %v1144
  %v1156 = vunpack.c.h.b16 %v1144
  %v1157 = vpack.c.b16 %v1149, %v1149
  %v1158 = vpack.c.b16 %v1150, %v1150
  %v1159 = vpack.c.b16 %v1151, %v1151
  %v1160 = vpack.c.b16 %v1152, %v1152
  %v1161 = vpack.c.b16 %v1153, %v1153
  %v1162 = vpack.c.b16 %v1154, %v1154
  %v1163 = vpack.c.b16 %v1155, %v1155
  %v1164 = vpack.c.b16 %v1156, %v1156
  %1173 = vst [vmem:[%s5] sm:$0xf] %v1157
  %1174 = vst [vmem:[%s5 + $0x4] sm:$0xf] %v1158
  %1175 = vst [vmem:[%s5 + $0x8] sm:$0xf] %v1159
  %1176 = vst [vmem:[%s5 + $0xc] sm:$0xf] %v1160
  %1177 = vst [vmem:[%s5 + $0x10] sm:$0xf] %v1161
  %1178 = vst [vmem:[%s5 + $0x14] sm:$0xf] %v1162
  %1179 = vst [vmem:[%s5 + $0x18] sm:$0xf] %v1163
  %1180 = vst [vmem:[%s5 + $0x1c] sm:$0xf] %v1164
  // Predicated region
  $region22: #{dgcnn_forward.8} parent=0 // pred_check
    _
  $region23: #{dgcnn_forward.8} parent=0 // pred_check_branch
    %1182 = sbr.rel (0) target = $region25
  $region24: #{dgcnn_forward.8} parent=0 // pred_region
    _
  $region25: #{dgcnn_forward.8} parent=0 // pred_fallthru
    _
  // Predicated region
  $region26: #{dgcnn_forward.8} parent=0 // pred_check
    _
  $region27: #{dgcnn_forward.8} parent=0 // pred_check_branch
    %1184 = sbr.rel (0) target = $region29
  $region28: #{dgcnn_forward.8} parent=0 // pred_region
    _
  $region29: #{dgcnn_forward.8} parent=0 // pred_fallthru
    _

// kernel: dgcnn_forward.9
$region0: #{dgcnn_forward.9}
  #allocation0 [shape = 'u32[]', space=smem, size = 0x4, offset = 0x4, fixed_abs, tag = 'smem constant byte address 0x4 - core index']
  #allocation1 [shape = 'u32[144,128]{1,0:T(1,128)}', space=vmem, size = 0x12000, scoped, tag = 'internal scratch']
  %s0 = inlined_call_operand.vmem [shape: bf16[8,64,128], index: 0, kind: input, shape index: {}]
  %s1 = inlined_call_operand.vmem [shape: bf16[64,128], index: 1, kind: input, shape index: {}]
  %s2 = inlined_call_operand.vmem [shape: bf16[128,256], index: 2, kind: input, shape index: {}]
  %s3 = inlined_call_operand.vmem [shape: bf16[128,256], index: 3, kind: input, shape index: {}]
  %s4 = inlined_call_operand.vmem [shape: f32[1,256], index: 4, kind: input, shape index: {}]
  %s5 = inlined_call_operand.vmem [shape: bf16[64,256], index: 5, kind: output, shape index: {}]
  %s6 = sld [smem:[#allocation0]]
  $region30: #{dgcnn_forward.9} parent=0
    _
  %s8 = ssub.s32 1, %s6
  %s9 = scalar_select 0, %s8, %s6
  // Predicated region
  $region2: #{dgcnn_forward.9} parent=0 // pred_check
    _
  $region3: #{dgcnn_forward.9} parent=0 // pred_check_branch
    %11 = sbr.rel (0) target = $region5
  $region4: #{dgcnn_forward.9} parent=0 // pred_region
    _
  $region5: #{dgcnn_forward.9} parent=0 // pred_fallthru
    _
  // Predicated region
  $region6: #{dgcnn_forward.9} parent=0 // pred_check
    _
  $region7: #{dgcnn_forward.9} parent=0 // pred_check_branch
    %13 = sbr.rel (0) target = $region9
  $region8: #{dgcnn_forward.9} parent=0 // pred_region
    _
  $region9: #{dgcnn_forward.9} parent=0 // pred_fallthru
    _
  // Predicated region
  $region10: #{dgcnn_forward.9} parent=0 // pred_check
    _
  $region11: #{dgcnn_forward.9} parent=0 // pred_check_branch
    %15 = sbr.rel (0) target = $region13
  $region12: #{dgcnn_forward.9} parent=0 // pred_region
    _
  $region13: #{dgcnn_forward.9} parent=0 // pred_fallthru
    _
  // Predicated region
  $region14: #{dgcnn_forward.9} parent=0 // pred_check
    _
  $region15: #{dgcnn_forward.9} parent=0 // pred_check_branch
    %17 = sbr.rel (0) target = $region17
  $region16: #{dgcnn_forward.9} parent=0 // pred_region
    _
  $region17: #{dgcnn_forward.9} parent=0 // pred_fallthru
    _
  // Predicated region
  $region18: #{dgcnn_forward.9} parent=0 // pred_check
    _
  $region19: #{dgcnn_forward.9} parent=0 // pred_check_branch
    %19 = sbr.rel (0) target = $region21
  $region20: #{dgcnn_forward.9} parent=0 // pred_region
    _
  $region21: #{dgcnn_forward.9} parent=0 // pred_fallthru
    _
  %v21 = vld [vmem:[%s1] sm:$0xf]
  %v22 = vld [vmem:[%s1 + $0x4] sm:$0xf]
  %v23 = vld [vmem:[%s1 + $0x8] sm:$0xf]
  %v24 = vld [vmem:[%s1 + $0xc] sm:$0xf]
  %v25 = vld [vmem:[%s1 + $0x10] sm:$0xf]
  %v26 = vld [vmem:[%s1 + $0x14] sm:$0xf]
  %v27 = vld [vmem:[%s1 + $0x18] sm:$0xf]
  %v28 = vld [vmem:[%s1 + $0x1c] sm:$0xf]
  %v29 = vld [vmem:[%s3] sm:$0xff]
  %v30 = vld [vmem:[%s3 + $0x8] sm:$0xff]
  %v31 = vld [vmem:[%s3 + $0x10] sm:$0xff]
  %v32 = vld [vmem:[%s3 + $0x18] sm:$0xff]
  %v33 = vld [vmem:[%s3 + $0x20] sm:$0xff]
  %v34 = vld [vmem:[%s3 + $0x28] sm:$0xff]
  %v35 = vld [vmem:[%s3 + $0x30] sm:$0xff]
  %v36 = vld [vmem:[%s3 + $0x38] sm:$0xff]
  %v37 = vld [vmem:[%s3 + $0x40] sm:$0xff]
  %v38 = vld [vmem:[%s3 + $0x48] sm:$0xff]
  %v39 = vld [vmem:[%s3 + $0x50] sm:$0xff]
  %v40 = vld [vmem:[%s3 + $0x58] sm:$0xff]
  %v41 = vld [vmem:[%s3 + $0x60] sm:$0xff]
  %v42 = vld [vmem:[%s3 + $0x68] sm:$0xff]
  %v43 = vld [vmem:[%s3 + $0x70] sm:$0xff]
  %v44 = vld [vmem:[%s3 + $0x78] sm:$0xff]
  %v53 = vunpack.c.l.b16 %v21
  %v54 = vunpack.c.l.b16 %v22
  %v55 = vunpack.c.l.b16 %v23
  %v56 = vunpack.c.l.b16 %v24
  %v57 = vunpack.c.l.b16 %v25
  %v58 = vunpack.c.l.b16 %v26
  %v59 = vunpack.c.l.b16 %v27
  %v60 = vunpack.c.l.b16 %v28
  %v61 = vpack.c.b16 %v54, %v53
  %v62 = vpack.c.b16 %v56, %v55
  %v63 = vpack.c.b16 %v58, %v57
  %v64 = vpack.c.b16 %v60, %v59
  %v85 = vunpack.c.l.b16 %v29
  %v86 = vunpack.c.h.b16 %v29
  %v87 = vunpack.c.l.b16 %v30
  %v88 = vunpack.c.h.b16 %v30
  %v89 = vunpack.c.l.b16 %v31
  %v90 = vunpack.c.h.b16 %v31
  %v91 = vunpack.c.l.b16 %v32
  %v92 = vunpack.c.h.b16 %v32
  %v93 = vunpack.c.l.b16 %v33
  %v94 = vunpack.c.h.b16 %v33
  %v95 = vunpack.c.l.b16 %v34
  %v96 = vunpack.c.h.b16 %v34
  %v97 = vunpack.c.l.b16 %v35
  %v98 = vunpack.c.h.b16 %v35
  %v99 = vunpack.c.l.b16 %v36
  %v100 = vunpack.c.h.b16 %v36
  %v101 = vunpack.c.l.b16 %v37
  %v102 = vunpack.c.h.b16 %v37
  %v103 = vunpack.c.l.b16 %v38
  %v104 = vunpack.c.h.b16 %v38
  %v105 = vunpack.c.l.b16 %v39
  %v106 = vunpack.c.h.b16 %v39
  %v107 = vunpack.c.l.b16 %v40
  %v108 = vunpack.c.h.b16 %v40
  %v109 = vunpack.c.l.b16 %v41
  %v110 = vunpack.c.h.b16 %v41
  %v111 = vunpack.c.l.b16 %v42
  %v112 = vunpack.c.h.b16 %v42
  %v113 = vunpack.c.l.b16 %v43
  %v114 = vunpack.c.h.b16 %v43
  %v115 = vunpack.c.l.b16 %v44
  %v116 = vunpack.c.h.b16 %v44
  %v117 = vpack.c.b16 %v87, %v85
  %v118 = vpack.c.b16 %v88, %v86
  %v119 = vpack.c.b16 %v91, %v89
  %v120 = vpack.c.b16 %v92, %v90
  %v121 = vpack.c.b16 %v95, %v93
  %v122 = vpack.c.b16 %v96, %v94
  %v123 = vpack.c.b16 %v99, %v97
  %v124 = vpack.c.b16 %v100, %v98
  %v125 = vpack.c.b16 %v103, %v101
  %v126 = vpack.c.b16 %v104, %v102
  %v127 = vpack.c.b16 %v107, %v105
  %v128 = vpack.c.b16 %v108, %v106
  %v129 = vpack.c.b16 %v111, %v109
  %v130 = vpack.c.b16 %v112, %v110
  %v131 = vpack.c.b16 %v115, %v113
  %v132 = vpack.c.b16 %v116, %v114
  %149 = vmatprep.subr.bf16.mxu0 %v132
  %150 = vmatpush1.bf16.msra.mxu0 %v131
  %151 = vmatprep.subr.bf16.mxu0 %v130
  %152 = vmatpush1.bf16.msra.mxu0 %v129
  %153 = vmatprep.subr.bf16.mxu0 %v128
  %154 = vmatpush1.bf16.msra.mxu0 %v127
  %155 = vmatprep.subr.bf16.mxu0 %v126
  %156 = vmatpush1.bf16.msra.mxu0 %v125
  %157 = vmatprep.subr.bf16.mxu0 %v124
  %158 = vmatpush1.bf16.msra.mxu0 %v123
  %159 = vmatprep.subr.bf16.mxu0 %v122
  %160 = vmatpush1.bf16.msra.mxu0 %v121
  %161 = vmatprep.subr.bf16.mxu0 %v120
  %162 = vmatpush1.bf16.msra.mxu0 %v119
  %163 = vmatprep.subr.bf16.mxu0 %v118
  %164 = vmatpush1.bf16.msra.mxu0 %v117
  %165 = vmatprep.subr.bf16.mxu0 0
  %166 = vmatpush2.bf16.msra.mxu0 0
  %167 = vmatprep.subr.bf16.mxu0 0
  %168 = vmatpush2.bf16.msra.mxu0 0
  %169 = vmatprep.subr.bf16.mxu0 0
  %170 = vmatpush2.bf16.msra.mxu0 0
  %171 = vmatprep.subr.bf16.mxu0 0
  %172 = vmatpush2.bf16.msra.mxu0 0
  %173 = vmatprep.subr.bf16.mxu0 0
  %174 = vmatpush2.bf16.msra.mxu0 0
  %175 = vmatprep.subr.bf16.mxu0 0
  %176 = vmatpush2.bf16.msra.mxu0 0
  %177 = vmatprep.subr.bf16.mxu0 0
  %178 = vmatpush2.bf16.msra.mxu0 0
  %179 = vmatprep.subr.bf16.mxu0 0
  %180 = vmatpush2.bf16.msra.mxu0 0
  %181 = vmatprep.mubr.bf16.mxu0 0
  %182 = vmatmul.mubr.bf16.gmra.mxu0 %v61
  %v183 = vpop.f32.mrf.mxu0
  %v184 = vadd.f32 0.0, %v183
  %v185 = vpop.f32.mrf.mxu0
  %v186 = vadd.f32 0.0, %v185
  %v187 = vpop.f32.mrf.mxu0
  %v188 = vadd.f32 0.0, %v187
  %v189 = vpop.f32.mrf.mxu0
  %v190 = vadd.f32 0.0, %v189
  %191 = vmatprep.mubr.bf16.mxu0 0
  %192 = vmatmul.mubr.bf16.gmra.mxu0 %v62
  %v193 = vpop.f32.mrf.mxu0
  %v194 = vadd.f32 0.0, %v193
  %v195 = vpop.f32.mrf.mxu0
  %v196 = vadd.f32 0.0, %v195
  %v197 = vpop.f32.mrf.mxu0
  %v198 = vadd.f32 0.0, %v197
  %v199 = vpop.f32.mrf.mxu0
  %v200 = vadd.f32 0.0, %v199
  %201 = vmatprep.mubr.bf16.mxu0 0
  %202 = vmatmul.mubr.bf16.gmra.mxu0 %v63
  %v203 = vpop.f32.mrf.mxu0
  %v204 = vadd.f32 0.0, %v203
  %v205 = vpop.f32.mrf.mxu0
  %v206 = vadd.f32 0.0, %v205
  %v207 = vpop.f32.mrf.mxu0
  %v208 = vadd.f32 0.0, %v207
  %v209 = vpop.f32.mrf.mxu0
  %v210 = vadd.f32 0.0, %v209
  %211 = vmatprep.mubr.bf16.mxu0 0
  %212 = vmatmul.mubr.bf16.gmra.mxu0 %v64
  %v213 = vpop.f32.mrf.mxu0
  %v214 = vadd.f32 0.0, %v213
  %v215 = vpop.f32.mrf.mxu0
  %v216 = vadd.f32 0.0, %v215
  %v217 = vpop.f32.mrf.mxu0
  %v218 = vadd.f32 0.0, %v217
  %v219 = vpop.f32.mrf.mxu0
  %v220 = vadd.f32 0.0, %v219
  %221 = vdwg.mxu0
  %v222 = vld [vmem:[%s0] sm:$0xf]
  %v223 = vld [vmem:[%s0 + $0x4] sm:$0xf]
  %v224 = vld [vmem:[%s0 + $0x8] sm:$0xf]
  %v225 = vld [vmem:[%s0 + $0xc] sm:$0xf]
  %v226 = vld [vmem:[%s0 + $0x10] sm:$0xf]
  %v227 = vld [vmem:[%s0 + $0x14] sm:$0xf]
  %v228 = vld [vmem:[%s0 + $0x18] sm:$0xf]
  %v229 = vld [vmem:[%s0 + $0x1c] sm:$0xf]
  %v230 = vld [vmem:[%s2] sm:$0xff]
  %v231 = vld [vmem:[%s2 + $0x8] sm:$0xff]
  %v232 = vld [vmem:[%s2 + $0x10] sm:$0xff]
  %v233 = vld [vmem:[%s2 + $0x18] sm:$0xff]
  %v234 = vld [vmem:[%s2 + $0x20] sm:$0xff]
  %v235 = vld [vmem:[%s2 + $0x28] sm:$0xff]
  %v236 = vld [vmem:[%s2 + $0x30] sm:$0xff]
  %v237 = vld [vmem:[%s2 + $0x38] sm:$0xff]
  %v238 = vld [vmem:[%s2 + $0x40] sm:$0xff]
  %v239 = vld [vmem:[%s2 + $0x48] sm:$0xff]
  %v240 = vld [vmem:[%s2 + $0x50] sm:$0xff]
  %v241 = vld [vmem:[%s2 + $0x58] sm:$0xff]
  %v242 = vld [vmem:[%s2 + $0x60] sm:$0xff]
  %v243 = vld [vmem:[%s2 + $0x68] sm:$0xff]
  %v244 = vld [vmem:[%s2 + $0x70] sm:$0xff]
  %v245 = vld [vmem:[%s2 + $0x78] sm:$0xff]
  %v254 = vunpack.c.l.b16 %v222
  %v255 = vunpack.c.l.b16 %v223
  %v256 = vunpack.c.l.b16 %v224
  %v257 = vunpack.c.l.b16 %v225
  %v258 = vunpack.c.l.b16 %v226
  %v259 = vunpack.c.l.b16 %v227
  %v260 = vunpack.c.l.b16 %v228
  %v261 = vunpack.c.l.b16 %v229
  %v262 = vpack.c.b16 %v255, %v254
  %v263 = vpack.c.b16 %v257, %v256
  %v264 = vpack.c.b16 %v259, %v258
  %v265 = vpack.c.b16 %v261, %v260
  %v286 = vunpack.c.l.b16 %v230
  %v287 = vunpack.c.h.b16 %v230
  %v288 = vunpack.c.l.b16 %v231
  %v289 = vunpack.c.h.b16 %v231
  %v290 = vunpack.c.l.b16 %v232
  %v291 = vunpack.c.h.b16 %v232
  %v292 = vunpack.c.l.b16 %v233
  %v293 = vunpack.c.h.b16 %v233
  %v294 = vunpack.c.l.b16 %v234
  %v295 = vunpack.c.h.b16 %v234
  %v296 = vunpack.c.l.b16 %v235
  %v297 = vunpack.c.h.b16 %v235
  %v298 = vunpack.c.l.b16 %v236
  %v299 = vunpack.c.h.b16 %v236
  %v300 = vunpack.c.l.b16 %v237
  %v301 = vunpack.c.h.b16 %v237
  %v302 = vunpack.c.l.b16 %v238
  %v303 = vunpack.c.h.b16 %v238
  %v304 = vunpack.c.l.b16 %v239
  %v305 = vunpack.c.h.b16 %v239
  %v306 = vunpack.c.l.b16 %v240
  %v307 = vunpack.c.h.b16 %v240
  %v308 = vunpack.c.l.b16 %v241
  %v309 = vunpack.c.h.b16 %v241
  %v310 = vunpack.c.l.b16 %v242
  %v311 = vunpack.c.h.b16 %v242
  %v312 = vunpack.c.l.b16 %v243
  %v313 = vunpack.c.h.b16 %v243
  %v314 = vunpack.c.l.b16 %v244
  %v315 = vunpack.c.h.b16 %v244
  %v316 = vunpack.c.l.b16 %v245
  %v317 = vunpack.c.h.b16 %v245
  %v318 = vpack.c.b16 %v288, %v286
  %v319 = vpack.c.b16 %v289, %v287
  %v320 = vpack.c.b16 %v292, %v290
  %v321 = vpack.c.b16 %v293, %v291
  %v322 = vpack.c.b16 %v296, %v294
  %v323 = vpack.c.b16 %v297, %v295
  %v324 = vpack.c.b16 %v300, %v298
  %v325 = vpack.c.b16 %v301, %v299
  %v326 = vpack.c.b16 %v304, %v302
  %v327 = vpack.c.b16 %v305, %v303
  %v328 = vpack.c.b16 %v308, %v306
  %v329 = vpack.c.b16 %v309, %v307
  %v330 = vpack.c.b16 %v312, %v310
  %v331 = vpack.c.b16 %v313, %v311
  %v332 = vpack.c.b16 %v316, %v314
  %v333 = vpack.c.b16 %v317, %v315
  %350 = vmatprep.subr.bf16.mxu0 %v333
  %351 = vmatpush1.bf16.msra.mxu0 %v332
  %352 = vmatprep.subr.bf16.mxu0 %v331
  %353 = vmatpush1.bf16.msra.mxu0 %v330
  %354 = vmatprep.subr.bf16.mxu0 %v329
  %355 = vmatpush1.bf16.msra.mxu0 %v328
  %356 = vmatprep.subr.bf16.mxu0 %v327
  %357 = vmatpush1.bf16.msra.mxu0 %v326
  %358 = vmatprep.subr.bf16.mxu0 %v325
  %359 = vmatpush1.bf16.msra.mxu0 %v324
  %360 = vmatprep.subr.bf16.mxu0 %v323
  %361 = vmatpush1.bf16.msra.mxu0 %v322
  %362 = vmatprep.subr.bf16.mxu0 %v321
  %363 = vmatpush1.bf16.msra.mxu0 %v320
  %364 = vmatprep.subr.bf16.mxu0 %v319
  %365 = vmatpush1.bf16.msra.mxu0 %v318
  %366 = vmatprep.subr.bf16.mxu0 0
  %367 = vmatpush2.bf16.msra.mxu0 0
  %368 = vmatprep.subr.bf16.mxu0 0
  %369 = vmatpush2.bf16.msra.mxu0 0
  %370 = vmatprep.subr.bf16.mxu0 0
  %371 = vmatpush2.bf16.msra.mxu0 0
  %372 = vmatprep.subr.bf16.mxu0 0
  %373 = vmatpush2.bf16.msra.mxu0 0
  %374 = vmatprep.subr.bf16.mxu0 0
  %375 = vmatpush2.bf16.msra.mxu0 0
  %376 = vmatprep.subr.bf16.mxu0 0
  %377 = vmatpush2.bf16.msra.mxu0 0
  %378 = vmatprep.subr.bf16.mxu0 0
  %379 = vmatpush2.bf16.msra.mxu0 0
  %380 = vmatprep.subr.bf16.mxu0 0
  %381 = vmatpush2.bf16.msra.mxu0 0
  %382 = vmatprep.mubr.bf16.mxu0 0
  %383 = vmatmul.mubr.bf16.gmra.mxu0 %v262
  %v384 = vpop.f32.mrf.mxu0
  %v385 = vadd.f32 0.0, %v384
  %v386 = vpop.f32.mrf.mxu0
  %v387 = vadd.f32 0.0, %v386
  %v388 = vpop.f32.mrf.mxu0
  %v389 = vadd.f32 0.0, %v388
  %v390 = vpop.f32.mrf.mxu0
  %v391 = vadd.f32 0.0, %v390
  %392 = vmatprep.mubr.bf16.mxu0 0
  %393 = vmatmul.mubr.bf16.gmra.mxu0 %v263
  %v394 = vpop.f32.mrf.mxu0
  %v395 = vadd.f32 0.0, %v394
  %v396 = vpop.f32.mrf.mxu0
  %v397 = vadd.f32 0.0, %v396
  %v398 = vpop.f32.mrf.mxu0
  %v399 = vadd.f32 0.0, %v398
  %v400 = vpop.f32.mrf.mxu0
  %v401 = vadd.f32 0.0, %v400
  %402 = vmatprep.mubr.bf16.mxu0 0
  %403 = vmatmul.mubr.bf16.gmra.mxu0 %v264
  %v404 = vpop.f32.mrf.mxu0
  %v405 = vadd.f32 0.0, %v404
  %v406 = vpop.f32.mrf.mxu0
  %v407 = vadd.f32 0.0, %v406
  %v408 = vpop.f32.mrf.mxu0
  %v409 = vadd.f32 0.0, %v408
  %v410 = vpop.f32.mrf.mxu0
  %v411 = vadd.f32 0.0, %v410
  %412 = vmatprep.mubr.bf16.mxu0 0
  %413 = vmatmul.mubr.bf16.gmra.mxu0 %v265
  %v414 = vpop.f32.mrf.mxu0
  %v415 = vadd.f32 0.0, %v414
  %v416 = vpop.f32.mrf.mxu0
  %v417 = vadd.f32 0.0, %v416
  %v418 = vpop.f32.mrf.mxu0
  %v419 = vadd.f32 0.0, %v418
  %v420 = vpop.f32.mrf.mxu0
  %v421 = vadd.f32 0.0, %v420
  %422 = vdwg.mxu0
  %s423 = scalar_lea.vmem %s0, 32
  %v424 = vld [vmem:[%s423] sm:$0xf]
  %v425 = vld [vmem:[%s423 + $0x4] sm:$0xf]
  %v426 = vld [vmem:[%s423 + $0x8] sm:$0xf]
  %v427 = vld [vmem:[%s423 + $0xc] sm:$0xf]
  %v428 = vld [vmem:[%s423 + $0x10] sm:$0xf]
  %v429 = vld [vmem:[%s423 + $0x14] sm:$0xf]
  %v430 = vld [vmem:[%s423 + $0x18] sm:$0xf]
  %v431 = vld [vmem:[%s423 + $0x1c] sm:$0xf]
  %v440 = vunpack.c.l.b16 %v424
  %v441 = vunpack.c.l.b16 %v425
  %v442 = vunpack.c.l.b16 %v426
  %v443 = vunpack.c.l.b16 %v427
  %v444 = vunpack.c.l.b16 %v428
  %v445 = vunpack.c.l.b16 %v429
  %v446 = vunpack.c.l.b16 %v430
  %v447 = vunpack.c.l.b16 %v431
  %v448 = vpack.c.b16 %v441, %v440
  %v449 = vpack.c.b16 %v443, %v442
  %v450 = vpack.c.b16 %v445, %v444
  %v451 = vpack.c.b16 %v447, %v446
  %456 = vmatprep.subr.bf16.mxu0 %v333
  %457 = vmatpush1.bf16.msra.mxu0 %v332
  %458 = vmatprep.subr.bf16.mxu0 %v331
  %459 = vmatpush1.bf16.msra.mxu0 %v330
  %460 = vmatprep.subr.bf16.mxu0 %v329
  %461 = vmatpush1.bf16.msra.mxu0 %v328
  %462 = vmatprep.subr.bf16.mxu0 %v327
  %463 = vmatpush1.bf16.msra.mxu0 %v326
  %464 = vmatprep.subr.bf16.mxu0 %v325
  %465 = vmatpush1.bf16.msra.mxu0 %v324
  %466 = vmatprep.subr.bf16.mxu0 %v323
  %467 = vmatpush1.bf16.msra.mxu0 %v322
  %468 = vmatprep.subr.bf16.mxu0 %v321
  %469 = vmatpush1.bf16.msra.mxu0 %v320
  %470 = vmatprep.subr.bf16.mxu0 %v319
  %471 = vmatpush1.bf16.msra.mxu0 %v318
  %472 = vmatprep.subr.bf16.mxu0 0
  %473 = vmatpush2.bf16.msra.mxu0 0
  %474 = vmatprep.subr.bf16.mxu0 0
  %475 = vmatpush2.bf16.msra.mxu0 0
  %476 = vmatprep.subr.bf16.mxu0 0
  %477 = vmatpush2.bf16.msra.mxu0 0
  %478 = vmatprep.subr.bf16.mxu0 0
  %479 = vmatpush2.bf16.msra.mxu0 0
  %480 = vmatprep.subr.bf16.mxu0 0
  %481 = vmatpush2.bf16.msra.mxu0 0
  %482 = vmatprep.subr.bf16.mxu0 0
  %483 = vmatpush2.bf16.msra.mxu0 0
  %484 = vmatprep.subr.bf16.mxu0 0
  %485 = vmatpush2.bf16.msra.mxu0 0
  %486 = vmatprep.subr.bf16.mxu0 0
  %487 = vmatpush2.bf16.msra.mxu0 0
  %488 = vmatprep.mubr.bf16.mxu0 0
  %489 = vmatmul.mubr.bf16.gmra.mxu0 %v448
  %v490 = vpop.f32.mrf.mxu0
  %v491 = vadd.f32 0.0, %v490
  %v492 = vpop.f32.mrf.mxu0
  %v493 = vadd.f32 0.0, %v492
  %v494 = vpop.f32.mrf.mxu0
  %v495 = vadd.f32 0.0, %v494
  %v496 = vpop.f32.mrf.mxu0
  %v497 = vadd.f32 0.0, %v496
  %498 = vmatprep.mubr.bf16.mxu0 0
  %499 = vmatmul.mubr.bf16.gmra.mxu0 %v449
  %v500 = vpop.f32.mrf.mxu0
  %v501 = vadd.f32 0.0, %v500
  %v502 = vpop.f32.mrf.mxu0
  %v503 = vadd.f32 0.0, %v502
  %v504 = vpop.f32.mrf.mxu0
  %v505 = vadd.f32 0.0, %v504
  %v506 = vpop.f32.mrf.mxu0
  %v507 = vadd.f32 0.0, %v506
  %508 = vmatprep.mubr.bf16.mxu0 0
  %509 = vmatmul.mubr.bf16.gmra.mxu0 %v450
  %v510 = vpop.f32.mrf.mxu0
  %v511 = vadd.f32 0.0, %v510
  %v512 = vpop.f32.mrf.mxu0
  %v513 = vadd.f32 0.0, %v512
  %v514 = vpop.f32.mrf.mxu0
  %v515 = vadd.f32 0.0, %v514
  %v516 = vpop.f32.mrf.mxu0
  %v517 = vadd.f32 0.0, %v516
  %518 = vmatprep.mubr.bf16.mxu0 0
  %519 = vmatmul.mubr.bf16.gmra.mxu0 %v451
  %v520 = vpop.f32.mrf.mxu0
  %v521 = vadd.f32 0.0, %v520
  %v522 = vpop.f32.mrf.mxu0
  %v523 = vadd.f32 0.0, %v522
  %v524 = vpop.f32.mrf.mxu0
  %v525 = vadd.f32 0.0, %v524
  %v526 = vpop.f32.mrf.mxu0
  %v527 = vadd.f32 0.0, %v526
  %528 = vdwg.mxu0
  %v529 = vmax.f32 %v385, %v491
  %v530 = vmax.f32 %v387, %v493
  %v531 = vmax.f32 %v389, %v495
  %v532 = vmax.f32 %v391, %v497
  %v533 = vmax.f32 %v395, %v501
  %v534 = vmax.f32 %v397, %v503
  %v535 = vmax.f32 %v399, %v505
  %v536 = vmax.f32 %v401, %v507
  %v537 = vmax.f32 %v405, %v511
  %v538 = vmax.f32 %v407, %v513
  %v539 = vmax.f32 %v409, %v515
  %v540 = vmax.f32 %v411, %v517
  %v541 = vmax.f32 %v415, %v521
  %v542 = vmax.f32 %v417, %v523
  %v543 = vmax.f32 %v419, %v525
  %v544 = vmax.f32 %v421, %v527
  %s545 = scalar_lea.vmem %s0, 64
  %v546 = vld [vmem:[%s545] sm:$0xf]
  %v547 = vld [vmem:[%s545 + $0x4] sm:$0xf]
  %v548 = vld [vmem:[%s545 + $0x8] sm:$0xf]
  %v549 = vld [vmem:[%s545 + $0xc] sm:$0xf]
  %v550 = vld [vmem:[%s545 + $0x10] sm:$0xf]
  %v551 = vld [vmem:[%s545 + $0x14] sm:$0xf]
  %v552 = vld [vmem:[%s545 + $0x18] sm:$0xf]
  %v553 = vld [vmem:[%s545 + $0x1c] sm:$0xf]
  %v562 = vunpack.c.l.b16 %v546
  %v563 = vunpack.c.l.b16 %v547
  %v564 = vunpack.c.l.b16 %v548
  %v565 = vunpack.c.l.b16 %v549
  %v566 = vunpack.c.l.b16 %v550
  %v567 = vunpack.c.l.b16 %v551
  %v568 = vunpack.c.l.b16 %v552
  %v569 = vunpack.c.l.b16 %v553
  %v570 = vpack.c.b16 %v563, %v562
  %v571 = vpack.c.b16 %v565, %v564
  %v572 = vpack.c.b16 %v567, %v566
  %v573 = vpack.c.b16 %v569, %v568
  %578 = vmatprep.subr.bf16.mxu0 %v333
  %579 = vmatpush1.bf16.msra.mxu0 %v332
  %580 = vmatprep.subr.bf16.mxu0 %v331
  %581 = vmatpush1.bf16.msra.mxu0 %v330
  %582 = vmatprep.subr.bf16.mxu0 %v329
  %583 = vmatpush1.bf16.msra.mxu0 %v328
  %584 = vmatprep.subr.bf16.mxu0 %v327
  %585 = vmatpush1.bf16.msra.mxu0 %v326
  %586 = vmatprep.subr.bf16.mxu0 %v325
  %587 = vmatpush1.bf16.msra.mxu0 %v324
  %588 = vmatprep.subr.bf16.mxu0 %v323
  %589 = vmatpush1.bf16.msra.mxu0 %v322
  %590 = vmatprep.subr.bf16.mxu0 %v321
  %591 = vmatpush1.bf16.msra.mxu0 %v320
  %592 = vmatprep.subr.bf16.mxu0 %v319
  %593 = vmatpush1.bf16.msra.mxu0 %v318
  %594 = vmatprep.subr.bf16.mxu0 0
  %595 = vmatpush2.bf16.msra.mxu0 0
  %596 = vmatprep.subr.bf16.mxu0 0
  %597 = vmatpush2.bf16.msra.mxu0 0
  %598 = vmatprep.subr.bf16.mxu0 0
  %599 = vmatpush2.bf16.msra.mxu0 0
  %600 = vmatprep.subr.bf16.mxu0 0
  %601 = vmatpush2.bf16.msra.mxu0 0
  %602 = vmatprep.subr.bf16.mxu0 0
  %603 = vmatpush2.bf16.msra.mxu0 0
  %604 = vmatprep.subr.bf16.mxu0 0
  %605 = vmatpush2.bf16.msra.mxu0 0
  %606 = vmatprep.subr.bf16.mxu0 0
  %607 = vmatpush2.bf16.msra.mxu0 0
  %608 = vmatprep.subr.bf16.mxu0 0
  %609 = vmatpush2.bf16.msra.mxu0 0
  %610 = vmatprep.mubr.bf16.mxu0 0
  %611 = vmatmul.mubr.bf16.gmra.mxu0 %v570
  %v612 = vpop.f32.mrf.mxu0
  %v613 = vadd.f32 0.0, %v612
  %v614 = vpop.f32.mrf.mxu0
  %v615 = vadd.f32 0.0, %v614
  %v616 = vpop.f32.mrf.mxu0
  %v617 = vadd.f32 0.0, %v616
  %v618 = vpop.f32.mrf.mxu0
  %v619 = vadd.f32 0.0, %v618
  %620 = vmatprep.mubr.bf16.mxu0 0
  %621 = vmatmul.mubr.bf16.gmra.mxu0 %v571
  %v622 = vpop.f32.mrf.mxu0
  %v623 = vadd.f32 0.0, %v622
  %v624 = vpop.f32.mrf.mxu0
  %v625 = vadd.f32 0.0, %v624
  %v626 = vpop.f32.mrf.mxu0
  %v627 = vadd.f32 0.0, %v626
  %v628 = vpop.f32.mrf.mxu0
  %v629 = vadd.f32 0.0, %v628
  %630 = vmatprep.mubr.bf16.mxu0 0
  %631 = vmatmul.mubr.bf16.gmra.mxu0 %v572
  %v632 = vpop.f32.mrf.mxu0
  %v633 = vadd.f32 0.0, %v632
  %v634 = vpop.f32.mrf.mxu0
  %v635 = vadd.f32 0.0, %v634
  %v636 = vpop.f32.mrf.mxu0
  %v637 = vadd.f32 0.0, %v636
  %v638 = vpop.f32.mrf.mxu0
  %v639 = vadd.f32 0.0, %v638
  %640 = vmatprep.mubr.bf16.mxu0 0
  %641 = vmatmul.mubr.bf16.gmra.mxu0 %v573
  %v642 = vpop.f32.mrf.mxu0
  %v643 = vadd.f32 0.0, %v642
  %v644 = vpop.f32.mrf.mxu0
  %v645 = vadd.f32 0.0, %v644
  %v646 = vpop.f32.mrf.mxu0
  %v647 = vadd.f32 0.0, %v646
  %v648 = vpop.f32.mrf.mxu0
  %v649 = vadd.f32 0.0, %v648
  %650 = vdwg.mxu0
  %v651 = vmax.f32 %v529, %v613
  %v652 = vmax.f32 %v530, %v615
  %v653 = vmax.f32 %v531, %v617
  %v654 = vmax.f32 %v532, %v619
  %v655 = vmax.f32 %v533, %v623
  %v656 = vmax.f32 %v534, %v625
  %v657 = vmax.f32 %v535, %v627
  %v658 = vmax.f32 %v536, %v629
  %v659 = vmax.f32 %v537, %v633
  %v660 = vmax.f32 %v538, %v635
  %v661 = vmax.f32 %v539, %v637
  %v662 = vmax.f32 %v540, %v639
  %v663 = vmax.f32 %v541, %v643
  %v664 = vmax.f32 %v542, %v645
  %v665 = vmax.f32 %v543, %v647
  %v666 = vmax.f32 %v544, %v649
  %s667 = scalar_lea.vmem %s0, 96
  %v668 = vld [vmem:[%s667] sm:$0xf]
  %v669 = vld [vmem:[%s667 + $0x4] sm:$0xf]
  %v670 = vld [vmem:[%s667 + $0x8] sm:$0xf]
  %v671 = vld [vmem:[%s667 + $0xc] sm:$0xf]
  %v672 = vld [vmem:[%s667 + $0x10] sm:$0xf]
  %v673 = vld [vmem:[%s667 + $0x14] sm:$0xf]
  %v674 = vld [vmem:[%s667 + $0x18] sm:$0xf]
  %v675 = vld [vmem:[%s667 + $0x1c] sm:$0xf]
  %v684 = vunpack.c.l.b16 %v668
  %v685 = vunpack.c.l.b16 %v669
  %v686 = vunpack.c.l.b16 %v670
  %v687 = vunpack.c.l.b16 %v671
  %v688 = vunpack.c.l.b16 %v672
  %v689 = vunpack.c.l.b16 %v673
  %v690 = vunpack.c.l.b16 %v674
  %v691 = vunpack.c.l.b16 %v675
  %v692 = vpack.c.b16 %v685, %v684
  %v693 = vpack.c.b16 %v687, %v686
  %v694 = vpack.c.b16 %v689, %v688
  %v695 = vpack.c.b16 %v691, %v690
  %700 = vmatprep.subr.bf16.mxu0 %v333
  %701 = vmatpush1.bf16.msra.mxu0 %v332
  %702 = vmatprep.subr.bf16.mxu0 %v331
  %703 = vmatpush1.bf16.msra.mxu0 %v330
  %704 = vmatprep.subr.bf16.mxu0 %v329
  %705 = vmatpush1.bf16.msra.mxu0 %v328
  %706 = vmatprep.subr.bf16.mxu0 %v327
  %707 = vmatpush1.bf16.msra.mxu0 %v326
  %708 = vmatprep.subr.bf16.mxu0 %v325
  %709 = vmatpush1.bf16.msra.mxu0 %v324
  %710 = vmatprep.subr.bf16.mxu0 %v323
  %711 = vmatpush1.bf16.msra.mxu0 %v322
  %712 = vmatprep.subr.bf16.mxu0 %v321
  %713 = vmatpush1.bf16.msra.mxu0 %v320
  %714 = vmatprep.subr.bf16.mxu0 %v319
  %715 = vmatpush1.bf16.msra.mxu0 %v318
  %716 = vmatprep.subr.bf16.mxu0 0
  %717 = vmatpush2.bf16.msra.mxu0 0
  %718 = vmatprep.subr.bf16.mxu0 0
  %719 = vmatpush2.bf16.msra.mxu0 0
  %720 = vmatprep.subr.bf16.mxu0 0
  %721 = vmatpush2.bf16.msra.mxu0 0
  %722 = vmatprep.subr.bf16.mxu0 0
  %723 = vmatpush2.bf16.msra.mxu0 0
  %724 = vmatprep.subr.bf16.mxu0 0
  %725 = vmatpush2.bf16.msra.mxu0 0
  %726 = vmatprep.subr.bf16.mxu0 0
  %727 = vmatpush2.bf16.msra.mxu0 0
  %728 = vmatprep.subr.bf16.mxu0 0
  %729 = vmatpush2.bf16.msra.mxu0 0
  %730 = vmatprep.subr.bf16.mxu0 0
  %731 = vmatpush2.bf16.msra.mxu0 0
  %732 = vmatprep.mubr.bf16.mxu0 0
  %733 = vmatmul.mubr.bf16.gmra.mxu0 %v692
  %v734 = vpop.f32.mrf.mxu0
  %v735 = vadd.f32 0.0, %v734
  %v736 = vpop.f32.mrf.mxu0
  %v737 = vadd.f32 0.0, %v736
  %v738 = vpop.f32.mrf.mxu0
  %v739 = vadd.f32 0.0, %v738
  %v740 = vpop.f32.mrf.mxu0
  %v741 = vadd.f32 0.0, %v740
  %742 = vmatprep.mubr.bf16.mxu0 0
  %743 = vmatmul.mubr.bf16.gmra.mxu0 %v693
  %v744 = vpop.f32.mrf.mxu0
  %v745 = vadd.f32 0.0, %v744
  %v746 = vpop.f32.mrf.mxu0
  %v747 = vadd.f32 0.0, %v746
  %v748 = vpop.f32.mrf.mxu0
  %v749 = vadd.f32 0.0, %v748
  %v750 = vpop.f32.mrf.mxu0
  %v751 = vadd.f32 0.0, %v750
  %752 = vmatprep.mubr.bf16.mxu0 0
  %753 = vmatmul.mubr.bf16.gmra.mxu0 %v694
  %v754 = vpop.f32.mrf.mxu0
  %v755 = vadd.f32 0.0, %v754
  %v756 = vpop.f32.mrf.mxu0
  %v757 = vadd.f32 0.0, %v756
  %v758 = vpop.f32.mrf.mxu0
  %v759 = vadd.f32 0.0, %v758
  %v760 = vpop.f32.mrf.mxu0
  %v761 = vadd.f32 0.0, %v760
  %762 = vmatprep.mubr.bf16.mxu0 0
  %763 = vmatmul.mubr.bf16.gmra.mxu0 %v695
  %v764 = vpop.f32.mrf.mxu0
  %v765 = vadd.f32 0.0, %v764
  %v766 = vpop.f32.mrf.mxu0
  %v767 = vadd.f32 0.0, %v766
  %v768 = vpop.f32.mrf.mxu0
  %v769 = vadd.f32 0.0, %v768
  %v770 = vpop.f32.mrf.mxu0
  %v771 = vadd.f32 0.0, %v770
  %772 = vdwg.mxu0
  %v773 = vmax.f32 %v651, %v735
  %v774 = vmax.f32 %v652, %v737
  %v775 = vmax.f32 %v653, %v739
  %v776 = vmax.f32 %v654, %v741
  %v777 = vmax.f32 %v655, %v745
  %v778 = vmax.f32 %v656, %v747
  %v779 = vmax.f32 %v657, %v749
  %v780 = vmax.f32 %v658, %v751
  %v781 = vmax.f32 %v659, %v755
  %v782 = vmax.f32 %v660, %v757
  %v783 = vmax.f32 %v661, %v759
  %v784 = vmax.f32 %v662, %v761
  %v785 = vmax.f32 %v663, %v765
  %v786 = vmax.f32 %v664, %v767
  %v787 = vmax.f32 %v665, %v769
  %v788 = vmax.f32 %v666, %v771
  %s789 = scalar_lea.vmem %s0, 128
  %v790 = vld [vmem:[%s789] sm:$0xf]
  %v791 = vld [vmem:[%s789 + $0x4] sm:$0xf]
  %v792 = vld [vmem:[%s789 + $0x8] sm:$0xf]
  %v793 = vld [vmem:[%s789 + $0xc] sm:$0xf]
  %v794 = vld [vmem:[%s789 + $0x10] sm:$0xf]
  %v795 = vld [vmem:[%s789 + $0x14] sm:$0xf]
  %v796 = vld [vmem:[%s789 + $0x18] sm:$0xf]
  %v797 = vld [vmem:[%s789 + $0x1c] sm:$0xf]
  %v806 = vunpack.c.l.b16 %v790
  %v807 = vunpack.c.l.b16 %v791
  %v808 = vunpack.c.l.b16 %v792
  %v809 = vunpack.c.l.b16 %v793
  %v810 = vunpack.c.l.b16 %v794
  %v811 = vunpack.c.l.b16 %v795
  %v812 = vunpack.c.l.b16 %v796
  %v813 = vunpack.c.l.b16 %v797
  %v814 = vpack.c.b16 %v807, %v806
  %v815 = vpack.c.b16 %v809, %v808
  %v816 = vpack.c.b16 %v811, %v810
  %v817 = vpack.c.b16 %v813, %v812
  %822 = vmatprep.subr.bf16.mxu0 %v333
  %823 = vmatpush1.bf16.msra.mxu0 %v332
  %824 = vmatprep.subr.bf16.mxu0 %v331
  %825 = vmatpush1.bf16.msra.mxu0 %v330
  %826 = vmatprep.subr.bf16.mxu0 %v329
  %827 = vmatpush1.bf16.msra.mxu0 %v328
  %828 = vmatprep.subr.bf16.mxu0 %v327
  %829 = vmatpush1.bf16.msra.mxu0 %v326
  %830 = vmatprep.subr.bf16.mxu0 %v325
  %831 = vmatpush1.bf16.msra.mxu0 %v324
  %832 = vmatprep.subr.bf16.mxu0 %v323
  %833 = vmatpush1.bf16.msra.mxu0 %v322
  %834 = vmatprep.subr.bf16.mxu0 %v321
  %835 = vmatpush1.bf16.msra.mxu0 %v320
  %836 = vmatprep.subr.bf16.mxu0 %v319
  %837 = vmatpush1.bf16.msra.mxu0 %v318
  %838 = vmatprep.subr.bf16.mxu0 0
  %839 = vmatpush2.bf16.msra.mxu0 0
  %840 = vmatprep.subr.bf16.mxu0 0
  %841 = vmatpush2.bf16.msra.mxu0 0
  %842 = vmatprep.subr.bf16.mxu0 0
  %843 = vmatpush2.bf16.msra.mxu0 0
  %844 = vmatprep.subr.bf16.mxu0 0
  %845 = vmatpush2.bf16.msra.mxu0 0
  %846 = vmatprep.subr.bf16.mxu0 0
  %847 = vmatpush2.bf16.msra.mxu0 0
  %848 = vmatprep.subr.bf16.mxu0 0
  %849 = vmatpush2.bf16.msra.mxu0 0
  %850 = vmatprep.subr.bf16.mxu0 0
  %851 = vmatpush2.bf16.msra.mxu0 0
  %852 = vmatprep.subr.bf16.mxu0 0
  %853 = vmatpush2.bf16.msra.mxu0 0
  %854 = vmatprep.mubr.bf16.mxu0 0
  %855 = vmatmul.mubr.bf16.gmra.mxu0 %v814
  %v856 = vpop.f32.mrf.mxu0
  %v857 = vadd.f32 0.0, %v856
  %v858 = vpop.f32.mrf.mxu0
  %v859 = vadd.f32 0.0, %v858
  %v860 = vpop.f32.mrf.mxu0
  %v861 = vadd.f32 0.0, %v860
  %v862 = vpop.f32.mrf.mxu0
  %v863 = vadd.f32 0.0, %v862
  %864 = vmatprep.mubr.bf16.mxu0 0
  %865 = vmatmul.mubr.bf16.gmra.mxu0 %v815
  %v866 = vpop.f32.mrf.mxu0
  %v867 = vadd.f32 0.0, %v866
  %v868 = vpop.f32.mrf.mxu0
  %v869 = vadd.f32 0.0, %v868
  %v870 = vpop.f32.mrf.mxu0
  %v871 = vadd.f32 0.0, %v870
  %v872 = vpop.f32.mrf.mxu0
  %v873 = vadd.f32 0.0, %v872
  %874 = vmatprep.mubr.bf16.mxu0 0
  %875 = vmatmul.mubr.bf16.gmra.mxu0 %v816
  %v876 = vpop.f32.mrf.mxu0
  %v877 = vadd.f32 0.0, %v876
  %v878 = vpop.f32.mrf.mxu0
  %v879 = vadd.f32 0.0, %v878
  %v880 = vpop.f32.mrf.mxu0
  %v881 = vadd.f32 0.0, %v880
  %v882 = vpop.f32.mrf.mxu0
  %v883 = vadd.f32 0.0, %v882
  %884 = vmatprep.mubr.bf16.mxu0 0
  %885 = vmatmul.mubr.bf16.gmra.mxu0 %v817
  %v886 = vpop.f32.mrf.mxu0
  %v887 = vadd.f32 0.0, %v886
  %v888 = vpop.f32.mrf.mxu0
  %v889 = vadd.f32 0.0, %v888
  %v890 = vpop.f32.mrf.mxu0
  %v891 = vadd.f32 0.0, %v890
  %v892 = vpop.f32.mrf.mxu0
  %v893 = vadd.f32 0.0, %v892
  %894 = vdwg.mxu0
  %v895 = vmax.f32 %v773, %v857
  %v896 = vmax.f32 %v774, %v859
  %v897 = vmax.f32 %v775, %v861
  %v898 = vmax.f32 %v776, %v863
  %v899 = vmax.f32 %v777, %v867
  %v900 = vmax.f32 %v778, %v869
  %v901 = vmax.f32 %v779, %v871
  %v902 = vmax.f32 %v780, %v873
  %v903 = vmax.f32 %v781, %v877
  %v904 = vmax.f32 %v782, %v879
  %v905 = vmax.f32 %v783, %v881
  %v906 = vmax.f32 %v784, %v883
  %v907 = vmax.f32 %v785, %v887
  %v908 = vmax.f32 %v786, %v889
  %v909 = vmax.f32 %v787, %v891
  %v910 = vmax.f32 %v788, %v893
  %s911 = scalar_lea.vmem %s0, 160
  %v912 = vld [vmem:[%s911] sm:$0xf]
  %v913 = vld [vmem:[%s911 + $0x4] sm:$0xf]
  %v914 = vld [vmem:[%s911 + $0x8] sm:$0xf]
  %v915 = vld [vmem:[%s911 + $0xc] sm:$0xf]
  %v916 = vld [vmem:[%s911 + $0x10] sm:$0xf]
  %v917 = vld [vmem:[%s911 + $0x14] sm:$0xf]
  %v918 = vld [vmem:[%s911 + $0x18] sm:$0xf]
  %v919 = vld [vmem:[%s911 + $0x1c] sm:$0xf]
  %v928 = vunpack.c.l.b16 %v912
  %v929 = vunpack.c.l.b16 %v913
  %v930 = vunpack.c.l.b16 %v914
  %v931 = vunpack.c.l.b16 %v915
  %v932 = vunpack.c.l.b16 %v916
  %v933 = vunpack.c.l.b16 %v917
  %v934 = vunpack.c.l.b16 %v918
  %v935 = vunpack.c.l.b16 %v919
  %v936 = vpack.c.b16 %v929, %v928
  %v937 = vpack.c.b16 %v931, %v930
  %v938 = vpack.c.b16 %v933, %v932
  %v939 = vpack.c.b16 %v935, %v934
  %944 = vmatprep.subr.bf16.mxu0 %v333
  %945 = vmatpush1.bf16.msra.mxu0 %v332
  %946 = vmatprep.subr.bf16.mxu0 %v331
  %947 = vmatpush1.bf16.msra.mxu0 %v330
  %948 = vmatprep.subr.bf16.mxu0 %v329
  %949 = vmatpush1.bf16.msra.mxu0 %v328
  %950 = vmatprep.subr.bf16.mxu0 %v327
  %951 = vmatpush1.bf16.msra.mxu0 %v326
  %952 = vmatprep.subr.bf16.mxu0 %v325
  %953 = vmatpush1.bf16.msra.mxu0 %v324
  %954 = vmatprep.subr.bf16.mxu0 %v323
  %955 = vmatpush1.bf16.msra.mxu0 %v322
  %956 = vmatprep.subr.bf16.mxu0 %v321
  %957 = vmatpush1.bf16.msra.mxu0 %v320
  %958 = vmatprep.subr.bf16.mxu0 %v319
  %959 = vmatpush1.bf16.msra.mxu0 %v318
  %960 = vmatprep.subr.bf16.mxu0 0
  %961 = vmatpush2.bf16.msra.mxu0 0
  %962 = vmatprep.subr.bf16.mxu0 0
  %963 = vmatpush2.bf16.msra.mxu0 0
  %964 = vmatprep.subr.bf16.mxu0 0
  %965 = vmatpush2.bf16.msra.mxu0 0
  %966 = vmatprep.subr.bf16.mxu0 0
  %967 = vmatpush2.bf16.msra.mxu0 0
  %968 = vmatprep.subr.bf16.mxu0 0
  %969 = vmatpush2.bf16.msra.mxu0 0
  %970 = vmatprep.subr.bf16.mxu0 0
  %971 = vmatpush2.bf16.msra.mxu0 0
  %972 = vmatprep.subr.bf16.mxu0 0
  %973 = vmatpush2.bf16.msra.mxu0 0
  %974 = vmatprep.subr.bf16.mxu0 0
  %975 = vmatpush2.bf16.msra.mxu0 0
  %976 = vmatprep.mubr.bf16.mxu0 0
  %977 = vmatmul.mubr.bf16.gmra.mxu0 %v936
  %v978 = vpop.f32.mrf.mxu0
  %v979 = vadd.f32 0.0, %v978
  %v980 = vpop.f32.mrf.mxu0
  %v981 = vadd.f32 0.0, %v980
  %v982 = vpop.f32.mrf.mxu0
  %v983 = vadd.f32 0.0, %v982
  %v984 = vpop.f32.mrf.mxu0
  %v985 = vadd.f32 0.0, %v984
  %986 = vmatprep.mubr.bf16.mxu0 0
  %987 = vmatmul.mubr.bf16.gmra.mxu0 %v937
  %v988 = vpop.f32.mrf.mxu0
  %v989 = vadd.f32 0.0, %v988
  %v990 = vpop.f32.mrf.mxu0
  %v991 = vadd.f32 0.0, %v990
  %v992 = vpop.f32.mrf.mxu0
  %v993 = vadd.f32 0.0, %v992
  %v994 = vpop.f32.mrf.mxu0
  %v995 = vadd.f32 0.0, %v994
  %996 = vmatprep.mubr.bf16.mxu0 0
  %997 = vmatmul.mubr.bf16.gmra.mxu0 %v938
  %v998 = vpop.f32.mrf.mxu0
  %v999 = vadd.f32 0.0, %v998
  %v1000 = vpop.f32.mrf.mxu0
  %v1001 = vadd.f32 0.0, %v1000
  %v1002 = vpop.f32.mrf.mxu0
  %v1003 = vadd.f32 0.0, %v1002
  %v1004 = vpop.f32.mrf.mxu0
  %v1005 = vadd.f32 0.0, %v1004
  %1006 = vmatprep.mubr.bf16.mxu0 0
  %1007 = vmatmul.mubr.bf16.gmra.mxu0 %v939
  %v1008 = vpop.f32.mrf.mxu0
  %v1009 = vadd.f32 0.0, %v1008
  %v1010 = vpop.f32.mrf.mxu0
  %v1011 = vadd.f32 0.0, %v1010
  %v1012 = vpop.f32.mrf.mxu0
  %v1013 = vadd.f32 0.0, %v1012
  %v1014 = vpop.f32.mrf.mxu0
  %v1015 = vadd.f32 0.0, %v1014
  %1016 = vdwg.mxu0
  %v1017 = vmax.f32 %v895, %v979
  %v1018 = vmax.f32 %v896, %v981
  %v1019 = vmax.f32 %v897, %v983
  %v1020 = vmax.f32 %v898, %v985
  %v1021 = vmax.f32 %v899, %v989
  %v1022 = vmax.f32 %v900, %v991
  %v1023 = vmax.f32 %v901, %v993
  %v1024 = vmax.f32 %v902, %v995
  %v1025 = vmax.f32 %v903, %v999
  %v1026 = vmax.f32 %v904, %v1001
  %v1027 = vmax.f32 %v905, %v1003
  %v1028 = vmax.f32 %v906, %v1005
  %v1029 = vmax.f32 %v907, %v1009
  %v1030 = vmax.f32 %v908, %v1011
  %v1031 = vmax.f32 %v909, %v1013
  %v1032 = vmax.f32 %v910, %v1015
  %s1033 = scalar_lea.vmem %s0, 192
  %v1034 = vld [vmem:[%s1033] sm:$0xf]
  %v1035 = vld [vmem:[%s1033 + $0x4] sm:$0xf]
  %v1036 = vld [vmem:[%s1033 + $0x8] sm:$0xf]
  %v1037 = vld [vmem:[%s1033 + $0xc] sm:$0xf]
  %v1038 = vld [vmem:[%s1033 + $0x10] sm:$0xf]
  %v1039 = vld [vmem:[%s1033 + $0x14] sm:$0xf]
  %v1040 = vld [vmem:[%s1033 + $0x18] sm:$0xf]
  %v1041 = vld [vmem:[%s1033 + $0x1c] sm:$0xf]
  %v1050 = vunpack.c.l.b16 %v1034
  %v1051 = vunpack.c.l.b16 %v1035
  %v1052 = vunpack.c.l.b16 %v1036
  %v1053 = vunpack.c.l.b16 %v1037
  %v1054 = vunpack.c.l.b16 %v1038
  %v1055 = vunpack.c.l.b16 %v1039
  %v1056 = vunpack.c.l.b16 %v1040
  %v1057 = vunpack.c.l.b16 %v1041
  %v1058 = vpack.c.b16 %v1051, %v1050
  %v1059 = vpack.c.b16 %v1053, %v1052
  %v1060 = vpack.c.b16 %v1055, %v1054
  %v1061 = vpack.c.b16 %v1057, %v1056
  %1066 = vmatprep.subr.bf16.mxu0 %v333
  %1067 = vmatpush1.bf16.msra.mxu0 %v332
  %1068 = vmatprep.subr.bf16.mxu0 %v331
  %1069 = vmatpush1.bf16.msra.mxu0 %v330
  %1070 = vmatprep.subr.bf16.mxu0 %v329
  %1071 = vmatpush1.bf16.msra.mxu0 %v328
  %1072 = vmatprep.subr.bf16.mxu0 %v327
  %1073 = vmatpush1.bf16.msra.mxu0 %v326
  %1074 = vmatprep.subr.bf16.mxu0 %v325
  %1075 = vmatpush1.bf16.msra.mxu0 %v324
  %1076 = vmatprep.subr.bf16.mxu0 %v323
  %1077 = vmatpush1.bf16.msra.mxu0 %v322
  %1078 = vmatprep.subr.bf16.mxu0 %v321
  %1079 = vmatpush1.bf16.msra.mxu0 %v320
  %1080 = vmatprep.subr.bf16.mxu0 %v319
  %1081 = vmatpush1.bf16.msra.mxu0 %v318
  %1082 = vmatprep.subr.bf16.mxu0 0
  %1083 = vmatpush2.bf16.msra.mxu0 0
  %1084 = vmatprep.subr.bf16.mxu0 0
  %1085 = vmatpush2.bf16.msra.mxu0 0
  %1086 = vmatprep.subr.bf16.mxu0 0
  %1087 = vmatpush2.bf16.msra.mxu0 0
  %1088 = vmatprep.subr.bf16.mxu0 0
  %1089 = vmatpush2.bf16.msra.mxu0 0
  %1090 = vmatprep.subr.bf16.mxu0 0
  %1091 = vmatpush2.bf16.msra.mxu0 0
  %1092 = vmatprep.subr.bf16.mxu0 0
  %1093 = vmatpush2.bf16.msra.mxu0 0
  %1094 = vmatprep.subr.bf16.mxu0 0
  %1095 = vmatpush2.bf16.msra.mxu0 0
  %1096 = vmatprep.subr.bf16.mxu0 0
  %1097 = vmatpush2.bf16.msra.mxu0 0
  %1098 = vmatprep.mubr.bf16.mxu0 0
  %1099 = vmatmul.mubr.bf16.gmra.mxu0 %v1058
  %v1100 = vpop.f32.mrf.mxu0
  %v1101 = vadd.f32 0.0, %v1100
  %v1102 = vpop.f32.mrf.mxu0
  %v1103 = vadd.f32 0.0, %v1102
  %v1104 = vpop.f32.mrf.mxu0
  %v1105 = vadd.f32 0.0, %v1104
  %v1106 = vpop.f32.mrf.mxu0
  %v1107 = vadd.f32 0.0, %v1106
  %1108 = vmatprep.mubr.bf16.mxu0 0
  %1109 = vmatmul.mubr.bf16.gmra.mxu0 %v1059
  %v1110 = vpop.f32.mrf.mxu0
  %v1111 = vadd.f32 0.0, %v1110
  %v1112 = vpop.f32.mrf.mxu0
  %v1113 = vadd.f32 0.0, %v1112
  %v1114 = vpop.f32.mrf.mxu0
  %v1115 = vadd.f32 0.0, %v1114
  %v1116 = vpop.f32.mrf.mxu0
  %v1117 = vadd.f32 0.0, %v1116
  %1118 = vmatprep.mubr.bf16.mxu0 0
  %1119 = vmatmul.mubr.bf16.gmra.mxu0 %v1060
  %v1120 = vpop.f32.mrf.mxu0
  %v1121 = vadd.f32 0.0, %v1120
  %v1122 = vpop.f32.mrf.mxu0
  %v1123 = vadd.f32 0.0, %v1122
  %v1124 = vpop.f32.mrf.mxu0
  %v1125 = vadd.f32 0.0, %v1124
  %v1126 = vpop.f32.mrf.mxu0
  %v1127 = vadd.f32 0.0, %v1126
  %1128 = vmatprep.mubr.bf16.mxu0 0
  %1129 = vmatmul.mubr.bf16.gmra.mxu0 %v1061
  %v1130 = vpop.f32.mrf.mxu0
  %v1131 = vadd.f32 0.0, %v1130
  %v1132 = vpop.f32.mrf.mxu0
  %v1133 = vadd.f32 0.0, %v1132
  %v1134 = vpop.f32.mrf.mxu0
  %v1135 = vadd.f32 0.0, %v1134
  %v1136 = vpop.f32.mrf.mxu0
  %v1137 = vadd.f32 0.0, %v1136
  %1138 = vdwg.mxu0
  %v1139 = vmax.f32 %v1017, %v1101
  %v1140 = vmax.f32 %v1018, %v1103
  %v1141 = vmax.f32 %v1019, %v1105
  %v1142 = vmax.f32 %v1020, %v1107
  %v1143 = vmax.f32 %v1021, %v1111
  %v1144 = vmax.f32 %v1022, %v1113
  %v1145 = vmax.f32 %v1023, %v1115
  %v1146 = vmax.f32 %v1024, %v1117
  %v1147 = vmax.f32 %v1025, %v1121
  %v1148 = vmax.f32 %v1026, %v1123
  %v1149 = vmax.f32 %v1027, %v1125
  %v1150 = vmax.f32 %v1028, %v1127
  %v1151 = vmax.f32 %v1029, %v1131
  %v1152 = vmax.f32 %v1030, %v1133
  %v1153 = vmax.f32 %v1031, %v1135
  %v1154 = vmax.f32 %v1032, %v1137
  %s1155 = scalar_lea.vmem %s0, 224
  %v1156 = vld [vmem:[%s1155] sm:$0xf]
  %v1157 = vld [vmem:[%s1155 + $0x4] sm:$0xf]
  %v1158 = vld [vmem:[%s1155 + $0x8] sm:$0xf]
  %v1159 = vld [vmem:[%s1155 + $0xc] sm:$0xf]
  %v1160 = vld [vmem:[%s1155 + $0x10] sm:$0xf]
  %v1161 = vld [vmem:[%s1155 + $0x14] sm:$0xf]
  %v1162 = vld [vmem:[%s1155 + $0x18] sm:$0xf]
  %v1163 = vld [vmem:[%s1155 + $0x1c] sm:$0xf]
  %v1172 = vunpack.c.l.b16 %v1156
  %v1173 = vunpack.c.l.b16 %v1157
  %v1174 = vunpack.c.l.b16 %v1158
  %v1175 = vunpack.c.l.b16 %v1159
  %v1176 = vunpack.c.l.b16 %v1160
  %v1177 = vunpack.c.l.b16 %v1161
  %v1178 = vunpack.c.l.b16 %v1162
  %v1179 = vunpack.c.l.b16 %v1163
  %v1180 = vpack.c.b16 %v1173, %v1172
  %v1181 = vpack.c.b16 %v1175, %v1174
  %v1182 = vpack.c.b16 %v1177, %v1176
  %v1183 = vpack.c.b16 %v1179, %v1178
  %1188 = vmatprep.subr.bf16.mxu0 %v333
  %1189 = vmatpush1.bf16.msra.mxu0 %v332
  %1190 = vmatprep.subr.bf16.mxu0 %v331
  %1191 = vmatpush1.bf16.msra.mxu0 %v330
  %1192 = vmatprep.subr.bf16.mxu0 %v329
  %1193 = vmatpush1.bf16.msra.mxu0 %v328
  %1194 = vmatprep.subr.bf16.mxu0 %v327
  %1195 = vmatpush1.bf16.msra.mxu0 %v326
  %1196 = vmatprep.subr.bf16.mxu0 %v325
  %1197 = vmatpush1.bf16.msra.mxu0 %v324
  %1198 = vmatprep.subr.bf16.mxu0 %v323
  %1199 = vmatpush1.bf16.msra.mxu0 %v322
  %1200 = vmatprep.subr.bf16.mxu0 %v321
  %1201 = vmatpush1.bf16.msra.mxu0 %v320
  %1202 = vmatprep.subr.bf16.mxu0 %v319
  %1203 = vmatpush1.bf16.msra.mxu0 %v318
  %1204 = vmatprep.subr.bf16.mxu0 0
  %1205 = vmatpush2.bf16.msra.mxu0 0
  %1206 = vmatprep.subr.bf16.mxu0 0
  %1207 = vmatpush2.bf16.msra.mxu0 0
  %1208 = vmatprep.subr.bf16.mxu0 0
  %1209 = vmatpush2.bf16.msra.mxu0 0
  %1210 = vmatprep.subr.bf16.mxu0 0
  %1211 = vmatpush2.bf16.msra.mxu0 0
  %1212 = vmatprep.subr.bf16.mxu0 0
  %1213 = vmatpush2.bf16.msra.mxu0 0
  %1214 = vmatprep.subr.bf16.mxu0 0
  %1215 = vmatpush2.bf16.msra.mxu0 0
  %1216 = vmatprep.subr.bf16.mxu0 0
  %1217 = vmatpush2.bf16.msra.mxu0 0
  %1218 = vmatprep.subr.bf16.mxu0 0
  %1219 = vmatpush2.bf16.msra.mxu0 0
  %1220 = vmatprep.mubr.bf16.mxu0 0
  %1221 = vmatmul.mubr.bf16.gmra.mxu0 %v1180
  %v1222 = vpop.f32.mrf.mxu0
  %v1223 = vadd.f32 0.0, %v1222
  %v1224 = vpop.f32.mrf.mxu0
  %v1225 = vadd.f32 0.0, %v1224
  %v1226 = vpop.f32.mrf.mxu0
  %v1227 = vadd.f32 0.0, %v1226
  %v1228 = vpop.f32.mrf.mxu0
  %v1229 = vadd.f32 0.0, %v1228
  %1230 = vmatprep.mubr.bf16.mxu0 0
  %1231 = vmatmul.mubr.bf16.gmra.mxu0 %v1181
  %v1232 = vpop.f32.mrf.mxu0
  %v1233 = vadd.f32 0.0, %v1232
  %v1234 = vpop.f32.mrf.mxu0
  %v1235 = vadd.f32 0.0, %v1234
  %v1236 = vpop.f32.mrf.mxu0
  %v1237 = vadd.f32 0.0, %v1236
  %v1238 = vpop.f32.mrf.mxu0
  %v1239 = vadd.f32 0.0, %v1238
  %1240 = vmatprep.mubr.bf16.mxu0 0
  %1241 = vmatmul.mubr.bf16.gmra.mxu0 %v1182
  %v1242 = vpop.f32.mrf.mxu0
  %v1243 = vadd.f32 0.0, %v1242
  %v1244 = vpop.f32.mrf.mxu0
  %v1245 = vadd.f32 0.0, %v1244
  %v1246 = vpop.f32.mrf.mxu0
  %v1247 = vadd.f32 0.0, %v1246
  %v1248 = vpop.f32.mrf.mxu0
  %v1249 = vadd.f32 0.0, %v1248
  %1250 = vmatprep.mubr.bf16.mxu0 0
  %1251 = vmatmul.mubr.bf16.gmra.mxu0 %v1183
  %v1252 = vpop.f32.mrf.mxu0
  %v1253 = vadd.f32 0.0, %v1252
  %v1254 = vpop.f32.mrf.mxu0
  %v1255 = vadd.f32 0.0, %v1254
  %v1256 = vpop.f32.mrf.mxu0
  %v1257 = vadd.f32 0.0, %v1256
  %v1258 = vpop.f32.mrf.mxu0
  %v1259 = vadd.f32 0.0, %v1258
  %1260 = vdwg.mxu0
  %v1261 = vmax.f32 %v1139, %v1223
  %v1262 = vmax.f32 %v1140, %v1225
  %v1263 = vmax.f32 %v1141, %v1227
  %v1264 = vmax.f32 %v1142, %v1229
  %v1265 = vmax.f32 %v1143, %v1233
  %v1266 = vmax.f32 %v1144, %v1235
  %v1267 = vmax.f32 %v1145, %v1237
  %v1268 = vmax.f32 %v1146, %v1239
  %v1269 = vmax.f32 %v1147, %v1243
  %v1270 = vmax.f32 %v1148, %v1245
  %v1271 = vmax.f32 %v1149, %v1247
  %v1272 = vmax.f32 %v1150, %v1249
  %v1273 = vmax.f32 %v1151, %v1253
  %v1274 = vmax.f32 %v1152, %v1255
  %v1275 = vmax.f32 %v1153, %v1257
  %v1276 = vmax.f32 %v1154, %v1259
  %v1277 = vadd.f32 %v1261, %v184
  %v1278 = vadd.f32 %v1262, %v186
  %v1279 = vadd.f32 %v1263, %v188
  %v1280 = vadd.f32 %v1264, %v190
  %v1281 = vadd.f32 %v1265, %v194
  %v1282 = vadd.f32 %v1266, %v196
  %v1283 = vadd.f32 %v1267, %v198
  %v1284 = vadd.f32 %v1268, %v200
  %v1285 = vadd.f32 %v1269, %v204
  %v1286 = vadd.f32 %v1270, %v206
  %v1287 = vadd.f32 %v1271, %v208
  %v1288 = vadd.f32 %v1272, %v210
  %v1289 = vadd.f32 %v1273, %v214
  %v1290 = vadd.f32 %v1274, %v216
  %v1291 = vadd.f32 %v1275, %v218
  %v1292 = vadd.f32 %v1276, %v220
  %v1293 = vld [vmem:[%s4] sm:$0x3]
  %v1295 = vlaneseq
  %v1296 = vshrl.u32 %v1295, 7
  %v1297 = vsub.s32 0, %v1296
  %v1298 = vrot.slane %v1293, %v1297
  %v1299 = vlaneseq
  %v1300 = vshrl.u32 %v1299, 7
  %v1301 = vsub.s32 1, %v1300
  %v1302 = vrot.slane %v1293, %v1301
  %v1305 = vadd.f32 %v1277, %v1298
  %v1306 = vadd.f32 %v1278, %v1302
  %v1307 = vadd.f32 %v1279, %v1298
  %v1308 = vadd.f32 %v1280, %v1302
  %v1309 = vadd.f32 %v1281, %v1298
  %v1310 = vadd.f32 %v1282, %v1302
  %v1311 = vadd.f32 %v1283, %v1298
  %v1312 = vadd.f32 %v1284, %v1302
  %v1313 = vadd.f32 %v1285, %v1298
  %v1314 = vadd.f32 %v1286, %v1302
  %v1315 = vadd.f32 %v1287, %v1298
  %v1316 = vadd.f32 %v1288, %v1302
  %v1317 = vadd.f32 %v1289, %v1298
  %v1318 = vadd.f32 %v1290, %v1302
  %v1319 = vadd.f32 %v1291, %v1298
  %v1320 = vadd.f32 %v1292, %v1302
  %vm1321 = vcmp.gt.f32.partialorder %v1305, 0.0
  %vm1322 = vcmp.gt.f32.partialorder %v1306, 0.0
  %vm1323 = vcmp.gt.f32.partialorder %v1307, 0.0
  %vm1324 = vcmp.gt.f32.partialorder %v1308, 0.0
  %vm1325 = vcmp.gt.f32.partialorder %v1309, 0.0
  %vm1326 = vcmp.gt.f32.partialorder %v1310, 0.0
  %vm1327 = vcmp.gt.f32.partialorder %v1311, 0.0
  %vm1328 = vcmp.gt.f32.partialorder %v1312, 0.0
  %vm1329 = vcmp.gt.f32.partialorder %v1313, 0.0
  %vm1330 = vcmp.gt.f32.partialorder %v1314, 0.0
  %vm1331 = vcmp.gt.f32.partialorder %v1315, 0.0
  %vm1332 = vcmp.gt.f32.partialorder %v1316, 0.0
  %vm1333 = vcmp.gt.f32.partialorder %v1317, 0.0
  %vm1334 = vcmp.gt.f32.partialorder %v1318, 0.0
  %vm1335 = vcmp.gt.f32.partialorder %v1319, 0.0
  %vm1336 = vcmp.gt.f32.partialorder %v1320, 0.0
  %v1337 = vmul.f32 %v1305, 0.2
  %v1338 = vmul.f32 %v1306, 0.2
  %v1339 = vmul.f32 %v1307, 0.2
  %v1340 = vmul.f32 %v1308, 0.2
  %v1341 = vmul.f32 %v1309, 0.2
  %v1342 = vmul.f32 %v1310, 0.2
  %v1343 = vmul.f32 %v1311, 0.2
  %v1344 = vmul.f32 %v1312, 0.2
  %v1345 = vmul.f32 %v1313, 0.2
  %v1346 = vmul.f32 %v1314, 0.2
  %v1347 = vmul.f32 %v1315, 0.2
  %v1348 = vmul.f32 %v1316, 0.2
  %v1349 = vmul.f32 %v1317, 0.2
  %v1350 = vmul.f32 %v1318, 0.2
  %v1351 = vmul.f32 %v1319, 0.2
  %v1352 = vmul.f32 %v1320, 0.2
  %v1353 = vsel %vm1321, %v1305, %v1337
  %v1354 = vsel %vm1322, %v1306, %v1338
  %v1355 = vsel %vm1323, %v1307, %v1339
  %v1356 = vsel %vm1324, %v1308, %v1340
  %v1357 = vsel %vm1325, %v1309, %v1341
  %v1358 = vsel %vm1326, %v1310, %v1342
  %v1359 = vsel %vm1327, %v1311, %v1343
  %v1360 = vsel %vm1328, %v1312, %v1344
  %v1361 = vsel %vm1329, %v1313, %v1345
  %v1362 = vsel %vm1330, %v1314, %v1346
  %v1363 = vsel %vm1331, %v1315, %v1347
  %v1364 = vsel %vm1332, %v1316, %v1348
  %v1365 = vsel %vm1333, %v1317, %v1349
  %v1366 = vsel %vm1334, %v1318, %v1350
  %v1367 = vsel %vm1335, %v1319, %v1351
  %v1368 = vsel %vm1336, %v1320, %v1352
  %v1369 = vpack.c.bf16 %v1355, %v1353
  %v1370 = vpack.c.bf16 %v1356, %v1354
  %v1371 = vpack.c.bf16 %v1359, %v1357
  %v1372 = vpack.c.bf16 %v1360, %v1358
  %v1373 = vpack.c.bf16 %v1363, %v1361
  %v1374 = vpack.c.bf16 %v1364, %v1362
  %v1375 = vpack.c.bf16 %v1367, %v1365
  %v1376 = vpack.c.bf16 %v1368, %v1366
  %v1385 = vunpack.c.l.b16 %v1369
  %v1386 = vunpack.c.l.b16 %v1370
  %v1387 = vunpack.c.h.b16 %v1369
  %v1388 = vunpack.c.h.b16 %v1370
  %v1389 = vunpack.c.l.b16 %v1371
  %v1390 = vunpack.c.l.b16 %v1372
  %v1391 = vunpack.c.h.b16 %v1371
  %v1392 = vunpack.c.h.b16 %v1372
  %v1393 = vunpack.c.l.b16 %v1373
  %v1394 = vunpack.c.l.b16 %v1374
  %v1395 = vunpack.c.h.b16 %v1373
  %v1396 = vunpack.c.h.b16 %v1374
  %v1397 = vunpack.c.l.b16 %v1375
  %v1398 = vunpack.c.l.b16 %v1376
  %v1399 = vunpack.c.h.b16 %v1375
  %v1400 = vunpack.c.h.b16 %v1376
  %v1401 = vpack.c.b16 %v1386, %v1385
  %v1402 = vpack.c.b16 %v1388, %v1387
  %v1403 = vpack.c.b16 %v1390, %v1389
  %v1404 = vpack.c.b16 %v1392, %v1391
  %v1405 = vpack.c.b16 %v1394, %v1393
  %v1406 = vpack.c.b16 %v1396, %v1395
  %v1407 = vpack.c.b16 %v1398, %v1397
  %v1408 = vpack.c.b16 %v1400, %v1399
  %1417 = vst [vmem:[%s5] sm:$0xff] %v1401
  %1418 = vst [vmem:[%s5 + $0x8] sm:$0xff] %v1402
  %1419 = vst [vmem:[%s5 + $0x10] sm:$0xff] %v1403
  %1420 = vst [vmem:[%s5 + $0x18] sm:$0xff] %v1404
  %1421 = vst [vmem:[%s5 + $0x20] sm:$0xff] %v1405
  %1422 = vst [vmem:[%s5 + $0x28] sm:$0xff] %v1406
  %1423 = vst [vmem:[%s5 + $0x30] sm:$0xff] %v1407
  %1424 = vst [vmem:[%s5 + $0x38] sm:$0xff] %v1408
  // Predicated region
  $region22: #{dgcnn_forward.9} parent=0 // pred_check
    _
  $region23: #{dgcnn_forward.9} parent=0 // pred_check_branch
    %1426 = sbr.rel (0) target = $region25
  $region24: #{dgcnn_forward.9} parent=0 // pred_region
    _
  $region25: #{dgcnn_forward.9} parent=0 // pred_fallthru
    _
  // Predicated region
  $region26: #{dgcnn_forward.9} parent=0 // pred_check
    _
  $region27: #{dgcnn_forward.9} parent=0 // pred_check_branch
    %1428 = sbr.rel (0) target = $region29
  $region28: #{dgcnn_forward.9} parent=0 // pred_region
    _
  $region29: #{dgcnn_forward.9} parent=0 // pred_fallthru
    _

// kernel: dgcnn_forward.10
$region0: #{dgcnn_forward.10}
  #allocation0 [shape = 'u32[]', space=smem, size = 0x4, offset = 0x4, fixed_abs, tag = 'smem constant byte address 0x4 - core index']
  #allocation1 [shape = 'u32[144,128]{1,0:T(1,128)}', space=vmem, size = 0x12000, scoped, tag = 'internal scratch']
  %s0 = inlined_call_operand.vmem [shape: bf16[2,32,64], index: 0, kind: input, shape index: {}]
  %s1 = inlined_call_operand.vmem [shape: bf16[2,32,64], index: 1, kind: input, shape index: {}]
  %s2 = inlined_call_operand.vmem [shape: bf16[2,32,128], index: 2, kind: input, shape index: {}]
  %s3 = inlined_call_operand.vmem [shape: bf16[2,32,256], index: 3, kind: input, shape index: {}]
  %s4 = inlined_call_operand.vmem [shape: bf16[64,64], index: 4, kind: input, shape index: {}]
  %s5 = inlined_call_operand.vmem [shape: bf16[64,64], index: 5, kind: input, shape index: {}]
  %s6 = inlined_call_operand.vmem [shape: bf16[128,64], index: 6, kind: input, shape index: {}]
  %s7 = inlined_call_operand.vmem [shape: bf16[256,64], index: 7, kind: input, shape index: {}]
  %s8 = inlined_call_operand.vmem [shape: f32[1,64], index: 8, kind: input, shape index: {}]
  %s9 = inlined_call_operand.vmem [shape: f32[2,1,64], index: 9, kind: output, shape index: {0}]
  %s10 = inlined_call_operand.vmem [shape: f32[2,1,64], index: 10, kind: output, shape index: {1}]
  %11 = xla_tuple %s9, %s10
  %s12 = sld [smem:[#allocation0]]
  $region89: #{dgcnn_forward.10} parent=0
    _
  %s14 = ssub.s32 1, %s12
  %s15 = scalar_select 0, %s14, %s12
  loop: start=0, step=1, limit=4
  $region2: #{dgcnn_forward.10} parent=0 // loop_pre_header
    _
  $region3: #{dgcnn_forward.10} parent=0 // loop_header
    %s17 = sphi 0, %s21
    %p18 = scmp.ge.s32.totalorder %s17, 4
    %s24 = sphi 0, %s36
    %s25 = sphi 0, %s32
    %s26 = sphi 0, %s24
    %s27 = sphi 0, %s25
    %s28 = sphi 0, %s26
    %s29 = sphi 0, %s27
    %s41 = sphi 0, %s43
    %s44 = sphi 0, %s41
    %s45 = sphi 0, %s44
    %s61 = sphi 0, %s45
    %s69 = sphi 0, %s71
    %s72 = sphi 0, %s69
    %s73 = sphi 0, %s72
    %s89 = sphi 0, %s73
    %s97 = sphi 0, %s99
    %s100 = sphi 0, %s97
    %s101 = sphi 0, %s100
    %s117 = sphi 0, %s101
    %s125 = sphi 0, %s127
    %s128 = sphi 0, %s125
    %s129 = sphi 0, %s128
    %s145 = sphi 0, %s129
    %s149 = sphi 0, %s149
    %s151 = sphi 0, %s149
    %s152 = sphi 0, %s151
    %s166 = sphi 0, %s152
    %s170 = sphi 0, %s170
    %s172 = sphi 0, %s170
    %s173 = sphi 0, %s172
    %s187 = sphi 0, %s173
    %s191 = sphi 0, %s191
    %s193 = sphi 0, %s191
    %s194 = sphi 0, %s193
    %s208 = sphi 0, %s194
    %s212 = sphi 0, %s212
    %s214 = sphi 0, %s212
    %s215 = sphi 0, %s214
    %s229 = sphi 0, %s215
    %s233 = sphi 0, %s233
    %s235 = sphi 0, %s233
    %s236 = sphi 0, %s235
    %s250 = sphi 0, %s236
    %s256 = sphi 0, %s258
    %s259 = sphi 0, %s256
    %s260 = sphi 0, %s259
    %s276 = sphi 0, %s260
    %s282 = sphi 0, %s284
    %s285 = sphi 0, %s282
    %s286 = sphi 0, %s285
    %s302 = sphi 0, %s286
  $region4: #{dgcnn_forward.10} parent=0 // loop_header_branch
    %20 = sbr.rel (%p18) target = $region8
  $region5: #{dgcnn_forward.10} parent=0 // loop_body
    %s22 = ssub.s32 %s17, 1
    %s23 = ssub.s32 %s17, 2
    %s30 = sadd.s32 1, %s25
    %p31 = scmp.ge.s32.totalorder %s30, 1
    %s32 = scalar_select %p31, 0, %s30
    %s33 = sadd.s32 1, %s24
    %s34 = scalar_select %p31, %s33, %s24
    %p35 = scmp.ge.s32.totalorder %s34, 2
    %s36 = scalar_select %p35, 0, %s34
    %s37 = ssub.s32 %s24, %s36
    %s38 = ssub.s32 %s25, %s32
    %s39 = sor.u32 %s37, %s38
    %p40 = scmp.eq.s32.totalorder %s39, 0
    %s42 = sadd.s32 %s41, 1
    %s43 = scalar_select %p40, %s41, %s42
    %p46 = pneg %p40
    %p47 = scmp.eq.s32.totalorder %s17, 1
    %p48 = por %p46, %p47
    %p49 = scmp.ne.s32.totalorder %s41, %s44
    %p50 = scmp.eq.s32.totalorder %s17, 0
    %p51 = por %p49, %p50
    %p52 = scmp.ne.s32.totalorder %s41, %s44
    %p53 = scmp.eq.s32.totalorder %s22, 1
    %p54 = por %p52, %p53
    %p55 = scmp.ne.s32.totalorder %s44, %s45
    %p56 = scmp.eq.s32.totalorder %s22, 0
    %p57 = por %p55, %p56
    %p58 = scmp.ne.s32.totalorder %s44, %s45
    %p59 = scmp.eq.s32.totalorder %s23, 1
    %p60 = por %p58, %p59
    %p62 = scmp.ne.s32.totalorder %s45, %s61
    %p63 = scmp.eq.s32.totalorder %s23, 0
    %p64 = por %p62, %p63
    %s65 = ssub.s32 %s24, %s36
    %s66 = ssub.s32 %s25, %s32
    %s67 = sor.u32 %s65, %s66
    %p68 = scmp.eq.s32.totalorder %s67, 0
    %s70 = sadd.s32 %s69, 1
    %s71 = scalar_select %p68, %s69, %s70
    %p74 = pneg %p68
    %p75 = scmp.eq.s32.totalorder %s17, 1
    %p76 = por %p74, %p75
    %p77 = scmp.ne.s32.totalorder %s69, %s72
    %p78 = scmp.eq.s32.totalorder %s17, 0
    %p79 = por %p77, %p78
    %p80 = scmp.ne.s32.totalorder %s69, %s72
    %p81 = scmp.eq.s32.totalorder %s22, 1
    %p82 = por %p80, %p81
    %p83 = scmp.ne.s32.totalorder %s72, %s73
    %p84 = scmp.eq.s32.totalorder %s22, 0
    %p85 = por %p83, %p84
    %p86 = scmp.ne.s32.totalorder %s72, %s73
    %p87 = scmp.eq.s32.totalorder %s23, 1
    %p88 = por %p86, %p87
    %p90 = scmp.ne.s32.totalorder %s73, %s89
    %p91 = scmp.eq.s32.totalorder %s23, 0
    %p92 = por %p90, %p91
    %s93 = ssub.s32 %s24, %s36
    %s94 = ssub.s32 %s25, %s32
    %s95 = sor.u32 %s93, %s94
    %p96 = scmp.eq.s32.totalorder %s95, 0
    %s98 = sadd.s32 %s97, 1
    %s99 = scalar_select %p96, %s97, %s98
    %p102 = pneg %p96
    %p103 = scmp.eq.s32.totalorder %s17, 1
    %p104 = por %p102, %p103
    %p105 = scmp.ne.s32.totalorder %s97, %s100
    %p106 = scmp.eq.s32.totalorder %s17, 0
    %p107 = por %p105, %p106
    %p108 = scmp.ne.s32.totalorder %s97, %s100
    %p109 = scmp.eq.s32.totalorder %s22, 1
    %p110 = por %p108, %p109
    %p111 = scmp.ne.s32.totalorder %s100, %s101
    %p112 = scmp.eq.s32.totalorder %s22, 0
    %p113 = por %p111, %p112
    %p114 = scmp.ne.s32.totalorder %s100, %s101
    %p115 = scmp.eq.s32.totalorder %s23, 1
    %p116 = por %p114, %p115
    %p118 = scmp.ne.s32.totalorder %s101, %s117
    %p119 = scmp.eq.s32.totalorder %s23, 0
    %p120 = por %p118, %p119
    %s121 = ssub.s32 %s24, %s36
    %s122 = ssub.s32 %s25, %s32
    %s123 = sor.u32 %s121, %s122
    %p124 = scmp.eq.s32.totalorder %s123, 0
    %s126 = sadd.s32 %s125, 1
    %s127 = scalar_select %p124, %s125, %s126
    %p130 = pneg %p124
    %p131 = scmp.eq.s32.totalorder %s17, 1
    %p132 = por %p130, %p131
    %p133 = scmp.ne.s32.totalorder %s125, %s128
    %p134 = scmp.eq.s32.totalorder %s17, 0
    %p135 = por %p133, %p134
    %p136 = scmp.ne.s32.totalorder %s125, %s128
    %p137 = scmp.eq.s32.totalorder %s22, 1
    %p138 = por %p136, %p137
    %p139 = scmp.ne.s32.totalorder %s128, %s129
    %p140 = scmp.eq.s32.totalorder %s22, 0
    %p141 = por %p139, %p140
    %p142 = scmp.ne.s32.totalorder %s128, %s129
    %p143 = scmp.eq.s32.totalorder %s23, 1
    %p144 = por %p142, %p143
    %p146 = scmp.ne.s32.totalorder %s129, %s145
    %p147 = scmp.eq.s32.totalorder %s23, 0
    %p148 = por %p146, %p147
    %s150 = sadd.s32 %s149, 1
    %p153 = scmp.eq.s32.totalorder %s17, 1
    %p154 = scmp.ne.s32.totalorder %s149, %s151
    %p155 = scmp.eq.s32.totalorder %s17, 0
    %p156 = por %p154, %p155
    %p157 = scmp.ne.s32.totalorder %s149, %s151
    %p158 = scmp.eq.s32.totalorder %s22, 1
    %p159 = por %p157, %p158
    %p160 = scmp.ne.s32.totalorder %s151, %s152
    %p161 = scmp.eq.s32.totalorder %s22, 0
    %p162 = por %p160, %p161
    %p163 = scmp.ne.s32.totalorder %s151, %s152
    %p164 = scmp.eq.s32.totalorder %s23, 1
    %p165 = por %p163, %p164
    %p167 = scmp.ne.s32.totalorder %s152, %s166
    %p168 = scmp.eq.s32.totalorder %s23, 0
    %p169 = por %p167, %p168
    %s171 = sadd.s32 %s170, 1
    %p174 = scmp.eq.s32.totalorder %s17, 1
    %p175 = scmp.ne.s32.totalorder %s170, %s172
    %p176 = scmp.eq.s32.totalorder %s17, 0
    %p177 = por %p175, %p176
    %p178 = scmp.ne.s32.totalorder %s170, %s172
    %p179 = scmp.eq.s32.totalorder %s22, 1
    %p180 = por %p178, %p179
    %p181 = scmp.ne.s32.totalorder %s172, %s173
    %p182 = scmp.eq.s32.totalorder %s22, 0
    %p183 = por %p181, %p182
    %p184 = scmp.ne.s32.totalorder %s172, %s173
    %p185 = scmp.eq.s32.totalorder %s23, 1
    %p186 = por %p184, %p185
    %p188 = scmp.ne.s32.totalorder %s173, %s187
    %p189 = scmp.eq.s32.totalorder %s23, 0
    %p190 = por %p188, %p189
    %s192 = sadd.s32 %s191, 1
    %p195 = scmp.eq.s32.totalorder %s17, 1
    %p196 = scmp.ne.s32.totalorder %s191, %s193
    %p197 = scmp.eq.s32.totalorder %s17, 0
    %p198 = por %p196, %p197
    %p199 = scmp.ne.s32.totalorder %s191, %s193
    %p200 = scmp.eq.s32.totalorder %s22, 1
    %p201 = por %p199, %p200
    %p202 = scmp.ne.s32.totalorder %s193, %s194
    %p203 = scmp.eq.s32.totalorder %s22, 0
    %p204 = por %p202, %p203
    %p205 = scmp.ne.s32.totalorder %s193, %s194
    %p206 = scmp.eq.s32.totalorder %s23, 1
    %p207 = por %p205, %p206
    %p209 = scmp.ne.s32.totalorder %s194, %s208
    %p210 = scmp.eq.s32.totalorder %s23, 0
    %p211 = por %p209, %p210
    %s213 = sadd.s32 %s212, 1
    %p216 = scmp.eq.s32.totalorder %s17, 1
    %p217 = scmp.ne.s32.totalorder %s212, %s214
    %p218 = scmp.eq.s32.totalorder %s17, 0
    %p219 = por %p217, %p218
    %p220 = scmp.ne.s32.totalorder %s212, %s214
    %p221 = scmp.eq.s32.totalorder %s22, 1
    %p222 = por %p220, %p221
    %p223 = scmp.ne.s32.totalorder %s214, %s215
    %p224 = scmp.eq.s32.totalorder %s22, 0
    %p225 = por %p223, %p224
    %p226 = scmp.ne.s32.totalorder %s214, %s215
    %p227 = scmp.eq.s32.totalorder %s23, 1
    %p228 = por %p226, %p227
    %p230 = scmp.ne.s32.totalorder %s215, %s229
    %p231 = scmp.eq.s32.totalorder %s23, 0
    %p232 = por %p230, %p231
    %s234 = sadd.s32 %s233, 1
    %p237 = scmp.eq.s32.totalorder %s17, 1
    %p238 = scmp.ne.s32.totalorder %s233, %s235
    %p239 = scmp.eq.s32.totalorder %s17, 0
    %p240 = por %p238, %p239
    %p241 = scmp.ne.s32.totalorder %s233, %s235
    %p242 = scmp.eq.s32.totalorder %s22, 1
    %p243 = por %p241, %p242
    %p244 = scmp.ne.s32.totalorder %s235, %s236
    %p245 = scmp.eq.s32.totalorder %s22, 0
    %p246 = por %p244, %p245
    %p247 = scmp.ne.s32.totalorder %s235, %s236
    %p248 = scmp.eq.s32.totalorder %s23, 1
    %p249 = por %p247, %p248
    %p251 = scmp.ne.s32.totalorder %s236, %s250
    %p252 = scmp.eq.s32.totalorder %s23, 0
    %p253 = por %p251, %p252
    %s254 = ssub.s32 %s24, %s36
    %p255 = scmp.eq.s32.totalorder %s254, 0
    %s257 = sadd.s32 %s256, 1
    %s258 = scalar_select %p255, %s256, %s257
    %p261 = pneg %p255
    %p262 = scmp.eq.s32.totalorder %s17, 1
    %p263 = por %p261, %p262
    %p264 = scmp.ne.s32.totalorder %s256, %s259
    %p265 = scmp.eq.s32.totalorder %s17, 0
    %p266 = por %p264, %p265
    %p267 = scmp.ne.s32.totalorder %s256, %s259
    %p268 = scmp.eq.s32.totalorder %s22, 1
    %p269 = por %p267, %p268
    %p270 = scmp.ne.s32.totalorder %s259, %s260
    %p271 = scmp.eq.s32.totalorder %s22, 0
    %p272 = por %p270, %p271
    %p273 = scmp.ne.s32.totalorder %s259, %s260
    %p274 = scmp.eq.s32.totalorder %s23, 1
    %p275 = por %p273, %p274
    %p277 = scmp.ne.s32.totalorder %s260, %s276
    %p278 = scmp.eq.s32.totalorder %s23, 0
    %p279 = por %p277, %p278
    %s280 = ssub.s32 %s24, %s36
    %p281 = scmp.eq.s32.totalorder %s280, 0
    %s283 = sadd.s32 %s282, 1
    %s284 = scalar_select %p281, %s282, %s283
    %p287 = pneg %p281
    %p288 = scmp.eq.s32.totalorder %s17, 1
    %p289 = por %p287, %p288
    %p290 = scmp.ne.s32.totalorder %s282, %s285
    %p291 = scmp.eq.s32.totalorder %s17, 0
    %p292 = por %p290, %p291
    %p293 = scmp.ne.s32.totalorder %s282, %s285
    %p294 = scmp.eq.s32.totalorder %s22, 1
    %p295 = por %p293, %p294
    %p296 = scmp.ne.s32.totalorder %s285, %s286
    %p297 = scmp.eq.s32.totalorder %s22, 0
    %p298 = por %p296, %p297
    %p299 = scmp.ne.s32.totalorder %s285, %s286
    %p300 = scmp.eq.s32.totalorder %s23, 1
    %p301 = por %p299, %p300
    %p303 = scmp.ne.s32.totalorder %s286, %s302
    %p304 = scmp.eq.s32.totalorder %s23, 0
    %p305 = por %p303, %p304
    %p306 = scmp.le.s32.totalorder 1, %s17
    %p307 = scmp.lt.s32.totalorder %s17, 3
    %p308 = pnand %p306, %p307
    %p309 = pneg %p308
    // Predicated region
    $region9: #{dgcnn_forward.10} parent=5 // pred_check
      _
    $region10: #{dgcnn_forward.10} parent=5 // pred_check_branch
      %311 = sbr.rel (%p308) target = $region12
    $region11: #{dgcnn_forward.10} parent=5 // pred_region
      %s312 = ssub.s32 %s17, 1
      // Predicated region
      $region13: #{dgcnn_forward.10} parent=11 // pred_check
        %p313 = pneg %p162
      $region14: #{dgcnn_forward.10} parent=11 // pred_check_branch
        %315 = sbr.rel (%p313) target = $region16
      $region15: #{dgcnn_forward.10} parent=11 // pred_region
        _
      $region16: #{dgcnn_forward.10} parent=11 // pred_fallthru
        _
      // Predicated region
      $region17: #{dgcnn_forward.10} parent=11 // pred_check
        %p316 = pneg %p183
      $region18: #{dgcnn_forward.10} parent=11 // pred_check_branch
        %318 = sbr.rel (%p316) target = $region20
      $region19: #{dgcnn_forward.10} parent=11 // pred_region
        _
      $region20: #{dgcnn_forward.10} parent=11 // pred_fallthru
        _
      // Predicated region
      $region21: #{dgcnn_forward.10} parent=11 // pred_check
        %p319 = pneg %p204
      $region22: #{dgcnn_forward.10} parent=11 // pred_check_branch
        %321 = sbr.rel (%p319) target = $region24
      $region23: #{dgcnn_forward.10} parent=11 // pred_region
        _
      $region24: #{dgcnn_forward.10} parent=11 // pred_fallthru
        _
      // Predicated region
      $region25: #{dgcnn_forward.10} parent=11 // pred_check
        %p322 = pneg %p225
      $region26: #{dgcnn_forward.10} parent=11 // pred_check_branch
        %324 = sbr.rel (%p322) target = $region28
      $region27: #{dgcnn_forward.10} parent=11 // pred_region
        _
      $region28: #{dgcnn_forward.10} parent=11 // pred_fallthru
        _
      // Predicated region
      $region29: #{dgcnn_forward.10} parent=11 // pred_check
        %p325 = pneg %p246
      $region30: #{dgcnn_forward.10} parent=11 // pred_check_branch
        %327 = sbr.rel (%p325) target = $region32
      $region31: #{dgcnn_forward.10} parent=11 // pred_region
        _
      $region32: #{dgcnn_forward.10} parent=11 // pred_fallthru
        _
    $region12: #{dgcnn_forward.10} parent=5 // pred_fallthru
      _
    %p328 = scmp.lt.s32.totalorder %s17, 2
    // Predicated region
    $region33: #{dgcnn_forward.10} parent=5 // pred_check
      %p329 = pneg %p328
    $region34: #{dgcnn_forward.10} parent=5 // pred_check_branch
      %331 = sbr.rel (%p329) target = $region36
    $region35: #{dgcnn_forward.10} parent=5 // pred_region
      // Predicated region
      $region37: #{dgcnn_forward.10} parent=35 // pred_check
        %p332 = pneg %p51
      $region38: #{dgcnn_forward.10} parent=35 // pred_check_branch
        %334 = sbr.rel (%p332) target = $region40
      $region39: #{dgcnn_forward.10} parent=35 // pred_region
        %s335 = smul.u32 4, %s25
        %p336 = scmp.lt.s32.totalorder %s24, 1
        %s337 = scalar_select %p336, %s24, 1
        %p338 = scmp.lt.s32.totalorder %s335, 3
        %s339 = scalar_select %p338, %s335, 3
        %s340 = smul.addr %s337, 4
        %s341 = sadd.s32 %s339, %s340
        %s342 = smul.addr %s341, 4
        %s343 = scalar_lea.vmem %s0, %s342
        %s344 = smul.u32 4, %s25
      $region40: #{dgcnn_forward.10} parent=35 // pred_fallthru
        _
      // Predicated region
      $region41: #{dgcnn_forward.10} parent=35 // pred_check
        %p345 = pneg %p79
      $region42: #{dgcnn_forward.10} parent=35 // pred_check_branch
        %347 = sbr.rel (%p345) target = $region44
      $region43: #{dgcnn_forward.10} parent=35 // pred_region
        %s348 = smul.u32 4, %s25
        %p349 = scmp.lt.s32.totalorder %s24, 1
        %s350 = scalar_select %p349, %s24, 1
        %p351 = scmp.lt.s32.totalorder %s348, 3
        %s352 = scalar_select %p351, %s348, 3
        %s353 = smul.addr %s350, 4
        %s354 = sadd.s32 %s352, %s353
        %s355 = smul.addr %s354, 4
        %s356 = scalar_lea.vmem %s1, %s355
        %s357 = smul.u32 4, %s25
      $region44: #{dgcnn_forward.10} parent=35 // pred_fallthru
        _
      // Predicated region
      $region45: #{dgcnn_forward.10} parent=35 // pred_check
        %p358 = pneg %p107
      $region46: #{dgcnn_forward.10} parent=35 // pred_check_branch
        %360 = sbr.rel (%p358) target = $region48
      $region47: #{dgcnn_forward.10} parent=35 // pred_region
        %s361 = smul.u32 4, %s25
        %p362 = scmp.lt.s32.totalorder %s24, 1
        %s363 = scalar_select %p362, %s24, 1
        %p364 = scmp.lt.s32.totalorder %s361, 3
        %s365 = scalar_select %p364, %s361, 3
        %s366 = smul.addr %s363, 4
        %s367 = sadd.s32 %s365, %s366
        %s368 = smul.addr %s367, 4
        %s369 = scalar_lea.vmem %s2, %s368
        %s370 = smul.u32 4, %s25
      $region48: #{dgcnn_forward.10} parent=35 // pred_fallthru
        _
      // Predicated region
      $region49: #{dgcnn_forward.10} parent=35 // pred_check
        %p371 = pneg %p135
      $region50: #{dgcnn_forward.10} parent=35 // pred_check_branch
        %373 = sbr.rel (%p371) target = $region52
      $region51: #{dgcnn_forward.10} parent=35 // pred_region
        %s374 = smul.u32 4, %s25
        %p375 = scmp.lt.s32.totalorder %s24, 1
        %s376 = scalar_select %p375, %s24, 1
        %p377 = scmp.lt.s32.totalorder %s374, 3
        %s378 = scalar_select %p377, %s374, 3
        %s379 = smul.addr %s378, 2
        %s380 = smul.addr %s376, 8
        %s381 = sadd.s32 %s379, %s380
        %s382 = smul.addr %s381, 4
        %s383 = scalar_lea.vmem %s3, %s382
        %s384 = smul.u32 4, %s25
      $region52: #{dgcnn_forward.10} parent=35 // pred_fallthru
        _
    $region36: #{dgcnn_forward.10} parent=5 // pred_fallthru
      _
    %p385 = scmp.le.s32.totalorder 1, %s17
    %p386 = scmp.lt.s32.totalorder %s17, 3
    %p387 = pnand %p385, %p386
    %p388 = pneg %p387
    // Predicated region
    $region53: #{dgcnn_forward.10} parent=5 // pred_check
      _
    $region54: #{dgcnn_forward.10} parent=5 // pred_check_branch
      %390 = sbr.rel (%p387) target = $region56
    $region55: #{dgcnn_forward.10} parent=5 // pred_region
      %s391 = ssub.s32 %s17, 1
      %s392 = smul.u32 4, %s27
      %p393 = scmp.lt.s32.totalorder %s26, 1
      %s394 = scalar_select %p393, %s26, 1
      %p395 = scmp.lt.s32.totalorder %s392, 3
      %s396 = scalar_select %p395, %s392, 3
      %s397 = smul.addr %s394, 4
      %s398 = sadd.s32 %s396, %s397
      %s399 = smul.addr %s398, 4
      %s400 = scalar_lea.vmem %s0, %s399
      %p401 = pneg %p57
      %p402 = pneg %p54
      %s403 = smul.u32 4, %s27
      %p404 = scmp.lt.s32.totalorder %s26, 1
      %s405 = scalar_select %p404, %s26, 1
      %p406 = scmp.lt.s32.totalorder %s403, 3
      %s407 = scalar_select %p406, %s403, 3
      %s408 = smul.addr %s405, 4
      %s409 = sadd.s32 %s407, %s408
      %s410 = smul.addr %s409, 4
      %s411 = scalar_lea.vmem %s1, %s410
      %p412 = pneg %p85
      %p413 = pneg %p82
      %s414 = smul.u32 4, %s27
      %p415 = scmp.lt.s32.totalorder %s26, 1
      %s416 = scalar_select %p415, %s26, 1
      %p417 = scmp.lt.s32.totalorder %s414, 3
      %s418 = scalar_select %p417, %s414, 3
      %s419 = smul.addr %s416, 4
      %s420 = sadd.s32 %s418, %s419
      %s421 = smul.addr %s420, 4
      %s422 = scalar_lea.vmem %s2, %s421
      %p423 = pneg %p113
      %p424 = pneg %p110
      %s425 = smul.u32 4, %s27
      %p426 = scmp.lt.s32.totalorder %s26, 1
      %s427 = scalar_select %p426, %s26, 1
      %p428 = scmp.lt.s32.totalorder %s425, 3
      %s429 = scalar_select %p428, %s425, 3
      %s430 = smul.addr %s429, 2
      %s431 = smul.addr %s427, 8
      %s432 = sadd.s32 %s430, %s431
      %s433 = smul.addr %s432, 4
      %s434 = scalar_lea.vmem %s3, %s433
      %p435 = pneg %p141
      %p436 = pneg %p138
      %p437 = pneg %p162
      %p438 = pneg %p159
      %p439 = pneg %p183
      %p440 = pneg %p180
      %p441 = pneg %p204
      %p442 = pneg %p201
      %p443 = pneg %p225
      %p444 = pneg %p222
      %p445 = pneg %p246
      %p446 = pneg %p243
      %p447 = pneg %p272
      %p448 = pneg %p269
      %p449 = scmp.lt.s32.totalorder %s26, 1
      %s450 = scalar_select %p449, %s26, 1
      %s451 = scalar_lea.vmem %s9, %s450
      %p452 = pneg %p298
      %p453 = pneg %p295
      %p454 = scmp.lt.s32.totalorder %s26, 1
      %s455 = scalar_select %p454, %s26, 1
      %s456 = scalar_lea.vmem %s10, %s455
      %s457 = smul.u32 4, %s27
      %p458 = scmp.lt.s32.totalorder %s26, 1
      %s459 = scalar_select %p458, %s26, 1
      %p460 = scmp.lt.s32.totalorder %s457, 3
      %s461 = scalar_select %p460, %s457, 3
      %s462 = smul.addr %s459, 4
      %s463 = sadd.s32 %s461, %s462
      %s464 = smul.addr %s463, 4
      %s465 = scalar_lea.vmem %s0, %s464
      %s466 = smul.u32 4, %s27
      %s467 = smul.u32 4, %s27
      %p468 = scmp.lt.s32.totalorder %s26, 1
      %s469 = scalar_select %p468, %s26, 1
      %p470 = scmp.lt.s32.totalorder %s467, 3
      %s471 = scalar_select %p470, %s467, 3
      %s472 = smul.addr %s469, 4
      %s473 = sadd.s32 %s471, %s472
      %s474 = smul.addr %s473, 4
      %s475 = scalar_lea.vmem %s1, %s474
      %s476 = smul.u32 4, %s27
      %s477 = smul.u32 4, %s27
      %p478 = scmp.lt.s32.totalorder %s26, 1
      %s479 = scalar_select %p478, %s26, 1
      %p480 = scmp.lt.s32.totalorder %s477, 3
      %s481 = scalar_select %p480, %s477, 3
      %s482 = smul.addr %s479, 4
      %s483 = sadd.s32 %s481, %s482
      %s484 = smul.addr %s483, 4
      %s485 = scalar_lea.vmem %s2, %s484
      %s486 = smul.u32 4, %s27
      %s487 = smul.u32 4, %s27
      %p488 = scmp.lt.s32.totalorder %s26, 1
      %s489 = scalar_select %p488, %s26, 1
      %p490 = scmp.lt.s32.totalorder %s487, 3
      %s491 = scalar_select %p490, %s487, 3
      %s492 = smul.addr %s491, 2
      %s493 = smul.addr %s489, 8
      %s494 = sadd.s32 %s492, %s493
      %s495 = smul.addr %s494, 4
      %s496 = scalar_lea.vmem %s3, %s495
      %s497 = smul.u32 4, %s27
      %p498 = scmp.lt.s32.totalorder %s26, 1
      %s499 = scalar_select %p498, %s26, 1
      %s500 = scalar_lea.vmem %s9, %s499
      %p501 = scmp.lt.s32.totalorder %s26, 1
      %s502 = scalar_select %p501, %s26, 1
      %s503 = scalar_lea.vmem %s10, %s502
      %v505 = vld [vmem:[%s465] sm:$0xf]
      %v506 = vld [vmem:[%s465 + $0x4] sm:$0xf]
      %v507 = vld [vmem:[%s465 + $0x8] sm:$0xf]
      %v508 = vld [vmem:[%s465 + $0xc] sm:$0xf]
      %v509 = vld [vmem:[%s4] sm:$0xf]
      %v510 = vld [vmem:[%s4 + $0x4] sm:$0xf]
      %v511 = vld [vmem:[%s4 + $0x8] sm:$0xf]
      %v512 = vld [vmem:[%s4 + $0xc] sm:$0xf]
      %v513 = vld [vmem:[%s4 + $0x10] sm:$0xf]
      %v514 = vld [vmem:[%s4 + $0x14] sm:$0xf]
      %v515 = vld [vmem:[%s4 + $0x18] sm:$0xf]
      %v516 = vld [vmem:[%s4 + $0x1c] sm:$0xf]
      %v517 = vld [vmem:[%s475] sm:$0xf]
      %v518 = vld [vmem:[%s475 + $0x4] sm:$0xf]
      %v519 = vld [vmem:[%s475 + $0x8] sm:$0xf]
      %v520 = vld [vmem:[%s475 + $0xc] sm:$0xf]
      %v521 = vld [vmem:[%s5] sm:$0xf]
      %v522 = vld [vmem:[%s5 + $0x4] sm:$0xf]
      %v523 = vld [vmem:[%s5 + $0x8] sm:$0xf]
      %v524 = vld [vmem:[%s5 + $0xc] sm:$0xf]
      %v525 = vld [vmem:[%s5 + $0x10] sm:$0xf]
      %v526 = vld [vmem:[%s5 + $0x14] sm:$0xf]
      %v527 = vld [vmem:[%s5 + $0x18] sm:$0xf]
      %v528 = vld [vmem:[%s5 + $0x1c] sm:$0xf]
      %v533 = vunpack.c.l.b16 %v517
      %v534 = vunpack.c.l.b16 %v518
      %v535 = vunpack.c.l.b16 %v519
      %v536 = vunpack.c.l.b16 %v520
      %v537 = vpack.c.b16 %v534, %v533
      %v538 = vpack.c.b16 %v536, %v535
      %v547 = vunpack.c.l.b16 %v521
      %v548 = vunpack.c.l.b16 %v522
      %v549 = vunpack.c.l.b16 %v523
      %v550 = vunpack.c.l.b16 %v524
      %v551 = vunpack.c.l.b16 %v525
      %v552 = vunpack.c.l.b16 %v526
      %v553 = vunpack.c.l.b16 %v527
      %v554 = vunpack.c.l.b16 %v528
      %v555 = vpack.c.b16 %v548, %v547
      %v556 = vpack.c.b16 %v550, %v549
      %v557 = vpack.c.b16 %v552, %v551
      %v558 = vpack.c.b16 %v554, %v553
      %vm563 = vcmask 523264
      %v565 = vsel %vm563, %v537, 0
      %v568 = vsel %vm563, %v538, 0
      %570 = vmatprep.subr.bf16.mxu0 0
      %571 = vmatpush1.bf16.msra.mxu0 0
      %572 = vmatprep.subr.bf16.mxu0 0
      %573 = vmatpush1.bf16.msra.mxu0 0
      %574 = vmatprep.subr.bf16.mxu0 0
      %575 = vmatpush1.bf16.msra.mxu0 0
      %576 = vmatprep.subr.bf16.mxu0 0
      %577 = vmatpush1.bf16.msra.mxu0 0
      %578 = vmatprep.subr.bf16.mxu0 0
      %579 = vmatpush1.bf16.msra.mxu0 %v558
      %580 = vmatprep.subr.bf16.mxu0 0
      %581 = vmatpush1.bf16.msra.mxu0 %v557
      %582 = vmatprep.subr.bf16.mxu0 0
      %583 = vmatpush1.bf16.msra.mxu0 %v556
      %584 = vmatprep.subr.bf16.mxu0 0
      %585 = vmatpush1.bf16.msra.mxu0 %v555
      %586 = vmatprep.subr.bf16.mxu0 0
      %587 = vmatpush2.bf16.msra.mxu0 0
      %588 = vmatprep.subr.bf16.mxu0 0
      %589 = vmatpush2.bf16.msra.mxu0 0
      %590 = vmatprep.subr.bf16.mxu0 0
      %591 = vmatpush2.bf16.msra.mxu0 0
      %592 = vmatprep.subr.bf16.mxu0 0
      %593 = vmatpush2.bf16.msra.mxu0 0
      %594 = vmatprep.subr.bf16.mxu0 0
      %595 = vmatpush2.bf16.msra.mxu0 0
      %596 = vmatprep.subr.bf16.mxu0 0
      %597 = vmatpush2.bf16.msra.mxu0 0
      %598 = vmatprep.subr.bf16.mxu0 0
      %599 = vmatpush2.bf16.msra.mxu0 0
      %600 = vmatprep.subr.bf16.mxu0 0
      %601 = vmatpush2.bf16.msra.mxu0 0
      %602 = vmatprep.mubr.bf16.mxu0 0
      %603 = vmatmul.mubr.bf16.gmra.mxu0 %v565
      %v604 = vpop.f32.mrf.mxu0
      %v605 = vadd.f32 0.0, %v604
      %v606 = vpop.f32.mrf.mxu0
      %v607 = vpop.f32.mrf.mxu0
      %v608 = vadd.f32 0.0, %v607
      %v609 = vpop.f32.mrf.mxu0
      %610 = vmatprep.mubr.bf16.mxu0 0
      %611 = vmatmul.mubr.bf16.gmra.mxu0 %v568
      %v612 = vpop.f32.mrf.mxu0
      %v613 = vadd.f32 0.0, %v612
      %v614 = vpop.f32.mrf.mxu0
      %v615 = vpop.f32.mrf.mxu0
      %v616 = vadd.f32 0.0, %v615
      %v617 = vpop.f32.mrf.mxu0
      %618 = vdwg.mxu0
      %v623 = vunpack.c.l.b16 %v505
      %v624 = vunpack.c.l.b16 %v506
      %v625 = vunpack.c.l.b16 %v507
      %v626 = vunpack.c.l.b16 %v508
      %v627 = vpack.c.b16 %v624, %v623
      %v628 = vpack.c.b16 %v626, %v625
      %v637 = vunpack.c.l.b16 %v509
      %v638 = vunpack.c.l.b16 %v510
      %v639 = vunpack.c.l.b16 %v511
      %v640 = vunpack.c.l.b16 %v512
      %v641 = vunpack.c.l.b16 %v513
      %v642 = vunpack.c.l.b16 %v514
      %v643 = vunpack.c.l.b16 %v515
      %v644 = vunpack.c.l.b16 %v516
      %v645 = vpack.c.b16 %v638, %v637
      %v646 = vpack.c.b16 %v640, %v639
      %v647 = vpack.c.b16 %v642, %v641
      %v648 = vpack.c.b16 %v644, %v643
      %v654 = vsel %vm563, %v627, 0
      %v657 = vsel %vm563, %v628, 0
      %659 = vmatprep.subr.bf16.mxu0 0
      %660 = vmatpush1.bf16.msra.mxu0 0
      %661 = vmatprep.subr.bf16.mxu0 0
      %662 = vmatpush1.bf16.msra.mxu0 0
      %663 = vmatprep.subr.bf16.mxu0 0
      %664 = vmatpush1.bf16.msra.mxu0 0
      %665 = vmatprep.subr.bf16.mxu0 0
      %666 = vmatpush1.bf16.msra.mxu0 0
      %667 = vmatprep.subr.bf16.mxu0 0
      %668 = vmatpush1.bf16.msra.mxu0 %v648
      %669 = vmatprep.subr.bf16.mxu0 0
      %670 = vmatpush1.bf16.msra.mxu0 %v647
      %671 = vmatprep.subr.bf16.mxu0 0
      %672 = vmatpush1.bf16.msra.mxu0 %v646
      %673 = vmatprep.subr.bf16.mxu0 0
      %674 = vmatpush1.bf16.msra.mxu0 %v645
      %675 = vmatprep.subr.bf16.mxu0 0
      %676 = vmatpush2.bf16.msra.mxu0 0
      %677 = vmatprep.subr.bf16.mxu0 0
      %678 = vmatpush2.bf16.msra.mxu0 0
      %679 = vmatprep.subr.bf16.mxu0 0
      %680 = vmatpush2.bf16.msra.mxu0 0
      %681 = vmatprep.subr.bf16.mxu0 0
      %682 = vmatpush2.bf16.msra.mxu0 0
      %683 = vmatprep.subr.bf16.mxu0 0
      %684 = vmatpush2.bf16.msra.mxu0 0
      %685 = vmatprep.subr.bf16.mxu0 0
      %686 = vmatpush2.bf16.msra.mxu0 0
      %687 = vmatprep.subr.bf16.mxu0 0
      %688 = vmatpush2.bf16.msra.mxu0 0
      %689 = vmatprep.subr.bf16.mxu0 0
      %690 = vmatpush2.bf16.msra.mxu0 0
      %691 = vmatprep.mubr.bf16.mxu0 0
      %692 = vmatmul.mubr.bf16.gmra.mxu0 %v654
      %v693 = vpop.f32.mrf.mxu0
      %v694 = vadd.f32 %v605, %v693
      %v695 = vpop.f32.mrf.mxu0
      %v696 = vpop.f32.mrf.mxu0
      %v697 = vadd.f32 %v608, %v696
      %v698 = vpop.f32.mrf.mxu0
      %699 = vmatprep.mubr.bf16.mxu0 0
      %700 = vmatmul.mubr.bf16.gmra.mxu0 %v657
      %v701 = vpop.f32.mrf.mxu0
      %v702 = vadd.f32 %v613, %v701
      %v703 = vpop.f32.mrf.mxu0
      %v704 = vpop.f32.mrf.mxu0
      %v705 = vadd.f32 %v616, %v704
      %v706 = vpop.f32.mrf.mxu0
      %707 = vdwg.mxu0
      %v708 = vld [vmem:[%s485] sm:$0xf]
      %v709 = vld [vmem:[%s485 + $0x4] sm:$0xf]
      %v710 = vld [vmem:[%s485 + $0x8] sm:$0xf]
      %v711 = vld [vmem:[%s485 + $0xc] sm:$0xf]
      %v712 = vld [vmem:[%s6] sm:$0xf]
      %v713 = vld [vmem:[%s6 + $0x4] sm:$0xf]
      %v714 = vld [vmem:[%s6 + $0x8] sm:$0xf]
      %v715 = vld [vmem:[%s6 + $0xc] sm:$0xf]
      %v716 = vld [vmem:[%s6 + $0x10] sm:$0xf]
      %v717 = vld [vmem:[%s6 + $0x14] sm:$0xf]
      %v718 = vld [vmem:[%s6 + $0x18] sm:$0xf]
      %v719 = vld [vmem:[%s6 + $0x1c] sm:$0xf]
      %v720 = vld [vmem:[%s6 + $0x20] sm:$0xf]
      %v721 = vld [vmem:[%s6 + $0x24] sm:$0xf]
      %v722 = vld [vmem:[%s6 + $0x28] sm:$0xf]
      %v723 = vld [vmem:[%s6 + $0x2c] sm:$0xf]
      %v724 = vld [vmem:[%s6 + $0x30] sm:$0xf]
      %v725 = vld [vmem:[%s6 + $0x34] sm:$0xf]
      %v726 = vld [vmem:[%s6 + $0x38] sm:$0xf]
      %v727 = vld [vmem:[%s6 + $0x3c] sm:$0xf]
      %v732 = vunpack.c.l.b16 %v708
      %v733 = vunpack.c.l.b16 %v709
      %v734 = vunpack.c.l.b16 %v710
      %v735 = vunpack.c.l.b16 %v711
      %v736 = vpack.c.b16 %v733, %v732
      %v737 = vpack.c.b16 %v735, %v734
      %v756 = vunpack.c.l.b16 %v712
      %v757 = vunpack.c.l.b16 %v713
      %v758 = vunpack.c.l.b16 %v714
      %v759 = vunpack.c.l.b16 %v715
      %v760 = vunpack.c.l.b16 %v716
      %v761 = vunpack.c.l.b16 %v717
      %v762 = vunpack.c.l.b16 %v718
      %v763 = vunpack.c.l.b16 %v719
      %v764 = vunpack.c.l.b16 %v720
      %v765 = vunpack.c.l.b16 %v721
      %v766 = vunpack.c.l.b16 %v722
      %v767 = vunpack.c.l.b16 %v723
      %v768 = vunpack.c.l.b16 %v724
      %v769 = vunpack.c.l.b16 %v725
      %v770 = vunpack.c.l.b16 %v726
      %v771 = vunpack.c.l.b16 %v727
      %v772 = vpack.c.b16 %v757, %v756
      %v773 = vpack.c.b16 %v759, %v758
      %v774 = vpack.c.b16 %v761, %v760
      %v775 = vpack.c.b16 %v763, %v762
      %v776 = vpack.c.b16 %v765, %v764
      %v777 = vpack.c.b16 %v767, %v766
      %v778 = vpack.c.b16 %v769, %v768
      %v779 = vpack.c.b16 %v771, %v770
      %788 = vmatprep.subr.bf16.mxu0 0
      %789 = vmatpush1.bf16.msra.mxu0 %v779
      %790 = vmatprep.subr.bf16.mxu0 0
      %791 = vmatpush1.bf16.msra.mxu0 %v778
      %792 = vmatprep.subr.bf16.mxu0 0
      %793 = vmatpush1.bf16.msra.mxu0 %v777
      %794 = vmatprep.subr.bf16.mxu0 0
      %795 = vmatpush1.bf16.msra.mxu0 %v776
      %796 = vmatprep.subr.bf16.mxu0 0
      %797 = vmatpush1.bf16.msra.mxu0 %v775
      %798 = vmatprep.subr.bf16.mxu0 0
      %799 = vmatpush1.bf16.msra.mxu0 %v774
      %800 = vmatprep.subr.bf16.mxu0 0
      %801 = vmatpush1.bf16.msra.mxu0 %v773
      %802 = vmatprep.subr.bf16.mxu0 0
      %803 = vmatpush1.bf16.msra.mxu0 %v772
      %804 = vmatprep.subr.bf16.mxu0 0
      %805 = vmatpush2.bf16.msra.mxu0 0
      %806 = vmatprep.subr.bf16.mxu0 0
      %807 = vmatpush2.bf16.msra.mxu0 0
      %808 = vmatprep.subr.bf16.mxu0 0
      %809 = vmatpush2.bf16.msra.mxu0 0
      %810 = vmatprep.subr.bf16.mxu0 0
      %811 = vmatpush2.bf16.msra.mxu0 0
      %812 = vmatprep.subr.bf16.mxu0 0
      %813 = vmatpush2.bf16.msra.mxu0 0
      %814 = vmatprep.subr.bf16.mxu0 0
      %815 = vmatpush2.bf16.msra.mxu0 0
      %816 = vmatprep.subr.bf16.mxu0 0
      %817 = vmatpush2.bf16.msra.mxu0 0
      %818 = vmatprep.subr.bf16.mxu0 0
      %819 = vmatpush2.bf16.msra.mxu0 0
      %820 = vmatprep.mubr.bf16.mxu0 0
      %821 = vmatmul.mubr.bf16.gmra.mxu0 %v736
      %v822 = vpop.f32.mrf.mxu0
      %v823 = vadd.f32 0.0, %v822
      %v824 = vpop.f32.mrf.mxu0
      %v825 = vpop.f32.mrf.mxu0
      %v826 = vadd.f32 0.0, %v825
      %v827 = vpop.f32.mrf.mxu0
      %828 = vmatprep.mubr.bf16.mxu0 0
      %829 = vmatmul.mubr.bf16.gmra.mxu0 %v737
      %v830 = vpop.f32.mrf.mxu0
      %v831 = vadd.f32 0.0, %v830
      %v832 = vpop.f32.mrf.mxu0
      %v833 = vpop.f32.mrf.mxu0
      %v834 = vadd.f32 0.0, %v833
      %v835 = vpop.f32.mrf.mxu0
      %836 = vdwg.mxu0
      %v837 = vadd.f32 %v694, %v823
      %v838 = vadd.f32 %v697, %v826
      %v839 = vadd.f32 %v702, %v831
      %v840 = vadd.f32 %v705, %v834
      %v841 = vld [vmem:[%s496] sm:$0xff]
      %v842 = vld [vmem:[%s496 + $0x8] sm:$0xff]
      %v843 = vld [vmem:[%s496 + $0x10] sm:$0xff]
      %v844 = vld [vmem:[%s496 + $0x18] sm:$0xff]
      %v845 = vld [vmem:[%s7] sm:$0xf]
      %v846 = vld [vmem:[%s7 + $0x4] sm:$0xf]
      %v847 = vld [vmem:[%s7 + $0x8] sm:$0xf]
      %v848 = vld [vmem:[%s7 + $0xc] sm:$0xf]
      %v849 = vld [vmem:[%s7 + $0x10] sm:$0xf]
      %v850 = vld [vmem:[%s7 + $0x14] sm:$0xf]
      %v851 = vld [vmem:[%s7 + $0x18] sm:$0xf]
      %v852 = vld [vmem:[%s7 + $0x1c] sm:$0xf]
      %v853 = vld [vmem:[%s7 + $0x20] sm:$0xf]
      %v854 = vld [vmem:[%s7 + $0x24] sm:$0xf]
      %v855 = vld [vmem:[%s7 + $0x28] sm:$0xf]
      %v856 = vld [vmem:[%s7 + $0x2c] sm:$0xf]
      %v857 = vld [vmem:[%s7 + $0x30] sm:$0xf]
      %v858 = vld [vmem:[%s7 + $0x34] sm:$0xf]
      %v859 = vld [vmem:[%s7 + $0x38] sm:$0xf]
      %v860 = vld [vmem:[%s7 + $0x3c] sm:$0xf]
      %v861 = vld [vmem:[%s7 + $0x40] sm:$0xf]
      %v862 = vld [vmem:[%s7 + $0x44] sm:$0xf]
      %v863 = vld [vmem:[%s7 + $0x48] sm:$0xf]
      %v864 = vld [vmem:[%s7 + $0x4c] sm:$0xf]
      %v865 = vld [vmem:[%s7 + $0x50] sm:$0xf]
      %v866 = vld [vmem:[%s7 + $0x54] sm:$0xf]
      %v867 = vld [vmem:[%s7 + $0x58] sm:$0xf]
      %v868 = vld [vmem:[%s7 + $0x5c] sm:$0xf]
      %v869 = vld [vmem:[%s7 + $0x60] sm:$0xf]
      %v870 = vld [vmem:[%s7 + $0x64] sm:$0xf]
      %v871 = vld [vmem:[%s7 + $0x68] sm:$0xf]
      %v872 = vld [vmem:[%s7 + $0x6c] sm:$0xf]
      %v873 = vld [vmem:[%s7 + $0x70] sm:$0xf]
      %v874 = vld [vmem:[%s7 + $0x74] sm:$0xf]
      %v875 = vld [vmem:[%s7 + $0x78] sm:$0xf]
      %v876 = vld [vmem:[%s7 + $0x7c] sm:$0xf]
      %v881 = vunpack.c.l.b16 %v841
      %v882 = vunpack.c.h.b16 %v841
      %v883 = vunpack.c.l.b16 %v842
      %v884 = vunpack.c.h.b16 %v842
      %v885 = vunpack.c.l.b16 %v843
      %v886 = vunpack.c.h.b16 %v843
      %v887 = vunpack.c.l.b16 %v844
      %v888 = vunpack.c.h.b16 %v844
      %v889 = vpack.c.b16 %v883, %v881
      %v890 = vpack.c.b16 %v884, %v882
      %v891 = vpack.c.b16 %v887, %v885
      %v892 = vpack.c.b16 %v888, %v886
      %v929 = vunpack.c.l.b16 %v845
      %v930 = vunpack.c.l.b16 %v846
      %v931 = vunpack.c.l.b16 %v847
      %v932 = vunpack.c.l.b16 %v848
      %v933 = vunpack.c.l.b16 %v849
      %v934 = vunpack.c.l.b16 %v850
      %v935 = vunpack.c.l.b16 %v851
      %v936 = vunpack.c.l.b16 %v852
      %v937 = vunpack.c.l.b16 %v853
      %v938 = vunpack.c.l.b16 %v854
      %v939 = vunpack.c.l.b16 %v855
      %v940 = vunpack.c.l.b16 %v856
      %v941 = vunpack.c.l.b16 %v857
      %v942 = vunpack.c.l.b16 %v858
      %v943 = vunpack.c.l.b16 %v859
      %v944 = vunpack.c.l.b16 %v860
      %v945 = vunpack.c.l.b16 %v861
      %v946 = vunpack.c.l.b16 %v862
      %v947 = vunpack.c.l.b16 %v863
      %v948 = vunpack.c.l.b16 %v864
      %v949 = vunpack.c.l.b16 %v865
      %v950 = vunpack.c.l.b16 %v866
      %v951 = vunpack.c.l.b16 %v867
      %v952 = vunpack.c.l.b16 %v868
      %v953 = vunpack.c.l.b16 %v869
      %v954 = vunpack.c.l.b16 %v870
      %v955 = vunpack.c.l.b16 %v871
      %v956 = vunpack.c.l.b16 %v872
      %v957 = vunpack.c.l.b16 %v873
      %v958 = vunpack.c.l.b16 %v874
      %v959 = vunpack.c.l.b16 %v875
      %v960 = vunpack.c.l.b16 %v876
      %v961 = vpack.c.b16 %v930, %v929
      %v962 = vpack.c.b16 %v932, %v931
      %v963 = vpack.c.b16 %v934, %v933
      %v964 = vpack.c.b16 %v936, %v935
      %v965 = vpack.c.b16 %v938, %v937
      %v966 = vpack.c.b16 %v940, %v939
      %v967 = vpack.c.b16 %v942, %v941
      %v968 = vpack.c.b16 %v944, %v943
      %v969 = vpack.c.b16 %v946, %v945
      %v970 = vpack.c.b16 %v948, %v947
      %v971 = vpack.c.b16 %v950, %v949
      %v972 = vpack.c.b16 %v952, %v951
      %v973 = vpack.c.b16 %v954, %v953
      %v974 = vpack.c.b16 %v956, %v955
      %v975 = vpack.c.b16 %v958, %v957
      %v976 = vpack.c.b16 %v960, %v959
      %993 = vmatprep.subr.bf16.mxu0 0
      %994 = vmatpush1.bf16.msra.mxu0 %v968
      %995 = vmatprep.subr.bf16.mxu0 0
      %996 = vmatpush1.bf16.msra.mxu0 %v967
      %997 = vmatprep.subr.bf16.mxu0 0
      %998 = vmatpush1.bf16.msra.mxu0 %v966
      %999 = vmatprep.subr.bf16.mxu0 0
      %1000 = vmatpush1.bf16.msra.mxu0 %v965
      %1001 = vmatprep.subr.bf16.mxu0 0
      %1002 = vmatpush1.bf16.msra.mxu0 %v964
      %1003 = vmatprep.subr.bf16.mxu0 0
      %1004 = vmatpush1.bf16.msra.mxu0 %v963
      %1005 = vmatprep.subr.bf16.mxu0 0
      %1006 = vmatpush1.bf16.msra.mxu0 %v962
      %1007 = vmatprep.subr.bf16.mxu0 0
      %1008 = vmatpush1.bf16.msra.mxu0 %v961
      %1009 = vmatprep.subr.bf16.mxu0 0
      %1010 = vmatpush2.bf16.msra.mxu0 %v976
      %1011 = vmatprep.subr.bf16.mxu0 0
      %1012 = vmatpush2.bf16.msra.mxu0 %v975
      %1013 = vmatprep.subr.bf16.mxu0 0
      %1014 = vmatpush2.bf16.msra.mxu0 %v974
      %1015 = vmatprep.subr.bf16.mxu0 0
      %1016 = vmatpush2.bf16.msra.mxu0 %v973
      %1017 = vmatprep.subr.bf16.mxu0 0
      %1018 = vmatpush2.bf16.msra.mxu0 %v972
      %1019 = vmatprep.subr.bf16.mxu0 0
      %1020 = vmatpush2.bf16.msra.mxu0 %v971
      %1021 = vmatprep.subr.bf16.mxu0 0
      %1022 = vmatpush2.bf16.msra.mxu0 %v970
      %1023 = vmatprep.subr.bf16.mxu0 0
      %1024 = vmatpush2.bf16.msra.mxu0 %v969
      %1025 = vmatprep.mubr.bf16.mxu0 %v890
      %1026 = vmatmul.mubr.bf16.gmra.mxu0 %v889
      %v1027 = vpop.f32.mrf.mxu0
      %v1028 = vadd.f32 0.0, %v1027
      %v1029 = vpop.f32.mrf.mxu0
      %v1030 = vpop.f32.mrf.mxu0
      %v1031 = vadd.f32 0.0, %v1030
      %v1032 = vpop.f32.mrf.mxu0
      %1033 = vmatprep.mubr.bf16.mxu0 %v892
      %1034 = vmatmul.mubr.bf16.gmra.mxu0 %v891
      %v1035 = vpop.f32.mrf.mxu0
      %v1036 = vadd.f32 0.0, %v1035
      %v1037 = vpop.f32.mrf.mxu0
      %v1038 = vpop.f32.mrf.mxu0
      %v1039 = vadd.f32 0.0, %v1038
      %v1040 = vpop.f32.mrf.mxu0
      %1041 = vdwg.mxu0
      %v1042 = vadd.f32 %v837, %v1028
      %v1043 = vadd.f32 %v838, %v1031
      %v1044 = vadd.f32 %v839, %v1036
      %v1045 = vadd.f32 %v840, %v1039
      %v1046 = vld [vmem:[%s8] sm:$0x1]
      %v1048 = vlaneseq
      %v1049 = vshrl.u32 %v1048, 7
      %v1050 = vsub.s32 0, %v1049
      %v1051 = vrot.slane %v1046, %v1050
      %v1053 = vadd.f32 %v1042, %v1051
      %v1054 = vadd.f32 %v1043, %v1051
      %v1055 = vadd.f32 %v1044, %v1051
      %v1056 = vadd.f32 %v1045, %v1051
      %vm1057 = vcmp.gt.f32.partialorder %v1053, 0.0
      %vm1058 = vcmp.gt.f32.partialorder %v1054, 0.0
      %vm1059 = vcmp.gt.f32.partialorder %v1055, 0.0
      %vm1060 = vcmp.gt.f32.partialorder %v1056, 0.0
      %v1061 = vmul.f32 %v1053, 0.2
      %v1062 = vmul.f32 %v1054, 0.2
      %v1063 = vmul.f32 %v1055, 0.2
      %v1064 = vmul.f32 %v1056, 0.2
      %v1065 = vsel %vm1057, %v1053, %v1061
      %v1066 = vsel %vm1058, %v1054, %v1062
      %v1067 = vsel %vm1059, %v1055, %v1063
      %v1068 = vsel %vm1060, %v1056, %v1064
      %v1069 = vsel %vm563, %v1065, -inf
      %v1070 = vsel %vm563, %v1066, -inf
      %v1071 = vsel %vm563, %v1067, -inf
      %v1072 = vsel %vm563, %v1068, -inf
      %v1073 = vmax.f32 %v1069, %v1070
      %v1074 = vmax.f32 %v1071, %v1072
      %v1075 = vmax.f32 %v1073, %v1074
      %v1076 = vrot.slane %v1075, 4
      %v1077 = vmax.f32 %v1075, %v1076
      %v1078 = vrot.slane %v1077, 2
      %v1079 = vmax.f32 %v1077, %v1078
      %v1080 = vrot.slane %v1079, 1
      %v1081 = vmax.f32 %v1079, %v1080
      %v1082 = vsel %vm563, %v1065, 0.0
      %v1083 = vsel %vm563, %v1066, 0.0
      %v1084 = vadd.f32 %v1082, %v1083
      %v1085 = vsel %vm563, %v1067, 0.0
      %v1086 = vadd.f32 %v1084, %v1085
      %v1087 = vsel %vm563, %v1068, 0.0
      %v1088 = vadd.f32 %v1086, %v1087
      %v1089 = vrot.slane %v1088, 4
      %v1090 = vadd.f32 %v1088, %v1089
      %v1091 = vrot.slane %v1090, 2
      %v1092 = vadd.f32 %v1090, %v1091
      %v1093 = vrot.slane %v1092, 1
      %v1094 = vadd.f32 %v1092, %v1093
      %p1095 = scmp.eq.s32.totalorder %s27, 0
      // Predicated region
      $region57: #{dgcnn_forward.10} parent=55 // pred_check
        %p1096 = pneg %p1095
      $region58: #{dgcnn_forward.10} parent=55 // pred_check_branch
        %1098 = sbr.rel (%p1096) target = $region60
      $region59: #{dgcnn_forward.10} parent=55 // pred_region
        %vm1099 = vcmask 516096
        %1100 = vst.msk [vmem:[%s500] sm:$0x1] %vm1099, %v1081
        %1101 = vst.msk [vmem:[%s503] sm:$0x1] %vm1099, %v1094
      $region60: #{dgcnn_forward.10} parent=55 // pred_fallthru
        _
      %p1102 = scmp.gt.s32.totalorder %s27, 0
      // Predicated region
      $region61: #{dgcnn_forward.10} parent=55 // pred_check
        %p1103 = pneg %p1102
      $region62: #{dgcnn_forward.10} parent=55 // pred_check_branch
        %1105 = sbr.rel (%p1103) target = $region64
      $region63: #{dgcnn_forward.10} parent=55 // pred_region
        %v1106 = vld [vmem:[%s500] sm:$0x1]
        %v1107 = vmax.f32 %v1106, %v1081
        %vm1108 = vcmask 516096
        %1109 = vst.msk [vmem:[%s500] sm:$0x1] %vm1108, %v1107
        %v1110 = vld [vmem:[%s503] sm:$0x1]
        %v1111 = vadd.f32 %v1110, %v1094
        %1112 = vst.msk [vmem:[%s503] sm:$0x1] %vm1108, %v1111
      $region64: #{dgcnn_forward.10} parent=55 // pred_fallthru
        _
      // Predicated region
      $region65: #{dgcnn_forward.10} parent=55 // pred_check
        %p1113 = pneg %p1095
      $region66: #{dgcnn_forward.10} parent=55 // pred_check_branch
        %1115 = sbr.rel (%p1113) target = $region68
      $region67: #{dgcnn_forward.10} parent=55 // pred_region
        %v1116 = vld [vmem:[%s503] sm:$0x1]
        %v1117 = vmul.f32 %v1116, 0.03125
        %vm1118 = vcmask 516096
        %1119 = vst.msk [vmem:[%s503] sm:$0x1] %vm1118, %v1117
      $region68: #{dgcnn_forward.10} parent=55 // pred_fallthru
        _
      %p1120 = scmp.lt.s32.totalorder %s26, 1
      %s1121 = scalar_select %p1120, %s26, 1
      %s1122 = scalar_lea.vmem %s9, %s1121
      %p1123 = scmp.lt.s32.totalorder %s26, 1
      %s1124 = scalar_select %p1123, %s26, 1
      %s1125 = scalar_lea.vmem %s10, %s1124
      // Predicated region
      $region69: #{dgcnn_forward.10} parent=55 // pred_check
        %p1126 = pneg %p269
      $region70: #{dgcnn_forward.10} parent=55 // pred_check_branch
        %1128 = sbr.rel (%p1126) target = $region72
      $region71: #{dgcnn_forward.10} parent=55 // pred_region
        _
      $region72: #{dgcnn_forward.10} parent=55 // pred_fallthru
        _
      // Predicated region
      $region73: #{dgcnn_forward.10} parent=55 // pred_check
        %p1129 = pneg %p295
      $region74: #{dgcnn_forward.10} parent=55 // pred_check_branch
        %1131 = sbr.rel (%p1129) target = $region76
      $region75: #{dgcnn_forward.10} parent=55 // pred_region
        _
      $region76: #{dgcnn_forward.10} parent=55 // pred_fallthru
        _
    $region56: #{dgcnn_forward.10} parent=5 // pred_fallthru
      _
    %p1132 = scmp.le.s32.totalorder 2, %s17
    // Predicated region
    $region77: #{dgcnn_forward.10} parent=5 // pred_check
      %p1133 = pneg %p1132
    $region78: #{dgcnn_forward.10} parent=5 // pred_check_branch
      %1135 = sbr.rel (%p1133) target = $region80
    $region79: #{dgcnn_forward.10} parent=5 // pred_region
      %s1136 = ssub.s32 %s17, 2
      // Predicated region
      $region81: #{dgcnn_forward.10} parent=79 // pred_check
        %p1137 = pneg %p275
      $region82: #{dgcnn_forward.10} parent=79 // pred_check_branch
        %1139 = sbr.rel (%p1137) target = $region84
      $region83: #{dgcnn_forward.10} parent=79 // pred_region
        %p1140 = scmp.lt.s32.totalorder %s28, 1
        %s1141 = scalar_select %p1140, %s28, 1
        %s1142 = scalar_lea.vmem %s9, %s1141
      $region84: #{dgcnn_forward.10} parent=79 // pred_fallthru
        _
      // Predicated region
      $region85: #{dgcnn_forward.10} parent=79 // pred_check
        %p1143 = pneg %p301
      $region86: #{dgcnn_forward.10} parent=79 // pred_check_branch
        %1145 = sbr.rel (%p1143) target = $region88
      $region87: #{dgcnn_forward.10} parent=79 // pred_region
        %p1146 = scmp.lt.s32.totalorder %s28, 1
        %s1147 = scalar_select %p1146, %s28, 1
        %s1148 = scalar_lea.vmem %s10, %s1147
      $region88: #{dgcnn_forward.10} parent=79 // pred_fallthru
        _
    $region80: #{dgcnn_forward.10} parent=5 // pred_fallthru
      _
  $region6: #{dgcnn_forward.10} parent=0 // loop_footer
    %s21 = sadd.s32 1, %s17
  $region7: #{dgcnn_forward.10} parent=0 // loop_footer_branch
    %16 = sbr.rel target = $region3
  $region8: #{dgcnn_forward.10} parent=0 // loop_exit
    _

// kernel: dgcnn_forward.11
$region0: #{dgcnn_forward.11}
  #allocation0 [shape = 'u32[]', space=smem, size = 0x4, offset = 0x4, fixed_abs, tag = 'smem constant byte address 0x4 - core index']
  #allocation1 [shape = 'u32[144,128]{1,0:T(1,128)}', space=vmem, size = 0x12000, scoped, tag = 'internal scratch']
  %s0 = inlined_call_operand.vmem [shape: f32[2,128], index: 0, kind: input, shape index: {}]
  %s1 = inlined_call_operand.vmem [shape: bf16[128,512], index: 1, kind: input, shape index: {}]
  %s2 = inlined_call_operand.vmem [shape: f32[1,512], index: 2, kind: input, shape index: {}]
  %s3 = inlined_call_operand.vmem [shape: bf16[512,256], index: 3, kind: input, shape index: {}]
  %s4 = inlined_call_operand.vmem [shape: f32[1,256], index: 4, kind: input, shape index: {}]
  %s5 = inlined_call_operand.vmem [shape: bf16[256,40], index: 5, kind: input, shape index: {}]
  %s6 = inlined_call_operand.vmem [shape: f32[1,40], index: 6, kind: input, shape index: {}]
  %s7 = inlined_call_operand.hbm [shape: f32[2,40], index: 7, kind: output, shape index: {}]
  %s8 = sld [smem:[#allocation0]]
  $region38: #{dgcnn_forward.11} parent=0
    _
  %s10 = ssub.s32 1, %s8
  %s11 = scalar_select 0, %s10, %s8
  $region1: #{dgcnn_forward.11} parent=0
    #allocation2 [shape = 'u8[1024]{0}', space=vmem, size = 0x400, scoped, tag = 'output window, operand 0, single buffered']
    #allocation3 [shape = 's32[1]{0}', space=sflag, size = 0x4, scoped, tag = 'scoped memory for dgcnn_forward.11']
    %12 = vsyncpa [#allocation3], 0
    // Predicated region
    $region2: #{dgcnn_forward.11} parent=1 // pred_check
      _
    $region3: #{dgcnn_forward.11} parent=1 // pred_check_branch
      %14 = sbr.rel (0) target = $region5
    $region4: #{dgcnn_forward.11} parent=1 // pred_region
      _
    $region5: #{dgcnn_forward.11} parent=1 // pred_fallthru
      _
    // Predicated region
    $region6: #{dgcnn_forward.11} parent=1 // pred_check
      _
    $region7: #{dgcnn_forward.11} parent=1 // pred_check_branch
      %16 = sbr.rel (0) target = $region9
    $region8: #{dgcnn_forward.11} parent=1 // pred_region
      _
    $region9: #{dgcnn_forward.11} parent=1 // pred_fallthru
      _
    // Predicated region
    $region10: #{dgcnn_forward.11} parent=1 // pred_check
      _
    $region11: #{dgcnn_forward.11} parent=1 // pred_check_branch
      %18 = sbr.rel (0) target = $region13
    $region12: #{dgcnn_forward.11} parent=1 // pred_region
      _
    $region13: #{dgcnn_forward.11} parent=1 // pred_fallthru
      _
    // Predicated region
    $region14: #{dgcnn_forward.11} parent=1 // pred_check
      _
    $region15: #{dgcnn_forward.11} parent=1 // pred_check_branch
      %20 = sbr.rel (0) target = $region17
    $region16: #{dgcnn_forward.11} parent=1 // pred_region
      _
    $region17: #{dgcnn_forward.11} parent=1 // pred_fallthru
      _
    // Predicated region
    $region18: #{dgcnn_forward.11} parent=1 // pred_check
      _
    $region19: #{dgcnn_forward.11} parent=1 // pred_check_branch
      %22 = sbr.rel (0) target = $region21
    $region20: #{dgcnn_forward.11} parent=1 // pred_region
      _
    $region21: #{dgcnn_forward.11} parent=1 // pred_fallthru
      _
    // Predicated region
    $region22: #{dgcnn_forward.11} parent=1 // pred_check
      _
    $region23: #{dgcnn_forward.11} parent=1 // pred_check_branch
      %24 = sbr.rel (0) target = $region25
    $region24: #{dgcnn_forward.11} parent=1 // pred_region
      _
    $region25: #{dgcnn_forward.11} parent=1 // pred_fallthru
      _
    // Predicated region
    $region26: #{dgcnn_forward.11} parent=1 // pred_check
      _
    $region27: #{dgcnn_forward.11} parent=1 // pred_check_branch
      %26 = sbr.rel (0) target = $region29
    $region28: #{dgcnn_forward.11} parent=1 // pred_region
      _
    $region29: #{dgcnn_forward.11} parent=1 // pred_fallthru
      _
    %v28 = vld [vmem:[%s0] sm:$0x3]
    %v29 = vpack.c.bf16 %v28, %v28
    %v30 = vld [vmem:[%s1] sm:$0xff]
    %v31 = vld [vmem:[%s1 + $0x8] sm:$0xff]
    %v32 = vld [vmem:[%s1 + $0x10] sm:$0xff]
    %v33 = vld [vmem:[%s1 + $0x18] sm:$0xff]
    %v34 = vld [vmem:[%s1 + $0x20] sm:$0xff]
    %v35 = vld [vmem:[%s1 + $0x28] sm:$0xff]
    %v36 = vld [vmem:[%s1 + $0x30] sm:$0xff]
    %v37 = vld [vmem:[%s1 + $0x38] sm:$0xff]
    %v38 = vld [vmem:[%s1 + $0x40] sm:$0xff]
    %v39 = vld [vmem:[%s1 + $0x48] sm:$0xff]
    %v40 = vld [vmem:[%s1 + $0x50] sm:$0xff]
    %v41 = vld [vmem:[%s1 + $0x58] sm:$0xff]
    %v42 = vld [vmem:[%s1 + $0x60] sm:$0xff]
    %v43 = vld [vmem:[%s1 + $0x68] sm:$0xff]
    %v44 = vld [vmem:[%s1 + $0x70] sm:$0xff]
    %v45 = vld [vmem:[%s1 + $0x78] sm:$0xff]
    %v46 = vld [vmem:[%s1 + $0x80] sm:$0xff]
    %v47 = vld [vmem:[%s1 + $0x88] sm:$0xff]
    %v48 = vld [vmem:[%s1 + $0x90] sm:$0xff]
    %v49 = vld [vmem:[%s1 + $0x98] sm:$0xff]
    %v50 = vld [vmem:[%s1 + $0xa0] sm:$0xff]
    %v51 = vld [vmem:[%s1 + $0xa8] sm:$0xff]
    %v52 = vld [vmem:[%s1 + $0xb0] sm:$0xff]
    %v53 = vld [vmem:[%s1 + $0xb8] sm:$0xff]
    %v54 = vld [vmem:[%s1 + $0xc0] sm:$0xff]
    %v55 = vld [vmem:[%s1 + $0xc8] sm:$0xff]
    %v56 = vld [vmem:[%s1 + $0xd0] sm:$0xff]
    %v57 = vld [vmem:[%s1 + $0xd8] sm:$0xff]
    %v58 = vld [vmem:[%s1 + $0xe0] sm:$0xff]
    %v59 = vld [vmem:[%s1 + $0xe8] sm:$0xff]
    %v60 = vld [vmem:[%s1 + $0xf0] sm:$0xff]
    %v61 = vld [vmem:[%s1 + $0xf8] sm:$0xff]
    %v62 = vld [vmem:[%s2] sm:$0xf]
    %v64 = vlaneseq
    %v65 = vshrl.u32 %v64, 7
    %v66 = vsub.s32 0, %v65
    %v67 = vrot.slane %v62, %v66
    %v68 = vlaneseq
    %v69 = vshrl.u32 %v68, 7
    %v70 = vsub.s32 1, %v69
    %v71 = vrot.slane %v62, %v70
    %v72 = vlaneseq
    %v73 = vshrl.u32 %v72, 7
    %v74 = vsub.s32 2, %v73
    %v75 = vrot.slane %v62, %v74
    %v76 = vlaneseq
    %v77 = vshrl.u32 %v76, 7
    %v78 = vsub.s32 3, %v77
    %v79 = vrot.slane %v62, %v78
    %v116 = vunpack.c.l.b16 %v30
    %v117 = vunpack.c.h.b16 %v30
    %v118 = vunpack.c.l.b16 %v31
    %v119 = vunpack.c.h.b16 %v31
    %v120 = vunpack.c.l.b16 %v32
    %v121 = vunpack.c.h.b16 %v32
    %v122 = vunpack.c.l.b16 %v33
    %v123 = vunpack.c.h.b16 %v33
    %v124 = vunpack.c.l.b16 %v34
    %v125 = vunpack.c.h.b16 %v34
    %v126 = vunpack.c.l.b16 %v35
    %v127 = vunpack.c.h.b16 %v35
    %v128 = vunpack.c.l.b16 %v36
    %v129 = vunpack.c.h.b16 %v36
    %v130 = vunpack.c.l.b16 %v37
    %v131 = vunpack.c.h.b16 %v37
    %v132 = vunpack.c.l.b16 %v38
    %v133 = vunpack.c.h.b16 %v38
    %v134 = vunpack.c.l.b16 %v39
    %v135 = vunpack.c.h.b16 %v39
    %v136 = vunpack.c.l.b16 %v40
    %v137 = vunpack.c.h.b16 %v40
    %v138 = vunpack.c.l.b16 %v41
    %v139 = vunpack.c.h.b16 %v41
    %v140 = vunpack.c.l.b16 %v42
    %v141 = vunpack.c.h.b16 %v42
    %v142 = vunpack.c.l.b16 %v43
    %v143 = vunpack.c.h.b16 %v43
    %v144 = vunpack.c.l.b16 %v44
    %v145 = vunpack.c.h.b16 %v44
    %v146 = vunpack.c.l.b16 %v45
    %v147 = vunpack.c.h.b16 %v45
    %v148 = vunpack.c.l.b16 %v46
    %v149 = vunpack.c.h.b16 %v46
    %v150 = vunpack.c.l.b16 %v47
    %v151 = vunpack.c.h.b16 %v47
    %v152 = vunpack.c.l.b16 %v48
    %v153 = vunpack.c.h.b16 %v48
    %v154 = vunpack.c.l.b16 %v49
    %v155 = vunpack.c.h.b16 %v49
    %v156 = vunpack.c.l.b16 %v50
    %v157 = vunpack.c.h.b16 %v50
    %v158 = vunpack.c.l.b16 %v51
    %v159 = vunpack.c.h.b16 %v51
    %v160 = vunpack.c.l.b16 %v52
    %v161 = vunpack.c.h.b16 %v52
    %v162 = vunpack.c.l.b16 %v53
    %v163 = vunpack.c.h.b16 %v53
    %v164 = vunpack.c.l.b16 %v54
    %v165 = vunpack.c.h.b16 %v54
    %v166 = vunpack.c.l.b16 %v55
    %v167 = vunpack.c.h.b16 %v55
    %v168 = vunpack.c.l.b16 %v56
    %v169 = vunpack.c.h.b16 %v56
    %v170 = vunpack.c.l.b16 %v57
    %v171 = vunpack.c.h.b16 %v57
    %v172 = vunpack.c.l.b16 %v58
    %v173 = vunpack.c.h.b16 %v58
    %v174 = vunpack.c.l.b16 %v59
    %v175 = vunpack.c.h.b16 %v59
    %v176 = vunpack.c.l.b16 %v60
    %v177 = vunpack.c.h.b16 %v60
    %v178 = vunpack.c.l.b16 %v61
    %v179 = vunpack.c.h.b16 %v61
    %v180 = vpack.c.b16 %v120, %v116
    %v181 = vpack.c.b16 %v121, %v117
    %v182 = vpack.c.b16 %v122, %v118
    %v183 = vpack.c.b16 %v123, %v119
    %v184 = vpack.c.b16 %v128, %v124
    %v185 = vpack.c.b16 %v129, %v125
    %v186 = vpack.c.b16 %v130, %v126
    %v187 = vpack.c.b16 %v131, %v127
    %v188 = vpack.c.b16 %v136, %v132
    %v189 = vpack.c.b16 %v137, %v133
    %v190 = vpack.c.b16 %v138, %v134
    %v191 = vpack.c.b16 %v139, %v135
    %v192 = vpack.c.b16 %v144, %v140
    %v193 = vpack.c.b16 %v145, %v141
    %v194 = vpack.c.b16 %v146, %v142
    %v195 = vpack.c.b16 %v147, %v143
    %v196 = vpack.c.b16 %v152, %v148
    %v197 = vpack.c.b16 %v153, %v149
    %v198 = vpack.c.b16 %v154, %v150
    %v199 = vpack.c.b16 %v155, %v151
    %v200 = vpack.c.b16 %v160, %v156
    %v201 = vpack.c.b16 %v161, %v157
    %v202 = vpack.c.b16 %v162, %v158
    %v203 = vpack.c.b16 %v163, %v159
    %v204 = vpack.c.b16 %v168, %v164
    %v205 = vpack.c.b16 %v169, %v165
    %v206 = vpack.c.b16 %v170, %v166
    %v207 = vpack.c.b16 %v171, %v167
    %v208 = vpack.c.b16 %v176, %v172
    %v209 = vpack.c.b16 %v177, %v173
    %v210 = vpack.c.b16 %v178, %v174
    %v211 = vpack.c.b16 %v179, %v175
    %244 = vmatprep.subr.bf16.mxu0 %v209
    %245 = vmatpush1.bf16.msra.mxu0 %v208
    %246 = vmatprep.subr.bf16.mxu0 %v205
    %247 = vmatpush1.bf16.msra.mxu0 %v204
    %248 = vmatprep.subr.bf16.mxu0 %v201
    %249 = vmatpush1.bf16.msra.mxu0 %v200
    %250 = vmatprep.subr.bf16.mxu0 %v197
    %251 = vmatpush1.bf16.msra.mxu0 %v196
    %252 = vmatprep.subr.bf16.mxu0 %v193
    %253 = vmatpush1.bf16.msra.mxu0 %v192
    %254 = vmatprep.subr.bf16.mxu0 %v189
    %255 = vmatpush1.bf16.msra.mxu0 %v188
    %256 = vmatprep.subr.bf16.mxu0 %v185
    %257 = vmatpush1.bf16.msra.mxu0 %v184
    %258 = vmatprep.subr.bf16.mxu0 %v181
    %259 = vmatpush1.bf16.msra.mxu0 %v180
    %260 = vmatprep.subr.bf16.mxu0 0
    %261 = vmatpush2.bf16.msra.mxu0 0
    %262 = vmatprep.subr.bf16.mxu0 0
    %263 = vmatpush2.bf16.msra.mxu0 0
    %264 = vmatprep.subr.bf16.mxu0 0
    %265 = vmatpush2.bf16.msra.mxu0 0
    %266 = vmatprep.subr.bf16.mxu0 0
    %267 = vmatpush2.bf16.msra.mxu0 0
    %268 = vmatprep.subr.bf16.mxu0 0
    %269 = vmatpush2.bf16.msra.mxu0 0
    %270 = vmatprep.subr.bf16.mxu0 0
    %271 = vmatpush2.bf16.msra.mxu0 0
    %272 = vmatprep.subr.bf16.mxu0 0
    %273 = vmatpush2.bf16.msra.mxu0 0
    %274 = vmatprep.subr.bf16.mxu0 0
    %275 = vmatpush2.bf16.msra.mxu0 0
    %276 = vmatprep.mubr.bf16.mxu0 0
    %277 = vmatmul.mubr.bf16.gmra.mxu0 %v29
    %v278 = vpop.f32.mrf.mxu0
    %v279 = vadd.f32 %v67, %v278
    %v280 = vpop.f32.mrf.mxu0
    %v281 = vadd.f32 %v71, %v280
    %v282 = vpop.f32.mrf.mxu0
    %v283 = vpop.f32.mrf.mxu0
    %284 = vdwg.mxu0
    %285 = vmatprep.subr.bf16.mxu0 %v211
    %286 = vmatpush1.bf16.msra.mxu0 %v210
    %287 = vmatprep.subr.bf16.mxu0 %v207
    %288 = vmatpush1.bf16.msra.mxu0 %v206
    %289 = vmatprep.subr.bf16.mxu0 %v203
    %290 = vmatpush1.bf16.msra.mxu0 %v202
    %291 = vmatprep.subr.bf16.mxu0 %v199
    %292 = vmatpush1.bf16.msra.mxu0 %v198
    %293 = vmatprep.subr.bf16.mxu0 %v195
    %294 = vmatpush1.bf16.msra.mxu0 %v194
    %295 = vmatprep.subr.bf16.mxu0 %v191
    %296 = vmatpush1.bf16.msra.mxu0 %v190
    %297 = vmatprep.subr.bf16.mxu0 %v187
    %298 = vmatpush1.bf16.msra.mxu0 %v186
    %299 = vmatprep.subr.bf16.mxu0 %v183
    %300 = vmatpush1.bf16.msra.mxu0 %v182
    %301 = vmatprep.subr.bf16.mxu0 0
    %302 = vmatpush2.bf16.msra.mxu0 0
    %303 = vmatprep.subr.bf16.mxu0 0
    %304 = vmatpush2.bf16.msra.mxu0 0
    %305 = vmatprep.subr.bf16.mxu0 0
    %306 = vmatpush2.bf16.msra.mxu0 0
    %307 = vmatprep.subr.bf16.mxu0 0
    %308 = vmatpush2.bf16.msra.mxu0 0
    %309 = vmatprep.subr.bf16.mxu0 0
    %310 = vmatpush2.bf16.msra.mxu0 0
    %311 = vmatprep.subr.bf16.mxu0 0
    %312 = vmatpush2.bf16.msra.mxu0 0
    %313 = vmatprep.subr.bf16.mxu0 0
    %314 = vmatpush2.bf16.msra.mxu0 0
    %315 = vmatprep.subr.bf16.mxu0 0
    %316 = vmatpush2.bf16.msra.mxu0 0
    %317 = vmatprep.mubr.bf16.mxu0 0
    %318 = vmatmul.mubr.bf16.gmra.mxu0 %v29
    %v319 = vpop.f32.mrf.mxu0
    %v320 = vadd.f32 %v75, %v319
    %v321 = vpop.f32.mrf.mxu0
    %v322 = vadd.f32 %v79, %v321
    %v323 = vpop.f32.mrf.mxu0
    %v324 = vpop.f32.mrf.mxu0
    %325 = vdwg.mxu0
    %vm326 = vcmp.gt.f32.partialorder %v279, 0.0
    %vm327 = vcmp.gt.f32.partialorder %v281, 0.0
    %vm328 = vcmp.gt.f32.partialorder %v320, 0.0
    %vm329 = vcmp.gt.f32.partialorder %v322, 0.0
    %v330 = vmul.f32 %v279, 0.2
    %v331 = vmul.f32 %v281, 0.2
    %v332 = vmul.f32 %v320, 0.2
    %v333 = vmul.f32 %v322, 0.2
    %v334 = vsel %vm326, %v279, %v330
    %v335 = vsel %vm327, %v281, %v331
    %v336 = vsel %vm328, %v320, %v332
    %v337 = vsel %vm329, %v322, %v333
    %v338 = vpack.c.bf16 %v334, %v334
    %v339 = vpack.c.bf16 %v335, %v335
    %v340 = vpack.c.bf16 %v336, %v336
    %v341 = vpack.c.bf16 %v337, %v337
    %v342 = vld [vmem:[%s3] sm:$0xff]
    %v343 = vld [vmem:[%s3 + $0x8] sm:$0xff]
    %v344 = vld [vmem:[%s3 + $0x10] sm:$0xff]
    %v345 = vld [vmem:[%s3 + $0x18] sm:$0xff]
    %v346 = vld [vmem:[%s3 + $0x20] sm:$0xff]
    %v347 = vld [vmem:[%s3 + $0x28] sm:$0xff]
    %v348 = vld [vmem:[%s3 + $0x30] sm:$0xff]
    %v349 = vld [vmem:[%s3 + $0x38] sm:$0xff]
    %v350 = vld [vmem:[%s3 + $0x40] sm:$0xff]
    %v351 = vld [vmem:[%s3 + $0x48] sm:$0xff]
    %v352 = vld [vmem:[%s3 + $0x50] sm:$0xff]
    %v353 = vld [vmem:[%s3 + $0x58] sm:$0xff]
    %v354 = vld [vmem:[%s3 + $0x60] sm:$0xff]
    %v355 = vld [vmem:[%s3 + $0x68] sm:$0xff]
    %v356 = vld [vmem:[%s3 + $0x70] sm:$0xff]
    %v357 = vld [vmem:[%s3 + $0x78] sm:$0xff]
    %v358 = vld [vmem:[%s3 + $0x80] sm:$0xff]
    %v359 = vld [vmem:[%s3 + $0x88] sm:$0xff]
    %v360 = vld [vmem:[%s3 + $0x90] sm:$0xff]
    %v361 = vld [vmem:[%s3 + $0x98] sm:$0xff]
    %v362 = vld [vmem:[%s3 + $0xa0] sm:$0xff]
    %v363 = vld [vmem:[%s3 + $0xa8] sm:$0xff]
    %v364 = vld [vmem:[%s3 + $0xb0] sm:$0xff]
    %v365 = vld [vmem:[%s3 + $0xb8] sm:$0xff]
    %v366 = vld [vmem:[%s3 + $0xc0] sm:$0xff]
    %v367 = vld [vmem:[%s3 + $0xc8] sm:$0xff]
    %v368 = vld [vmem:[%s3 + $0xd0] sm:$0xff]
    %v369 = vld [vmem:[%s3 + $0xd8] sm:$0xff]
    %v370 = vld [vmem:[%s3 + $0xe0] sm:$0xff]
    %v371 = vld [vmem:[%s3 + $0xe8] sm:$0xff]
    %v372 = vld [vmem:[%s3 + $0xf0] sm:$0xff]
    %v373 = vld [vmem:[%s3 + $0xf8] sm:$0xff]
    %v374 = vld [vmem:[%s3 + $0x100] sm:$0xff]
    %v375 = vld [vmem:[%s3 + $0x108] sm:$0xff]
    %v376 = vld [vmem:[%s3 + $0x110] sm:$0xff]
    %v377 = vld [vmem:[%s3 + $0x118] sm:$0xff]
    %v378 = vld [vmem:[%s3 + $0x120] sm:$0xff]
    %v379 = vld [vmem:[%s3 + $0x128] sm:$0xff]
    %v380 = vld [vmem:[%s3 + $0x130] sm:$0xff]
    %v381 = vld [vmem:[%s3 + $0x138] sm:$0xff]
    %v382 = vld [vmem:[%s3 + $0x140] sm:$0xff]
    %v383 = vld [vmem:[%s3 + $0x148] sm:$0xff]
    %v384 = vld [vmem:[%s3 + $0x150] sm:$0xff]
    %v385 = vld [vmem:[%s3 + $0x158] sm:$0xff]
    %v386 = vld [vmem:[%s3 + $0x160] sm:$0xff]
    %v387 = vld [vmem:[%s3 + $0x168] sm:$0xff]
    %v388 = vld [vmem:[%s3 + $0x170] sm:$0xff]
    %v389 = vld [vmem:[%s3 + $0x178] sm:$0xff]
    %v390 = vld [vmem:[%s3 + $0x180] sm:$0xff]
    %v391 = vld [vmem:[%s3 + $0x188] sm:$0xff]
    %v392 = vld [vmem:[%s3 + $0x190] sm:$0xff]
    %v393 = vld [vmem:[%s3 + $0x198] sm:$0xff]
    %v394 = vld [vmem:[%s3 + $0x1a0] sm:$0xff]
    %v395 = vld [vmem:[%s3 + $0x1a8] sm:$0xff]
    %v396 = vld [vmem:[%s3 + $0x1b0] sm:$0xff]
    %v397 = vld [vmem:[%s3 + $0x1b8] sm:$0xff]
    %v398 = vld [vmem:[%s3 + $0x1c0] sm:$0xff]
    %v399 = vld [vmem:[%s3 + $0x1c8] sm:$0xff]
    %v400 = vld [vmem:[%s3 + $0x1d0] sm:$0xff]
    %v401 = vld [vmem:[%s3 + $0x1d8] sm:$0xff]
    %v402 = vld [vmem:[%s3 + $0x1e0] sm:$0xff]
    %v403 = vld [vmem:[%s3 + $0x1e8] sm:$0xff]
    %v404 = vld [vmem:[%s3 + $0x1f0] sm:$0xff]
    %v405 = vld [vmem:[%s3 + $0x1f8] sm:$0xff]
    %v406 = vld [vmem:[%s4] sm:$0x3]
    %v408 = vlaneseq
    %v409 = vshrl.u32 %v408, 7
    %v410 = vsub.s32 0, %v409
    %v411 = vrot.slane %v406, %v410
    %v412 = vlaneseq
    %v413 = vshrl.u32 %v412, 7
    %v414 = vsub.s32 1, %v413
    %v415 = vrot.slane %v406, %v414
    %v482 = vunpack.c.l.b16 %v342
    %v483 = vunpack.c.h.b16 %v342
    %v484 = vunpack.c.l.b16 %v343
    %v485 = vunpack.c.h.b16 %v343
    %v486 = vunpack.c.l.b16 %v344
    %v487 = vunpack.c.h.b16 %v344
    %v488 = vunpack.c.l.b16 %v345
    %v489 = vunpack.c.h.b16 %v345
    %v490 = vunpack.c.l.b16 %v346
    %v491 = vunpack.c.h.b16 %v346
    %v492 = vunpack.c.l.b16 %v347
    %v493 = vunpack.c.h.b16 %v347
    %v494 = vunpack.c.l.b16 %v348
    %v495 = vunpack.c.h.b16 %v348
    %v496 = vunpack.c.l.b16 %v349
    %v497 = vunpack.c.h.b16 %v349
    %v498 = vunpack.c.l.b16 %v350
    %v499 = vunpack.c.h.b16 %v350
    %v500 = vunpack.c.l.b16 %v351
    %v501 = vunpack.c.h.b16 %v351
    %v502 = vunpack.c.l.b16 %v352
    %v503 = vunpack.c.h.b16 %v352
    %v504 = vunpack.c.l.b16 %v353
    %v505 = vunpack.c.h.b16 %v353
    %v506 = vunpack.c.l.b16 %v354
    %v507 = vunpack.c.h.b16 %v354
    %v508 = vunpack.c.l.b16 %v355
    %v509 = vunpack.c.h.b16 %v355
    %v510 = vunpack.c.l.b16 %v356
    %v511 = vunpack.c.h.b16 %v356
    %v512 = vunpack.c.l.b16 %v357
    %v513 = vunpack.c.h.b16 %v357
    %v514 = vunpack.c.l.b16 %v358
    %v515 = vunpack.c.h.b16 %v358
    %v516 = vunpack.c.l.b16 %v359
    %v517 = vunpack.c.h.b16 %v359
    %v518 = vunpack.c.l.b16 %v360
    %v519 = vunpack.c.h.b16 %v360
    %v520 = vunpack.c.l.b16 %v361
    %v521 = vunpack.c.h.b16 %v361
    %v522 = vunpack.c.l.b16 %v362
    %v523 = vunpack.c.h.b16 %v362
    %v524 = vunpack.c.l.b16 %v363
    %v525 = vunpack.c.h.b16 %v363
    %v526 = vunpack.c.l.b16 %v364
    %v527 = vunpack.c.h.b16 %v364
    %v528 = vunpack.c.l.b16 %v365
    %v529 = vunpack.c.h.b16 %v365
    %v530 = vunpack.c.l.b16 %v366
    %v531 = vunpack.c.h.b16 %v366
    %v532 = vunpack.c.l.b16 %v367
    %v533 = vunpack.c.h.b16 %v367
    %v534 = vunpack.c.l.b16 %v368
    %v535 = vunpack.c.h.b16 %v368
    %v536 = vunpack.c.l.b16 %v369
    %v537 = vunpack.c.h.b16 %v369
    %v538 = vunpack.c.l.b16 %v370
    %v539 = vunpack.c.h.b16 %v370
    %v540 = vunpack.c.l.b16 %v371
    %v541 = vunpack.c.h.b16 %v371
    %v542 = vunpack.c.l.b16 %v372
    %v543 = vunpack.c.h.b16 %v372
    %v544 = vunpack.c.l.b16 %v373
    %v545 = vunpack.c.h.b16 %v373
    %v546 = vunpack.c.l.b16 %v374
    %v547 = vunpack.c.h.b16 %v374
    %v548 = vunpack.c.l.b16 %v375
    %v549 = vunpack.c.h.b16 %v375
    %v550 = vunpack.c.l.b16 %v376
    %v551 = vunpack.c.h.b16 %v376
    %v552 = vunpack.c.l.b16 %v377
    %v553 = vunpack.c.h.b16 %v377
    %v554 = vunpack.c.l.b16 %v378
    %v555 = vunpack.c.h.b16 %v378
    %v556 = vunpack.c.l.b16 %v379
    %v557 = vunpack.c.h.b16 %v379
    %v558 = vunpack.c.l.b16 %v380
    %v559 = vunpack.c.h.b16 %v380
    %v560 = vunpack.c.l.b16 %v381
    %v561 = vunpack.c.h.b16 %v381
    %v562 = vunpack.c.l.b16 %v382
    %v563 = vunpack.c.h.b16 %v382
    %v564 = vunpack.c.l.b16 %v383
    %v565 = vunpack.c.h.b16 %v383
    %v566 = vunpack.c.l.b16 %v384
    %v567 = vunpack.c.h.b16 %v384
    %v568 = vunpack.c.l.b16 %v385
    %v569 = vunpack.c.h.b16 %v385
    %v570 = vunpack.c.l.b16 %v386
    %v571 = vunpack.c.h.b16 %v386
    %v572 = vunpack.c.l.b16 %v387
    %v573 = vunpack.c.h.b16 %v387
    %v574 = vunpack.c.l.b16 %v388
    %v575 = vunpack.c.h.b16 %v388
    %v576 = vunpack.c.l.b16 %v389
    %v577 = vunpack.c.h.b16 %v389
    %v578 = vunpack.c.l.b16 %v390
    %v579 = vunpack.c.h.b16 %v390
    %v580 = vunpack.c.l.b16 %v391
    %v581 = vunpack.c.h.b16 %v391
    %v582 = vunpack.c.l.b16 %v392
    %v583 = vunpack.c.h.b16 %v392
    %v584 = vunpack.c.l.b16 %v393
    %v585 = vunpack.c.h.b16 %v393
    %v586 = vunpack.c.l.b16 %v394
    %v587 = vunpack.c.h.b16 %v394
    %v588 = vunpack.c.l.b16 %v395
    %v589 = vunpack.c.h.b16 %v395
    %v590 = vunpack.c.l.b16 %v396
    %v591 = vunpack.c.h.b16 %v396
    %v592 = vunpack.c.l.b16 %v397
    %v593 = vunpack.c.h.b16 %v397
    %v594 = vunpack.c.l.b16 %v398
    %v595 = vunpack.c.h.b16 %v398
    %v596 = vunpack.c.l.b16 %v399
    %v597 = vunpack.c.h.b16 %v399
    %v598 = vunpack.c.l.b16 %v400
    %v599 = vunpack.c.h.b16 %v400
    %v600 = vunpack.c.l.b16 %v401
    %v601 = vunpack.c.h.b16 %v401
    %v602 = vunpack.c.l.b16 %v402
    %v603 = vunpack.c.h.b16 %v402
    %v604 = vunpack.c.l.b16 %v403
    %v605 = vunpack.c.h.b16 %v403
    %v606 = vunpack.c.l.b16 %v404
    %v607 = vunpack.c.h.b16 %v404
    %v608 = vunpack.c.l.b16 %v405
    %v609 = vunpack.c.h.b16 %v405
    %v610 = vpack.c.b16 %v484, %v482
    %v611 = vpack.c.b16 %v485, %v483
    %v612 = vpack.c.b16 %v488, %v486
    %v613 = vpack.c.b16 %v489, %v487
    %v614 = vpack.c.b16 %v492, %v490
    %v615 = vpack.c.b16 %v493, %v491
    %v616 = vpack.c.b16 %v496, %v494
    %v617 = vpack.c.b16 %v497, %v495
    %v618 = vpack.c.b16 %v500, %v498
    %v619 = vpack.c.b16 %v501, %v499
    %v620 = vpack.c.b16 %v504, %v502
    %v621 = vpack.c.b16 %v505, %v503
    %v622 = vpack.c.b16 %v508, %v506
    %v623 = vpack.c.b16 %v509, %v507
    %v624 = vpack.c.b16 %v512, %v510
    %v625 = vpack.c.b16 %v513, %v511
    %v626 = vpack.c.b16 %v516, %v514
    %v627 = vpack.c.b16 %v517, %v515
    %v628 = vpack.c.b16 %v520, %v518
    %v629 = vpack.c.b16 %v521, %v519
    %v630 = vpack.c.b16 %v524, %v522
    %v631 = vpack.c.b16 %v525, %v523
    %v632 = vpack.c.b16 %v528, %v526
    %v633 = vpack.c.b16 %v529, %v527
    %v634 = vpack.c.b16 %v532, %v530
    %v635 = vpack.c.b16 %v533, %v531
    %v636 = vpack.c.b16 %v536, %v534
    %v637 = vpack.c.b16 %v537, %v535
    %v638 = vpack.c.b16 %v540, %v538
    %v639 = vpack.c.b16 %v541, %v539
    %v640 = vpack.c.b16 %v544, %v542
    %v641 = vpack.c.b16 %v545, %v543
    %v642 = vpack.c.b16 %v548, %v546
    %v643 = vpack.c.b16 %v549, %v547
    %v644 = vpack.c.b16 %v552, %v550
    %v645 = vpack.c.b16 %v553, %v551
    %v646 = vpack.c.b16 %v556, %v554
    %v647 = vpack.c.b16 %v557, %v555
    %v648 = vpack.c.b16 %v560, %v558
    %v649 = vpack.c.b16 %v561, %v559
    %v650 = vpack.c.b16 %v564, %v562
    %v651 = vpack.c.b16 %v565, %v563
    %v652 = vpack.c.b16 %v568, %v566
    %v653 = vpack.c.b16 %v569, %v567
    %v654 = vpack.c.b16 %v572, %v570
    %v655 = vpack.c.b16 %v573, %v571
    %v656 = vpack.c.b16 %v576, %v574
    %v657 = vpack.c.b16 %v577, %v575
    %v658 = vpack.c.b16 %v580, %v578
    %v659 = vpack.c.b16 %v581, %v579
    %v660 = vpack.c.b16 %v584, %v582
    %v661 = vpack.c.b16 %v585, %v583
    %v662 = vpack.c.b16 %v588, %v586
    %v663 = vpack.c.b16 %v589, %v587
    %v664 = vpack.c.b16 %v592, %v590
    %v665 = vpack.c.b16 %v593, %v591
    %v666 = vpack.c.b16 %v596, %v594
    %v667 = vpack.c.b16 %v597, %v595
    %v668 = vpack.c.b16 %v600, %v598
    %v669 = vpack.c.b16 %v601, %v599
    %v670 = vpack.c.b16 %v604, %v602
    %v671 = vpack.c.b16 %v605, %v603
    %v672 = vpack.c.b16 %v608, %v606
    %v673 = vpack.c.b16 %v609, %v607
    %738 = vmatprep.subr.bf16.mxu0 %v625
    %739 = vmatpush1.bf16.msra.mxu0 %v624
    %740 = vmatprep.subr.bf16.mxu0 %v623
    %741 = vmatpush1.bf16.msra.mxu0 %v622
    %742 = vmatprep.subr.bf16.mxu0 %v621
    %743 = vmatpush1.bf16.msra.mxu0 %v620
    %744 = vmatprep.subr.bf16.mxu0 %v619
    %745 = vmatpush1.bf16.msra.mxu0 %v618
    %746 = vmatprep.subr.bf16.mxu0 %v617
    %747 = vmatpush1.bf16.msra.mxu0 %v616
    %748 = vmatprep.subr.bf16.mxu0 %v615
    %749 = vmatpush1.bf16.msra.mxu0 %v614
    %750 = vmatprep.subr.bf16.mxu0 %v613
    %751 = vmatpush1.bf16.msra.mxu0 %v612
    %752 = vmatprep.subr.bf16.mxu0 %v611
    %753 = vmatpush1.bf16.msra.mxu0 %v610
    %754 = vmatprep.subr.bf16.mxu0 %v641
    %755 = vmatpush2.bf16.msra.mxu0 %v640
    %756 = vmatprep.subr.bf16.mxu0 %v639
    %757 = vmatpush2.bf16.msra.mxu0 %v638
    %758 = vmatprep.subr.bf16.mxu0 %v637
    %759 = vmatpush2.bf16.msra.mxu0 %v636
    %760 = vmatprep.subr.bf16.mxu0 %v635
    %761 = vmatpush2.bf16.msra.mxu0 %v634
    %762 = vmatprep.subr.bf16.mxu0 %v633
    %763 = vmatpush2.bf16.msra.mxu0 %v632
    %764 = vmatprep.subr.bf16.mxu0 %v631
    %765 = vmatpush2.bf16.msra.mxu0 %v630
    %766 = vmatprep.subr.bf16.mxu0 %v629
    %767 = vmatpush2.bf16.msra.mxu0 %v628
    %768 = vmatprep.subr.bf16.mxu0 %v627
    %769 = vmatpush2.bf16.msra.mxu0 %v626
    %770 = vmatprep.mubr.bf16.mxu0 %v339
    %771 = vmatmul.mubr.bf16.gmra.mxu0 %v338
    %v772 = vpop.f32.mrf.mxu0
    %v773 = vadd.f32 %v411, %v772
    %v774 = vpop.f32.mrf.mxu0
    %v775 = vadd.f32 %v415, %v774
    %v776 = vpop.f32.mrf.mxu0
    %v777 = vpop.f32.mrf.mxu0
    %778 = vdwg.mxu0
    %779 = vmatprep.subr.bf16.mxu0 %v657
    %780 = vmatpush1.bf16.msra.mxu0 %v656
    %781 = vmatprep.subr.bf16.mxu0 %v655
    %782 = vmatpush1.bf16.msra.mxu0 %v654
    %783 = vmatprep.subr.bf16.mxu0 %v653
    %784 = vmatpush1.bf16.msra.mxu0 %v652
    %785 = vmatprep.subr.bf16.mxu0 %v651
    %786 = vmatpush1.bf16.msra.mxu0 %v650
    %787 = vmatprep.subr.bf16.mxu0 %v649
    %788 = vmatpush1.bf16.msra.mxu0 %v648
    %789 = vmatprep.subr.bf16.mxu0 %v647
    %790 = vmatpush1.bf16.msra.mxu0 %v646
    %791 = vmatprep.subr.bf16.mxu0 %v645
    %792 = vmatpush1.bf16.msra.mxu0 %v644
    %793 = vmatprep.subr.bf16.mxu0 %v643
    %794 = vmatpush1.bf16.msra.mxu0 %v642
    %795 = vmatprep.subr.bf16.mxu0 %v673
    %796 = vmatpush2.bf16.msra.mxu0 %v672
    %797 = vmatprep.subr.bf16.mxu0 %v671
    %798 = vmatpush2.bf16.msra.mxu0 %v670
    %799 = vmatprep.subr.bf16.mxu0 %v669
    %800 = vmatpush2.bf16.msra.mxu0 %v668
    %801 = vmatprep.subr.bf16.mxu0 %v667
    %802 = vmatpush2.bf16.msra.mxu0 %v666
    %803 = vmatprep.subr.bf16.mxu0 %v665
    %804 = vmatpush2.bf16.msra.mxu0 %v664
    %805 = vmatprep.subr.bf16.mxu0 %v663
    %806 = vmatpush2.bf16.msra.mxu0 %v662
    %807 = vmatprep.subr.bf16.mxu0 %v661
    %808 = vmatpush2.bf16.msra.mxu0 %v660
    %809 = vmatprep.subr.bf16.mxu0 %v659
    %810 = vmatpush2.bf16.msra.mxu0 %v658
    %811 = vmatprep.mubr.bf16.mxu0 %v341
    %812 = vmatmul.mubr.bf16.gmra.mxu0 %v340
    %v813 = vpop.f32.mrf.mxu0
    %v814 = vadd.f32 %v773, %v813
    %v815 = vpop.f32.mrf.mxu0
    %v816 = vadd.f32 %v775, %v815
    %v817 = vpop.f32.mrf.mxu0
    %v818 = vpop.f32.mrf.mxu0
    %819 = vdwg.mxu0
    %vm820 = vcmp.gt.f32.partialorder %v814, 0.0
    %vm821 = vcmp.gt.f32.partialorder %v816, 0.0
    %v822 = vmul.f32 %v814, 0.2
    %v823 = vmul.f32 %v816, 0.2
    %v824 = vsel %vm820, %v814, %v822
    %v825 = vsel %vm821, %v816, %v823
    %v826 = vpack.c.bf16 %v824, %v824
    %v827 = vpack.c.bf16 %v825, %v825
    %v828 = vld [vmem:[%s5] sm:$0xf]
    %v829 = vld [vmem:[%s5 + $0x4] sm:$0xf]
    %v830 = vld [vmem:[%s5 + $0x8] sm:$0xf]
    %v831 = vld [vmem:[%s5 + $0xc] sm:$0xf]
    %v832 = vld [vmem:[%s5 + $0x10] sm:$0xf]
    %v833 = vld [vmem:[%s5 + $0x14] sm:$0xf]
    %v834 = vld [vmem:[%s5 + $0x18] sm:$0xf]
    %v835 = vld [vmem:[%s5 + $0x1c] sm:$0xf]
    %v836 = vld [vmem:[%s5 + $0x20] sm:$0xf]
    %v837 = vld [vmem:[%s5 + $0x24] sm:$0xf]
    %v838 = vld [vmem:[%s5 + $0x28] sm:$0xf]
    %v839 = vld [vmem:[%s5 + $0x2c] sm:$0xf]
    %v840 = vld [vmem:[%s5 + $0x30] sm:$0xf]
    %v841 = vld [vmem:[%s5 + $0x34] sm:$0xf]
    %v842 = vld [vmem:[%s5 + $0x38] sm:$0xf]
    %v843 = vld [vmem:[%s5 + $0x3c] sm:$0xf]
    %v844 = vld [vmem:[%s5 + $0x40] sm:$0xf]
    %v845 = vld [vmem:[%s5 + $0x44] sm:$0xf]
    %v846 = vld [vmem:[%s5 + $0x48] sm:$0xf]
    %v847 = vld [vmem:[%s5 + $0x4c] sm:$0xf]
    %v848 = vld [vmem:[%s5 + $0x50] sm:$0xf]
    %v849 = vld [vmem:[%s5 + $0x54] sm:$0xf]
    %v850 = vld [vmem:[%s5 + $0x58] sm:$0xf]
    %v851 = vld [vmem:[%s5 + $0x5c] sm:$0xf]
    %v852 = vld [vmem:[%s5 + $0x60] sm:$0xf]
    %v853 = vld [vmem:[%s5 + $0x64] sm:$0xf]
    %v854 = vld [vmem:[%s5 + $0x68] sm:$0xf]
    %v855 = vld [vmem:[%s5 + $0x6c] sm:$0xf]
    %v856 = vld [vmem:[%s5 + $0x70] sm:$0xf]
    %v857 = vld [vmem:[%s5 + $0x74] sm:$0xf]
    %v858 = vld [vmem:[%s5 + $0x78] sm:$0xf]
    %v859 = vld [vmem:[%s5 + $0x7c] sm:$0xf]
    %v860 = vld [vmem:[%s6] sm:$0x1]
    %v862 = vlaneseq
    %v863 = vshrl.u32 %v862, 7
    %v864 = vsub.s32 0, %v863
    %v865 = vrot.slane %v860, %v864
    %v899 = vunpack.c.l.b16 %v828
    %v900 = vunpack.c.l.b16 %v829
    %v901 = vunpack.c.l.b16 %v830
    %v902 = vunpack.c.l.b16 %v831
    %v903 = vunpack.c.l.b16 %v832
    %v904 = vunpack.c.l.b16 %v833
    %v905 = vunpack.c.l.b16 %v834
    %v906 = vunpack.c.l.b16 %v835
    %v907 = vunpack.c.l.b16 %v836
    %v908 = vunpack.c.l.b16 %v837
    %v909 = vunpack.c.l.b16 %v838
    %v910 = vunpack.c.l.b16 %v839
    %v911 = vunpack.c.l.b16 %v840
    %v912 = vunpack.c.l.b16 %v841
    %v913 = vunpack.c.l.b16 %v842
    %v914 = vunpack.c.l.b16 %v843
    %v915 = vunpack.c.l.b16 %v844
    %v916 = vunpack.c.l.b16 %v845
    %v917 = vunpack.c.l.b16 %v846
    %v918 = vunpack.c.l.b16 %v847
    %v919 = vunpack.c.l.b16 %v848
    %v920 = vunpack.c.l.b16 %v849
    %v921 = vunpack.c.l.b16 %v850
    %v922 = vunpack.c.l.b16 %v851
    %v923 = vunpack.c.l.b16 %v852
    %v924 = vunpack.c.l.b16 %v853
    %v925 = vunpack.c.l.b16 %v854
    %v926 = vunpack.c.l.b16 %v855
    %v927 = vunpack.c.l.b16 %v856
    %v928 = vunpack.c.l.b16 %v857
    %v929 = vunpack.c.l.b16 %v858
    %v930 = vunpack.c.l.b16 %v859
    %v931 = vpack.c.b16 %v900, %v899
    %v932 = vpack.c.b16 %v902, %v901
    %v933 = vpack.c.b16 %v904, %v903
    %v934 = vpack.c.b16 %v906, %v905
    %v935 = vpack.c.b16 %v908, %v907
    %v936 = vpack.c.b16 %v910, %v909
    %v937 = vpack.c.b16 %v912, %v911
    %v938 = vpack.c.b16 %v914, %v913
    %v939 = vpack.c.b16 %v916, %v915
    %v940 = vpack.c.b16 %v918, %v917
    %v941 = vpack.c.b16 %v920, %v919
    %v942 = vpack.c.b16 %v922, %v921
    %v943 = vpack.c.b16 %v924, %v923
    %v944 = vpack.c.b16 %v926, %v925
    %v945 = vpack.c.b16 %v928, %v927
    %v946 = vpack.c.b16 %v930, %v929
    %963 = vmatprep.subr.bf16.mxu0 0
    %964 = vmatpush1.bf16.msra.mxu0 %v938
    %965 = vmatprep.subr.bf16.mxu0 0
    %966 = vmatpush1.bf16.msra.mxu0 %v937
    %967 = vmatprep.subr.bf16.mxu0 0
    %968 = vmatpush1.bf16.msra.mxu0 %v936
    %969 = vmatprep.subr.bf16.mxu0 0
    %970 = vmatpush1.bf16.msra.mxu0 %v935
    %971 = vmatprep.subr.bf16.mxu0 0
    %972 = vmatpush1.bf16.msra.mxu0 %v934
    %973 = vmatprep.subr.bf16.mxu0 0
    %974 = vmatpush1.bf16.msra.mxu0 %v933
    %975 = vmatprep.subr.bf16.mxu0 0
    %976 = vmatpush1.bf16.msra.mxu0 %v932
    %977 = vmatprep.subr.bf16.mxu0 0
    %978 = vmatpush1.bf16.msra.mxu0 %v931
    %979 = vmatprep.subr.bf16.mxu0 0
    %980 = vmatpush2.bf16.msra.mxu0 %v946
    %981 = vmatprep.subr.bf16.mxu0 0
    %982 = vmatpush2.bf16.msra.mxu0 %v945
    %983 = vmatprep.subr.bf16.mxu0 0
    %984 = vmatpush2.bf16.msra.mxu0 %v944
    %985 = vmatprep.subr.bf16.mxu0 0
    %986 = vmatpush2.bf16.msra.mxu0 %v943
    %987 = vmatprep.subr.bf16.mxu0 0
    %988 = vmatpush2.bf16.msra.mxu0 %v942
    %989 = vmatprep.subr.bf16.mxu0 0
    %990 = vmatpush2.bf16.msra.mxu0 %v941
    %991 = vmatprep.subr.bf16.mxu0 0
    %992 = vmatpush2.bf16.msra.mxu0 %v940
    %993 = vmatprep.subr.bf16.mxu0 0
    %994 = vmatpush2.bf16.msra.mxu0 %v939
    %995 = vmatprep.mubr.bf16.mxu0 %v827
    %996 = vmatmul.mubr.bf16.gmra.mxu0 %v826
    %v997 = vpop.f32.mrf.mxu0
    %v998 = vadd.f32 %v865, %v997
    %v999 = vpop.f32.mrf.mxu0
    %v1000 = vpop.f32.mrf.mxu0
    %v1001 = vpop.f32.mrf.mxu0
    %1002 = vdwg.mxu0
    %vm1003 = vcmask 320512
    %1004 = vst.msk [vmem:[#allocation2] sm:$0x3] %vm1003, %v998
    // Predicated region
    $region30: #{dgcnn_forward.11} parent=1 // pred_check
      _
    $region31: #{dgcnn_forward.11} parent=1 // pred_check_branch
      %1006 = sbr.rel (0) target = $region33
    $region32: #{dgcnn_forward.11} parent=1 // pred_region
      %s1008 = ssub.s32 32, 32
      %1009 = vsyncadd [#allocation3], %s1008
      %s1011 = sshll.u32 [#allocation2], 4
      %s1012 = int_to_ptr.vmem [resolvable:$true] %s1011
      %1014 = dma.vmem_to_hbm [thread:$0]  %s1012, 32, %s7, [#allocation3]
    $region33: #{dgcnn_forward.11} parent=1 // pred_fallthru
      _
    // Predicated region
    $region34: #{dgcnn_forward.11} parent=1 // pred_check
      _
    $region35: #{dgcnn_forward.11} parent=1 // pred_check_branch
      %1016 = sbr.rel (0) target = $region37
    $region36: #{dgcnn_forward.11} parent=1 // pred_region
      %1017 = dma.done [#allocation3], 32
    $region37: #{dgcnn_forward.11} parent=1 // pred_fallthru
      _
    %1018 = vsyncpa [#allocation3], 1

</llo_original>
